<compile_context>
chip_gen: v7x
topology: tpu7x:2x2x1
jax: 0.10.0
libtpu: 0.0.40
codegen_flags: <defaults>
</compile_context>

<pallas_src>
import math
import functools

import numpy as np
import jax
import jax.numpy as jnp
from jax.experimental import pallas as pl
from jax.experimental.pallas import tpu as pltpu


# ----------------------------------------------------------------------------
# Compiler params
# ----------------------------------------------------------------------------

@functools.lru_cache(maxsize=1)
def _vmem_limit_bytes():
    # Generation-aware VMEM budget (~45% of physical capacity), safe fallback.
    try:
        cap = getattr(pltpu.get_tpu_info(), "vmem_capacity_bytes", None)
        if cap:
            return int(cap * 0.45)
    except Exception:
        pass
    return 32 * 1024 * 1024


def _cparams(sem):
    return pltpu.CompilerParams(dimension_semantics=sem,
                                vmem_limit_bytes=_vmem_limit_bytes())


# ----------------------------------------------------------------------------
# In-kernel helpers (fast reciprocal, exact-ish GELU, '+' depthwise shift, MLP)
# ----------------------------------------------------------------------------

_SQRT_HALF = 0.7071067811865476


def _fast_recip(x):
    # approx reciprocal (EUP slot) + one Newton step -> ~f32 accuracy.
    r = pl.reciprocal(x, approx=True)
    return r * (2.0 - x * r)


def _erf_f32(x):
    # Abramowitz & Stegun 7.1.26, |abs err| <= 1.5e-7; built from exp/mul/add/select.
    a1, a2, a3, a4, a5 = 0.254829592, -0.284496736, 1.421413741, -1.453152027, 1.061405429
    pc = 0.3275911
    ax = jnp.abs(x)
    t = _fast_recip(1.0 + pc * ax)
    poly = ((((a5 * t + a4) * t + a3) * t + a2) * t + a1) * t
    y = 1.0 - poly * jnp.exp(-ax * ax)
    return jnp.where(x < 0.0, -y, y)


def _gelu(x):
    # TODO(synk): exact-erf nn.GELU approximated with a <=1.5e-7-abs-error polynomial
    #             (lax.erf has no guaranteed Mosaic lowering).
    return 0.5 * x * (1.0 + _erf_f32(x * _SQRT_HALF))


def _shift_plus(x, grp, w_first, w_last, h_first, h_last, W):
    """ShiftConv2d1x1 '+' depthwise shift (zero padded, val=1.0) on (C, H*W) data."""
    N = x.shape[1]
    right = jnp.where(w_last, 0.0, pltpu.roll(x, N - 1, axis=1))   # x[h, w+1]
    left = jnp.where(w_first, 0.0, pltpu.roll(x, 1, axis=1))       # x[h, w-1]
    down = jnp.where(h_last, 0.0, pltpu.roll(x, N - W, axis=1))    # x[h+1, w]
    up = jnp.where(h_first, 0.0, pltpu.roll(x, W, axis=1))         # x[h-1, w]
    return jnp.where(grp == 0, right,
           jnp.where(grp == 1, left,
           jnp.where(grp == 2, down,
           jnp.where(grp == 3, up, x))))


def _mlp_residual(y, w1, b1, w2, b2, grp_x, grp_h,
                  w_first, w_last, h_first, h_last, W):
    """y + Mlp(y): shift+ -> fc1 -> GELU -> shift+ -> fc2 (hidden stays in VMEM)."""
    ys = _shift_plus(y, grp_x, w_first, w_last, h_first, h_last, W)
    h = jnp.dot(w1, ys, preferred_element_type=jnp.float32) + b1
    h = _gelu(h)
    hs = _shift_plus(h, grp_h, w_first, w_last, h_first, h_last, W)
    z = jnp.dot(w2, hs, preferred_element_type=jnp.float32) + b2
    return y + z


# ----------------------------------------------------------------------------
# Pallas kernels (one per block per image)
# ----------------------------------------------------------------------------

def _lt_mlp_kernel(x_ref, scale_ref, bias_ref, w1_ref, b1_ref, w2_ref, b2_ref,
                   wid_ref, sel5_ref, grpx_ref, grph_ref, o_ref, *, W):
    """x + LTModeler(x) followed by (+ Mlp), all fused, per image, (C, H*W) layout."""
    x = x_ref[...]                                     # (C, N)
    N = x.shape[1]
    wid = wid_ref[...]                                 # (1, N) int32: w coordinate
    lane = jax.lax.broadcasted_iota(jnp.int32, (1, N), 1)
    w_first, w_last = wid == 0, wid == W - 1
    h_first, h_last = lane < W, lane >= N - W
    sel5 = sel5_ref[...]                               # (C, 1): channel % 5

    # PixelMixer: per-(channel%5) circular shifts as XLU lane rotations.
    right = jnp.where(w_last, pltpu.roll(x, W - 1, axis=1), pltpu.roll(x, N - 1, axis=1))
    left = jnp.where(w_first, pltpu.roll(x, N - W + 1, axis=1), pltpu.roll(x, 1, axis=1))
    down = pltpu.roll(x, N - W, axis=1)                # flat roll == circular row roll
    up = pltpu.roll(x, W, axis=1)
    mix = jnp.where(sel5 == 0, right,
          jnp.where(sel5 == 1, left,
          jnp.where(sel5 == 2, down,
          jnp.where(sel5 == 3, up, x))))

    # x + BatchNorm(mix - x): running-stats BN folded into a per-channel affine.
    y = x + (mix - x) * scale_ref[...] + bias_ref[...]

    out = _mlp_residual(y, w1_ref[...], b1_ref[...], w2_ref[...], b2_ref[...],
                        grpx_ref[...], grph_ref[...],
                        w_first, w_last, h_first, h_last, W)
    o_ref[...] = out.astype(o_ref.dtype)


def _gt_mlp_kernel(x_ref, wa_ref, ba_ref, gq_ref, gk_ref, wp_ref, bp_ref,
                   w1_ref, b1_ref, w2_ref, b2_ref, wid_ref, grpx_ref, grph_ref,
                   o_ref, *, W, num_heads, n_cfg):
    """x + GTModeler(x) followed by (+ Mlp), all fused, per image, (C, H*W) layout."""
    x = x_ref[...]                                     # (dim, N)
    dim, N = x.shape

    # qkv 1x1 conv (+folded BN): lane-dense MXU matmul, output last dim = N.
    qkv = jnp.dot(wa_ref[...], x, preferred_element_type=jnp.float32) + ba_ref[...]

    cs = (2 * dim) // n_cfg                            # channels per window config
    c = cs // (2 * num_heads)                          # channels per head
    wp = wp_ref[...]
    y = bp_ref[...] + x                                # proj bias + residual (epilogue)
    col = 0
    for cfg in range(n_cfg):
        # Window partition + spatial shift folded into a same-window (group-id) mask.
        same = gq_ref[cfg] == gk_ref[cfg]              # (N, 1) == (1, N) -> (N, N)
        base = cfg * cs
        for hd in range(num_heads):
            q = qkv[base + hd * c: base + (hd + 1) * c, :]                         # (c, N)
            v = qkv[base + (num_heads + hd) * c: base + (num_heads + hd + 1) * c, :]
            # scores over all token pairs, masked to same-window pairs.
            s = jnp.dot(q.T, q, preferred_element_type=jnp.float32)               # (N, N)
            s = jnp.where(same, s, -1e30)
            s = s - jnp.max(s, axis=-1, keepdims=True)
            p = jnp.exp(s)
            p = p * _fast_recip(jnp.sum(p, axis=-1, keepdims=True))
            # out[ch, i] = sum_j v[ch, j] * p[i, j]
            o = jax.lax.dot_general(v, p, (((1,), (1,)), ((), ())),
                                    preferred_element_type=jnp.float32)           # (c, N)
            # proj conv: accumulate the corresponding column block of wp.
            y = y + jnp.dot(wp[:, col:col + c], o, preferred_element_type=jnp.float32)
            col += c

    wid = wid_ref[...]
    lane = jax.lax.broadcasted_iota(jnp.int32, (1, N), 1)
    out = _mlp_residual(y, w1_ref[...], b1_ref[...], w2_ref[...], b2_ref[...],
                        grpx_ref[...], grph_ref[...],
                        wid == 0, wid == W - 1, lane < W, lane >= N - W, W)
    o_ref[...] = out.astype(o_ref.dtype)


# ----------------------------------------------------------------------------
# Kernel wrappers
# ----------------------------------------------------------------------------

def _full_spec(shape):
    return pl.BlockSpec(shape, lambda b: (0,) * len(shape))


def _chan_consts(C, Hd):
    grp_x = jnp.asarray((np.arange(C) // (C // 5)).reshape(C, 1), jnp.int32)
    grp_h = jnp.asarray((np.arange(Hd) // (Hd // 5)).reshape(Hd, 1), jnp.int32)
    return grp_x, grp_h


def lt_mlp_block(xf, p, H, W, wid):
    """x = x + LTModeler(x); x = x + Mlp(x).  One fused pallas_call, grid over images."""
    B, C, N = xf.shape
    Hd = p["fc1_w"].shape[0]
    sel5 = jnp.asarray((np.arange(C) % 5).reshape(C, 1), jnp.int32)
    grp_x, grp_h = _chan_consts(C, Hd)
    kern = functools.partial(_lt_mlp_kernel, W=W)
    return pl.pallas_call(
        kern,
        out_shape=jax.ShapeDtypeStruct((B, C, N), xf.dtype),
        grid=(B,),
        in_specs=[
            pl.BlockSpec((None, C, N), lambda b: (b, 0, 0)),
            _full_spec((C, 1)), _full_spec((C, 1)),
            _full_spec((Hd, C)), _full_spec((Hd, 1)),
            _full_spec((C, Hd)), _full_spec((C, 1)),
            _full_spec((1, N)), _full_spec((C, 1)),
            _full_spec((C, 1)), _full_spec((Hd, 1)),
        ],
        out_specs=pl.BlockSpec((None, C, N), lambda b: (b, 0, 0)),
        compiler_params=_cparams(("parallel",)),
    )(xf, p["bn_scale"], p["bn_bias"], p["fc1_w"], p["fc1_b"], p["fc2_w"], p["fc2_b"],
      wid, sel5, grp_x, grp_h)


def gt_mlp_block(xf, p, H, W, num_heads, window_list, shift_list, wid):
    """x = x + GTModeler(x); x = x + Mlp(x).  One fused pallas_call, grid over images."""
    B, C, N = xf.shape
    Hd = p["fc1_w"].shape[0]
    n_cfg = len(window_list)
    gq_np, gk_np = [], []
    for (ws1, ws2), (sh, sw) in zip(window_list, shift_list):
        # TODO(synk): ragged windows (reflect-padding path) are not supported.
        assert H % ws1 == 0 and W % ws2 == 0, "H, W must be divisible by window size"
        nw = W // ws2
        gh = ((np.arange(H) + sh) % H) // ws1          # shifted window row index
        gw = ((np.arange(W) + sw) % W) // ws2          # shifted window col index
        gid = (gh[:, None] * nw + gw[None, :]).reshape(N)
        gq_np.append(gid.reshape(N, 1))
        gk_np.append(gid.reshape(1, N))
    gq = jnp.asarray(np.stack(gq_np, 0), jnp.int32)    # (n_cfg, N, 1)
    gk = jnp.asarray(np.stack(gk_np, 0), jnp.int32)    # (n_cfg, 1, N)
    grp_x, grp_h = _chan_consts(C, Hd)
    kern = functools.partial(_gt_mlp_kernel, W=W, num_heads=num_heads, n_cfg=n_cfg)
    return pl.pallas_call(
        kern,
        out_shape=jax.ShapeDtypeStruct((B, C, N), xf.dtype),
        grid=(B,),
        in_specs=[
            pl.BlockSpec((None, C, N), lambda b: (b, 0, 0)),
            _full_spec((2 * C, C)), _full_spec((2 * C, 1)),
            _full_spec((n_cfg, N, 1)), _full_spec((n_cfg, 1, N)),
            _full_spec((C, C)), _full_spec((C, 1)),
            _full_spec((Hd, C)), _full_spec((Hd, 1)),
            _full_spec((C, Hd)), _full_spec((C, 1)),
            _full_spec((1, N)), _full_spec((C, 1)), _full_spec((Hd, 1)),
        ],
        out_specs=pl.BlockSpec((None, C, N), lambda b: (b, 0, 0)),
        compiler_params=_cparams(("parallel",)),
    )(xf, p["attn_w"], p["attn_b"], gq, gk, p["proj_w"], p["proj_b"],
      p["fc1_w"], p["fc1_b"], p["fc2_w"], p["fc2_b"], wid, grp_x, grp_h)


# ----------------------------------------------------------------------------
# Full forward
# ----------------------------------------------------------------------------

def lgt_group_forward(x, params, *, block_types, block_shifts, num_heads, window_list):
    B, dim, H, W = x.shape
    N = H * W
    # NCHW -> (B, C, H*W): channels on sublanes, spatial on lanes (pure reshape).
    xf = x.reshape(B, dim, N)
    wid = jnp.asarray((np.arange(N) % W).reshape(1, N), jnp.int32)
    for p, btype, shifts in zip(params, block_types, block_shifts):
        if btype == "gt":
            xf = gt_mlp_block(xf, p, H, W, num_heads, window_list, shifts, wid)
        else:
            xf = lt_mlp_block(xf, p, H, W, wid)
    # conv_list=None -> Identity; back to NCHW is again a pure reshape.
    return xf.reshape(B, dim, H, W)


# ----------------------------------------------------------------------------
# Deterministic parameter init (weights stored as (Cout, Cin); biases as (Cout, 1))
# ----------------------------------------------------------------------------

def init_lgt_group(key, dim, num_block, num_heads, num_gtmodeler,
                   window_list, shift_list, mlp_ratio):
    hidden = dim * mlp_ratio
    eps = 1e-5
    params, block_types, block_shifts = [], [], []
    bkeys = jax.random.split(key, num_block)
    for b in range(num_block):
        kb = jax.random.split(bkeys[b], 12)
        blk = {}
        if b <= num_gtmodeler - 1:
            block_types.append("gt")
            w_attn = jax.random.normal(kb[0], (2 * dim, dim), jnp.float32) / math.sqrt(dim)
            b_attn = 0.01 * jax.random.normal(kb[1], (2 * dim,), jnp.float32)
            gamma = 1.0 + 0.1 * jax.random.normal(kb[2], (2 * dim,), jnp.float32)
            beta = 0.1 * jax.random.normal(kb[3], (2 * dim,), jnp.float32)
            mean = 0.1 * jax.random.normal(kb[4], (2 * dim,), jnp.float32)
            var = 1.0 + 0.1 * jax.random.uniform(kb[5], (2 * dim,), jnp.float32)
            scale = gamma / jnp.sqrt(var + eps)
            blk["attn_w"] = w_attn * scale[:, None]                 # BN folded into conv
            blk["attn_b"] = ((b_attn - mean) * scale + beta).reshape(2 * dim, 1)
            blk["proj_w"] = jax.random.normal(kb[6], (dim, dim), jnp.float32) / math.sqrt(dim)
            blk["proj_b"] = (0.01 * jax.random.normal(kb[7], (dim,), jnp.float32)).reshape(dim, 1)
            block_shifts.append(tuple(shift_list) if (b + 1) % 2 == 0
                                else ((0, 0),) * len(window_list))
        else:
            block_types.append("lt")
            gamma = 1.0 + 0.1 * jax.random.normal(kb[2], (dim,), jnp.float32)
            beta = 0.1 * jax.random.normal(kb[3], (dim,), jnp.float32)
            mean = 0.1 * jax.random.normal(kb[4], (dim,), jnp.float32)
            var = 1.0 + 0.1 * jax.random.uniform(kb[5], (dim,), jnp.float32)
            scale = gamma / jnp.sqrt(var + eps)
            blk["bn_scale"] = scale.reshape(dim, 1)
            blk["bn_bias"] = (beta - mean * scale).reshape(dim, 1)
            block_shifts.append(((0, 0),) * len(window_list))
        blk["fc1_w"] = jax.random.normal(kb[8], (hidden, dim), jnp.float32) / math.sqrt(dim)
        blk["fc1_b"] = (0.01 * jax.random.normal(kb[9], (hidden,), jnp.float32)).reshape(hidden, 1)
        blk["fc2_w"] = jax.random.normal(kb[10], (dim, hidden), jnp.float32) / math.sqrt(hidden)
        blk["fc2_b"] = (0.01 * jax.random.normal(kb[11], (dim,), jnp.float32)).reshape(dim, 1)
        params.append(blk)
    return params, tuple(block_types), tuple(block_shifts)


# ----------------------------------------------------------------------------
# Main
# ----------------------------------------------------------------------------

if __name__ == "__main__":
    # Small config consistent with module constraints:
    #   dim % 5 == 0, hidden % 5 == 0, dim divisible by 2*num_heads*len(window_list),
    #   H, W divisible by the window sizes.
    dim = 20
    num_block = 3
    num_heads = 2
    num_gtmodeler = 2          # blocks 0,1 = GTModeler; block 2 = LTModeler
    window_list = ((4, 4),)
    shift_list = ((2, 2),)
    mlp_ratio = 2
    B, H, W = 2, 16, 16

    key = jax.random.PRNGKey(0)
    kx, kp = jax.random.split(key)
    x = jax.random.normal(kx, (B, dim, H, W), jnp.float32)

    params, block_types, block_shifts = init_lgt_group(
        kp, dim, num_block, num_heads, num_gtmodeler, window_list, shift_list, mlp_ratio)

    fwd = jax.jit(functools.partial(
        lgt_group_forward,
        block_types=block_types, block_shifts=block_shifts,
        num_heads=num_heads, window_list=window_list))

    out = jax.block_until_ready(fwd(x, params))
    assert out.shape == (B, dim, H, W)
    assert bool(jnp.all(jnp.isfinite(out)))
    print("KERNEL_OK")
</pallas_src>

<mosaic_0001>
module attributes {stable_mosaic.version = 11 : i64} {
  func.func @_lt_mlp_kernel(%arg0: i32, %arg1: memref<1x20x256xf32, #tpu.memory_space<vmem>>, %arg2: memref<20x1xf32, #tpu.memory_space<vmem>>, %arg3: memref<20x1xf32, #tpu.memory_space<vmem>>, %arg4: memref<40x20xf32, #tpu.memory_space<vmem>>, %arg5: memref<40x1xf32, #tpu.memory_space<vmem>>, %arg6: memref<20x40xf32, #tpu.memory_space<vmem>>, %arg7: memref<20x1xf32, #tpu.memory_space<vmem>>, %arg8: memref<1x256xi32, #tpu.memory_space<vmem>>, %arg9: memref<20x1xi32, #tpu.memory_space<vmem>>, %arg10: memref<20x1xi32, #tpu.memory_space<vmem>>, %arg11: memref<40x1xi32, #tpu.memory_space<vmem>>, %arg12: memref<1x20x256xf32, #tpu.memory_space<vmem>>) attributes {dimension_semantics = [#tpu.dimension_semantics<parallel>], iteration_bounds = array<i64: 2>, scalar_prefetch = 0 : i64, scratch_operands = 0 : i64, tpu.core_type = #tpu.core_type<tc>, window_params = [{transform_indices = @transform_0, window_bounds = array<i64: 1, 20, 256>}, {pipeline_mode = #tpu.pipeline_mode<synchronous>, transform_indices = @transform_1, window_bounds = array<i64: 20, 1>}, {pipeline_mode = #tpu.pipeline_mode<synchronous>, transform_indices = @transform_2, window_bounds = array<i64: 20, 1>}, {pipeline_mode = #tpu.pipeline_mode<synchronous>, transform_indices = @transform_3, window_bounds = array<i64: 40, 20>}, {pipeline_mode = #tpu.pipeline_mode<synchronous>, transform_indices = @transform_4, window_bounds = array<i64: 40, 1>}, {pipeline_mode = #tpu.pipeline_mode<synchronous>, transform_indices = @transform_5, window_bounds = array<i64: 20, 40>}, {pipeline_mode = #tpu.pipeline_mode<synchronous>, transform_indices = @transform_6, window_bounds = array<i64: 20, 1>}, {pipeline_mode = #tpu.pipeline_mode<synchronous>, transform_indices = @transform_7, window_bounds = array<i64: 1, 256>}, {pipeline_mode = #tpu.pipeline_mode<synchronous>, transform_indices = @transform_8, window_bounds = array<i64: 20, 1>}, {pipeline_mode = #tpu.pipeline_mode<synchronous>, transform_indices = @transform_9, window_bounds = array<i64: 20, 1>}, {pipeline_mode = #tpu.pipeline_mode<synchronous>, transform_indices = @transform_10, window_bounds = array<i64: 40, 1>}, {transform_indices = @transform_11, window_bounds = array<i64: 1, 20, 256>}]} {
    %c0 = arith.constant 0 : index
    %c0_0 = arith.constant 0 : index
    %c0_1 = arith.constant 0 : index
    %0 = vector.load %arg1[%c0, %c0_0, %c0_1] : memref<1x20x256xf32, #tpu.memory_space<vmem>>, vector<1x20x256xf32>
    %1 = vector.shape_cast %0 : vector<1x20x256xf32> to vector<20x256xf32>
    %c0_2 = arith.constant 0 : index
    %c0_3 = arith.constant 0 : index
    %2 = vector.load %arg8[%c0_2, %c0_3] : memref<1x256xi32, #tpu.memory_space<vmem>>, vector<1x256xi32>
    %3 = tpu.iota {dimensions = array<i32: 1>} : vector<1x256xi32>
    %c0_i32 = arith.constant 0 : i32
    %4 = vector.broadcast %c0_i32 : i32 to vector<1x256xi32>
    %5 = arith.cmpi eq, %2, %4 : vector<1x256xi32>
    %c15_i32 = arith.constant 15 : i32
    %6 = vector.broadcast %c15_i32 : i32 to vector<1x256xi32>
    %7 = arith.cmpi eq, %2, %6 : vector<1x256xi32>
    %c16_i32 = arith.constant 16 : i32
    %8 = vector.broadcast %c16_i32 : i32 to vector<1x256xi32>
    %9 = arith.cmpi slt, %3, %8 : vector<1x256xi32>
    %c240_i32 = arith.constant 240 : i32
    %10 = vector.broadcast %c240_i32 : i32 to vector<1x256xi32>
    %11 = arith.cmpi sge, %3, %10 : vector<1x256xi32>
    %c0_4 = arith.constant 0 : index
    %c0_5 = arith.constant 0 : index
    %12 = vector.load %arg9[%c0_4, %c0_5] : memref<20x1xi32, #tpu.memory_space<vmem>>, vector<20x1xi32>
    %c15_i32_6 = arith.constant 15 : i32
    %13 = tpu.dynamic_rotate %1 by %c15_i32_6 dim 1 : vector<20x256xf32>, i32 -> vector<20x256xf32>
    %c255_i32 = arith.constant 255 : i32
    %14 = tpu.dynamic_rotate %1 by %c255_i32 dim 1 : vector<20x256xf32>, i32 -> vector<20x256xf32>
    %15 = vector.shape_cast %7 : vector<1x256xi1> to vector<1x256xi1>
    %16 = vector.broadcast %15 : vector<1x256xi1> to vector<20x256xi1>
    %17 = arith.select %16, %13, %14 : vector<20x256xi1>, vector<20x256xf32>
    %c241_i32 = arith.constant 241 : i32
    %18 = tpu.dynamic_rotate %1 by %c241_i32 dim 1 : vector<20x256xf32>, i32 -> vector<20x256xf32>
    %c1_i32 = arith.constant 1 : i32
    %19 = tpu.dynamic_rotate %1 by %c1_i32 dim 1 : vector<20x256xf32>, i32 -> vector<20x256xf32>
    %20 = vector.shape_cast %5 : vector<1x256xi1> to vector<1x256xi1>
    %21 = vector.broadcast %20 : vector<1x256xi1> to vector<20x256xi1>
    %22 = arith.select %21, %18, %19 : vector<20x256xi1>, vector<20x256xf32>
    %c240_i32_7 = arith.constant 240 : i32
    %23 = tpu.dynamic_rotate %1 by %c240_i32_7 dim 1 : vector<20x256xf32>, i32 -> vector<20x256xf32>
    %c16_i32_8 = arith.constant 16 : i32
    %24 = tpu.dynamic_rotate %1 by %c16_i32_8 dim 1 : vector<20x256xf32>, i32 -> vector<20x256xf32>
    %c0_i32_9 = arith.constant 0 : i32
    %25 = vector.broadcast %c0_i32_9 : i32 to vector<20x1xi32>
    %26 = arith.cmpi eq, %12, %25 : vector<20x1xi32>
    %c1_i32_10 = arith.constant 1 : i32
    %27 = vector.broadcast %c1_i32_10 : i32 to vector<20x1xi32>
    %28 = arith.cmpi eq, %12, %27 : vector<20x1xi32>
    %c2_i32 = arith.constant 2 : i32
    %29 = vector.broadcast %c2_i32 : i32 to vector<20x1xi32>
    %30 = arith.cmpi eq, %12, %29 : vector<20x1xi32>
    %c3_i32 = arith.constant 3 : i32
    %31 = vector.broadcast %c3_i32 : i32 to vector<20x1xi32>
    %32 = arith.cmpi eq, %12, %31 : vector<20x1xi32>
    %33 = vector.shape_cast %32 : vector<20x1xi1> to vector<20x1xi1>
    %34 = vector.broadcast %33 : vector<20x1xi1> to vector<20x256xi1>
    %35 = arith.select %34, %24, %1 : vector<20x256xi1>, vector<20x256xf32>
    %36 = vector.shape_cast %30 : vector<20x1xi1> to vector<20x1xi1>
    %37 = vector.broadcast %36 : vector<20x1xi1> to vector<20x256xi1>
    %38 = arith.select %37, %23, %35 : vector<20x256xi1>, vector<20x256xf32>
    %39 = vector.shape_cast %28 : vector<20x1xi1> to vector<20x1xi1>
    %40 = vector.broadcast %39 : vector<20x1xi1> to vector<20x256xi1>
    %41 = arith.select %40, %22, %38 : vector<20x256xi1>, vector<20x256xf32>
    %42 = vector.shape_cast %26 : vector<20x1xi1> to vector<20x1xi1>
    %43 = vector.broadcast %42 : vector<20x1xi1> to vector<20x256xi1>
    %44 = arith.select %43, %17, %41 : vector<20x256xi1>, vector<20x256xf32>
    %45 = arith.subf %44, %1 : vector<20x256xf32>
    %c0_11 = arith.constant 0 : index
    %c0_12 = arith.constant 0 : index
    %46 = vector.load %arg2[%c0_11, %c0_12] : memref<20x1xf32, #tpu.memory_space<vmem>>, vector<20x1xf32>
    %47 = vector.broadcast %46 : vector<20x1xf32> to vector<20x256xf32>
    %48 = arith.mulf %45, %47 : vector<20x256xf32>
    %49 = arith.addf %1, %48 : vector<20x256xf32>
    %c0_13 = arith.constant 0 : index
    %c0_14 = arith.constant 0 : index
    %50 = vector.load %arg3[%c0_13, %c0_14] : memref<20x1xf32, #tpu.memory_space<vmem>>, vector<20x1xf32>
    %51 = vector.broadcast %50 : vector<20x1xf32> to vector<20x256xf32>
    %52 = arith.addf %49, %51 : vector<20x256xf32>
    %c0_15 = arith.constant 0 : index
    %c0_16 = arith.constant 0 : index
    %53 = vector.load %arg4[%c0_15, %c0_16] : memref<40x20xf32, #tpu.memory_space<vmem>>, vector<40x20xf32>
    %c0_17 = arith.constant 0 : index
    %c0_18 = arith.constant 0 : index
    %54 = vector.load %arg5[%c0_17, %c0_18] : memref<40x1xf32, #tpu.memory_space<vmem>>, vector<40x1xf32>
    %c0_19 = arith.constant 0 : index
    %c0_20 = arith.constant 0 : index
    %55 = vector.load %arg6[%c0_19, %c0_20] : memref<20x40xf32, #tpu.memory_space<vmem>>, vector<20x40xf32>
    %c0_21 = arith.constant 0 : index
    %c0_22 = arith.constant 0 : index
    %56 = vector.load %arg7[%c0_21, %c0_22] : memref<20x1xf32, #tpu.memory_space<vmem>>, vector<20x1xf32>
    %c0_23 = arith.constant 0 : index
    %c0_24 = arith.constant 0 : index
    %57 = vector.load %arg10[%c0_23, %c0_24] : memref<20x1xi32, #tpu.memory_space<vmem>>, vector<20x1xi32>
    %c0_25 = arith.constant 0 : index
    %c0_26 = arith.constant 0 : index
    %58 = vector.load %arg11[%c0_25, %c0_26] : memref<40x1xi32, #tpu.memory_space<vmem>>, vector<40x1xi32>
    %c255_i32_27 = arith.constant 255 : i32
    %59 = tpu.dynamic_rotate %52 by %c255_i32_27 dim 1 : vector<20x256xf32>, i32 -> vector<20x256xf32>
    %cst = arith.constant 0.000000e+00 : f32
    %60 = vector.shape_cast %7 : vector<1x256xi1> to vector<1x256xi1>
    %61 = vector.broadcast %60 : vector<1x256xi1> to vector<20x256xi1>
    %62 = vector.broadcast %cst : f32 to vector<20x256xf32>
    %63 = arith.select %61, %62, %59 : vector<20x256xi1>, vector<20x256xf32>
    %c1_i32_28 = arith.constant 1 : i32
    %64 = tpu.dynamic_rotate %52 by %c1_i32_28 dim 1 : vector<20x256xf32>, i32 -> vector<20x256xf32>
    %cst_29 = arith.constant 0.000000e+00 : f32
    %65 = vector.shape_cast %5 : vector<1x256xi1> to vector<1x256xi1>
    %66 = vector.broadcast %65 : vector<1x256xi1> to vector<20x256xi1>
    %67 = vector.broadcast %cst_29 : f32 to vector<20x256xf32>
    %68 = arith.select %66, %67, %64 : vector<20x256xi1>, vector<20x256xf32>
    %c240_i32_30 = arith.constant 240 : i32
    %69 = tpu.dynamic_rotate %52 by %c240_i32_30 dim 1 : vector<20x256xf32>, i32 -> vector<20x256xf32>
    %cst_31 = arith.constant 0.000000e+00 : f32
    %70 = vector.shape_cast %11 : vector<1x256xi1> to vector<1x256xi1>
    %71 = vector.broadcast %70 : vector<1x256xi1> to vector<20x256xi1>
    %72 = vector.broadcast %cst_31 : f32 to vector<20x256xf32>
    %73 = arith.select %71, %72, %69 : vector<20x256xi1>, vector<20x256xf32>
    %c16_i32_32 = arith.constant 16 : i32
    %74 = tpu.dynamic_rotate %52 by %c16_i32_32 dim 1 : vector<20x256xf32>, i32 -> vector<20x256xf32>
    %cst_33 = arith.constant 0.000000e+00 : f32
    %75 = vector.shape_cast %9 : vector<1x256xi1> to vector<1x256xi1>
    %76 = vector.broadcast %75 : vector<1x256xi1> to vector<20x256xi1>
    %77 = vector.broadcast %cst_33 : f32 to vector<20x256xf32>
    %78 = arith.select %76, %77, %74 : vector<20x256xi1>, vector<20x256xf32>
    %c0_i32_34 = arith.constant 0 : i32
    %79 = vector.broadcast %c0_i32_34 : i32 to vector<20x1xi32>
    %80 = arith.cmpi eq, %57, %79 : vector<20x1xi32>
    %c1_i32_35 = arith.constant 1 : i32
    %81 = vector.broadcast %c1_i32_35 : i32 to vector<20x1xi32>
    %82 = arith.cmpi eq, %57, %81 : vector<20x1xi32>
    %c2_i32_36 = arith.constant 2 : i32
    %83 = vector.broadcast %c2_i32_36 : i32 to vector<20x1xi32>
    %84 = arith.cmpi eq, %57, %83 : vector<20x1xi32>
    %c3_i32_37 = arith.constant 3 : i32
    %85 = vector.broadcast %c3_i32_37 : i32 to vector<20x1xi32>
    %86 = arith.cmpi eq, %57, %85 : vector<20x1xi32>
    %87 = vector.shape_cast %86 : vector<20x1xi1> to vector<20x1xi1>
    %88 = vector.broadcast %87 : vector<20x1xi1> to vector<20x256xi1>
    %89 = arith.select %88, %78, %52 : vector<20x256xi1>, vector<20x256xf32>
    %90 = vector.shape_cast %84 : vector<20x1xi1> to vector<20x1xi1>
    %91 = vector.broadcast %90 : vector<20x1xi1> to vector<20x256xi1>
    %92 = arith.select %91, %73, %89 : vector<20x256xi1>, vector<20x256xf32>
    %93 = vector.shape_cast %82 : vector<20x1xi1> to vector<20x1xi1>
    %94 = vector.broadcast %93 : vector<20x1xi1> to vector<20x256xi1>
    %95 = arith.select %94, %68, %92 : vector<20x256xi1>, vector<20x256xf32>
    %96 = vector.shape_cast %80 : vector<20x1xi1> to vector<20x1xi1>
    %97 = vector.broadcast %96 : vector<20x1xi1> to vector<20x256xi1>
    %98 = arith.select %97, %63, %95 : vector<20x256xi1>, vector<20x256xf32>
    %cst_38 = arith.constant dense<0.000000e+00> : vector<40x256xf32>
    %99 = tpu.matmul %53, %98, %cst_38 {dimension_numbers = #tpu.dot_dimension_numbers<[1], [0], [0], [1], [0, 0, 1, 1], [], []>} : vector<40x20xf32>, vector<20x256xf32>, vector<40x256xf32> -> vector<40x256xf32>
    %100 = vector.broadcast %54 : vector<40x1xf32> to vector<40x256xf32>
    %101 = arith.addf %99, %100 : vector<40x256xf32>
    %cst_39 = arith.constant 5.000000e-01 : f32
    %102 = vector.broadcast %cst_39 : f32 to vector<40x256xf32>
    %103 = arith.mulf %102, %101 : vector<40x256xf32>
    %cst_40 = arith.constant 0.707106769 : f32
    %104 = vector.broadcast %cst_40 : f32 to vector<40x256xf32>
    %105 = arith.mulf %101, %104 : vector<40x256xf32>
    %106 = math.absf %105 : vector<40x256xf32>
    %cst_41 = arith.constant 0.327591091 : f32
    %107 = vector.broadcast %cst_41 : f32 to vector<40x256xf32>
    %108 = arith.mulf %107, %106 : vector<40x256xf32>
    %cst_42 = arith.constant 1.000000e+00 : f32
    %109 = vector.broadcast %cst_42 : f32 to vector<40x256xf32>
    %110 = arith.addf %109, %108 : vector<40x256xf32>
    %111 = tpu.reciprocal %110 {approx = true} : vector<40x256xf32> -> vector<40x256xf32>
    %112 = arith.mulf %110, %111 : vector<40x256xf32>
    %cst_43 = arith.constant 2.000000e+00 : f32
    %113 = vector.broadcast %cst_43 : f32 to vector<40x256xf32>
    %114 = arith.subf %113, %112 : vector<40x256xf32>
    %115 = arith.mulf %111, %114 : vector<40x256xf32>
    %cst_44 = arith.constant 1.06140542 : f32
    %116 = vector.broadcast %cst_44 : f32 to vector<40x256xf32>
    %117 = arith.mulf %116, %115 : vector<40x256xf32>
    %cst_45 = arith.constant -1.45315206 : f32
    %118 = vector.broadcast %cst_45 : f32 to vector<40x256xf32>
    %119 = arith.addf %117, %118 : vector<40x256xf32>
    %120 = arith.mulf %119, %115 : vector<40x256xf32>
    %cst_46 = arith.constant 1.42141378 : f32
    %121 = vector.broadcast %cst_46 : f32 to vector<40x256xf32>
    %122 = arith.addf %120, %121 : vector<40x256xf32>
    %123 = arith.mulf %122, %115 : vector<40x256xf32>
    %cst_47 = arith.constant -0.284496725 : f32
    %124 = vector.broadcast %cst_47 : f32 to vector<40x256xf32>
    %125 = arith.addf %123, %124 : vector<40x256xf32>
    %126 = arith.mulf %125, %115 : vector<40x256xf32>
    %cst_48 = arith.constant 0.254829586 : f32
    %127 = vector.broadcast %cst_48 : f32 to vector<40x256xf32>
    %128 = arith.addf %126, %127 : vector<40x256xf32>
    %129 = arith.mulf %128, %115 : vector<40x256xf32>
    %cst_49 = arith.constant 0.000000e+00 : f32
    %130 = vector.broadcast %cst_49 : f32 to vector<40x256xf32>
    %131 = arith.subf %130, %106 : vector<40x256xf32>
    %132 = arith.mulf %131, %106 : vector<40x256xf32>
    %133 = math.exp %132 : vector<40x256xf32>
    %134 = arith.mulf %129, %133 : vector<40x256xf32>
    %cst_50 = arith.constant 1.000000e+00 : f32
    %135 = vector.broadcast %cst_50 : f32 to vector<40x256xf32>
    %136 = arith.subf %135, %134 : vector<40x256xf32>
    %cst_51 = arith.constant 0.000000e+00 : f32
    %137 = vector.broadcast %cst_51 : f32 to vector<40x256xf32>
    %138 = arith.cmpf olt, %105, %137 : vector<40x256xf32>
    %cst_52 = arith.constant 0.000000e+00 : f32
    %139 = vector.broadcast %cst_52 : f32 to vector<40x256xf32>
    %140 = arith.subf %139, %136 : vector<40x256xf32>
    %141 = arith.select %138, %140, %136 : vector<40x256xi1>, vector<40x256xf32>
    %cst_53 = arith.constant 1.000000e+00 : f32
    %142 = vector.broadcast %cst_53 : f32 to vector<40x256xf32>
    %143 = arith.addf %142, %141 : vector<40x256xf32>
    %144 = arith.mulf %103, %143 : vector<40x256xf32>
    %c255_i32_54 = arith.constant 255 : i32
    %145 = tpu.dynamic_rotate %144 by %c255_i32_54 dim 1 : vector<40x256xf32>, i32 -> vector<40x256xf32>
    %cst_55 = arith.constant 0.000000e+00 : f32
    %146 = vector.shape_cast %7 : vector<1x256xi1> to vector<1x256xi1>
    %147 = vector.broadcast %146 : vector<1x256xi1> to vector<40x256xi1>
    %148 = vector.broadcast %cst_55 : f32 to vector<40x256xf32>
    %149 = arith.select %147, %148, %145 : vector<40x256xi1>, vector<40x256xf32>
    %c1_i32_56 = arith.constant 1 : i32
    %150 = tpu.dynamic_rotate %144 by %c1_i32_56 dim 1 : vector<40x256xf32>, i32 -> vector<40x256xf32>
    %cst_57 = arith.constant 0.000000e+00 : f32
    %151 = vector.shape_cast %5 : vector<1x256xi1> to vector<1x256xi1>
    %152 = vector.broadcast %151 : vector<1x256xi1> to vector<40x256xi1>
    %153 = vector.broadcast %cst_57 : f32 to vector<40x256xf32>
    %154 = arith.select %152, %153, %150 : vector<40x256xi1>, vector<40x256xf32>
    %c240_i32_58 = arith.constant 240 : i32
    %155 = tpu.dynamic_rotate %144 by %c240_i32_58 dim 1 : vector<40x256xf32>, i32 -> vector<40x256xf32>
    %cst_59 = arith.constant 0.000000e+00 : f32
    %156 = vector.shape_cast %11 : vector<1x256xi1> to vector<1x256xi1>
    %157 = vector.broadcast %156 : vector<1x256xi1> to vector<40x256xi1>
    %158 = vector.broadcast %cst_59 : f32 to vector<40x256xf32>
    %159 = arith.select %157, %158, %155 : vector<40x256xi1>, vector<40x256xf32>
    %c16_i32_60 = arith.constant 16 : i32
    %160 = tpu.dynamic_rotate %144 by %c16_i32_60 dim 1 : vector<40x256xf32>, i32 -> vector<40x256xf32>
    %cst_61 = arith.constant 0.000000e+00 : f32
    %161 = vector.shape_cast %9 : vector<1x256xi1> to vector<1x256xi1>
    %162 = vector.broadcast %161 : vector<1x256xi1> to vector<40x256xi1>
    %163 = vector.broadcast %cst_61 : f32 to vector<40x256xf32>
    %164 = arith.select %162, %163, %160 : vector<40x256xi1>, vector<40x256xf32>
    %c0_i32_62 = arith.constant 0 : i32
    %165 = vector.broadcast %c0_i32_62 : i32 to vector<40x1xi32>
    %166 = arith.cmpi eq, %58, %165 : vector<40x1xi32>
    %c1_i32_63 = arith.constant 1 : i32
    %167 = vector.broadcast %c1_i32_63 : i32 to vector<40x1xi32>
    %168 = arith.cmpi eq, %58, %167 : vector<40x1xi32>
    %c2_i32_64 = arith.constant 2 : i32
    %169 = vector.broadcast %c2_i32_64 : i32 to vector<40x1xi32>
    %170 = arith.cmpi eq, %58, %169 : vector<40x1xi32>
    %c3_i32_65 = arith.constant 3 : i32
    %171 = vector.broadcast %c3_i32_65 : i32 to vector<40x1xi32>
    %172 = arith.cmpi eq, %58, %171 : vector<40x1xi32>
    %173 = vector.shape_cast %172 : vector<40x1xi1> to vector<40x1xi1>
    %174 = vector.broadcast %173 : vector<40x1xi1> to vector<40x256xi1>
    %175 = arith.select %174, %164, %144 : vector<40x256xi1>, vector<40x256xf32>
    %176 = vector.shape_cast %170 : vector<40x1xi1> to vector<40x1xi1>
    %177 = vector.broadcast %176 : vector<40x1xi1> to vector<40x256xi1>
    %178 = arith.select %177, %159, %175 : vector<40x256xi1>, vector<40x256xf32>
    %179 = vector.shape_cast %168 : vector<40x1xi1> to vector<40x1xi1>
    %180 = vector.broadcast %179 : vector<40x1xi1> to vector<40x256xi1>
    %181 = arith.select %180, %154, %178 : vector<40x256xi1>, vector<40x256xf32>
    %182 = vector.shape_cast %166 : vector<40x1xi1> to vector<40x1xi1>
    %183 = vector.broadcast %182 : vector<40x1xi1> to vector<40x256xi1>
    %184 = arith.select %183, %149, %181 : vector<40x256xi1>, vector<40x256xf32>
    %cst_66 = arith.constant dense<0.000000e+00> : vector<20x256xf32>
    %185 = tpu.matmul %55, %184, %cst_66 {dimension_numbers = #tpu.dot_dimension_numbers<[1], [0], [0], [1], [0, 0, 1, 1], [], []>} : vector<20x40xf32>, vector<40x256xf32>, vector<20x256xf32> -> vector<20x256xf32>
    %186 = vector.broadcast %56 : vector<20x1xf32> to vector<20x256xf32>
    %187 = arith.addf %185, %186 : vector<20x256xf32>
    %188 = arith.addf %52, %187 : vector<20x256xf32>
    %c0_67 = arith.constant 0 : index
    %c0_68 = arith.constant 0 : index
    %c0_69 = arith.constant 0 : index
    %189 = vector.load %arg12[%c0_67, %c0_68, %c0_69] : memref<1x20x256xf32, #tpu.memory_space<vmem>>, vector<1x20x256xf32>
    %190 = vector.shape_cast %189 : vector<1x20x256xf32> to vector<20x256xf32>
    %191 = vector.shape_cast %188 : vector<20x256xf32> to vector<1x20x256xf32>
    tpu.vector_store %arg12[%c0_67, %c0_68, %c0_69], %191 {strides = array<i32>} : memref<1x20x256xf32, #tpu.memory_space<vmem>>, vector<1x20x256xf32>,
    return
  }
  func.func @transform_0(%arg0: i32) -> (i32, i32, i32) {
    %c0_i32 = arith.constant 0 : i32
    %c0_i32_0 = arith.constant 0 : i32
    %c0_i32_1 = arith.constant 0 : i32
    return %arg0, %c0_i32, %c0_i32_0 : i32, i32, i32
  }
  func.func @transform_1(%arg0: i32) -> (i32, i32) {
    %c0_i32 = arith.constant 0 : i32
    %c0_i32_0 = arith.constant 0 : i32
    %c0_i32_1 = arith.constant 0 : i32
    return %c0_i32, %c0_i32_0 : i32, i32
  }
  func.func @transform_2(%arg0: i32) -> (i32, i32) {
    %c0_i32 = arith.constant 0 : i32
    %c0_i32_0 = arith.constant 0 : i32
    %c0_i32_1 = arith.constant 0 : i32
    return %c0_i32, %c0_i32_0 : i32, i32
  }
  func.func @transform_3(%arg0: i32) -> (i32, i32) {
    %c0_i32 = arith.constant 0 : i32
    %c0_i32_0 = arith.constant 0 : i32
    %c0_i32_1 = arith.constant 0 : i32
    return %c0_i32, %c0_i32_0 : i32, i32
  }
  func.func @transform_4(%arg0: i32) -> (i32, i32) {
    %c0_i32 = arith.constant 0 : i32
    %c0_i32_0 = arith.constant 0 : i32
    %c0_i32_1 = arith.constant 0 : i32
    return %c0_i32, %c0_i32_0 : i32, i32
  }
  func.func @transform_5(%arg0: i32) -> (i32, i32) {
    %c0_i32 = arith.constant 0 : i32
    %c0_i32_0 = arith.constant 0 : i32
    %c0_i32_1 = arith.constant 0 : i32
    return %c0_i32, %c0_i32_0 : i32, i32
  }
  func.func @transform_6(%arg0: i32) -> (i32, i32) {
    %c0_i32 = arith.constant 0 : i32
    %c0_i32_0 = arith.constant 0 : i32
    %c0_i32_1 = arith.constant 0 : i32
    return %c0_i32, %c0_i32_0 : i32, i32
  }
  func.func @transform_7(%arg0: i32) -> (i32, i32) {
    %c0_i32 = arith.constant 0 : i32
    %c0_i32_0 = arith.constant 0 : i32
    %c0_i32_1 = arith.constant 0 : i32
    return %c0_i32, %c0_i32_0 : i32, i32
  }
  func.func @transform_8(%arg0: i32) -> (i32, i32) {
    %c0_i32 = arith.constant 0 : i32
    %c0_i32_0 = arith.constant 0 : i32
    %c0_i32_1 = arith.constant 0 : i32
    return %c0_i32, %c0_i32_0 : i32, i32
  }
  func.func @transform_9(%arg0: i32) -> (i32, i32) {
    %c0_i32 = arith.constant 0 : i32
    %c0_i32_0 = arith.constant 0 : i32
    %c0_i32_1 = arith.constant 0 : i32
    return %c0_i32, %c0_i32_0 : i32, i32
  }
  func.func @transform_10(%arg0: i32) -> (i32, i32) {
    %c0_i32 = arith.constant 0 : i32
    %c0_i32_0 = arith.constant 0 : i32
    %c0_i32_1 = arith.constant 0 : i32
    return %c0_i32, %c0_i32_0 : i32, i32
  }
  func.func @transform_11(%arg0: i32) -> (i32, i32, i32) {
    %c0_i32 = arith.constant 0 : i32
    %c0_i32_0 = arith.constant 0 : i32
    %c0_i32_1 = arith.constant 0 : i32
    return %arg0, %c0_i32, %c0_i32_0 : i32, i32, i32
  }
}

module attributes {stable_mosaic.version = 11 : i64} {
  func.func @_gt_mlp_kernel(%arg0: i32, %arg1: memref<1x20x256xf32, #tpu.memory_space<vmem>>, %arg2: memref<40x20xf32, #tpu.memory_space<vmem>>, %arg3: memref<40x1xf32, #tpu.memory_space<vmem>>, %arg4: memref<1x256x1xi32, #tpu.memory_space<vmem>>, %arg5: memref<1x1x256xi32, #tpu.memory_space<vmem>>, %arg6: memref<20x20xf32, #tpu.memory_space<vmem>>, %arg7: memref<20x1xf32, #tpu.memory_space<vmem>>, %arg8: memref<40x20xf32, #tpu.memory_space<vmem>>, %arg9: memref<40x1xf32, #tpu.memory_space<vmem>>, %arg10: memref<20x40xf32, #tpu.memory_space<vmem>>, %arg11: memref<20x1xf32, #tpu.memory_space<vmem>>, %arg12: memref<1x256xi32, #tpu.memory_space<vmem>>, %arg13: memref<20x1xi32, #tpu.memory_space<vmem>>, %arg14: memref<40x1xi32, #tpu.memory_space<vmem>>, %arg15: memref<1x20x256xf32, #tpu.memory_space<vmem>>) attributes {dimension_semantics = [#tpu.dimension_semantics<parallel>], iteration_bounds = array<i64: 2>, scalar_prefetch = 0 : i64, scratch_operands = 0 : i64, tpu.core_type = #tpu.core_type<tc>, window_params = [{transform_indices = @transform_0, window_bounds = array<i64: 1, 20, 256>}, {pipeline_mode = #tpu.pipeline_mode<synchronous>, transform_indices = @transform_1, window_bounds = array<i64: 40, 20>}, {pipeline_mode = #tpu.pipeline_mode<synchronous>, transform_indices = @transform_2, window_bounds = array<i64: 40, 1>}, {pipeline_mode = #tpu.pipeline_mode<synchronous>, transform_indices = @transform_3, window_bounds = array<i64: 1, 256, 1>}, {pipeline_mode = #tpu.pipeline_mode<synchronous>, transform_indices = @transform_4, window_bounds = array<i64: 1, 1, 256>}, {pipeline_mode = #tpu.pipeline_mode<synchronous>, transform_indices = @transform_5, window_bounds = array<i64: 20, 20>}, {pipeline_mode = #tpu.pipeline_mode<synchronous>, transform_indices = @transform_6, window_bounds = array<i64: 20, 1>}, {pipeline_mode = #tpu.pipeline_mode<synchronous>, transform_indices = @transform_7, window_bounds = array<i64: 40, 20>}, {pipeline_mode = #tpu.pipeline_mode<synchronous>, transform_indices = @transform_8, window_bounds = array<i64: 40, 1>}, {pipeline_mode = #tpu.pipeline_mode<synchronous>, transform_indices = @transform_9, window_bounds = array<i64: 20, 40>}, {pipeline_mode = #tpu.pipeline_mode<synchronous>, transform_indices = @transform_10, window_bounds = array<i64: 20, 1>}, {pipeline_mode = #tpu.pipeline_mode<synchronous>, transform_indices = @transform_11, window_bounds = array<i64: 1, 256>}, {pipeline_mode = #tpu.pipeline_mode<synchronous>, transform_indices = @transform_12, window_bounds = array<i64: 20, 1>}, {pipeline_mode = #tpu.pipeline_mode<synchronous>, transform_indices = @transform_13, window_bounds = array<i64: 40, 1>}, {transform_indices = @transform_14, window_bounds = array<i64: 1, 20, 256>}]} {
    %c0 = arith.constant 0 : index
    %c0_0 = arith.constant 0 : index
    %c0_1 = arith.constant 0 : index
    %0 = vector.load %arg1[%c0, %c0_0, %c0_1] : memref<1x20x256xf32, #tpu.memory_space<vmem>>, vector<1x20x256xf32>
    %1 = vector.shape_cast %0 : vector<1x20x256xf32> to vector<20x256xf32>
    %c0_2 = arith.constant 0 : index
    %c0_3 = arith.constant 0 : index
    %2 = vector.load %arg2[%c0_2, %c0_3] : memref<40x20xf32, #tpu.memory_space<vmem>>, vector<40x20xf32>
    %cst = arith.constant dense<0.000000e+00> : vector<40x256xf32>
    %3 = tpu.matmul %2, %1, %cst {dimension_numbers = #tpu.dot_dimension_numbers<[1], [0], [0], [1], [0, 0, 1, 1], [], []>} : vector<40x20xf32>, vector<20x256xf32>, vector<40x256xf32> -> vector<40x256xf32>
    %c0_4 = arith.constant 0 : index
    %c0_5 = arith.constant 0 : index
    %4 = vector.load %arg3[%c0_4, %c0_5] : memref<40x1xf32, #tpu.memory_space<vmem>>, vector<40x1xf32>
    %5 = vector.broadcast %4 : vector<40x1xf32> to vector<40x256xf32>
    %6 = arith.addf %3, %5 : vector<40x256xf32>
    %c0_6 = arith.constant 0 : index
    %c0_7 = arith.constant 0 : index
    %7 = vector.load %arg6[%c0_6, %c0_7] : memref<20x20xf32, #tpu.memory_space<vmem>>, vector<20x20xf32>
    %c0_8 = arith.constant 0 : index
    %c0_9 = arith.constant 0 : index
    %8 = vector.load %arg7[%c0_8, %c0_9] : memref<20x1xf32, #tpu.memory_space<vmem>>, vector<20x1xf32>
    %9 = vector.broadcast %8 : vector<20x1xf32> to vector<20x256xf32>
    %10 = arith.addf %9, %1 : vector<20x256xf32>
    %c0_10 = arith.constant 0 : index
    %c0_11 = arith.constant 0 : index
    %c0_12 = arith.constant 0 : index
    %11 = vector.load %arg4[%c0_10, %c0_11, %c0_12] : memref<1x256x1xi32, #tpu.memory_space<vmem>>, vector<1x256x1xi32>
    %12 = vector.shape_cast %11 : vector<1x256x1xi32> to vector<256x1xi32>
    %c0_13 = arith.constant 0 : index
    %c0_14 = arith.constant 0 : index
    %c0_15 = arith.constant 0 : index
    %13 = vector.load %arg5[%c0_13, %c0_14, %c0_15] : memref<1x1x256xi32, #tpu.memory_space<vmem>>, vector<1x1x256xi32>
    %14 = vector.shape_cast %13 : vector<1x1x256xi32> to vector<1x256xi32>
    %15 = vector.broadcast %12 : vector<256x1xi32> to vector<256x256xi32>
    %16 = vector.broadcast %14 : vector<1x256xi32> to vector<256x256xi32>
    %17 = arith.cmpi eq, %15, %16 : vector<256x256xi32>
    %18 = vector.extract_strided_slice %6 {offsets = [0, 0], sizes = [10, 256], strides = [1, 1]} : vector<40x256xf32> to vector<10x256xf32>
    %19 = vector.extract_strided_slice %6 {offsets = [20, 0], sizes = [10, 256], strides = [1, 1]} : vector<40x256xf32> to vector<10x256xf32>
    %20 = tpu.transpose %18, [1, 0] : vector<10x256xf32> -> vector<256x10xf32>
    %cst_16 = arith.constant dense<0.000000e+00> : vector<256x256xf32>
    %21 = tpu.matmul %20, %18, %cst_16 {dimension_numbers = #tpu.dot_dimension_numbers<[1], [0], [0], [1], [0, 0, 1, 1], [], []>} : vector<256x10xf32>, vector<10x256xf32>, vector<256x256xf32> -> vector<256x256xf32>
    %cst_17 = arith.constant -1.000000e+30 : f32
    %22 = vector.broadcast %cst_17 : f32 to vector<256x256xf32>
    %23 = arith.select %17, %21, %22 : vector<256x256xi1>, vector<256x256xf32>
    %cst_18 = arith.constant dense<0xFF800000> : vector<256xf32>
    %24 = vector.multi_reduction <maximumf>, %23, %cst_18 [1] : vector<256x256xf32> to vector<256xf32>
    %25 = vector.shape_cast %24 : vector<256xf32> to vector<256x1xf32>
    %26 = vector.broadcast %25 : vector<256x1xf32> to vector<256x256xf32>
    %27 = arith.subf %23, %26 : vector<256x256xf32>
    %28 = math.exp %27 : vector<256x256xf32>
    %cst_19 = arith.constant dense<0.000000e+00> : vector<256xf32>
    %29 = vector.multi_reduction <add>, %28, %cst_19 [1] : vector<256x256xf32> to vector<256xf32>
    %30 = vector.shape_cast %29 : vector<256xf32> to vector<256x1xf32>
    %31 = tpu.reciprocal %30 {approx = true} : vector<256x1xf32> -> vector<256x1xf32>
    %32 = arith.mulf %30, %31 : vector<256x1xf32>
    %cst_20 = arith.constant 2.000000e+00 : f32
    %33 = vector.broadcast %cst_20 : f32 to vector<256x1xf32>
    %34 = arith.subf %33, %32 : vector<256x1xf32>
    %35 = arith.mulf %31, %34 : vector<256x1xf32>
    %36 = vector.broadcast %35 : vector<256x1xf32> to vector<256x256xf32>
    %37 = arith.mulf %28, %36 : vector<256x256xf32>
    %cst_21 = arith.constant dense<0.000000e+00> : vector<10x256xf32>
    %38 = tpu.matmul %19, %37, %cst_21 {dimension_numbers = #tpu.dot_dimension_numbers<[1], [1], [0], [0], [0, 0, 1, 0], [], []>} : vector<10x256xf32>, vector<256x256xf32>, vector<10x256xf32> -> vector<10x256xf32>
    %39 = vector.extract_strided_slice %7 {offsets = [0, 0], sizes = [20, 10], strides = [1, 1]} : vector<20x20xf32> to vector<20x10xf32>
    %cst_22 = arith.constant dense<0.000000e+00> : vector<20x256xf32>
    %40 = tpu.matmul %39, %38, %cst_22 {dimension_numbers = #tpu.dot_dimension_numbers<[1], [0], [0], [1], [0, 0, 1, 1], [], []>} : vector<20x10xf32>, vector<10x256xf32>, vector<20x256xf32> -> vector<20x256xf32>
    %41 = arith.addf %10, %40 : vector<20x256xf32>
    %42 = vector.extract_strided_slice %6 {offsets = [10, 0], sizes = [10, 256], strides = [1, 1]} : vector<40x256xf32> to vector<10x256xf32>
    %43 = vector.extract_strided_slice %6 {offsets = [30, 0], sizes = [10, 256], strides = [1, 1]} : vector<40x256xf32> to vector<10x256xf32>
    %44 = tpu.transpose %42, [1, 0] : vector<10x256xf32> -> vector<256x10xf32>
    %cst_23 = arith.constant dense<0.000000e+00> : vector<256x256xf32>
    %45 = tpu.matmul %44, %42, %cst_23 {dimension_numbers = #tpu.dot_dimension_numbers<[1], [0], [0], [1], [0, 0, 1, 1], [], []>} : vector<256x10xf32>, vector<10x256xf32>, vector<256x256xf32> -> vector<256x256xf32>
    %cst_24 = arith.constant -1.000000e+30 : f32
    %46 = vector.broadcast %cst_24 : f32 to vector<256x256xf32>
    %47 = arith.select %17, %45, %46 : vector<256x256xi1>, vector<256x256xf32>
    %cst_25 = arith.constant dense<0xFF800000> : vector<256xf32>
    %48 = vector.multi_reduction <maximumf>, %47, %cst_25 [1] : vector<256x256xf32> to vector<256xf32>
    %49 = vector.shape_cast %48 : vector<256xf32> to vector<256x1xf32>
    %50 = vector.broadcast %49 : vector<256x1xf32> to vector<256x256xf32>
    %51 = arith.subf %47, %50 : vector<256x256xf32>
    %52 = math.exp %51 : vector<256x256xf32>
    %cst_26 = arith.constant dense<0.000000e+00> : vector<256xf32>
    %53 = vector.multi_reduction <add>, %52, %cst_26 [1] : vector<256x256xf32> to vector<256xf32>
    %54 = vector.shape_cast %53 : vector<256xf32> to vector<256x1xf32>
    %55 = tpu.reciprocal %54 {approx = true} : vector<256x1xf32> -> vector<256x1xf32>
    %56 = arith.mulf %54, %55 : vector<256x1xf32>
    %cst_27 = arith.constant 2.000000e+00 : f32
    %57 = vector.broadcast %cst_27 : f32 to vector<256x1xf32>
    %58 = arith.subf %57, %56 : vector<256x1xf32>
    %59 = arith.mulf %55, %58 : vector<256x1xf32>
    %60 = vector.broadcast %59 : vector<256x1xf32> to vector<256x256xf32>
    %61 = arith.mulf %52, %60 : vector<256x256xf32>
    %cst_28 = arith.constant dense<0.000000e+00> : vector<10x256xf32>
    %62 = tpu.matmul %43, %61, %cst_28 {dimension_numbers = #tpu.dot_dimension_numbers<[1], [1], [0], [0], [0, 0, 1, 0], [], []>} : vector<10x256xf32>, vector<256x256xf32>, vector<10x256xf32> -> vector<10x256xf32>
    %63 = vector.extract_strided_slice %7 {offsets = [0, 10], sizes = [20, 10], strides = [1, 1]} : vector<20x20xf32> to vector<20x10xf32>
    %cst_29 = arith.constant dense<0.000000e+00> : vector<20x256xf32>
    %64 = tpu.matmul %63, %62, %cst_29 {dimension_numbers = #tpu.dot_dimension_numbers<[1], [0], [0], [1], [0, 0, 1, 1], [], []>} : vector<20x10xf32>, vector<10x256xf32>, vector<20x256xf32> -> vector<20x256xf32>
    %65 = arith.addf %41, %64 : vector<20x256xf32>
    %c0_30 = arith.constant 0 : index
    %c0_31 = arith.constant 0 : index
    %66 = vector.load %arg12[%c0_30, %c0_31] : memref<1x256xi32, #tpu.memory_space<vmem>>, vector<1x256xi32>
    %67 = tpu.iota {dimensions = array<i32: 1>} : vector<1x256xi32>
    %c0_32 = arith.constant 0 : index
    %c0_33 = arith.constant 0 : index
    %68 = vector.load %arg8[%c0_32, %c0_33] : memref<40x20xf32, #tpu.memory_space<vmem>>, vector<40x20xf32>
    %c0_34 = arith.constant 0 : index
    %c0_35 = arith.constant 0 : index
    %69 = vector.load %arg9[%c0_34, %c0_35] : memref<40x1xf32, #tpu.memory_space<vmem>>, vector<40x1xf32>
    %c0_36 = arith.constant 0 : index
    %c0_37 = arith.constant 0 : index
    %70 = vector.load %arg10[%c0_36, %c0_37] : memref<20x40xf32, #tpu.memory_space<vmem>>, vector<20x40xf32>
    %c0_38 = arith.constant 0 : index
    %c0_39 = arith.constant 0 : index
    %71 = vector.load %arg11[%c0_38, %c0_39] : memref<20x1xf32, #tpu.memory_space<vmem>>, vector<20x1xf32>
    %c0_40 = arith.constant 0 : index
    %c0_41 = arith.constant 0 : index
    %72 = vector.load %arg13[%c0_40, %c0_41] : memref<20x1xi32, #tpu.memory_space<vmem>>, vector<20x1xi32>
    %c0_42 = arith.constant 0 : index
    %c0_43 = arith.constant 0 : index
    %73 = vector.load %arg14[%c0_42, %c0_43] : memref<40x1xi32, #tpu.memory_space<vmem>>, vector<40x1xi32>
    %c0_i32 = arith.constant 0 : i32
    %74 = vector.broadcast %c0_i32 : i32 to vector<1x256xi32>
    %75 = arith.cmpi eq, %66, %74 : vector<1x256xi32>
    %c15_i32 = arith.constant 15 : i32
    %76 = vector.broadcast %c15_i32 : i32 to vector<1x256xi32>
    %77 = arith.cmpi eq, %66, %76 : vector<1x256xi32>
    %c16_i32 = arith.constant 16 : i32
    %78 = vector.broadcast %c16_i32 : i32 to vector<1x256xi32>
    %79 = arith.cmpi slt, %67, %78 : vector<1x256xi32>
    %c240_i32 = arith.constant 240 : i32
    %80 = vector.broadcast %c240_i32 : i32 to vector<1x256xi32>
    %81 = arith.cmpi sge, %67, %80 : vector<1x256xi32>
    %c255_i32 = arith.constant 255 : i32
    %82 = tpu.dynamic_rotate %65 by %c255_i32 dim 1 : vector<20x256xf32>, i32 -> vector<20x256xf32>
    %cst_44 = arith.constant 0.000000e+00 : f32
    %83 = vector.shape_cast %77 : vector<1x256xi1> to vector<1x256xi1>
    %84 = vector.broadcast %83 : vector<1x256xi1> to vector<20x256xi1>
    %85 = vector.broadcast %cst_44 : f32 to vector<20x256xf32>
    %86 = arith.select %84, %85, %82 : vector<20x256xi1>, vector<20x256xf32>
    %c1_i32 = arith.constant 1 : i32
    %87 = tpu.dynamic_rotate %65 by %c1_i32 dim 1 : vector<20x256xf32>, i32 -> vector<20x256xf32>
    %cst_45 = arith.constant 0.000000e+00 : f32
    %88 = vector.shape_cast %75 : vector<1x256xi1> to vector<1x256xi1>
    %89 = vector.broadcast %88 : vector<1x256xi1> to vector<20x256xi1>
    %90 = vector.broadcast %cst_45 : f32 to vector<20x256xf32>
    %91 = arith.select %89, %90, %87 : vector<20x256xi1>, vector<20x256xf32>
    %c240_i32_46 = arith.constant 240 : i32
    %92 = tpu.dynamic_rotate %65 by %c240_i32_46 dim 1 : vector<20x256xf32>, i32 -> vector<20x256xf32>
    %cst_47 = arith.constant 0.000000e+00 : f32
    %93 = vector.shape_cast %81 : vector<1x256xi1> to vector<1x256xi1>
    %94 = vector.broadcast %93 : vector<1x256xi1> to vector<20x256xi1>
    %95 = vector.broadcast %cst_47 : f32 to vector<20x256xf32>
    %96 = arith.select %94, %95, %92 : vector<20x256xi1>, vector<20x256xf32>
    %c16_i32_48 = arith.constant 16 : i32
    %97 = tpu.dynamic_rotate %65 by %c16_i32_48 dim 1 : vector<20x256xf32>, i32 -> vector<20x256xf32>
    %cst_49 = arith.constant 0.000000e+00 : f32
    %98 = vector.shape_cast %79 : vector<1x256xi1> to vector<1x256xi1>
    %99 = vector.broadcast %98 : vector<1x256xi1> to vector<20x256xi1>
    %100 = vector.broadcast %cst_49 : f32 to vector<20x256xf32>
    %101 = arith.select %99, %100, %97 : vector<20x256xi1>, vector<20x256xf32>
    %c0_i32_50 = arith.constant 0 : i32
    %102 = vector.broadcast %c0_i32_50 : i32 to vector<20x1xi32>
    %103 = arith.cmpi eq, %72, %102 : vector<20x1xi32>
    %c1_i32_51 = arith.constant 1 : i32
    %104 = vector.broadcast %c1_i32_51 : i32 to vector<20x1xi32>
    %105 = arith.cmpi eq, %72, %104 : vector<20x1xi32>
    %c2_i32 = arith.constant 2 : i32
    %106 = vector.broadcast %c2_i32 : i32 to vector<20x1xi32>
    %107 = arith.cmpi eq, %72, %106 : vector<20x1xi32>
    %c3_i32 = arith.constant 3 : i32
    %108 = vector.broadcast %c3_i32 : i32 to vector<20x1xi32>
    %109 = arith.cmpi eq, %72, %108 : vector<20x1xi32>
    %110 = vector.shape_cast %109 : vector<20x1xi1> to vector<20x1xi1>
    %111 = vector.broadcast %110 : vector<20x1xi1> to vector<20x256xi1>
    %112 = arith.select %111, %101, %65 : vector<20x256xi1>, vector<20x256xf32>
    %113 = vector.shape_cast %107 : vector<20x1xi1> to vector<20x1xi1>
    %114 = vector.broadcast %113 : vector<20x1xi1> to vector<20x256xi1>
    %115 = arith.select %114, %96, %112 : vector<20x256xi1>, vector<20x256xf32>
    %116 = vector.shape_cast %105 : vector<20x1xi1> to vector<20x1xi1>
    %117 = vector.broadcast %116 : vector<20x1xi1> to vector<20x256xi1>
    %118 = arith.select %117, %91, %115 : vector<20x256xi1>, vector<20x256xf32>
    %119 = vector.shape_cast %103 : vector<20x1xi1> to vector<20x1xi1>
    %120 = vector.broadcast %119 : vector<20x1xi1> to vector<20x256xi1>
    %121 = arith.select %120, %86, %118 : vector<20x256xi1>, vector<20x256xf32>
    %cst_52 = arith.constant dense<0.000000e+00> : vector<40x256xf32>
    %122 = tpu.matmul %68, %121, %cst_52 {dimension_numbers = #tpu.dot_dimension_numbers<[1], [0], [0], [1], [0, 0, 1, 1], [], []>} : vector<40x20xf32>, vector<20x256xf32>, vector<40x256xf32> -> vector<40x256xf32>
    %123 = vector.broadcast %69 : vector<40x1xf32> to vector<40x256xf32>
    %124 = arith.addf %122, %123 : vector<40x256xf32>
    %cst_53 = arith.constant 5.000000e-01 : f32
    %125 = vector.broadcast %cst_53 : f32 to vector<40x256xf32>
    %126 = arith.mulf %125, %124 : vector<40x256xf32>
    %cst_54 = arith.constant 0.707106769 : f32
    %127 = vector.broadcast %cst_54 : f32 to vector<40x256xf32>
    %128 = arith.mulf %124, %127 : vector<40x256xf32>
    %129 = math.absf %128 : vector<40x256xf32>
    %cst_55 = arith.constant 0.327591091 : f32
    %130 = vector.broadcast %cst_55 : f32 to vector<40x256xf32>
    %131 = arith.mulf %130, %129 : vector<40x256xf32>
    %cst_56 = arith.constant 1.000000e+00 : f32
    %132 = vector.broadcast %cst_56 : f32 to vector<40x256xf32>
    %133 = arith.addf %132, %131 : vector<40x256xf32>
    %134 = tpu.reciprocal %133 {approx = true} : vector<40x256xf32> -> vector<40x256xf32>
    %135 = arith.mulf %133, %134 : vector<40x256xf32>
    %cst_57 = arith.constant 2.000000e+00 : f32
    %136 = vector.broadcast %cst_57 : f32 to vector<40x256xf32>
    %137 = arith.subf %136, %135 : vector<40x256xf32>
    %138 = arith.mulf %134, %137 : vector<40x256xf32>
    %cst_58 = arith.constant 1.06140542 : f32
    %139 = vector.broadcast %cst_58 : f32 to vector<40x256xf32>
    %140 = arith.mulf %139, %138 : vector<40x256xf32>
    %cst_59 = arith.constant -1.45315206 : f32
    %141 = vector.broadcast %cst_59 : f32 to vector<40x256xf32>
    %142 = arith.addf %140, %141 : vector<40x256xf32>
    %143 = arith.mulf %142, %138 : vector<40x256xf32>
    %cst_60 = arith.constant 1.42141378 : f32
    %144 = vector.broadcast %cst_60 : f32 to vector<40x256xf32>
    %145 = arith.addf %143, %144 : vector<40x256xf32>
    %146 = arith.mulf %145, %138 : vector<40x256xf32>
    %cst_61 = arith.constant -0.284496725 : f32
    %147 = vector.broadcast %cst_61 : f32 to vector<40x256xf32>
    %148 = arith.addf %146, %147 : vector<40x256xf32>
    %149 = arith.mulf %148, %138 : vector<40x256xf32>
    %cst_62 = arith.constant 0.254829586 : f32
    %150 = vector.broadcast %cst_62 : f32 to vector<40x256xf32>
    %151 = arith.addf %149, %150 : vector<40x256xf32>
    %152 = arith.mulf %151, %138 : vector<40x256xf32>
    %cst_63 = arith.constant 0.000000e+00 : f32
    %153 = vector.broadcast %cst_63 : f32 to vector<40x256xf32>
    %154 = arith.subf %153, %129 : vector<40x256xf32>
    %155 = arith.mulf %154, %129 : vector<40x256xf32>
    %156 = math.exp %155 : vector<40x256xf32>
    %157 = arith.mulf %152, %156 : vector<40x256xf32>
    %cst_64 = arith.constant 1.000000e+00 : f32
    %158 = vector.broadcast %cst_64 : f32 to vector<40x256xf32>
    %159 = arith.subf %158, %157 : vector<40x256xf32>
    %cst_65 = arith.constant 0.000000e+00 : f32
    %160 = vector.broadcast %cst_65 : f32 to vector<40x256xf32>
    %161 = arith.cmpf olt, %128, %160 : vector<40x256xf32>
    %cst_66 = arith.constant 0.000000e+00 : f32
    %162 = vector.broadcast %cst_66 : f32 to vector<40x256xf32>
    %163 = arith.subf %162, %159 : vector<40x256xf32>
    %164 = arith.select %161, %163, %159 : vector<40x256xi1>, vector<40x256xf32>
    %cst_67 = arith.constant 1.000000e+00 : f32
    %165 = vector.broadcast %cst_67 : f32 to vector<40x256xf32>
    %166 = arith.addf %165, %164 : vector<40x256xf32>
    %167 = arith.mulf %126, %166 : vector<40x256xf32>
    %c255_i32_68 = arith.constant 255 : i32
    %168 = tpu.dynamic_rotate %167 by %c255_i32_68 dim 1 : vector<40x256xf32>, i32 -> vector<40x256xf32>
    %cst_69 = arith.constant 0.000000e+00 : f32
    %169 = vector.shape_cast %77 : vector<1x256xi1> to vector<1x256xi1>
    %170 = vector.broadcast %169 : vector<1x256xi1> to vector<40x256xi1>
    %171 = vector.broadcast %cst_69 : f32 to vector<40x256xf32>
    %172 = arith.select %170, %171, %168 : vector<40x256xi1>, vector<40x256xf32>
    %c1_i32_70 = arith.constant 1 : i32
    %173 = tpu.dynamic_rotate %167 by %c1_i32_70 dim 1 : vector<40x256xf32>, i32 -> vector<40x256xf32>
    %cst_71 = arith.constant 0.000000e+00 : f32
    %174 = vector.shape_cast %75 : vector<1x256xi1> to vector<1x256xi1>
    %175 = vector.broadcast %174 : vector<1x256xi1> to vector<40x256xi1>
    %176 = vector.broadcast %cst_71 : f32 to vector<40x256xf32>
    %177 = arith.select %175, %176, %173 : vector<40x256xi1>, vector<40x256xf32>
    %c240_i32_72 = arith.constant 240 : i32
    %178 = tpu.dynamic_rotate %167 by %c240_i32_72 dim 1 : vector<40x256xf32>, i32 -> vector<40x256xf32>
    %cst_73 = arith.constant 0.000000e+00 : f32
    %179 = vector.shape_cast %81 : vector<1x256xi1> to vector<1x256xi1>
    %180 = vector.broadcast %179 : vector<1x256xi1> to vector<40x256xi1>
    %181 = vector.broadcast %cst_73 : f32 to vector<40x256xf32>
    %182 = arith.select %180, %181, %178 : vector<40x256xi1>, vector<40x256xf32>
    %c16_i32_74 = arith.constant 16 : i32
    %183 = tpu.dynamic_rotate %167 by %c16_i32_74 dim 1 : vector<40x256xf32>, i32 -> vector<40x256xf32>
    %cst_75 = arith.constant 0.000000e+00 : f32
    %184 = vector.shape_cast %79 : vector<1x256xi1> to vector<1x256xi1>
    %185 = vector.broadcast %184 : vector<1x256xi1> to vector<40x256xi1>
    %186 = vector.broadcast %cst_75 : f32 to vector<40x256xf32>
    %187 = arith.select %185, %186, %183 : vector<40x256xi1>, vector<40x256xf32>
    %c0_i32_76 = arith.constant 0 : i32
    %188 = vector.broadcast %c0_i32_76 : i32 to vector<40x1xi32>
    %189 = arith.cmpi eq, %73, %188 : vector<40x1xi32>
    %c1_i32_77 = arith.constant 1 : i32
    %190 = vector.broadcast %c1_i32_77 : i32 to vector<40x1xi32>
    %191 = arith.cmpi eq, %73, %190 : vector<40x1xi32>
    %c2_i32_78 = arith.constant 2 : i32
    %192 = vector.broadcast %c2_i32_78 : i32 to vector<40x1xi32>
    %193 = arith.cmpi eq, %73, %192 : vector<40x1xi32>
    %c3_i32_79 = arith.constant 3 : i32
    %194 = vector.broadcast %c3_i32_79 : i32 to vector<40x1xi32>
    %195 = arith.cmpi eq, %73, %194 : vector<40x1xi32>
    %196 = vector.shape_cast %195 : vector<40x1xi1> to vector<40x1xi1>
    %197 = vector.broadcast %196 : vector<40x1xi1> to vector<40x256xi1>
    %198 = arith.select %197, %187, %167 : vector<40x256xi1>, vector<40x256xf32>
    %199 = vector.shape_cast %193 : vector<40x1xi1> to vector<40x1xi1>
    %200 = vector.broadcast %199 : vector<40x1xi1> to vector<40x256xi1>
    %201 = arith.select %200, %182, %198 : vector<40x256xi1>, vector<40x256xf32>
    %202 = vector.shape_cast %191 : vector<40x1xi1> to vector<40x1xi1>
    %203 = vector.broadcast %202 : vector<40x1xi1> to vector<40x256xi1>
    %204 = arith.select %203, %177, %201 : vector<40x256xi1>, vector<40x256xf32>
    %205 = vector.shape_cast %189 : vector<40x1xi1> to vector<40x1xi1>
    %206 = vector.broadcast %205 : vector<40x1xi1> to vector<40x256xi1>
    %207 = arith.select %206, %172, %204 : vector<40x256xi1>, vector<40x256xf32>
    %cst_80 = arith.constant dense<0.000000e+00> : vector<20x256xf32>
    %208 = tpu.matmul %70, %207, %cst_80 {dimension_numbers = #tpu.dot_dimension_numbers<[1], [0], [0], [1], [0, 0, 1, 1], [], []>} : vector<20x40xf32>, vector<40x256xf32>, vector<20x256xf32> -> vector<20x256xf32>
    %209 = vector.broadcast %71 : vector<20x1xf32> to vector<20x256xf32>
    %210 = arith.addf %208, %209 : vector<20x256xf32>
    %211 = arith.addf %65, %210 : vector<20x256xf32>
    %c0_81 = arith.constant 0 : index
    %c0_82 = arith.constant 0 : index
    %c0_83 = arith.constant 0 : index
    %212 = vector.load %arg15[%c0_81, %c0_82, %c0_83] : memref<1x20x256xf32, #tpu.memory_space<vmem>>, vector<1x20x256xf32>
    %213 = vector.shape_cast %212 : vector<1x20x256xf32> to vector<20x256xf32>
    %214 = vector.shape_cast %211 : vector<20x256xf32> to vector<1x20x256xf32>
    tpu.vector_store %arg15[%c0_81, %c0_82, %c0_83], %214 {strides = array<i32>} : memref<1x20x256xf32, #tpu.memory_space<vmem>>, vector<1x20x256xf32>,
    return
  }
  func.func @transform_0(%arg0: i32) -> (i32, i32, i32) {
    %c0_i32 = arith.constant 0 : i32
    %c0_i32_0 = arith.constant 0 : i32
    %c0_i32_1 = arith.constant 0 : i32
    return %arg0, %c0_i32, %c0_i32_0 : i32, i32, i32
  }
  func.func @transform_1(%arg0: i32) -> (i32, i32) {
    %c0_i32 = arith.constant 0 : i32
    %c0_i32_0 = arith.constant 0 : i32
    %c0_i32_1 = arith.constant 0 : i32
    return %c0_i32, %c0_i32_0 : i32, i32
  }
  func.func @transform_2(%arg0: i32) -> (i32, i32) {
    %c0_i32 = arith.constant 0 : i32
    %c0_i32_0 = arith.constant 0 : i32
    %c0_i32_1 = arith.constant 0 : i32
    return %c0_i32, %c0_i32_0 : i32, i32
  }
  func.func @transform_3(%arg0: i32) -> (i32, i32, i32) {
    %c0_i32 = arith.constant 0 : i32
    %c0_i32_0 = arith.constant 0 : i32
    %c0_i32_1 = arith.constant 0 : i32
    %c0_i32_2 = arith.constant 0 : i32
    return %c0_i32, %c0_i32_0, %c0_i32_1 : i32, i32, i32
  }
  func.func @transform_4(%arg0: i32) -> (i32, i32, i32) {
    %c0_i32 = arith.constant 0 : i32
    %c0_i32_0 = arith.constant 0 : i32
    %c0_i32_1 = arith.constant 0 : i32
    %c0_i32_2 = arith.constant 0 : i32
    return %c0_i32, %c0_i32_0, %c0_i32_1 : i32, i32, i32
  }
  func.func @transform_5(%arg0: i32) -> (i32, i32) {
    %c0_i32 = arith.constant 0 : i32
    %c0_i32_0 = arith.constant 0 : i32
    %c0_i32_1 = arith.constant 0 : i32
    return %c0_i32, %c0_i32_0 : i32, i32
  }
  func.func @transform_6(%arg0: i32) -> (i32, i32) {
    %c0_i32 = arith.constant 0 : i32
    %c0_i32_0 = arith.constant 0 : i32
    %c0_i32_1 = arith.constant 0 : i32
    return %c0_i32, %c0_i32_0 : i32, i32
  }
  func.func @transform_7(%arg0: i32) -> (i32, i32) {
    %c0_i32 = arith.constant 0 : i32
    %c0_i32_0 = arith.constant 0 : i32
    %c0_i32_1 = arith.constant 0 : i32
    return %c0_i32, %c0_i32_0 : i32, i32
  }
  func.func @transform_8(%arg0: i32) -> (i32, i32) {
    %c0_i32 = arith.constant 0 : i32
    %c0_i32_0 = arith.constant 0 : i32
    %c0_i32_1 = arith.constant 0 : i32
    return %c0_i32, %c0_i32_0 : i32, i32
  }
  func.func @transform_9(%arg0: i32) -> (i32, i32) {
    %c0_i32 = arith.constant 0 : i32
    %c0_i32_0 = arith.constant 0 : i32
    %c0_i32_1 = arith.constant 0 : i32
    return %c0_i32, %c0_i32_0 : i32, i32
  }
  func.func @transform_10(%arg0: i32) -> (i32, i32) {
    %c0_i32 = arith.constant 0 : i32
    %c0_i32_0 = arith.constant 0 : i32
    %c0_i32_1 = arith.constant 0 : i32
    return %c0_i32, %c0_i32_0 : i32, i32
  }
  func.func @transform_11(%arg0: i32) -> (i32, i32) {
    %c0_i32 = arith.constant 0 : i32
    %c0_i32_0 = arith.constant 0 : i32
    %c0_i32_1 = arith.constant 0 : i32
    return %c0_i32, %c0_i32_0 : i32, i32
  }
  func.func @transform_12(%arg0: i32) -> (i32, i32) {
    %c0_i32 = arith.constant 0 : i32
    %c0_i32_0 = arith.constant 0 : i32
    %c0_i32_1 = arith.constant 0 : i32
    return %c0_i32, %c0_i32_0 : i32, i32
  }
  func.func @transform_13(%arg0: i32) -> (i32, i32) {
    %c0_i32 = arith.constant 0 : i32
    %c0_i32_0 = arith.constant 0 : i32
    %c0_i32_1 = arith.constant 0 : i32
    return %c0_i32, %c0_i32_0 : i32, i32
  }
  func.func @transform_14(%arg0: i32) -> (i32, i32, i32) {
    %c0_i32 = arith.constant 0 : i32
    %c0_i32_0 = arith.constant 0 : i32
    %c0_i32_1 = arith.constant 0 : i32
    return %arg0, %c0_i32, %c0_i32_0 : i32, i32, i32
  }
}

</mosaic_0001>

<llo_original>
// kernel: lgt_group_forward.5
$region0: #{lgt_group_forward.5}
  #allocation0 [shape = 'u32[]', space=smem, size = 0x4, offset = 0x4, fixed_abs, tag = 'smem constant byte address 0x4 - core index']
  #allocation1 [shape = 'u32[144,128]{1,0:T(1,128)}', space=vmem, size = 0x12000, scoped, tag = 'internal scratch']
  %s0 = inlined_call_operand.vmem [shape: f32[2,20,256], index: 0, kind: input, shape index: {}]
  %s1 = inlined_call_operand.vmem [shape: f32[20,1], index: 1, kind: input, shape index: {}]
  %s2 = inlined_call_operand.vmem [shape: f32[20,1], index: 2, kind: input, shape index: {}]
  %s3 = inlined_call_operand.vmem [shape: f32[40,20], index: 3, kind: input, shape index: {}]
  %s4 = inlined_call_operand.vmem [shape: f32[40,1], index: 4, kind: input, shape index: {}]
  %s5 = inlined_call_operand.vmem [shape: f32[20,40], index: 5, kind: input, shape index: {}]
  %s6 = inlined_call_operand.vmem [shape: f32[20,1], index: 6, kind: input, shape index: {}]
  %s7 = inlined_call_operand.vmem [shape: s32[1,256], index: 7, kind: input, shape index: {}]
  %s8 = inlined_call_operand.vmem [shape: s32[20,1], index: 8, kind: input, shape index: {}]
  %s9 = inlined_call_operand.vmem [shape: s32[20,1], index: 9, kind: input, shape index: {}]
  %s10 = inlined_call_operand.vmem [shape: s32[40,1], index: 10, kind: input, shape index: {}]
  %s11 = inlined_call_operand.vmem [shape: f32[2,20,256], index: 11, kind: output, shape index: {}]
  %s12 = sld [smem:[#allocation0]]
  $region77: #{lgt_group_forward.5} parent=0
    _
  %s14 = ssub.s32 1, %s12
  %s15 = scalar_select 0, %s14, %s12
  loop: start=0, step=1, limit=4
  $region2: #{lgt_group_forward.5} parent=0 // loop_pre_header
    _
  $region3: #{lgt_group_forward.5} parent=0 // loop_header
    %s17 = sphi 0, %s21
    %p18 = scmp.ge.s32.totalorder %s17, 4
    %s27 = sphi 0, %s29
    %s30 = sphi 0, %s27
    %s31 = sphi 0, %s30
    %s47 = sphi 0, %s31
    %s51 = sphi 0, %s51
    %s53 = sphi 0, %s51
    %s54 = sphi 0, %s53
    %s68 = sphi 0, %s54
    %s72 = sphi 0, %s72
    %s74 = sphi 0, %s72
    %s75 = sphi 0, %s74
    %s89 = sphi 0, %s75
    %s93 = sphi 0, %s93
    %s95 = sphi 0, %s93
    %s96 = sphi 0, %s95
    %s110 = sphi 0, %s96
    %s114 = sphi 0, %s114
    %s116 = sphi 0, %s114
    %s117 = sphi 0, %s116
    %s131 = sphi 0, %s117
    %s135 = sphi 0, %s135
    %s137 = sphi 0, %s135
    %s138 = sphi 0, %s137
    %s152 = sphi 0, %s138
    %s156 = sphi 0, %s156
    %s158 = sphi 0, %s156
    %s159 = sphi 0, %s158
    %s173 = sphi 0, %s159
    %s177 = sphi 0, %s177
    %s179 = sphi 0, %s177
    %s180 = sphi 0, %s179
    %s194 = sphi 0, %s180
    %s198 = sphi 0, %s198
    %s200 = sphi 0, %s198
    %s201 = sphi 0, %s200
    %s215 = sphi 0, %s201
    %s219 = sphi 0, %s219
    %s221 = sphi 0, %s219
    %s222 = sphi 0, %s221
    %s236 = sphi 0, %s222
    %s240 = sphi 0, %s240
    %s242 = sphi 0, %s240
    %s243 = sphi 0, %s242
    %s257 = sphi 0, %s243
    %s263 = sphi 0, %s265
    %s266 = sphi 0, %s263
    %s267 = sphi 0, %s266
    %s283 = sphi 0, %s267
  $region4: #{lgt_group_forward.5} parent=0 // loop_header_branch
    %20 = sbr.rel (%p18) target = $region8
  $region5: #{lgt_group_forward.5} parent=0 // loop_body
    %s22 = ssub.s32 %s17, 1
    %s23 = ssub.s32 %s17, 2
    %s24 = sadd.s32 %s17, 1
    %s25 = ssub.s32 %s17, %s24
    %p26 = scmp.eq.s32.totalorder %s25, 0
    %s28 = sadd.s32 %s27, 1
    %s29 = scalar_select %p26, %s27, %s28
    %p32 = pneg %p26
    %p33 = scmp.eq.s32.totalorder %s17, 1
    %p34 = por %p32, %p33
    %p35 = scmp.ne.s32.totalorder %s27, %s30
    %p36 = scmp.eq.s32.totalorder %s17, 0
    %p37 = por %p35, %p36
    %p38 = scmp.ne.s32.totalorder %s27, %s30
    %p39 = scmp.eq.s32.totalorder %s22, 1
    %p40 = por %p38, %p39
    %p41 = scmp.ne.s32.totalorder %s30, %s31
    %p42 = scmp.eq.s32.totalorder %s22, 0
    %p43 = por %p41, %p42
    %p44 = scmp.ne.s32.totalorder %s30, %s31
    %p45 = scmp.eq.s32.totalorder %s23, 1
    %p46 = por %p44, %p45
    %p48 = scmp.ne.s32.totalorder %s31, %s47
    %p49 = scmp.eq.s32.totalorder %s23, 0
    %p50 = por %p48, %p49
    %s52 = sadd.s32 %s51, 1
    %p55 = scmp.eq.s32.totalorder %s17, 1
    %p56 = scmp.ne.s32.totalorder %s51, %s53
    %p57 = scmp.eq.s32.totalorder %s17, 0
    %p58 = por %p56, %p57
    %p59 = scmp.ne.s32.totalorder %s51, %s53
    %p60 = scmp.eq.s32.totalorder %s22, 1
    %p61 = por %p59, %p60
    %p62 = scmp.ne.s32.totalorder %s53, %s54
    %p63 = scmp.eq.s32.totalorder %s22, 0
    %p64 = por %p62, %p63
    %p65 = scmp.ne.s32.totalorder %s53, %s54
    %p66 = scmp.eq.s32.totalorder %s23, 1
    %p67 = por %p65, %p66
    %p69 = scmp.ne.s32.totalorder %s54, %s68
    %p70 = scmp.eq.s32.totalorder %s23, 0
    %p71 = por %p69, %p70
    %s73 = sadd.s32 %s72, 1
    %p76 = scmp.eq.s32.totalorder %s17, 1
    %p77 = scmp.ne.s32.totalorder %s72, %s74
    %p78 = scmp.eq.s32.totalorder %s17, 0
    %p79 = por %p77, %p78
    %p80 = scmp.ne.s32.totalorder %s72, %s74
    %p81 = scmp.eq.s32.totalorder %s22, 1
    %p82 = por %p80, %p81
    %p83 = scmp.ne.s32.totalorder %s74, %s75
    %p84 = scmp.eq.s32.totalorder %s22, 0
    %p85 = por %p83, %p84
    %p86 = scmp.ne.s32.totalorder %s74, %s75
    %p87 = scmp.eq.s32.totalorder %s23, 1
    %p88 = por %p86, %p87
    %p90 = scmp.ne.s32.totalorder %s75, %s89
    %p91 = scmp.eq.s32.totalorder %s23, 0
    %p92 = por %p90, %p91
    %s94 = sadd.s32 %s93, 1
    %p97 = scmp.eq.s32.totalorder %s17, 1
    %p98 = scmp.ne.s32.totalorder %s93, %s95
    %p99 = scmp.eq.s32.totalorder %s17, 0
    %p100 = por %p98, %p99
    %p101 = scmp.ne.s32.totalorder %s93, %s95
    %p102 = scmp.eq.s32.totalorder %s22, 1
    %p103 = por %p101, %p102
    %p104 = scmp.ne.s32.totalorder %s95, %s96
    %p105 = scmp.eq.s32.totalorder %s22, 0
    %p106 = por %p104, %p105
    %p107 = scmp.ne.s32.totalorder %s95, %s96
    %p108 = scmp.eq.s32.totalorder %s23, 1
    %p109 = por %p107, %p108
    %p111 = scmp.ne.s32.totalorder %s96, %s110
    %p112 = scmp.eq.s32.totalorder %s23, 0
    %p113 = por %p111, %p112
    %s115 = sadd.s32 %s114, 1
    %p118 = scmp.eq.s32.totalorder %s17, 1
    %p119 = scmp.ne.s32.totalorder %s114, %s116
    %p120 = scmp.eq.s32.totalorder %s17, 0
    %p121 = por %p119, %p120
    %p122 = scmp.ne.s32.totalorder %s114, %s116
    %p123 = scmp.eq.s32.totalorder %s22, 1
    %p124 = por %p122, %p123
    %p125 = scmp.ne.s32.totalorder %s116, %s117
    %p126 = scmp.eq.s32.totalorder %s22, 0
    %p127 = por %p125, %p126
    %p128 = scmp.ne.s32.totalorder %s116, %s117
    %p129 = scmp.eq.s32.totalorder %s23, 1
    %p130 = por %p128, %p129
    %p132 = scmp.ne.s32.totalorder %s117, %s131
    %p133 = scmp.eq.s32.totalorder %s23, 0
    %p134 = por %p132, %p133
    %s136 = sadd.s32 %s135, 1
    %p139 = scmp.eq.s32.totalorder %s17, 1
    %p140 = scmp.ne.s32.totalorder %s135, %s137
    %p141 = scmp.eq.s32.totalorder %s17, 0
    %p142 = por %p140, %p141
    %p143 = scmp.ne.s32.totalorder %s135, %s137
    %p144 = scmp.eq.s32.totalorder %s22, 1
    %p145 = por %p143, %p144
    %p146 = scmp.ne.s32.totalorder %s137, %s138
    %p147 = scmp.eq.s32.totalorder %s22, 0
    %p148 = por %p146, %p147
    %p149 = scmp.ne.s32.totalorder %s137, %s138
    %p150 = scmp.eq.s32.totalorder %s23, 1
    %p151 = por %p149, %p150
    %p153 = scmp.ne.s32.totalorder %s138, %s152
    %p154 = scmp.eq.s32.totalorder %s23, 0
    %p155 = por %p153, %p154
    %s157 = sadd.s32 %s156, 1
    %p160 = scmp.eq.s32.totalorder %s17, 1
    %p161 = scmp.ne.s32.totalorder %s156, %s158
    %p162 = scmp.eq.s32.totalorder %s17, 0
    %p163 = por %p161, %p162
    %p164 = scmp.ne.s32.totalorder %s156, %s158
    %p165 = scmp.eq.s32.totalorder %s22, 1
    %p166 = por %p164, %p165
    %p167 = scmp.ne.s32.totalorder %s158, %s159
    %p168 = scmp.eq.s32.totalorder %s22, 0
    %p169 = por %p167, %p168
    %p170 = scmp.ne.s32.totalorder %s158, %s159
    %p171 = scmp.eq.s32.totalorder %s23, 1
    %p172 = por %p170, %p171
    %p174 = scmp.ne.s32.totalorder %s159, %s173
    %p175 = scmp.eq.s32.totalorder %s23, 0
    %p176 = por %p174, %p175
    %s178 = sadd.s32 %s177, 1
    %p181 = scmp.eq.s32.totalorder %s17, 1
    %p182 = scmp.ne.s32.totalorder %s177, %s179
    %p183 = scmp.eq.s32.totalorder %s17, 0
    %p184 = por %p182, %p183
    %p185 = scmp.ne.s32.totalorder %s177, %s179
    %p186 = scmp.eq.s32.totalorder %s22, 1
    %p187 = por %p185, %p186
    %p188 = scmp.ne.s32.totalorder %s179, %s180
    %p189 = scmp.eq.s32.totalorder %s22, 0
    %p190 = por %p188, %p189
    %p191 = scmp.ne.s32.totalorder %s179, %s180
    %p192 = scmp.eq.s32.totalorder %s23, 1
    %p193 = por %p191, %p192
    %p195 = scmp.ne.s32.totalorder %s180, %s194
    %p196 = scmp.eq.s32.totalorder %s23, 0
    %p197 = por %p195, %p196
    %s199 = sadd.s32 %s198, 1
    %p202 = scmp.eq.s32.totalorder %s17, 1
    %p203 = scmp.ne.s32.totalorder %s198, %s200
    %p204 = scmp.eq.s32.totalorder %s17, 0
    %p205 = por %p203, %p204
    %p206 = scmp.ne.s32.totalorder %s198, %s200
    %p207 = scmp.eq.s32.totalorder %s22, 1
    %p208 = por %p206, %p207
    %p209 = scmp.ne.s32.totalorder %s200, %s201
    %p210 = scmp.eq.s32.totalorder %s22, 0
    %p211 = por %p209, %p210
    %p212 = scmp.ne.s32.totalorder %s200, %s201
    %p213 = scmp.eq.s32.totalorder %s23, 1
    %p214 = por %p212, %p213
    %p216 = scmp.ne.s32.totalorder %s201, %s215
    %p217 = scmp.eq.s32.totalorder %s23, 0
    %p218 = por %p216, %p217
    %s220 = sadd.s32 %s219, 1
    %p223 = scmp.eq.s32.totalorder %s17, 1
    %p224 = scmp.ne.s32.totalorder %s219, %s221
    %p225 = scmp.eq.s32.totalorder %s17, 0
    %p226 = por %p224, %p225
    %p227 = scmp.ne.s32.totalorder %s219, %s221
    %p228 = scmp.eq.s32.totalorder %s22, 1
    %p229 = por %p227, %p228
    %p230 = scmp.ne.s32.totalorder %s221, %s222
    %p231 = scmp.eq.s32.totalorder %s22, 0
    %p232 = por %p230, %p231
    %p233 = scmp.ne.s32.totalorder %s221, %s222
    %p234 = scmp.eq.s32.totalorder %s23, 1
    %p235 = por %p233, %p234
    %p237 = scmp.ne.s32.totalorder %s222, %s236
    %p238 = scmp.eq.s32.totalorder %s23, 0
    %p239 = por %p237, %p238
    %s241 = sadd.s32 %s240, 1
    %p244 = scmp.eq.s32.totalorder %s17, 1
    %p245 = scmp.ne.s32.totalorder %s240, %s242
    %p246 = scmp.eq.s32.totalorder %s17, 0
    %p247 = por %p245, %p246
    %p248 = scmp.ne.s32.totalorder %s240, %s242
    %p249 = scmp.eq.s32.totalorder %s22, 1
    %p250 = por %p248, %p249
    %p251 = scmp.ne.s32.totalorder %s242, %s243
    %p252 = scmp.eq.s32.totalorder %s22, 0
    %p253 = por %p251, %p252
    %p254 = scmp.ne.s32.totalorder %s242, %s243
    %p255 = scmp.eq.s32.totalorder %s23, 1
    %p256 = por %p254, %p255
    %p258 = scmp.ne.s32.totalorder %s243, %s257
    %p259 = scmp.eq.s32.totalorder %s23, 0
    %p260 = por %p258, %p259
    %s261 = ssub.s32 %s17, %s24
    %p262 = scmp.eq.s32.totalorder %s261, 0
    %s264 = sadd.s32 %s263, 1
    %s265 = scalar_select %p262, %s263, %s264
    %p268 = pneg %p262
    %p269 = scmp.eq.s32.totalorder %s17, 1
    %p270 = por %p268, %p269
    %p271 = scmp.ne.s32.totalorder %s263, %s266
    %p272 = scmp.eq.s32.totalorder %s17, 0
    %p273 = por %p271, %p272
    %p274 = scmp.ne.s32.totalorder %s263, %s266
    %p275 = scmp.eq.s32.totalorder %s22, 1
    %p276 = por %p274, %p275
    %p277 = scmp.ne.s32.totalorder %s266, %s267
    %p278 = scmp.eq.s32.totalorder %s22, 0
    %p279 = por %p277, %p278
    %p280 = scmp.ne.s32.totalorder %s266, %s267
    %p281 = scmp.eq.s32.totalorder %s23, 1
    %p282 = por %p280, %p281
    %p284 = scmp.ne.s32.totalorder %s267, %s283
    %p285 = scmp.eq.s32.totalorder %s23, 0
    %p286 = por %p284, %p285
    %p287 = scmp.le.s32.totalorder 1, %s17
    %p288 = scmp.lt.s32.totalorder %s17, 3
    %p289 = pnand %p287, %p288
    %p290 = pneg %p289
    // Predicated region
    $region9: #{lgt_group_forward.5} parent=5 // pred_check
      _
    $region10: #{lgt_group_forward.5} parent=5 // pred_check_branch
      %292 = sbr.rel (%p289) target = $region12
    $region11: #{lgt_group_forward.5} parent=5 // pred_region
      %s293 = ssub.s32 %s17, 1
      // Predicated region
      $region13: #{lgt_group_forward.5} parent=11 // pred_check
        %p294 = pneg %p64
      $region14: #{lgt_group_forward.5} parent=11 // pred_check_branch
        %296 = sbr.rel (%p294) target = $region16
      $region15: #{lgt_group_forward.5} parent=11 // pred_region
        _
      $region16: #{lgt_group_forward.5} parent=11 // pred_fallthru
        _
      // Predicated region
      $region17: #{lgt_group_forward.5} parent=11 // pred_check
        %p297 = pneg %p85
      $region18: #{lgt_group_forward.5} parent=11 // pred_check_branch
        %299 = sbr.rel (%p297) target = $region20
      $region19: #{lgt_group_forward.5} parent=11 // pred_region
        _
      $region20: #{lgt_group_forward.5} parent=11 // pred_fallthru
        _
      // Predicated region
      $region21: #{lgt_group_forward.5} parent=11 // pred_check
        %p300 = pneg %p106
      $region22: #{lgt_group_forward.5} parent=11 // pred_check_branch
        %302 = sbr.rel (%p300) target = $region24
      $region23: #{lgt_group_forward.5} parent=11 // pred_region
        _
      $region24: #{lgt_group_forward.5} parent=11 // pred_fallthru
        _
      // Predicated region
      $region25: #{lgt_group_forward.5} parent=11 // pred_check
        %p303 = pneg %p127
      $region26: #{lgt_group_forward.5} parent=11 // pred_check_branch
        %305 = sbr.rel (%p303) target = $region28
      $region27: #{lgt_group_forward.5} parent=11 // pred_region
        _
      $region28: #{lgt_group_forward.5} parent=11 // pred_fallthru
        _
      // Predicated region
      $region29: #{lgt_group_forward.5} parent=11 // pred_check
        %p306 = pneg %p148
      $region30: #{lgt_group_forward.5} parent=11 // pred_check_branch
        %308 = sbr.rel (%p306) target = $region32
      $region31: #{lgt_group_forward.5} parent=11 // pred_region
        _
      $region32: #{lgt_group_forward.5} parent=11 // pred_fallthru
        _
      // Predicated region
      $region33: #{lgt_group_forward.5} parent=11 // pred_check
        %p309 = pneg %p169
      $region34: #{lgt_group_forward.5} parent=11 // pred_check_branch
        %311 = sbr.rel (%p309) target = $region36
      $region35: #{lgt_group_forward.5} parent=11 // pred_region
        _
      $region36: #{lgt_group_forward.5} parent=11 // pred_fallthru
        _
      // Predicated region
      $region37: #{lgt_group_forward.5} parent=11 // pred_check
        %p312 = pneg %p190
      $region38: #{lgt_group_forward.5} parent=11 // pred_check_branch
        %314 = sbr.rel (%p312) target = $region40
      $region39: #{lgt_group_forward.5} parent=11 // pred_region
        _
      $region40: #{lgt_group_forward.5} parent=11 // pred_fallthru
        _
      // Predicated region
      $region41: #{lgt_group_forward.5} parent=11 // pred_check
        %p315 = pneg %p211
      $region42: #{lgt_group_forward.5} parent=11 // pred_check_branch
        %317 = sbr.rel (%p315) target = $region44
      $region43: #{lgt_group_forward.5} parent=11 // pred_region
        _
      $region44: #{lgt_group_forward.5} parent=11 // pred_fallthru
        _
      // Predicated region
      $region45: #{lgt_group_forward.5} parent=11 // pred_check
        %p318 = pneg %p232
      $region46: #{lgt_group_forward.5} parent=11 // pred_check_branch
        %320 = sbr.rel (%p318) target = $region48
      $region47: #{lgt_group_forward.5} parent=11 // pred_region
        _
      $region48: #{lgt_group_forward.5} parent=11 // pred_fallthru
        _
      // Predicated region
      $region49: #{lgt_group_forward.5} parent=11 // pred_check
        %p321 = pneg %p253
      $region50: #{lgt_group_forward.5} parent=11 // pred_check_branch
        %323 = sbr.rel (%p321) target = $region52
      $region51: #{lgt_group_forward.5} parent=11 // pred_region
        _
      $region52: #{lgt_group_forward.5} parent=11 // pred_fallthru
        _
    $region12: #{lgt_group_forward.5} parent=5 // pred_fallthru
      _
    %p324 = scmp.lt.s32.totalorder %s17, 2
    // Predicated region
    $region53: #{lgt_group_forward.5} parent=5 // pred_check
      %p325 = pneg %p324
    $region54: #{lgt_group_forward.5} parent=5 // pred_check_branch
      %327 = sbr.rel (%p325) target = $region56
    $region55: #{lgt_group_forward.5} parent=5 // pred_region
      // Predicated region
      $region57: #{lgt_group_forward.5} parent=55 // pred_check
        %p328 = pneg %p37
      $region58: #{lgt_group_forward.5} parent=55 // pred_check_branch
        %330 = sbr.rel (%p328) target = $region60
      $region59: #{lgt_group_forward.5} parent=55 // pred_region
        %p331 = scmp.lt.s32.totalorder %s17, 1
        %s332 = scalar_select %p331, %s17, 1
        %s333 = smul.addr %s332, 6
        %s334 = smul.addr %s333, 8
        %s335 = scalar_lea.vmem %s0, %s334
      $region60: #{lgt_group_forward.5} parent=55 // pred_fallthru
        _
    $region56: #{lgt_group_forward.5} parent=5 // pred_fallthru
      _
    %p336 = scmp.le.s32.totalorder 1, %s17
    %p337 = scmp.lt.s32.totalorder %s17, 3
    %p338 = pnand %p336, %p337
    %p339 = pneg %p338
    // Predicated region
    $region61: #{lgt_group_forward.5} parent=5 // pred_check
      _
    $region62: #{lgt_group_forward.5} parent=5 // pred_check_branch
      %341 = sbr.rel (%p338) target = $region64
    $region63: #{lgt_group_forward.5} parent=5 // pred_region
      %s342 = ssub.s32 %s17, 1
      %p343 = scmp.lt.s32.totalorder %s22, 1
      %s344 = scalar_select %p343, %s22, 1
      %s345 = smul.addr %s344, 6
      %s346 = smul.addr %s345, 8
      %s347 = scalar_lea.vmem %s0, %s346
      %p348 = pneg %p43
      %p349 = pneg %p40
      %p350 = pneg %p64
      %p351 = pneg %p61
      %p352 = pneg %p85
      %p353 = pneg %p82
      %p354 = pneg %p106
      %p355 = pneg %p103
      %p356 = pneg %p127
      %p357 = pneg %p124
      %p358 = pneg %p148
      %p359 = pneg %p145
      %p360 = pneg %p169
      %p361 = pneg %p166
      %p362 = pneg %p190
      %p363 = pneg %p187
      %p364 = pneg %p211
      %p365 = pneg %p208
      %p366 = pneg %p232
      %p367 = pneg %p229
      %p368 = pneg %p253
      %p369 = pneg %p250
      %p370 = pneg %p279
      %p371 = pneg %p276
      %p372 = scmp.lt.s32.totalorder %s22, 1
      %s373 = scalar_select %p372, %s22, 1
      %s374 = smul.addr %s373, 6
      %s375 = smul.addr %s374, 8
      %s376 = scalar_lea.vmem %s11, %s375
      %p377 = scmp.lt.s32.totalorder %s22, 1
      %s378 = scalar_select %p377, %s22, 1
      %s379 = smul.addr %s378, 6
      %s380 = smul.addr %s379, 8
      %s381 = scalar_lea.vmem %s0, %s380
      %p382 = scmp.lt.s32.totalorder %s22, 1
      %s383 = scalar_select %p382, %s22, 1
      %s384 = smul.addr %s383, 6
      %s385 = smul.addr %s384, 8
      %s386 = scalar_lea.vmem %s11, %s385
      %v387 = vld [vmem:[%s381] sm:$0xff]
      %v388 = vld [vmem:[%s381 + $0x8] sm:$0xff]
      %v389 = vld [vmem:[%s381 + $0x10] sm:$0xff]
      %v390 = vld [vmem:[%s381 + $0x18] sm:$0xff]
      %v391 = vld [vmem:[%s381 + $0x20] sm:$0xf]
      %v392 = vld [vmem:[%s381 + $0x28] sm:$0xf]
      %v393 = vld [vmem:[%s7] sm:$0x3]
      %v394 = vlaneseq
      %v395 = vand.u32 %v394, 127
      %v396 = vadd.s32 %v395, 128
      %vm397 = vcmp.eq.s32.totalorder %v393, 0
      %vm398 = vcmp.eq.s32.totalorder %v393, 15
      %vm399 = vcmp.lt.s32.totalorder %v395, 16
      %vm400 = vcmp.lt.s32.totalorder %v396, 16
      %vm401 = vcmp.ge.s32.totalorder %v395, 240
      %vm402 = vcmp.ge.s32.totalorder %v396, 240
      %v403 = vld [vmem:[%s8] sm:$0xff]
      %v404 = vld [vmem:[%s8 + $0x8] sm:$0xff]
      %v405 = vld [vmem:[%s8 + $0x10] sm:$0xf]
      %406 = vrot.lane.b32.xlu0 %v387, 15
      %v407 = vpop.permute.xlu0 %406
      %408 = vrot.lane.b32.xlu0 %v389, 15
      %v409 = vpop.permute.xlu0 %408
      %410 = vrot.lane.b32.xlu0 %v391, 15
      %v411 = vpop.permute.xlu0 %410
      %412 = vrot.lane.b32.xlu0 %v388, 15
      %v413 = vpop.permute.xlu0 %412
      %414 = vrot.lane.b32.xlu0 %v390, 15
      %v415 = vpop.permute.xlu0 %414
      %416 = vrot.lane.b32.xlu0 %v392, 15
      %v417 = vpop.permute.xlu0 %416
      %vm418 = vcmp.lt.s32.totalorder %v395, 15
      %v419 = vsel %vm418, %v407, %v413
      %v420 = vsel %vm418, %v409, %v415
      %v421 = vsel %vm418, %v411, %v417
      %v422 = vsel %vm418, %v413, %v407
      %v423 = vsel %vm418, %v415, %v409
      %v424 = vsel %vm418, %v417, %v411
      %425 = vrot.lane.b32.xlu0 %v387, 127
      %v426 = vpop.permute.xlu0 %425
      %427 = vrot.lane.b32.xlu0 %v389, 127
      %v428 = vpop.permute.xlu0 %427
      %429 = vrot.lane.b32.xlu0 %v391, 127
      %v430 = vpop.permute.xlu0 %429
      %431 = vrot.lane.b32.xlu0 %v388, 127
      %v432 = vpop.permute.xlu0 %431
      %433 = vrot.lane.b32.xlu0 %v390, 127
      %v434 = vpop.permute.xlu0 %433
      %435 = vrot.lane.b32.xlu0 %v392, 127
      %v436 = vpop.permute.xlu0 %435
      %vm437 = vcmp.lt.s32.totalorder %v395, 127
      %v438 = vsel %vm437, %v426, %v432
      %v439 = vsel %vm437, %v428, %v434
      %v440 = vsel %vm437, %v430, %v436
      %v441 = vsel %vm437, %v432, %v426
      %v442 = vsel %vm437, %v434, %v428
      %v443 = vsel %vm437, %v436, %v430
      %v444 = vsel %vm398, 1, 0
      %v445 = vlaneseq
      %v446 = vshrl.u32 %v445, 7
      %v447 = vsub.s32 0, %v446
      %v448 = vrot.slane %v444, %v447
      %v449 = vlaneseq
      %v450 = vshrl.u32 %v449, 7
      %v451 = vsub.s32 1, %v450
      %v452 = vrot.slane %v444, %v451
      %vm453 = vcmp.eq.s32.totalorder %v448, 1
      %vm454 = vcmp.eq.s32.totalorder %v452, 1
      %v455 = vsel %vm453, %v422, %v438
      %v456 = vsel %vm454, %v419, %v441
      %v457 = vsel %vm453, %v423, %v439
      %v458 = vsel %vm454, %v420, %v442
      %v459 = vsel %vm453, %v424, %v440
      %v460 = vsel %vm454, %v421, %v443
      %461 = vrot.lane.b32.xlu0 %v387, 113
      %v462 = vpop.permute.xlu0 %461
      %463 = vrot.lane.b32.xlu0 %v389, 113
      %v464 = vpop.permute.xlu0 %463
      %465 = vrot.lane.b32.xlu0 %v391, 113
      %v466 = vpop.permute.xlu0 %465
      %467 = vrot.lane.b32.xlu0 %v388, 113
      %v468 = vpop.permute.xlu0 %467
      %469 = vrot.lane.b32.xlu0 %v390, 113
      %v470 = vpop.permute.xlu0 %469
      %471 = vrot.lane.b32.xlu0 %v392, 113
      %v472 = vpop.permute.xlu0 %471
      %vm473 = vcmp.lt.s32.totalorder %v395, 113
      %v474 = vsel %vm473, %v462, %v468
      %v475 = vsel %vm473, %v464, %v470
      %v476 = vsel %vm473, %v466, %v472
      %v477 = vsel %vm473, %v468, %v462
      %v478 = vsel %vm473, %v470, %v464
      %v479 = vsel %vm473, %v472, %v466
      %480 = vrot.lane.b32.xlu0 %v387, 1
      %v481 = vpop.permute.xlu0 %480
      %482 = vrot.lane.b32.xlu0 %v389, 1
      %v483 = vpop.permute.xlu0 %482
      %484 = vrot.lane.b32.xlu0 %v391, 1
      %v485 = vpop.permute.xlu0 %484
      %486 = vrot.lane.b32.xlu0 %v388, 1
      %v487 = vpop.permute.xlu0 %486
      %488 = vrot.lane.b32.xlu0 %v390, 1
      %v489 = vpop.permute.xlu0 %488
      %490 = vrot.lane.b32.xlu0 %v392, 1
      %v491 = vpop.permute.xlu0 %490
      %vm492 = vcmp.lt.s32.totalorder %v395, 1
      %v493 = vsel %vm492, %v481, %v487
      %v494 = vsel %vm492, %v483, %v489
      %v495 = vsel %vm492, %v485, %v491
      %v496 = vsel %vm492, %v487, %v481
      %v497 = vsel %vm492, %v489, %v483
      %v498 = vsel %vm492, %v491, %v485
      %v499 = vsel %vm397, 1, 0
      %v500 = vlaneseq
      %v501 = vshrl.u32 %v500, 7
      %v502 = vsub.s32 0, %v501
      %v503 = vrot.slane %v499, %v502
      %v504 = vlaneseq
      %v505 = vshrl.u32 %v504, 7
      %v506 = vsub.s32 1, %v505
      %v507 = vrot.slane %v499, %v506
      %vm508 = vcmp.eq.s32.totalorder %v503, 1
      %vm509 = vcmp.eq.s32.totalorder %v507, 1
      %v510 = vsel %vm508, %v474, %v496
      %v511 = vsel %vm509, %v477, %v493
      %v512 = vsel %vm508, %v475, %v497
      %v513 = vsel %vm509, %v478, %v494
      %v514 = vsel %vm508, %v476, %v498
      %v515 = vsel %vm509, %v479, %v495
      %516 = vrot.lane.b32.xlu0 %v387, 112
      %v517 = vpop.permute.xlu0 %516
      %518 = vrot.lane.b32.xlu0 %v389, 112
      %v519 = vpop.permute.xlu0 %518
      %520 = vrot.lane.b32.xlu0 %v391, 112
      %v521 = vpop.permute.xlu0 %520
      %522 = vrot.lane.b32.xlu0 %v388, 112
      %v523 = vpop.permute.xlu0 %522
      %524 = vrot.lane.b32.xlu0 %v390, 112
      %v525 = vpop.permute.xlu0 %524
      %526 = vrot.lane.b32.xlu0 %v392, 112
      %v527 = vpop.permute.xlu0 %526
      %vm528 = vcmp.lt.s32.totalorder %v395, 112
      %v529 = vsel %vm528, %v517, %v523
      %v530 = vsel %vm528, %v519, %v525
      %v531 = vsel %vm528, %v521, %v527
      %v532 = vsel %vm528, %v523, %v517
      %v533 = vsel %vm528, %v525, %v519
      %v534 = vsel %vm528, %v527, %v521
      %535 = vrot.lane.b32.xlu0 %v387, 16
      %v536 = vpop.permute.xlu0 %535
      %537 = vrot.lane.b32.xlu0 %v389, 16
      %v538 = vpop.permute.xlu0 %537
      %539 = vrot.lane.b32.xlu0 %v391, 16
      %v540 = vpop.permute.xlu0 %539
      %541 = vrot.lane.b32.xlu0 %v388, 16
      %v542 = vpop.permute.xlu0 %541
      %543 = vrot.lane.b32.xlu0 %v390, 16
      %v544 = vpop.permute.xlu0 %543
      %545 = vrot.lane.b32.xlu0 %v392, 16
      %v546 = vpop.permute.xlu0 %545
      %v547 = vsel %vm399, %v536, %v542
      %v548 = vsel %vm399, %v538, %v544
      %v549 = vsel %vm399, %v540, %v546
      %v550 = vsel %vm399, %v542, %v536
      %v551 = vsel %vm399, %v544, %v538
      %v552 = vsel %vm399, %v546, %v540
      %vm553 = vcmp.eq.s32.totalorder %v403, 0
      %vm554 = vcmp.eq.s32.totalorder %v404, 0
      %vm555 = vcmp.eq.s32.totalorder %v405, 0
      %vm556 = vcmp.eq.s32.totalorder %v403, 1
      %vm557 = vcmp.eq.s32.totalorder %v404, 1
      %vm558 = vcmp.eq.s32.totalorder %v405, 1
      %vm559 = vcmp.eq.s32.totalorder %v403, 2
      %vm560 = vcmp.eq.s32.totalorder %v404, 2
      %vm561 = vcmp.eq.s32.totalorder %v405, 2
      %vm562 = vcmp.eq.s32.totalorder %v403, 3
      %vm563 = vcmp.eq.s32.totalorder %v404, 3
      %vm564 = vcmp.eq.s32.totalorder %v405, 3
      %v565 = vsel %vm562, 1, 0
      %v566 = vsel %vm563, 1, 0
      %v567 = vsel %vm564, 1, 0
      %568 = vset.pattern.permute.xlu0 0
      %569 = vperm.xlu0 %568, %v565
      %v570 = vpop.permute.xlu0 %569
      %571 = vset.pattern.permute.xlu0 0
      %572 = vperm.xlu0 %571, %v566
      %v573 = vpop.permute.xlu0 %572
      %574 = vset.pattern.permute.xlu0 0
      %575 = vperm.xlu0 %574, %v567
      %v576 = vpop.permute.xlu0 %575
      %vm577 = vcmp.eq.s32.totalorder %v570, 1
      %vm578 = vcmp.eq.s32.totalorder %v573, 1
      %vm579 = vcmp.eq.s32.totalorder %v576, 1
      %v580 = vsel %vm577, %v550, %v387
      %v581 = vsel %vm577, %v547, %v388
      %v582 = vsel %vm578, %v551, %v389
      %v583 = vsel %vm578, %v548, %v390
      %v584 = vsel %vm579, %v552, %v391
      %v585 = vsel %vm579, %v549, %v392
      %v586 = vsel %vm559, 1, 0
      %v587 = vsel %vm560, 1, 0
      %v588 = vsel %vm561, 1, 0
      %589 = vset.pattern.permute.xlu0 0
      %590 = vperm.xlu0 %589, %v586
      %v591 = vpop.permute.xlu0 %590
      %592 = vset.pattern.permute.xlu0 0
      %593 = vperm.xlu0 %592, %v587
      %v594 = vpop.permute.xlu0 %593
      %595 = vset.pattern.permute.xlu0 0
      %596 = vperm.xlu0 %595, %v588
      %v597 = vpop.permute.xlu0 %596
      %vm598 = vcmp.eq.s32.totalorder %v591, 1
      %vm599 = vcmp.eq.s32.totalorder %v594, 1
      %vm600 = vcmp.eq.s32.totalorder %v597, 1
      %v601 = vsel %vm598, %v529, %v580
      %v602 = vsel %vm598, %v532, %v581
      %v603 = vsel %vm599, %v530, %v582
      %v604 = vsel %vm599, %v533, %v583
      %v605 = vsel %vm600, %v531, %v584
      %v606 = vsel %vm600, %v534, %v585
      %v607 = vsel %vm556, 1, 0
      %v608 = vsel %vm557, 1, 0
      %v609 = vsel %vm558, 1, 0
      %610 = vset.pattern.permute.xlu0 0
      %611 = vperm.xlu0 %610, %v607
      %v612 = vpop.permute.xlu0 %611
      %613 = vset.pattern.permute.xlu0 0
      %614 = vperm.xlu0 %613, %v608
      %v615 = vpop.permute.xlu0 %614
      %616 = vset.pattern.permute.xlu0 0
      %617 = vperm.xlu0 %616, %v609
      %v618 = vpop.permute.xlu0 %617
      %vm619 = vcmp.eq.s32.totalorder %v612, 1
      %vm620 = vcmp.eq.s32.totalorder %v615, 1
      %vm621 = vcmp.eq.s32.totalorder %v618, 1
      %v622 = vsel %vm619, %v510, %v601
      %v623 = vsel %vm619, %v511, %v602
      %v624 = vsel %vm620, %v512, %v603
      %v625 = vsel %vm620, %v513, %v604
      %v626 = vsel %vm621, %v514, %v605
      %v627 = vsel %vm621, %v515, %v606
      %v628 = vsel %vm553, 1, 0
      %v629 = vsel %vm554, 1, 0
      %v630 = vsel %vm555, 1, 0
      %631 = vset.pattern.permute.xlu0 0
      %632 = vperm.xlu0 %631, %v628
      %v633 = vpop.permute.xlu0 %632
      %634 = vset.pattern.permute.xlu0 0
      %635 = vperm.xlu0 %634, %v629
      %v636 = vpop.permute.xlu0 %635
      %637 = vset.pattern.permute.xlu0 0
      %638 = vperm.xlu0 %637, %v630
      %v639 = vpop.permute.xlu0 %638
      %vm640 = vcmp.eq.s32.totalorder %v633, 1
      %vm641 = vcmp.eq.s32.totalorder %v636, 1
      %vm642 = vcmp.eq.s32.totalorder %v639, 1
      %v643 = vsel %vm640, %v455, %v622
      %v644 = vsel %vm640, %v456, %v623
      %v645 = vsel %vm641, %v457, %v624
      %v646 = vsel %vm641, %v458, %v625
      %v647 = vsel %vm642, %v459, %v626
      %v648 = vsel %vm642, %v460, %v627
      %v649 = vsub.f32 %v643, %v387
      %v650 = vsub.f32 %v644, %v388
      %v651 = vsub.f32 %v645, %v389
      %v652 = vsub.f32 %v646, %v390
      %v653 = vsub.f32 %v647, %v391
      %v654 = vsub.f32 %v648, %v392
      %v655 = vld [vmem:[%s1] sm:$0xff]
      %v656 = vld [vmem:[%s1 + $0x8] sm:$0xff]
      %v657 = vld [vmem:[%s1 + $0x10] sm:$0xf]
      %659 = vset.pattern.permute.xlu0 0
      %660 = vperm.xlu0 %659, %v655
      %v661 = vpop.permute.xlu0 %660
      %664 = vset.pattern.permute.xlu0 0
      %665 = vperm.xlu0 %664, %v656
      %v666 = vpop.permute.xlu0 %665
      %669 = vset.pattern.permute.xlu0 0
      %670 = vperm.xlu0 %669, %v657
      %v671 = vpop.permute.xlu0 %670
      %v673 = vmul.f32 %v649, %v661
      %v674 = vmul.f32 %v650, %v661
      %v675 = vmul.f32 %v651, %v666
      %v676 = vmul.f32 %v652, %v666
      %v677 = vmul.f32 %v653, %v671
      %v678 = vmul.f32 %v654, %v671
      %v679 = vadd.f32 %v387, %v673
      %v680 = vadd.f32 %v388, %v674
      %v681 = vadd.f32 %v389, %v675
      %v682 = vadd.f32 %v390, %v676
      %v683 = vadd.f32 %v391, %v677
      %v684 = vadd.f32 %v392, %v678
      %v685 = vld [vmem:[%s2] sm:$0xff]
      %v686 = vld [vmem:[%s2 + $0x8] sm:$0xff]
      %v687 = vld [vmem:[%s2 + $0x10] sm:$0xf]
      %689 = vset.pattern.permute.xlu0 0
      %690 = vperm.xlu0 %689, %v685
      %v691 = vpop.permute.xlu0 %690
      %694 = vset.pattern.permute.xlu0 0
      %695 = vperm.xlu0 %694, %v686
      %v696 = vpop.permute.xlu0 %695
      %699 = vset.pattern.permute.xlu0 0
      %700 = vperm.xlu0 %699, %v687
      %v701 = vpop.permute.xlu0 %700
      %v703 = vadd.f32 %v679, %v691
      %v704 = vadd.f32 %v680, %v691
      %v705 = vadd.f32 %v681, %v696
      %v706 = vadd.f32 %v682, %v696
      %v707 = vadd.f32 %v683, %v701
      %v708 = vadd.f32 %v684, %v701
      %v709 = vld [vmem:[%s3] sm:$0xff]
      %v710 = vld [vmem:[%s3 + $0x8] sm:$0xff]
      %v711 = vld [vmem:[%s3 + $0x10] sm:$0xff]
      %v712 = vld [vmem:[%s3 + $0x18] sm:$0xff]
      %v713 = vld [vmem:[%s3 + $0x20] sm:$0xff]
      %v714 = vld [vmem:[%s4] sm:$0xff]
      %v715 = vld [vmem:[%s4 + $0x8] sm:$0xff]
      %v716 = vld [vmem:[%s4 + $0x10] sm:$0xff]
      %v717 = vld [vmem:[%s4 + $0x18] sm:$0xff]
      %v718 = vld [vmem:[%s4 + $0x20] sm:$0xff]
      %v719 = vld [vmem:[%s5] sm:$0xff]
      %v720 = vld [vmem:[%s5 + $0x8] sm:$0xff]
      %v721 = vld [vmem:[%s5 + $0x10] sm:$0xf]
      %v722 = vld [vmem:[%s6] sm:$0xff]
      %v723 = vld [vmem:[%s6 + $0x8] sm:$0xff]
      %v724 = vld [vmem:[%s6 + $0x10] sm:$0xf]
      %v725 = vld [vmem:[%s9] sm:$0xff]
      %v726 = vld [vmem:[%s9 + $0x8] sm:$0xff]
      %v727 = vld [vmem:[%s9 + $0x10] sm:$0xf]
      %v728 = vld [vmem:[%s10] sm:$0xff]
      %v729 = vld [vmem:[%s10 + $0x8] sm:$0xff]
      %v730 = vld [vmem:[%s10 + $0x10] sm:$0xff]
      %v731 = vld [vmem:[%s10 + $0x18] sm:$0xff]
      %v732 = vld [vmem:[%s10 + $0x20] sm:$0xff]
      %733 = vrot.lane.b32.xlu0 %v703, 127
      %v734 = vpop.permute.xlu0 %733
      %735 = vrot.lane.b32.xlu0 %v705, 127
      %v736 = vpop.permute.xlu0 %735
      %737 = vrot.lane.b32.xlu0 %v707, 127
      %v738 = vpop.permute.xlu0 %737
      %739 = vrot.lane.b32.xlu0 %v704, 127
      %v740 = vpop.permute.xlu0 %739
      %741 = vrot.lane.b32.xlu0 %v706, 127
      %v742 = vpop.permute.xlu0 %741
      %743 = vrot.lane.b32.xlu0 %v708, 127
      %v744 = vpop.permute.xlu0 %743
      %v745 = vsel %vm437, %v734, %v740
      %v746 = vsel %vm437, %v736, %v742
      %v747 = vsel %vm437, %v738, %v744
      %v748 = vsel %vm437, %v740, %v734
      %v749 = vsel %vm437, %v742, %v736
      %v750 = vsel %vm437, %v744, %v738
      %v751 = vsel %vm453, 0.0, %v745
      %v752 = vsel %vm454, 0.0, %v748
      %v753 = vsel %vm453, 0.0, %v746
      %v754 = vsel %vm454, 0.0, %v749
      %v755 = vsel %vm453, 0.0, %v747
      %v756 = vsel %vm454, 0.0, %v750
      %757 = vrot.lane.b32.xlu0 %v703, 1
      %v758 = vpop.permute.xlu0 %757
      %759 = vrot.lane.b32.xlu0 %v705, 1
      %v760 = vpop.permute.xlu0 %759
      %761 = vrot.lane.b32.xlu0 %v707, 1
      %v762 = vpop.permute.xlu0 %761
      %763 = vrot.lane.b32.xlu0 %v704, 1
      %v764 = vpop.permute.xlu0 %763
      %765 = vrot.lane.b32.xlu0 %v706, 1
      %v766 = vpop.permute.xlu0 %765
      %767 = vrot.lane.b32.xlu0 %v708, 1
      %v768 = vpop.permute.xlu0 %767
      %v769 = vsel %vm492, %v758, %v764
      %v770 = vsel %vm492, %v760, %v766
      %v771 = vsel %vm492, %v762, %v768
      %v772 = vsel %vm492, %v764, %v758
      %v773 = vsel %vm492, %v766, %v760
      %v774 = vsel %vm492, %v768, %v762
      %v775 = vsel %vm508, 0.0, %v772
      %v776 = vsel %vm509, 0.0, %v769
      %v777 = vsel %vm508, 0.0, %v773
      %v778 = vsel %vm509, 0.0, %v770
      %v779 = vsel %vm508, 0.0, %v774
      %v780 = vsel %vm509, 0.0, %v771
      %781 = vrot.lane.b32.xlu0 %v703, 112
      %v782 = vpop.permute.xlu0 %781
      %783 = vrot.lane.b32.xlu0 %v705, 112
      %v784 = vpop.permute.xlu0 %783
      %785 = vrot.lane.b32.xlu0 %v707, 112
      %v786 = vpop.permute.xlu0 %785
      %787 = vrot.lane.b32.xlu0 %v704, 112
      %v788 = vpop.permute.xlu0 %787
      %789 = vrot.lane.b32.xlu0 %v706, 112
      %v790 = vpop.permute.xlu0 %789
      %791 = vrot.lane.b32.xlu0 %v708, 112
      %v792 = vpop.permute.xlu0 %791
      %v793 = vsel %vm528, %v782, %v788
      %v794 = vsel %vm528, %v784, %v790
      %v795 = vsel %vm528, %v786, %v792
      %v796 = vsel %vm528, %v788, %v782
      %v797 = vsel %vm528, %v790, %v784
      %v798 = vsel %vm528, %v792, %v786
      %v799 = vsel %vm401, 1, 0
      %v800 = vsel %vm402, 1, 0
      %vm801 = vcmp.eq.s32.totalorder %v799, 1
      %vm802 = vcmp.eq.s32.totalorder %v800, 1
      %v803 = vsel %vm801, 0.0, %v793
      %v804 = vsel %vm802, 0.0, %v796
      %v805 = vsel %vm801, 0.0, %v794
      %v806 = vsel %vm802, 0.0, %v797
      %v807 = vsel %vm801, 0.0, %v795
      %v808 = vsel %vm802, 0.0, %v798
      %809 = vrot.lane.b32.xlu0 %v703, 16
      %v810 = vpop.permute.xlu0 %809
      %811 = vrot.lane.b32.xlu0 %v705, 16
      %v812 = vpop.permute.xlu0 %811
      %813 = vrot.lane.b32.xlu0 %v707, 16
      %v814 = vpop.permute.xlu0 %813
      %815 = vrot.lane.b32.xlu0 %v704, 16
      %v816 = vpop.permute.xlu0 %815
      %817 = vrot.lane.b32.xlu0 %v706, 16
      %v818 = vpop.permute.xlu0 %817
      %819 = vrot.lane.b32.xlu0 %v708, 16
      %v820 = vpop.permute.xlu0 %819
      %v821 = vsel %vm399, %v810, %v816
      %v822 = vsel %vm399, %v812, %v818
      %v823 = vsel %vm399, %v814, %v820
      %v824 = vsel %vm399, %v816, %v810
      %v825 = vsel %vm399, %v818, %v812
      %v826 = vsel %vm399, %v820, %v814
      %v827 = vsel %vm399, 1, 0
      %v828 = vsel %vm400, 1, 0
      %vm829 = vcmp.eq.s32.totalorder %v827, 1
      %vm830 = vcmp.eq.s32.totalorder %v828, 1
      %v831 = vsel %vm829, 0.0, %v824
      %v832 = vsel %vm830, 0.0, %v821
      %v833 = vsel %vm829, 0.0, %v825
      %v834 = vsel %vm830, 0.0, %v822
      %v835 = vsel %vm829, 0.0, %v826
      %v836 = vsel %vm830, 0.0, %v823
      %vm837 = vcmp.eq.s32.totalorder %v725, 0
      %vm838 = vcmp.eq.s32.totalorder %v726, 0
      %vm839 = vcmp.eq.s32.totalorder %v727, 0
      %vm840 = vcmp.eq.s32.totalorder %v725, 1
      %vm841 = vcmp.eq.s32.totalorder %v726, 1
      %vm842 = vcmp.eq.s32.totalorder %v727, 1
      %vm843 = vcmp.eq.s32.totalorder %v725, 2
      %vm844 = vcmp.eq.s32.totalorder %v726, 2
      %vm845 = vcmp.eq.s32.totalorder %v727, 2
      %vm846 = vcmp.eq.s32.totalorder %v725, 3
      %vm847 = vcmp.eq.s32.totalorder %v726, 3
      %vm848 = vcmp.eq.s32.totalorder %v727, 3
      %v849 = vsel %vm846, 1, 0
      %v850 = vsel %vm847, 1, 0
      %v851 = vsel %vm848, 1, 0
      %852 = vset.pattern.permute.xlu0 0
      %853 = vperm.xlu0 %852, %v849
      %v854 = vpop.permute.xlu0 %853
      %855 = vset.pattern.permute.xlu0 0
      %856 = vperm.xlu0 %855, %v850
      %v857 = vpop.permute.xlu0 %856
      %858 = vset.pattern.permute.xlu0 0
      %859 = vperm.xlu0 %858, %v851
      %v860 = vpop.permute.xlu0 %859
      %vm861 = vcmp.eq.s32.totalorder %v854, 1
      %vm862 = vcmp.eq.s32.totalorder %v857, 1
      %vm863 = vcmp.eq.s32.totalorder %v860, 1
      %v864 = vsel %vm861, %v831, %v703
      %v865 = vsel %vm861, %v832, %v704
      %v866 = vsel %vm862, %v833, %v705
      %v867 = vsel %vm862, %v834, %v706
      %v868 = vsel %vm863, %v835, %v707
      %v869 = vsel %vm863, %v836, %v708
      %v870 = vsel %vm843, 1, 0
      %v871 = vsel %vm844, 1, 0
      %v872 = vsel %vm845, 1, 0
      %873 = vset.pattern.permute.xlu0 0
      %874 = vperm.xlu0 %873, %v870
      %v875 = vpop.permute.xlu0 %874
      %876 = vset.pattern.permute.xlu0 0
      %877 = vperm.xlu0 %876, %v871
      %v878 = vpop.permute.xlu0 %877
      %879 = vset.pattern.permute.xlu0 0
      %880 = vperm.xlu0 %879, %v872
      %v881 = vpop.permute.xlu0 %880
      %vm882 = vcmp.eq.s32.totalorder %v875, 1
      %vm883 = vcmp.eq.s32.totalorder %v878, 1
      %vm884 = vcmp.eq.s32.totalorder %v881, 1
      %v885 = vsel %vm882, %v803, %v864
      %v886 = vsel %vm882, %v804, %v865
      %v887 = vsel %vm883, %v805, %v866
      %v888 = vsel %vm883, %v806, %v867
      %v889 = vsel %vm884, %v807, %v868
      %v890 = vsel %vm884, %v808, %v869
      %v891 = vsel %vm840, 1, 0
      %v892 = vsel %vm841, 1, 0
      %v893 = vsel %vm842, 1, 0
      %894 = vset.pattern.permute.xlu0 0
      %895 = vperm.xlu0 %894, %v891
      %v896 = vpop.permute.xlu0 %895
      %897 = vset.pattern.permute.xlu0 0
      %898 = vperm.xlu0 %897, %v892
      %v899 = vpop.permute.xlu0 %898
      %900 = vset.pattern.permute.xlu0 0
      %901 = vperm.xlu0 %900, %v893
      %v902 = vpop.permute.xlu0 %901
      %vm903 = vcmp.eq.s32.totalorder %v896, 1
      %vm904 = vcmp.eq.s32.totalorder %v899, 1
      %vm905 = vcmp.eq.s32.totalorder %v902, 1
      %v906 = vsel %vm903, %v775, %v885
      %v907 = vsel %vm903, %v776, %v886
      %v908 = vsel %vm904, %v777, %v887
      %v909 = vsel %vm904, %v778, %v888
      %v910 = vsel %vm905, %v779, %v889
      %v911 = vsel %vm905, %v780, %v890
      %v912 = vsel %vm837, 1, 0
      %v913 = vsel %vm838, 1, 0
      %v914 = vsel %vm839, 1, 0
      %915 = vset.pattern.permute.xlu0 0
      %916 = vperm.xlu0 %915, %v912
      %v917 = vpop.permute.xlu0 %916
      %918 = vset.pattern.permute.xlu0 0
      %919 = vperm.xlu0 %918, %v913
      %v920 = vpop.permute.xlu0 %919
      %921 = vset.pattern.permute.xlu0 0
      %922 = vperm.xlu0 %921, %v914
      %v923 = vpop.permute.xlu0 %922
      %vm924 = vcmp.eq.s32.totalorder %v917, 1
      %vm925 = vcmp.eq.s32.totalorder %v920, 1
      %vm926 = vcmp.eq.s32.totalorder %v923, 1
      %v927 = vsel %vm924, %v751, %v906
      %v928 = vsel %vm924, %v752, %v907
      %v929 = vsel %vm925, %v753, %v908
      %v930 = vsel %vm925, %v754, %v909
      %v931 = vsel %vm926, %v755, %v910
      %v932 = vsel %vm926, %v756, %v911
      %934 = vset.pattern.permute.xlu0 0
      %935 = vperm.xlu0 %934, %v714
      %v936 = vpop.permute.xlu0 %935
      %939 = vset.pattern.permute.xlu0 0
      %940 = vperm.xlu0 %939, %v715
      %v941 = vpop.permute.xlu0 %940
      %944 = vset.pattern.permute.xlu0 0
      %945 = vperm.xlu0 %944, %v716
      %v946 = vpop.permute.xlu0 %945
      %949 = vset.pattern.permute.xlu0 0
      %950 = vperm.xlu0 %949, %v717
      %v951 = vpop.permute.xlu0 %950
      %954 = vset.pattern.permute.xlu0 0
      %955 = vperm.xlu0 %954, %v718
      %v956 = vpop.permute.xlu0 %955
      %vm958 = vcmask 162816
      %v960 = vsel %vm958, %v709, 0
      %v963 = vsel %vm958, %v710, 0
      %v966 = vsel %vm958, %v711, 0
      %v969 = vsel %vm958, %v712, 0
      %v972 = vsel %vm958, %v713, 0
      %vm974 = vcmask 1043456
      %v976 = vsel %vm974, %v931, 0
      %v979 = vsel %vm974, %v932, 0
      %981 = vmatprep.subr.mxu0 %v928
      %982 = vmatpush1.msra.mxu0 %v927
      %983 = vmatprep.subr.mxu0 %v930
      %984 = vmatpush1.msra.mxu0 %v929
      %985 = vmatprep.subr.mxu0 %v979
      %986 = vmatpush1.msra.mxu0 %v976
      %987 = vmatprep.subr.mxu0 0.0
      %988 = vmatpush1.msra.mxu0 0.0
      %989 = vmatprep.subr.mxu0 0.0
      %990 = vmatpush1.msra.mxu0 0.0
      %991 = vmatprep.subr.mxu0 0.0
      %992 = vmatpush1.msra.mxu0 0.0
      %993 = vmatprep.subr.mxu0 0.0
      %994 = vmatpush1.msra.mxu0 0.0
      %995 = vmatprep.subr.mxu0 0.0
      %996 = vmatpush1.msra.mxu0 0.0
      %997 = vmatprep.subr.mxu0 0.0
      %998 = vmatpush1.msra.mxu0 0.0
      %999 = vmatprep.subr.mxu0 0.0
      %1000 = vmatpush1.msra.mxu0 0.0
      %1001 = vmatprep.subr.mxu0 0.0
      %1002 = vmatpush1.msra.mxu0 0.0
      %1003 = vmatprep.subr.mxu0 0.0
      %1004 = vmatpush1.msra.mxu0 0.0
      %1005 = vmatprep.subr.mxu0 0.0
      %1006 = vmatpush1.msra.mxu0 0.0
      %1007 = vmatprep.subr.mxu0 0.0
      %1008 = vmatpush1.msra.mxu0 0.0
      %1009 = vmatprep.subr.mxu0 0.0
      %1010 = vmatpush1.msra.mxu0 0.0
      %1011 = vmatprep.subr.mxu0 0.0
      %1012 = vmatpush1.msra.mxu0 0.0
      %1013 = vmatprep.subr.mxu0 0.0
      %1014 = vmatpush1.msra.mxu0 0.0
      %1015 = vmatprep.subr.mxu0 0.0
      %1016 = vmatpush1.msra.mxu0 0.0
      %1017 = vmatprep.subr.mxu0 0.0
      %1018 = vmatpush1.msra.mxu0 0.0
      %1019 = vmatprep.subr.mxu0 0.0
      %1020 = vmatpush1.msra.mxu0 0.0
      %1021 = vmatprep.subr.mxu0 0.0
      %1022 = vmatpush1.msra.mxu0 0.0
      %1023 = vmatprep.subr.mxu0 0.0
      %1024 = vmatpush1.msra.mxu0 0.0
      %1025 = vmatprep.subr.mxu0 0.0
      %1026 = vmatpush1.msra.mxu0 0.0
      %1027 = vmatprep.subr.mxu0 0.0
      %1028 = vmatpush1.msra.mxu0 0.0
      %1029 = vmatprep.subr.mxu0 0.0
      %1030 = vmatpush1.msra.mxu0 0.0
      %1031 = vmatprep.subr.mxu0 0.0
      %1032 = vmatpush1.msra.mxu0 0.0
      %1033 = vmatprep.subr.mxu0 0.0
      %1034 = vmatpush1.msra.mxu0 0.0
      %1035 = vmatprep.subr.mxu0 0.0
      %1036 = vmatpush1.msra.mxu0 0.0
      %1037 = vmatprep.subr.mxu0 0.0
      %1038 = vmatpush1.msra.mxu0 0.0
      %1039 = vmatprep.subr.mxu0 0.0
      %1040 = vmatpush1.msra.mxu0 0.0
      %1041 = vmatprep.subr.mxu0 0.0
      %1042 = vmatpush1.msra.mxu0 0.0
      %1043 = vmatprep.subr.mxu0 0.0
      %1044 = vmatpush1.msra.mxu0 0.0
      %1045 = vmatprep.mubr.f32.mxu0 0.0
      %1046 = vmatmul.mubr.f32.gmra.mrb[0].mxu0 %v960
      %v1047 = vpop.f32.mrb[0].mxu0
      %v1048 = vadd.f32 %v936, %v1047
      %v1049 = vpop.f32.mrb[0].mxu0
      %v1050 = vadd.f32 %v936, %v1049
      %1051 = vmatprep.mubr.f32.mxu0 0.0
      %1052 = vmatmul.mubr.f32.gmra.mrb[0].mxu0 %v963
      %v1053 = vpop.f32.mrb[0].mxu0
      %v1054 = vadd.f32 %v941, %v1053
      %v1055 = vpop.f32.mrb[0].mxu0
      %v1056 = vadd.f32 %v941, %v1055
      %1057 = vmatprep.mubr.f32.mxu0 0.0
      %1058 = vmatmul.mubr.f32.gmra.mrb[0].mxu0 %v966
      %v1059 = vpop.f32.mrb[0].mxu0
      %v1060 = vadd.f32 %v946, %v1059
      %v1061 = vpop.f32.mrb[0].mxu0
      %v1062 = vadd.f32 %v946, %v1061
      %1063 = vmatprep.mubr.f32.mxu0 0.0
      %1064 = vmatmul.mubr.f32.gmra.mrb[0].mxu0 %v969
      %v1065 = vpop.f32.mrb[0].mxu0
      %v1066 = vadd.f32 %v951, %v1065
      %v1067 = vpop.f32.mrb[0].mxu0
      %v1068 = vadd.f32 %v951, %v1067
      %1069 = vmatprep.mubr.f32.mxu0 0.0
      %1070 = vmatmul.mubr.f32.gmra.mrb[0].mxu0 %v972
      %v1071 = vpop.f32.mrb[0].mxu0
      %v1072 = vadd.f32 %v956, %v1071
      %v1073 = vpop.f32.mrb[0].mxu0
      %v1074 = vadd.f32 %v956, %v1073
      %1075 = vdwg.mxu0
      %v1076 = vmul.f32 %v1048, 0.5
      %v1077 = vmul.f32 %v1050, 0.5
      %v1078 = vmul.f32 %v1054, 0.5
      %v1079 = vmul.f32 %v1056, 0.5
      %v1080 = vmul.f32 %v1060, 0.5
      %v1081 = vmul.f32 %v1062, 0.5
      %v1082 = vmul.f32 %v1066, 0.5
      %v1083 = vmul.f32 %v1068, 0.5
      %v1084 = vmul.f32 %v1072, 0.5
      %v1085 = vmul.f32 %v1074, 0.5
      %v1086 = vmul.f32 %v1048, 0.70710677
      %v1087 = vmul.f32 %v1050, 0.70710677
      %v1088 = vmul.f32 %v1054, 0.70710677
      %v1089 = vmul.f32 %v1056, 0.70710677
      %v1090 = vmul.f32 %v1060, 0.70710677
      %v1091 = vmul.f32 %v1062, 0.70710677
      %v1092 = vmul.f32 %v1066, 0.70710677
      %v1093 = vmul.f32 %v1068, 0.70710677
      %v1094 = vmul.f32 %v1072, 0.70710677
      %v1095 = vmul.f32 %v1074, 0.70710677
      %v1096 = vand.u32 2147483647, %v1086
      %v1097 = vand.u32 2147483647, %v1087
      %v1098 = vand.u32 2147483647, %v1088
      %v1099 = vand.u32 2147483647, %v1089
      %v1100 = vand.u32 2147483647, %v1090
      %v1101 = vand.u32 2147483647, %v1091
      %v1102 = vand.u32 2147483647, %v1092
      %v1103 = vand.u32 2147483647, %v1093
      %v1104 = vand.u32 2147483647, %v1094
      %v1105 = vand.u32 2147483647, %v1095
      %v1106 = vmul.f32 %v1096, 0.3275911
      %v1107 = vmul.f32 %v1097, 0.3275911
      %v1108 = vmul.f32 %v1098, 0.3275911
      %v1109 = vmul.f32 %v1099, 0.3275911
      %v1110 = vmul.f32 %v1100, 0.3275911
      %v1111 = vmul.f32 %v1101, 0.3275911
      %v1112 = vmul.f32 %v1102, 0.3275911
      %v1113 = vmul.f32 %v1103, 0.3275911
      %v1114 = vmul.f32 %v1104, 0.3275911
      %v1115 = vmul.f32 %v1105, 0.3275911
      %v1116 = vadd.f32 %v1106, 1.0
      %v1117 = vadd.f32 %v1107, 1.0
      %v1118 = vadd.f32 %v1108, 1.0
      %v1119 = vadd.f32 %v1109, 1.0
      %v1120 = vadd.f32 %v1110, 1.0
      %v1121 = vadd.f32 %v1111, 1.0
      %v1122 = vadd.f32 %v1112, 1.0
      %v1123 = vadd.f32 %v1113, 1.0
      %v1124 = vadd.f32 %v1114, 1.0
      %v1125 = vadd.f32 %v1115, 1.0
      %v1126 = vrcp.pop %v1116
      %v1127 = vrcp.pop %v1117
      %v1128 = vrcp.pop %v1118
      %v1129 = vrcp.pop %v1119
      %v1130 = vrcp.pop %v1120
      %v1131 = vrcp.pop %v1121
      %v1132 = vrcp.pop %v1122
      %v1133 = vrcp.pop %v1123
      %v1134 = vrcp.pop %v1124
      %v1135 = vrcp.pop %v1125
      %v1136 = vmul.f32 %v1116, %v1126
      %v1137 = vmul.f32 %v1117, %v1127
      %v1138 = vmul.f32 %v1118, %v1128
      %v1139 = vmul.f32 %v1119, %v1129
      %v1140 = vmul.f32 %v1120, %v1130
      %v1141 = vmul.f32 %v1121, %v1131
      %v1142 = vmul.f32 %v1122, %v1132
      %v1143 = vmul.f32 %v1123, %v1133
      %v1144 = vmul.f32 %v1124, %v1134
      %v1145 = vmul.f32 %v1125, %v1135
      %v1146 = vsub.f32 2.0, %v1136
      %v1147 = vsub.f32 2.0, %v1137
      %v1148 = vsub.f32 2.0, %v1138
      %v1149 = vsub.f32 2.0, %v1139
      %v1150 = vsub.f32 2.0, %v1140
      %v1151 = vsub.f32 2.0, %v1141
      %v1152 = vsub.f32 2.0, %v1142
      %v1153 = vsub.f32 2.0, %v1143
      %v1154 = vsub.f32 2.0, %v1144
      %v1155 = vsub.f32 2.0, %v1145
      %v1156 = vmul.f32 %v1126, %v1146
      %v1157 = vmul.f32 %v1127, %v1147
      %v1158 = vmul.f32 %v1128, %v1148
      %v1159 = vmul.f32 %v1129, %v1149
      %v1160 = vmul.f32 %v1130, %v1150
      %v1161 = vmul.f32 %v1131, %v1151
      %v1162 = vmul.f32 %v1132, %v1152
      %v1163 = vmul.f32 %v1133, %v1153
      %v1164 = vmul.f32 %v1134, %v1154
      %v1165 = vmul.f32 %v1135, %v1155
      %v1166 = vmul.f32 %v1156, 1.0614054
      %v1167 = vmul.f32 %v1157, 1.0614054
      %v1168 = vmul.f32 %v1158, 1.0614054
      %v1169 = vmul.f32 %v1159, 1.0614054
      %v1170 = vmul.f32 %v1160, 1.0614054
      %v1171 = vmul.f32 %v1161, 1.0614054
      %v1172 = vmul.f32 %v1162, 1.0614054
      %v1173 = vmul.f32 %v1163, 1.0614054
      %v1174 = vmul.f32 %v1164, 1.0614054
      %v1175 = vmul.f32 %v1165, 1.0614054
      %v1176 = vadd.f32 %v1166, -1.4531521
      %v1177 = vadd.f32 %v1167, -1.4531521
      %v1178 = vadd.f32 %v1168, -1.4531521
      %v1179 = vadd.f32 %v1169, -1.4531521
      %v1180 = vadd.f32 %v1170, -1.4531521
      %v1181 = vadd.f32 %v1171, -1.4531521
      %v1182 = vadd.f32 %v1172, -1.4531521
      %v1183 = vadd.f32 %v1173, -1.4531521
      %v1184 = vadd.f32 %v1174, -1.4531521
      %v1185 = vadd.f32 %v1175, -1.4531521
      %v1186 = vmul.f32 %v1176, %v1156
      %v1187 = vmul.f32 %v1177, %v1157
      %v1188 = vmul.f32 %v1178, %v1158
      %v1189 = vmul.f32 %v1179, %v1159
      %v1190 = vmul.f32 %v1180, %v1160
      %v1191 = vmul.f32 %v1181, %v1161
      %v1192 = vmul.f32 %v1182, %v1162
      %v1193 = vmul.f32 %v1183, %v1163
      %v1194 = vmul.f32 %v1184, %v1164
      %v1195 = vmul.f32 %v1185, %v1165
      %v1196 = vadd.f32 %v1186, 1.4214138
      %v1197 = vadd.f32 %v1187, 1.4214138
      %v1198 = vadd.f32 %v1188, 1.4214138
      %v1199 = vadd.f32 %v1189, 1.4214138
      %v1200 = vadd.f32 %v1190, 1.4214138
      %v1201 = vadd.f32 %v1191, 1.4214138
      %v1202 = vadd.f32 %v1192, 1.4214138
      %v1203 = vadd.f32 %v1193, 1.4214138
      %v1204 = vadd.f32 %v1194, 1.4214138
      %v1205 = vadd.f32 %v1195, 1.4214138
      %v1206 = vmul.f32 %v1196, %v1156
      %v1207 = vmul.f32 %v1197, %v1157
      %v1208 = vmul.f32 %v1198, %v1158
      %v1209 = vmul.f32 %v1199, %v1159
      %v1210 = vmul.f32 %v1200, %v1160
      %v1211 = vmul.f32 %v1201, %v1161
      %v1212 = vmul.f32 %v1202, %v1162
      %v1213 = vmul.f32 %v1203, %v1163
      %v1214 = vmul.f32 %v1204, %v1164
      %v1215 = vmul.f32 %v1205, %v1165
      %v1216 = vadd.f32 %v1206, -0.28449672
      %v1217 = vadd.f32 %v1207, -0.28449672
      %v1218 = vadd.f32 %v1208, -0.28449672
      %v1219 = vadd.f32 %v1209, -0.28449672
      %v1220 = vadd.f32 %v1210, -0.28449672
      %v1221 = vadd.f32 %v1211, -0.28449672
      %v1222 = vadd.f32 %v1212, -0.28449672
      %v1223 = vadd.f32 %v1213, -0.28449672
      %v1224 = vadd.f32 %v1214, -0.28449672
      %v1225 = vadd.f32 %v1215, -0.28449672
      %v1226 = vmul.f32 %v1216, %v1156
      %v1227 = vmul.f32 %v1217, %v1157
      %v1228 = vmul.f32 %v1218, %v1158
      %v1229 = vmul.f32 %v1219, %v1159
      %v1230 = vmul.f32 %v1220, %v1160
      %v1231 = vmul.f32 %v1221, %v1161
      %v1232 = vmul.f32 %v1222, %v1162
      %v1233 = vmul.f32 %v1223, %v1163
      %v1234 = vmul.f32 %v1224, %v1164
      %v1235 = vmul.f32 %v1225, %v1165
      %v1236 = vadd.f32 %v1226, 0.2548296
      %v1237 = vadd.f32 %v1227, 0.2548296
      %v1238 = vadd.f32 %v1228, 0.2548296
      %v1239 = vadd.f32 %v1229, 0.2548296
      %v1240 = vadd.f32 %v1230, 0.2548296
      %v1241 = vadd.f32 %v1231, 0.2548296
      %v1242 = vadd.f32 %v1232, 0.2548296
      %v1243 = vadd.f32 %v1233, 0.2548296
      %v1244 = vadd.f32 %v1234, 0.2548296
      %v1245 = vadd.f32 %v1235, 0.2548296
      %v1246 = vmul.f32 %v1236, %v1156
      %v1247 = vmul.f32 %v1237, %v1157
      %v1248 = vmul.f32 %v1238, %v1158
      %v1249 = vmul.f32 %v1239, %v1159
      %v1250 = vmul.f32 %v1240, %v1160
      %v1251 = vmul.f32 %v1241, %v1161
      %v1252 = vmul.f32 %v1242, %v1162
      %v1253 = vmul.f32 %v1243, %v1163
      %v1254 = vmul.f32 %v1244, %v1164
      %v1255 = vmul.f32 %v1245, %v1165
      %v1256 = vsub.f32 0.0, %v1096
      %v1257 = vsub.f32 0.0, %v1097
      %v1258 = vsub.f32 0.0, %v1098
      %v1259 = vsub.f32 0.0, %v1099
      %v1260 = vsub.f32 0.0, %v1100
      %v1261 = vsub.f32 0.0, %v1101
      %v1262 = vsub.f32 0.0, %v1102
      %v1263 = vsub.f32 0.0, %v1103
      %v1264 = vsub.f32 0.0, %v1104
      %v1265 = vsub.f32 0.0, %v1105
      %v1266 = vmul.f32 %v1256, %v1096
      %v1267 = vmul.f32 %v1257, %v1097
      %v1268 = vmul.f32 %v1258, %v1098
      %v1269 = vmul.f32 %v1259, %v1099
      %v1270 = vmul.f32 %v1260, %v1100
      %v1271 = vmul.f32 %v1261, %v1101
      %v1272 = vmul.f32 %v1262, %v1102
      %v1273 = vmul.f32 %v1263, %v1103
      %v1274 = vmul.f32 %v1264, %v1104
      %v1275 = vmul.f32 %v1265, %v1105
      %v1276 = vmul.f32 %v1266, 1.442695
      %v1277 = vpow.pop %v1276
      %v1278 = vmul.f32 %v1267, 1.442695
      %v1279 = vpow.pop %v1278
      %v1280 = vmul.f32 %v1268, 1.442695
      %v1281 = vpow.pop %v1280
      %v1282 = vmul.f32 %v1269, 1.442695
      %v1283 = vpow.pop %v1282
      %v1284 = vmul.f32 %v1270, 1.442695
      %v1285 = vpow.pop %v1284
      %v1286 = vmul.f32 %v1271, 1.442695
      %v1287 = vpow.pop %v1286
      %v1288 = vmul.f32 %v1272, 1.442695
      %v1289 = vpow.pop %v1288
      %v1290 = vmul.f32 %v1273, 1.442695
      %v1291 = vpow.pop %v1290
      %v1292 = vmul.f32 %v1274, 1.442695
      %v1293 = vpow.pop %v1292
      %v1294 = vmul.f32 %v1275, 1.442695
      %v1295 = vpow.pop %v1294
      %v1296 = vmul.f32 %v1246, %v1277
      %v1297 = vmul.f32 %v1247, %v1279
      %v1298 = vmul.f32 %v1248, %v1281
      %v1299 = vmul.f32 %v1249, %v1283
      %v1300 = vmul.f32 %v1250, %v1285
      %v1301 = vmul.f32 %v1251, %v1287
      %v1302 = vmul.f32 %v1252, %v1289
      %v1303 = vmul.f32 %v1253, %v1291
      %v1304 = vmul.f32 %v1254, %v1293
      %v1305 = vmul.f32 %v1255, %v1295
      %v1306 = vsub.f32 1.0, %v1296
      %v1307 = vsub.f32 1.0, %v1297
      %v1308 = vsub.f32 1.0, %v1298
      %v1309 = vsub.f32 1.0, %v1299
      %v1310 = vsub.f32 1.0, %v1300
      %v1311 = vsub.f32 1.0, %v1301
      %v1312 = vsub.f32 1.0, %v1302
      %v1313 = vsub.f32 1.0, %v1303
      %v1314 = vsub.f32 1.0, %v1304
      %v1315 = vsub.f32 1.0, %v1305
      %vm1316 = vcmp.lt.f32.partialorder %v1086, 0.0
      %vm1317 = vcmp.lt.f32.partialorder %v1087, 0.0
      %vm1318 = vcmp.lt.f32.partialorder %v1088, 0.0
      %vm1319 = vcmp.lt.f32.partialorder %v1089, 0.0
      %vm1320 = vcmp.lt.f32.partialorder %v1090, 0.0
      %vm1321 = vcmp.lt.f32.partialorder %v1091, 0.0
      %vm1322 = vcmp.lt.f32.partialorder %v1092, 0.0
      %vm1323 = vcmp.lt.f32.partialorder %v1093, 0.0
      %vm1324 = vcmp.lt.f32.partialorder %v1094, 0.0
      %vm1325 = vcmp.lt.f32.partialorder %v1095, 0.0
      %v1326 = vsub.f32 0.0, %v1306
      %v1327 = vsub.f32 0.0, %v1307
      %v1328 = vsub.f32 0.0, %v1308
      %v1329 = vsub.f32 0.0, %v1309
      %v1330 = vsub.f32 0.0, %v1310
      %v1331 = vsub.f32 0.0, %v1311
      %v1332 = vsub.f32 0.0, %v1312
      %v1333 = vsub.f32 0.0, %v1313
      %v1334 = vsub.f32 0.0, %v1314
      %v1335 = vsub.f32 0.0, %v1315
      %v1336 = vsel %vm1316, %v1326, %v1306
      %v1337 = vsel %vm1317, %v1327, %v1307
      %v1338 = vsel %vm1318, %v1328, %v1308
      %v1339 = vsel %vm1319, %v1329, %v1309
      %v1340 = vsel %vm1320, %v1330, %v1310
      %v1341 = vsel %vm1321, %v1331, %v1311
      %v1342 = vsel %vm1322, %v1332, %v1312
      %v1343 = vsel %vm1323, %v1333, %v1313
      %v1344 = vsel %vm1324, %v1334, %v1314
      %v1345 = vsel %vm1325, %v1335, %v1315
      %v1346 = vadd.f32 %v1336, 1.0
      %v1347 = vadd.f32 %v1337, 1.0
      %v1348 = vadd.f32 %v1338, 1.0
      %v1349 = vadd.f32 %v1339, 1.0
      %v1350 = vadd.f32 %v1340, 1.0
      %v1351 = vadd.f32 %v1341, 1.0
      %v1352 = vadd.f32 %v1342, 1.0
      %v1353 = vadd.f32 %v1343, 1.0
      %v1354 = vadd.f32 %v1344, 1.0
      %v1355 = vadd.f32 %v1345, 1.0
      %v1356 = vmul.f32 %v1076, %v1346
      %v1357 = vmul.f32 %v1077, %v1347
      %v1358 = vmul.f32 %v1078, %v1348
      %v1359 = vmul.f32 %v1079, %v1349
      %v1360 = vmul.f32 %v1080, %v1350
      %v1361 = vmul.f32 %v1081, %v1351
      %v1362 = vmul.f32 %v1082, %v1352
      %v1363 = vmul.f32 %v1083, %v1353
      %v1364 = vmul.f32 %v1084, %v1354
      %v1365 = vmul.f32 %v1085, %v1355
      %1366 = vrot.lane.b32.xlu0 %v1356, 127
      %v1367 = vpop.permute.xlu0 %1366
      %1368 = vrot.lane.b32.xlu0 %v1358, 127
      %v1369 = vpop.permute.xlu0 %1368
      %1370 = vrot.lane.b32.xlu0 %v1360, 127
      %v1371 = vpop.permute.xlu0 %1370
      %1372 = vrot.lane.b32.xlu0 %v1362, 127
      %v1373 = vpop.permute.xlu0 %1372
      %1374 = vrot.lane.b32.xlu0 %v1364, 127
      %v1375 = vpop.permute.xlu0 %1374
      %1376 = vrot.lane.b32.xlu0 %v1357, 127
      %v1377 = vpop.permute.xlu0 %1376
      %1378 = vrot.lane.b32.xlu0 %v1359, 127
      %v1379 = vpop.permute.xlu0 %1378
      %1380 = vrot.lane.b32.xlu0 %v1361, 127
      %v1381 = vpop.permute.xlu0 %1380
      %1382 = vrot.lane.b32.xlu0 %v1363, 127
      %v1383 = vpop.permute.xlu0 %1382
      %1384 = vrot.lane.b32.xlu0 %v1365, 127
      %v1385 = vpop.permute.xlu0 %1384
      %v1386 = vsel %vm437, %v1367, %v1377
      %v1387 = vsel %vm437, %v1369, %v1379
      %v1388 = vsel %vm437, %v1371, %v1381
      %v1389 = vsel %vm437, %v1373, %v1383
      %v1390 = vsel %vm437, %v1375, %v1385
      %v1391 = vsel %vm437, %v1377, %v1367
      %v1392 = vsel %vm437, %v1379, %v1369
      %v1393 = vsel %vm437, %v1381, %v1371
      %v1394 = vsel %vm437, %v1383, %v1373
      %v1395 = vsel %vm437, %v1385, %v1375
      %v1396 = vsel %vm453, 0.0, %v1386
      %v1397 = vsel %vm454, 0.0, %v1391
      %v1398 = vsel %vm453, 0.0, %v1387
      %v1399 = vsel %vm454, 0.0, %v1392
      %v1400 = vsel %vm453, 0.0, %v1388
      %v1401 = vsel %vm454, 0.0, %v1393
      %v1402 = vsel %vm453, 0.0, %v1389
      %v1403 = vsel %vm454, 0.0, %v1394
      %v1404 = vsel %vm453, 0.0, %v1390
      %v1405 = vsel %vm454, 0.0, %v1395
      %1406 = vrot.lane.b32.xlu0 %v1356, 1
      %v1407 = vpop.permute.xlu0 %1406
      %1408 = vrot.lane.b32.xlu0 %v1358, 1
      %v1409 = vpop.permute.xlu0 %1408
      %1410 = vrot.lane.b32.xlu0 %v1360, 1
      %v1411 = vpop.permute.xlu0 %1410
      %1412 = vrot.lane.b32.xlu0 %v1362, 1
      %v1413 = vpop.permute.xlu0 %1412
      %1414 = vrot.lane.b32.xlu0 %v1364, 1
      %v1415 = vpop.permute.xlu0 %1414
      %1416 = vrot.lane.b32.xlu0 %v1357, 1
      %v1417 = vpop.permute.xlu0 %1416
      %1418 = vrot.lane.b32.xlu0 %v1359, 1
      %v1419 = vpop.permute.xlu0 %1418
      %1420 = vrot.lane.b32.xlu0 %v1361, 1
      %v1421 = vpop.permute.xlu0 %1420
      %1422 = vrot.lane.b32.xlu0 %v1363, 1
      %v1423 = vpop.permute.xlu0 %1422
      %1424 = vrot.lane.b32.xlu0 %v1365, 1
      %v1425 = vpop.permute.xlu0 %1424
      %v1426 = vsel %vm492, %v1407, %v1417
      %v1427 = vsel %vm492, %v1409, %v1419
      %v1428 = vsel %vm492, %v1411, %v1421
      %v1429 = vsel %vm492, %v1413, %v1423
      %v1430 = vsel %vm492, %v1415, %v1425
      %v1431 = vsel %vm492, %v1417, %v1407
      %v1432 = vsel %vm492, %v1419, %v1409
      %v1433 = vsel %vm492, %v1421, %v1411
      %v1434 = vsel %vm492, %v1423, %v1413
      %v1435 = vsel %vm492, %v1425, %v1415
      %v1436 = vsel %vm508, 0.0, %v1431
      %v1437 = vsel %vm509, 0.0, %v1426
      %v1438 = vsel %vm508, 0.0, %v1432
      %v1439 = vsel %vm509, 0.0, %v1427
      %v1440 = vsel %vm508, 0.0, %v1433
      %v1441 = vsel %vm509, 0.0, %v1428
      %v1442 = vsel %vm508, 0.0, %v1434
      %v1443 = vsel %vm509, 0.0, %v1429
      %v1444 = vsel %vm508, 0.0, %v1435
      %v1445 = vsel %vm509, 0.0, %v1430
      %1446 = vrot.lane.b32.xlu0 %v1356, 112
      %v1447 = vpop.permute.xlu0 %1446
      %1448 = vrot.lane.b32.xlu0 %v1358, 112
      %v1449 = vpop.permute.xlu0 %1448
      %1450 = vrot.lane.b32.xlu0 %v1360, 112
      %v1451 = vpop.permute.xlu0 %1450
      %1452 = vrot.lane.b32.xlu0 %v1362, 112
      %v1453 = vpop.permute.xlu0 %1452
      %1454 = vrot.lane.b32.xlu0 %v1364, 112
      %v1455 = vpop.permute.xlu0 %1454
      %1456 = vrot.lane.b32.xlu0 %v1357, 112
      %v1457 = vpop.permute.xlu0 %1456
      %1458 = vrot.lane.b32.xlu0 %v1359, 112
      %v1459 = vpop.permute.xlu0 %1458
      %1460 = vrot.lane.b32.xlu0 %v1361, 112
      %v1461 = vpop.permute.xlu0 %1460
      %1462 = vrot.lane.b32.xlu0 %v1363, 112
      %v1463 = vpop.permute.xlu0 %1462
      %1464 = vrot.lane.b32.xlu0 %v1365, 112
      %v1465 = vpop.permute.xlu0 %1464
      %v1466 = vsel %vm528, %v1447, %v1457
      %v1467 = vsel %vm528, %v1449, %v1459
      %v1468 = vsel %vm528, %v1451, %v1461
      %v1469 = vsel %vm528, %v1453, %v1463
      %v1470 = vsel %vm528, %v1455, %v1465
      %v1471 = vsel %vm528, %v1457, %v1447
      %v1472 = vsel %vm528, %v1459, %v1449
      %v1473 = vsel %vm528, %v1461, %v1451
      %v1474 = vsel %vm528, %v1463, %v1453
      %v1475 = vsel %vm528, %v1465, %v1455
      %v1476 = vsel %vm801, 0.0, %v1466
      %v1477 = vsel %vm802, 0.0, %v1471
      %v1478 = vsel %vm801, 0.0, %v1467
      %v1479 = vsel %vm802, 0.0, %v1472
      %v1480 = vsel %vm801, 0.0, %v1468
      %v1481 = vsel %vm802, 0.0, %v1473
      %v1482 = vsel %vm801, 0.0, %v1469
      %v1483 = vsel %vm802, 0.0, %v1474
      %v1484 = vsel %vm801, 0.0, %v1470
      %v1485 = vsel %vm802, 0.0, %v1475
      %1486 = vrot.lane.b32.xlu0 %v1356, 16
      %v1487 = vpop.permute.xlu0 %1486
      %1488 = vrot.lane.b32.xlu0 %v1358, 16
      %v1489 = vpop.permute.xlu0 %1488
      %1490 = vrot.lane.b32.xlu0 %v1360, 16
      %v1491 = vpop.permute.xlu0 %1490
      %1492 = vrot.lane.b32.xlu0 %v1362, 16
      %v1493 = vpop.permute.xlu0 %1492
      %1494 = vrot.lane.b32.xlu0 %v1364, 16
      %v1495 = vpop.permute.xlu0 %1494
      %1496 = vrot.lane.b32.xlu0 %v1357, 16
      %v1497 = vpop.permute.xlu0 %1496
      %1498 = vrot.lane.b32.xlu0 %v1359, 16
      %v1499 = vpop.permute.xlu0 %1498
      %1500 = vrot.lane.b32.xlu0 %v1361, 16
      %v1501 = vpop.permute.xlu0 %1500
      %1502 = vrot.lane.b32.xlu0 %v1363, 16
      %v1503 = vpop.permute.xlu0 %1502
      %1504 = vrot.lane.b32.xlu0 %v1365, 16
      %v1505 = vpop.permute.xlu0 %1504
      %v1506 = vsel %vm399, %v1487, %v1497
      %v1507 = vsel %vm399, %v1489, %v1499
      %v1508 = vsel %vm399, %v1491, %v1501
      %v1509 = vsel %vm399, %v1493, %v1503
      %v1510 = vsel %vm399, %v1495, %v1505
      %v1511 = vsel %vm399, %v1497, %v1487
      %v1512 = vsel %vm399, %v1499, %v1489
      %v1513 = vsel %vm399, %v1501, %v1491
      %v1514 = vsel %vm399, %v1503, %v1493
      %v1515 = vsel %vm399, %v1505, %v1495
      %v1516 = vsel %vm829, 0.0, %v1511
      %v1517 = vsel %vm830, 0.0, %v1506
      %v1518 = vsel %vm829, 0.0, %v1512
      %v1519 = vsel %vm830, 0.0, %v1507
      %v1520 = vsel %vm829, 0.0, %v1513
      %v1521 = vsel %vm830, 0.0, %v1508
      %v1522 = vsel %vm829, 0.0, %v1514
      %v1523 = vsel %vm830, 0.0, %v1509
      %v1524 = vsel %vm829, 0.0, %v1515
      %v1525 = vsel %vm830, 0.0, %v1510
      %vm1526 = vcmp.eq.s32.totalorder %v728, 0
      %vm1527 = vcmp.eq.s32.totalorder %v729, 0
      %vm1528 = vcmp.eq.s32.totalorder %v730, 0
      %vm1529 = vcmp.eq.s32.totalorder %v731, 0
      %vm1530 = vcmp.eq.s32.totalorder %v732, 0
      %vm1531 = vcmp.eq.s32.totalorder %v728, 1
      %vm1532 = vcmp.eq.s32.totalorder %v729, 1
      %vm1533 = vcmp.eq.s32.totalorder %v730, 1
      %vm1534 = vcmp.eq.s32.totalorder %v731, 1
      %vm1535 = vcmp.eq.s32.totalorder %v732, 1
      %vm1536 = vcmp.eq.s32.totalorder %v728, 2
      %vm1537 = vcmp.eq.s32.totalorder %v729, 2
      %vm1538 = vcmp.eq.s32.totalorder %v730, 2
      %vm1539 = vcmp.eq.s32.totalorder %v731, 2
      %vm1540 = vcmp.eq.s32.totalorder %v732, 2
      %vm1541 = vcmp.eq.s32.totalorder %v728, 3
      %vm1542 = vcmp.eq.s32.totalorder %v729, 3
      %vm1543 = vcmp.eq.s32.totalorder %v730, 3
      %vm1544 = vcmp.eq.s32.totalorder %v731, 3
      %vm1545 = vcmp.eq.s32.totalorder %v732, 3
      %v1546 = vsel %vm1541, 1, 0
      %v1547 = vsel %vm1542, 1, 0
      %v1548 = vsel %vm1543, 1, 0
      %v1549 = vsel %vm1544, 1, 0
      %v1550 = vsel %vm1545, 1, 0
      %1551 = vset.pattern.permute.xlu0 0
      %1552 = vperm.xlu0 %1551, %v1546
      %v1553 = vpop.permute.xlu0 %1552
      %1554 = vset.pattern.permute.xlu0 0
      %1555 = vperm.xlu0 %1554, %v1547
      %v1556 = vpop.permute.xlu0 %1555
      %1557 = vset.pattern.permute.xlu0 0
      %1558 = vperm.xlu0 %1557, %v1548
      %v1559 = vpop.permute.xlu0 %1558
      %1560 = vset.pattern.permute.xlu0 0
      %1561 = vperm.xlu0 %1560, %v1549
      %v1562 = vpop.permute.xlu0 %1561
      %1563 = vset.pattern.permute.xlu0 0
      %1564 = vperm.xlu0 %1563, %v1550
      %v1565 = vpop.permute.xlu0 %1564
      %vm1566 = vcmp.eq.s32.totalorder %v1553, 1
      %vm1567 = vcmp.eq.s32.totalorder %v1556, 1
      %vm1568 = vcmp.eq.s32.totalorder %v1559, 1
      %vm1569 = vcmp.eq.s32.totalorder %v1562, 1
      %vm1570 = vcmp.eq.s32.totalorder %v1565, 1
      %v1571 = vsel %vm1566, %v1516, %v1356
      %v1572 = vsel %vm1566, %v1517, %v1357
      %v1573 = vsel %vm1567, %v1518, %v1358
      %v1574 = vsel %vm1567, %v1519, %v1359
      %v1575 = vsel %vm1568, %v1520, %v1360
      %v1576 = vsel %vm1568, %v1521, %v1361
      %v1577 = vsel %vm1569, %v1522, %v1362
      %v1578 = vsel %vm1569, %v1523, %v1363
      %v1579 = vsel %vm1570, %v1524, %v1364
      %v1580 = vsel %vm1570, %v1525, %v1365
      %v1581 = vsel %vm1536, 1, 0
      %v1582 = vsel %vm1537, 1, 0
      %v1583 = vsel %vm1538, 1, 0
      %v1584 = vsel %vm1539, 1, 0
      %v1585 = vsel %vm1540, 1, 0
      %1586 = vset.pattern.permute.xlu0 0
      %1587 = vperm.xlu0 %1586, %v1581
      %v1588 = vpop.permute.xlu0 %1587
      %1589 = vset.pattern.permute.xlu0 0
      %1590 = vperm.xlu0 %1589, %v1582
      %v1591 = vpop.permute.xlu0 %1590
      %1592 = vset.pattern.permute.xlu0 0
      %1593 = vperm.xlu0 %1592, %v1583
      %v1594 = vpop.permute.xlu0 %1593
      %1595 = vset.pattern.permute.xlu0 0
      %1596 = vperm.xlu0 %1595, %v1584
      %v1597 = vpop.permute.xlu0 %1596
      %1598 = vset.pattern.permute.xlu0 0
      %1599 = vperm.xlu0 %1598, %v1585
      %v1600 = vpop.permute.xlu0 %1599
      %vm1601 = vcmp.eq.s32.totalorder %v1588, 1
      %vm1602 = vcmp.eq.s32.totalorder %v1591, 1
      %vm1603 = vcmp.eq.s32.totalorder %v1594, 1
      %vm1604 = vcmp.eq.s32.totalorder %v1597, 1
      %vm1605 = vcmp.eq.s32.totalorder %v1600, 1
      %v1606 = vsel %vm1601, %v1476, %v1571
      %v1607 = vsel %vm1601, %v1477, %v1572
      %v1608 = vsel %vm1602, %v1478, %v1573
      %v1609 = vsel %vm1602, %v1479, %v1574
      %v1610 = vsel %vm1603, %v1480, %v1575
      %v1611 = vsel %vm1603, %v1481, %v1576
      %v1612 = vsel %vm1604, %v1482, %v1577
      %v1613 = vsel %vm1604, %v1483, %v1578
      %v1614 = vsel %vm1605, %v1484, %v1579
      %v1615 = vsel %vm1605, %v1485, %v1580
      %v1616 = vsel %vm1531, 1, 0
      %v1617 = vsel %vm1532, 1, 0
      %v1618 = vsel %vm1533, 1, 0
      %v1619 = vsel %vm1534, 1, 0
      %v1620 = vsel %vm1535, 1, 0
      %1621 = vset.pattern.permute.xlu0 0
      %1622 = vperm.xlu0 %1621, %v1616
      %v1623 = vpop.permute.xlu0 %1622
      %1624 = vset.pattern.permute.xlu0 0
      %1625 = vperm.xlu0 %1624, %v1617
      %v1626 = vpop.permute.xlu0 %1625
      %1627 = vset.pattern.permute.xlu0 0
      %1628 = vperm.xlu0 %1627, %v1618
      %v1629 = vpop.permute.xlu0 %1628
      %1630 = vset.pattern.permute.xlu0 0
      %1631 = vperm.xlu0 %1630, %v1619
      %v1632 = vpop.permute.xlu0 %1631
      %1633 = vset.pattern.permute.xlu0 0
      %1634 = vperm.xlu0 %1633, %v1620
      %v1635 = vpop.permute.xlu0 %1634
      %vm1636 = vcmp.eq.s32.totalorder %v1623, 1
      %vm1637 = vcmp.eq.s32.totalorder %v1626, 1
      %vm1638 = vcmp.eq.s32.totalorder %v1629, 1
      %vm1639 = vcmp.eq.s32.totalorder %v1632, 1
      %vm1640 = vcmp.eq.s32.totalorder %v1635, 1
      %v1641 = vsel %vm1636, %v1436, %v1606
      %v1642 = vsel %vm1636, %v1437, %v1607
      %v1643 = vsel %vm1637, %v1438, %v1608
      %v1644 = vsel %vm1637, %v1439, %v1609
      %v1645 = vsel %vm1638, %v1440, %v1610
      %v1646 = vsel %vm1638, %v1441, %v1611
      %v1647 = vsel %vm1639, %v1442, %v1612
      %v1648 = vsel %vm1639, %v1443, %v1613
      %v1649 = vsel %vm1640, %v1444, %v1614
      %v1650 = vsel %vm1640, %v1445, %v1615
      %v1651 = vsel %vm1526, 1, 0
      %v1652 = vsel %vm1527, 1, 0
      %v1653 = vsel %vm1528, 1, 0
      %v1654 = vsel %vm1529, 1, 0
      %v1655 = vsel %vm1530, 1, 0
      %1656 = vset.pattern.permute.xlu0 0
      %1657 = vperm.xlu0 %1656, %v1651
      %v1658 = vpop.permute.xlu0 %1657
      %1659 = vset.pattern.permute.xlu0 0
      %1660 = vperm.xlu0 %1659, %v1652
      %v1661 = vpop.permute.xlu0 %1660
      %1662 = vset.pattern.permute.xlu0 0
      %1663 = vperm.xlu0 %1662, %v1653
      %v1664 = vpop.permute.xlu0 %1663
      %1665 = vset.pattern.permute.xlu0 0
      %1666 = vperm.xlu0 %1665, %v1654
      %v1667 = vpop.permute.xlu0 %1666
      %1668 = vset.pattern.permute.xlu0 0
      %1669 = vperm.xlu0 %1668, %v1655
      %v1670 = vpop.permute.xlu0 %1669
      %vm1671 = vcmp.eq.s32.totalorder %v1658, 1
      %vm1672 = vcmp.eq.s32.totalorder %v1661, 1
      %vm1673 = vcmp.eq.s32.totalorder %v1664, 1
      %vm1674 = vcmp.eq.s32.totalorder %v1667, 1
      %vm1675 = vcmp.eq.s32.totalorder %v1670, 1
      %v1676 = vsel %vm1671, %v1396, %v1641
      %v1677 = vsel %vm1671, %v1397, %v1642
      %v1678 = vsel %vm1672, %v1398, %v1643
      %v1679 = vsel %vm1672, %v1399, %v1644
      %v1680 = vsel %vm1673, %v1400, %v1645
      %v1681 = vsel %vm1673, %v1401, %v1646
      %v1682 = vsel %vm1674, %v1402, %v1647
      %v1683 = vsel %vm1674, %v1403, %v1648
      %v1684 = vsel %vm1675, %v1404, %v1649
      %v1685 = vsel %vm1675, %v1405, %v1650
      %1687 = vset.pattern.permute.xlu0 0
      %1688 = vperm.xlu0 %1687, %v722
      %v1689 = vpop.permute.xlu0 %1688
      %1692 = vset.pattern.permute.xlu0 0
      %1693 = vperm.xlu0 %1692, %v723
      %v1694 = vpop.permute.xlu0 %1693
      %1697 = vset.pattern.permute.xlu0 0
      %1698 = vperm.xlu0 %1697, %v724
      %v1699 = vpop.permute.xlu0 %1698
      %vm1701 = vcmask 326656
      %v1703 = vsel %vm1701, %v719, 0
      %v1706 = vsel %vm1701, %v720, 0
      %v1709 = vsel %vm1701, %v721, 0
      %1711 = vmatprep.subr.mxu0 %v1677
      %1712 = vmatpush1.msra.mxu0 %v1676
      %1713 = vmatprep.subr.mxu0 %v1679
      %1714 = vmatpush1.msra.mxu0 %v1678
      %1715 = vmatprep.subr.mxu0 %v1681
      %1716 = vmatpush1.msra.mxu0 %v1680
      %1717 = vmatprep.subr.mxu0 %v1683
      %1718 = vmatpush1.msra.mxu0 %v1682
      %1719 = vmatprep.subr.mxu0 %v1685
      %1720 = vmatpush1.msra.mxu0 %v1684
      %1721 = vmatprep.subr.mxu0 0.0
      %1722 = vmatpush1.msra.mxu0 0.0
      %1723 = vmatprep.subr.mxu0 0.0
      %1724 = vmatpush1.msra.mxu0 0.0
      %1725 = vmatprep.subr.mxu0 0.0
      %1726 = vmatpush1.msra.mxu0 0.0
      %1727 = vmatprep.subr.mxu0 0.0
      %1728 = vmatpush1.msra.mxu0 0.0
      %1729 = vmatprep.subr.mxu0 0.0
      %1730 = vmatpush1.msra.mxu0 0.0
      %1731 = vmatprep.subr.mxu0 0.0
      %1732 = vmatpush1.msra.mxu0 0.0
      %1733 = vmatprep.subr.mxu0 0.0
      %1734 = vmatpush1.msra.mxu0 0.0
      %1735 = vmatprep.subr.mxu0 0.0
      %1736 = vmatpush1.msra.mxu0 0.0
      %1737 = vmatprep.subr.mxu0 0.0
      %1738 = vmatpush1.msra.mxu0 0.0
      %1739 = vmatprep.subr.mxu0 0.0
      %1740 = vmatpush1.msra.mxu0 0.0
      %1741 = vmatprep.subr.mxu0 0.0
      %1742 = vmatpush1.msra.mxu0 0.0
      %1743 = vmatprep.subr.mxu0 0.0
      %1744 = vmatpush1.msra.mxu0 0.0
      %1745 = vmatprep.subr.mxu0 0.0
      %1746 = vmatpush1.msra.mxu0 0.0
      %1747 = vmatprep.subr.mxu0 0.0
      %1748 = vmatpush1.msra.mxu0 0.0
      %1749 = vmatprep.subr.mxu0 0.0
      %1750 = vmatpush1.msra.mxu0 0.0
      %1751 = vmatprep.subr.mxu0 0.0
      %1752 = vmatpush1.msra.mxu0 0.0
      %1753 = vmatprep.subr.mxu0 0.0
      %1754 = vmatpush1.msra.mxu0 0.0
      %1755 = vmatprep.subr.mxu0 0.0
      %1756 = vmatpush1.msra.mxu0 0.0
      %1757 = vmatprep.subr.mxu0 0.0
      %1758 = vmatpush1.msra.mxu0 0.0
      %1759 = vmatprep.subr.mxu0 0.0
      %1760 = vmatpush1.msra.mxu0 0.0
      %1761 = vmatprep.subr.mxu0 0.0
      %1762 = vmatpush1.msra.mxu0 0.0
      %1763 = vmatprep.subr.mxu0 0.0
      %1764 = vmatpush1.msra.mxu0 0.0
      %1765 = vmatprep.subr.mxu0 0.0
      %1766 = vmatpush1.msra.mxu0 0.0
      %1767 = vmatprep.subr.mxu0 0.0
      %1768 = vmatpush1.msra.mxu0 0.0
      %1769 = vmatprep.subr.mxu0 0.0
      %1770 = vmatpush1.msra.mxu0 0.0
      %1771 = vmatprep.subr.mxu0 0.0
      %1772 = vmatpush1.msra.mxu0 0.0
      %1773 = vmatprep.subr.mxu0 0.0
      %1774 = vmatpush1.msra.mxu0 0.0
      %1775 = vmatprep.mubr.f32.mxu0 0.0
      %1776 = vmatmul.mubr.f32.gmra.mrb[0].mxu0 %v1703
      %v1777 = vpop.f32.mrb[0].mxu0
      %v1778 = vadd.f32 %v1689, %v1777
      %v1779 = vpop.f32.mrb[0].mxu0
      %v1780 = vadd.f32 %v1689, %v1779
      %1781 = vmatprep.mubr.f32.mxu0 0.0
      %1782 = vmatmul.mubr.f32.gmra.mrb[0].mxu0 %v1706
      %v1783 = vpop.f32.mrb[0].mxu0
      %v1784 = vadd.f32 %v1694, %v1783
      %v1785 = vpop.f32.mrb[0].mxu0
      %v1786 = vadd.f32 %v1694, %v1785
      %1787 = vmatprep.mubr.f32.mxu0 0.0
      %1788 = vmatmul.mubr.f32.gmra.mrb[0].mxu0 %v1709
      %v1789 = vpop.f32.mrb[0].mxu0
      %v1790 = vadd.f32 %v1699, %v1789
      %v1791 = vpop.f32.mrb[0].mxu0
      %v1792 = vadd.f32 %v1699, %v1791
      %1793 = vdwg.mxu0
      %v1794 = vadd.f32 %v703, %v1778
      %v1795 = vadd.f32 %v704, %v1780
      %v1796 = vadd.f32 %v705, %v1784
      %v1797 = vadd.f32 %v706, %v1786
      %v1798 = vadd.f32 %v707, %v1790
      %v1799 = vadd.f32 %v708, %v1792
      %1800 = vst [vmem:[%s386] sm:$0xff] %v1794
      %1801 = vst [vmem:[%s386 + $0x8] sm:$0xff] %v1795
      %1802 = vst [vmem:[%s386 + $0x10] sm:$0xff] %v1796
      %1803 = vst [vmem:[%s386 + $0x18] sm:$0xff] %v1797
      %1804 = vst [vmem:[%s386 + $0x20] sm:$0xf] %v1798
      %1805 = vst [vmem:[%s386 + $0x28] sm:$0xf] %v1799
      %p1806 = scmp.lt.s32.totalorder %s22, 1
      %s1807 = scalar_select %p1806, %s22, 1
      %s1808 = smul.addr %s1807, 6
      %s1809 = smul.addr %s1808, 8
      %s1810 = scalar_lea.vmem %s11, %s1809
      // Predicated region
      $region65: #{lgt_group_forward.5} parent=63 // pred_check
        %p1811 = pneg %p276
      $region66: #{lgt_group_forward.5} parent=63 // pred_check_branch
        %1813 = sbr.rel (%p1811) target = $region68
      $region67: #{lgt_group_forward.5} parent=63 // pred_region
        _
      $region68: #{lgt_group_forward.5} parent=63 // pred_fallthru
        _
    $region64: #{lgt_group_forward.5} parent=5 // pred_fallthru
      _
    %p1814 = scmp.le.s32.totalorder 2, %s17
    // Predicated region
    $region69: #{lgt_group_forward.5} parent=5 // pred_check
      %p1815 = pneg %p1814
    $region70: #{lgt_group_forward.5} parent=5 // pred_check_branch
      %1817 = sbr.rel (%p1815) target = $region72
    $region71: #{lgt_group_forward.5} parent=5 // pred_region
      %s1818 = ssub.s32 %s17, 2
      // Predicated region
      $region73: #{lgt_group_forward.5} parent=71 // pred_check
        %p1819 = pneg %p282
      $region74: #{lgt_group_forward.5} parent=71 // pred_check_branch
        %1821 = sbr.rel (%p1819) target = $region76
      $region75: #{lgt_group_forward.5} parent=71 // pred_region
        %p1822 = scmp.lt.s32.totalorder %s23, 1
        %s1823 = scalar_select %p1822, %s23, 1
        %s1824 = smul.addr %s1823, 6
        %s1825 = smul.addr %s1824, 8
        %s1826 = scalar_lea.vmem %s11, %s1825
      $region76: #{lgt_group_forward.5} parent=71 // pred_fallthru
        _
    $region72: #{lgt_group_forward.5} parent=5 // pred_fallthru
      _
  $region6: #{lgt_group_forward.5} parent=0 // loop_footer
    %s21 = sadd.s32 1, %s17
  $region7: #{lgt_group_forward.5} parent=0 // loop_footer_branch
    %16 = sbr.rel target = $region3
  $region8: #{lgt_group_forward.5} parent=0 // loop_exit
    _

// kernel: lgt_group_forward.3
$region0: #{lgt_group_forward.3}
  #allocation0 [shape = 'u32[]', space=smem, size = 0x4, offset = 0x4, fixed_abs, tag = 'smem constant byte address 0x4 - core index']
  #allocation1 [shape = 'u32[144,128]{1,0:T(1,128)}', space=vmem, size = 0x12000, scoped, tag = 'internal scratch']
  %s0 = inlined_call_operand.vmem [shape: f32[2,20,256], index: 0, kind: input, shape index: {}]
  %s1 = inlined_call_operand.vmem [shape: f32[40,20], index: 1, kind: input, shape index: {}]
  %s2 = inlined_call_operand.vmem [shape: f32[40,1], index: 2, kind: input, shape index: {}]
  %s3 = inlined_call_operand.vmem [shape: s32[1,256,1], index: 3, kind: input, shape index: {}]
  %s4 = inlined_call_operand.vmem [shape: s32[1,1,256], index: 4, kind: input, shape index: {}]
  %s5 = inlined_call_operand.vmem [shape: f32[20,20], index: 5, kind: input, shape index: {}]
  %s6 = inlined_call_operand.vmem [shape: f32[20,1], index: 6, kind: input, shape index: {}]
  %s7 = inlined_call_operand.vmem [shape: f32[40,20], index: 7, kind: input, shape index: {}]
  %s8 = inlined_call_operand.vmem [shape: f32[40,1], index: 8, kind: input, shape index: {}]
  %s9 = inlined_call_operand.vmem [shape: f32[20,40], index: 9, kind: input, shape index: {}]
  %s10 = inlined_call_operand.vmem [shape: f32[20,1], index: 10, kind: input, shape index: {}]
  %s11 = inlined_call_operand.vmem [shape: s32[1,256], index: 11, kind: input, shape index: {}]
  %s12 = inlined_call_operand.vmem [shape: s32[20,1], index: 12, kind: input, shape index: {}]
  %s13 = inlined_call_operand.vmem [shape: s32[40,1], index: 13, kind: input, shape index: {}]
  %s14 = inlined_call_operand.vmem [shape: f32[2,20,256], index: 14, kind: output, shape index: {}]
  %s15 = sld [smem:[#allocation0]]
  $region89: #{lgt_group_forward.3} parent=0
    _
  %s17 = ssub.s32 1, %s15
  %s18 = scalar_select 0, %s17, %s15
  loop: start=0, step=1, limit=4
  $region2: #{lgt_group_forward.3} parent=0 // loop_pre_header
    _
  $region3: #{lgt_group_forward.3} parent=0 // loop_header
    %s20 = sphi 0, %s24
    %p21 = scmp.ge.s32.totalorder %s20, 4
    %s30 = sphi 0, %s32
    %s33 = sphi 0, %s30
    %s34 = sphi 0, %s33
    %s50 = sphi 0, %s34
    %s54 = sphi 0, %s54
    %s56 = sphi 0, %s54
    %s57 = sphi 0, %s56
    %s71 = sphi 0, %s57
    %s75 = sphi 0, %s75
    %s77 = sphi 0, %s75
    %s78 = sphi 0, %s77
    %s92 = sphi 0, %s78
    %s96 = sphi 0, %s96
    %s98 = sphi 0, %s96
    %s99 = sphi 0, %s98
    %s113 = sphi 0, %s99
    %s117 = sphi 0, %s117
    %s119 = sphi 0, %s117
    %s120 = sphi 0, %s119
    %s134 = sphi 0, %s120
    %s138 = sphi 0, %s138
    %s140 = sphi 0, %s138
    %s141 = sphi 0, %s140
    %s155 = sphi 0, %s141
    %s159 = sphi 0, %s159
    %s161 = sphi 0, %s159
    %s162 = sphi 0, %s161
    %s176 = sphi 0, %s162
    %s180 = sphi 0, %s180
    %s182 = sphi 0, %s180
    %s183 = sphi 0, %s182
    %s197 = sphi 0, %s183
    %s201 = sphi 0, %s201
    %s203 = sphi 0, %s201
    %s204 = sphi 0, %s203
    %s218 = sphi 0, %s204
    %s222 = sphi 0, %s222
    %s224 = sphi 0, %s222
    %s225 = sphi 0, %s224
    %s239 = sphi 0, %s225
    %s243 = sphi 0, %s243
    %s245 = sphi 0, %s243
    %s246 = sphi 0, %s245
    %s260 = sphi 0, %s246
    %s264 = sphi 0, %s264
    %s266 = sphi 0, %s264
    %s267 = sphi 0, %s266
    %s281 = sphi 0, %s267
    %s285 = sphi 0, %s285
    %s287 = sphi 0, %s285
    %s288 = sphi 0, %s287
    %s302 = sphi 0, %s288
    %s306 = sphi 0, %s306
    %s308 = sphi 0, %s306
    %s309 = sphi 0, %s308
    %s323 = sphi 0, %s309
    %s329 = sphi 0, %s331
    %s332 = sphi 0, %s329
    %s333 = sphi 0, %s332
    %s349 = sphi 0, %s333
  $region4: #{lgt_group_forward.3} parent=0 // loop_header_branch
    %23 = sbr.rel (%p21) target = $region8
  $region5: #{lgt_group_forward.3} parent=0 // loop_body
    %s25 = ssub.s32 %s20, 1
    %s26 = ssub.s32 %s20, 2
    %s27 = sadd.s32 %s20, 1
    %s28 = ssub.s32 %s20, %s27
    %p29 = scmp.eq.s32.totalorder %s28, 0
    %s31 = sadd.s32 %s30, 1
    %s32 = scalar_select %p29, %s30, %s31
    %p35 = pneg %p29
    %p36 = scmp.eq.s32.totalorder %s20, 1
    %p37 = por %p35, %p36
    %p38 = scmp.ne.s32.totalorder %s30, %s33
    %p39 = scmp.eq.s32.totalorder %s20, 0
    %p40 = por %p38, %p39
    %p41 = scmp.ne.s32.totalorder %s30, %s33
    %p42 = scmp.eq.s32.totalorder %s25, 1
    %p43 = por %p41, %p42
    %p44 = scmp.ne.s32.totalorder %s33, %s34
    %p45 = scmp.eq.s32.totalorder %s25, 0
    %p46 = por %p44, %p45
    %p47 = scmp.ne.s32.totalorder %s33, %s34
    %p48 = scmp.eq.s32.totalorder %s26, 1
    %p49 = por %p47, %p48
    %p51 = scmp.ne.s32.totalorder %s34, %s50
    %p52 = scmp.eq.s32.totalorder %s26, 0
    %p53 = por %p51, %p52
    %s55 = sadd.s32 %s54, 1
    %p58 = scmp.eq.s32.totalorder %s20, 1
    %p59 = scmp.ne.s32.totalorder %s54, %s56
    %p60 = scmp.eq.s32.totalorder %s20, 0
    %p61 = por %p59, %p60
    %p62 = scmp.ne.s32.totalorder %s54, %s56
    %p63 = scmp.eq.s32.totalorder %s25, 1
    %p64 = por %p62, %p63
    %p65 = scmp.ne.s32.totalorder %s56, %s57
    %p66 = scmp.eq.s32.totalorder %s25, 0
    %p67 = por %p65, %p66
    %p68 = scmp.ne.s32.totalorder %s56, %s57
    %p69 = scmp.eq.s32.totalorder %s26, 1
    %p70 = por %p68, %p69
    %p72 = scmp.ne.s32.totalorder %s57, %s71
    %p73 = scmp.eq.s32.totalorder %s26, 0
    %p74 = por %p72, %p73
    %s76 = sadd.s32 %s75, 1
    %p79 = scmp.eq.s32.totalorder %s20, 1
    %p80 = scmp.ne.s32.totalorder %s75, %s77
    %p81 = scmp.eq.s32.totalorder %s20, 0
    %p82 = por %p80, %p81
    %p83 = scmp.ne.s32.totalorder %s75, %s77
    %p84 = scmp.eq.s32.totalorder %s25, 1
    %p85 = por %p83, %p84
    %p86 = scmp.ne.s32.totalorder %s77, %s78
    %p87 = scmp.eq.s32.totalorder %s25, 0
    %p88 = por %p86, %p87
    %p89 = scmp.ne.s32.totalorder %s77, %s78
    %p90 = scmp.eq.s32.totalorder %s26, 1
    %p91 = por %p89, %p90
    %p93 = scmp.ne.s32.totalorder %s78, %s92
    %p94 = scmp.eq.s32.totalorder %s26, 0
    %p95 = por %p93, %p94
    %s97 = sadd.s32 %s96, 1
    %p100 = scmp.eq.s32.totalorder %s20, 1
    %p101 = scmp.ne.s32.totalorder %s96, %s98
    %p102 = scmp.eq.s32.totalorder %s20, 0
    %p103 = por %p101, %p102
    %p104 = scmp.ne.s32.totalorder %s96, %s98
    %p105 = scmp.eq.s32.totalorder %s25, 1
    %p106 = por %p104, %p105
    %p107 = scmp.ne.s32.totalorder %s98, %s99
    %p108 = scmp.eq.s32.totalorder %s25, 0
    %p109 = por %p107, %p108
    %p110 = scmp.ne.s32.totalorder %s98, %s99
    %p111 = scmp.eq.s32.totalorder %s26, 1
    %p112 = por %p110, %p111
    %p114 = scmp.ne.s32.totalorder %s99, %s113
    %p115 = scmp.eq.s32.totalorder %s26, 0
    %p116 = por %p114, %p115
    %s118 = sadd.s32 %s117, 1
    %p121 = scmp.eq.s32.totalorder %s20, 1
    %p122 = scmp.ne.s32.totalorder %s117, %s119
    %p123 = scmp.eq.s32.totalorder %s20, 0
    %p124 = por %p122, %p123
    %p125 = scmp.ne.s32.totalorder %s117, %s119
    %p126 = scmp.eq.s32.totalorder %s25, 1
    %p127 = por %p125, %p126
    %p128 = scmp.ne.s32.totalorder %s119, %s120
    %p129 = scmp.eq.s32.totalorder %s25, 0
    %p130 = por %p128, %p129
    %p131 = scmp.ne.s32.totalorder %s119, %s120
    %p132 = scmp.eq.s32.totalorder %s26, 1
    %p133 = por %p131, %p132
    %p135 = scmp.ne.s32.totalorder %s120, %s134
    %p136 = scmp.eq.s32.totalorder %s26, 0
    %p137 = por %p135, %p136
    %s139 = sadd.s32 %s138, 1
    %p142 = scmp.eq.s32.totalorder %s20, 1
    %p143 = scmp.ne.s32.totalorder %s138, %s140
    %p144 = scmp.eq.s32.totalorder %s20, 0
    %p145 = por %p143, %p144
    %p146 = scmp.ne.s32.totalorder %s138, %s140
    %p147 = scmp.eq.s32.totalorder %s25, 1
    %p148 = por %p146, %p147
    %p149 = scmp.ne.s32.totalorder %s140, %s141
    %p150 = scmp.eq.s32.totalorder %s25, 0
    %p151 = por %p149, %p150
    %p152 = scmp.ne.s32.totalorder %s140, %s141
    %p153 = scmp.eq.s32.totalorder %s26, 1
    %p154 = por %p152, %p153
    %p156 = scmp.ne.s32.totalorder %s141, %s155
    %p157 = scmp.eq.s32.totalorder %s26, 0
    %p158 = por %p156, %p157
    %s160 = sadd.s32 %s159, 1
    %p163 = scmp.eq.s32.totalorder %s20, 1
    %p164 = scmp.ne.s32.totalorder %s159, %s161
    %p165 = scmp.eq.s32.totalorder %s20, 0
    %p166 = por %p164, %p165
    %p167 = scmp.ne.s32.totalorder %s159, %s161
    %p168 = scmp.eq.s32.totalorder %s25, 1
    %p169 = por %p167, %p168
    %p170 = scmp.ne.s32.totalorder %s161, %s162
    %p171 = scmp.eq.s32.totalorder %s25, 0
    %p172 = por %p170, %p171
    %p173 = scmp.ne.s32.totalorder %s161, %s162
    %p174 = scmp.eq.s32.totalorder %s26, 1
    %p175 = por %p173, %p174
    %p177 = scmp.ne.s32.totalorder %s162, %s176
    %p178 = scmp.eq.s32.totalorder %s26, 0
    %p179 = por %p177, %p178
    %s181 = sadd.s32 %s180, 1
    %p184 = scmp.eq.s32.totalorder %s20, 1
    %p185 = scmp.ne.s32.totalorder %s180, %s182
    %p186 = scmp.eq.s32.totalorder %s20, 0
    %p187 = por %p185, %p186
    %p188 = scmp.ne.s32.totalorder %s180, %s182
    %p189 = scmp.eq.s32.totalorder %s25, 1
    %p190 = por %p188, %p189
    %p191 = scmp.ne.s32.totalorder %s182, %s183
    %p192 = scmp.eq.s32.totalorder %s25, 0
    %p193 = por %p191, %p192
    %p194 = scmp.ne.s32.totalorder %s182, %s183
    %p195 = scmp.eq.s32.totalorder %s26, 1
    %p196 = por %p194, %p195
    %p198 = scmp.ne.s32.totalorder %s183, %s197
    %p199 = scmp.eq.s32.totalorder %s26, 0
    %p200 = por %p198, %p199
    %s202 = sadd.s32 %s201, 1
    %p205 = scmp.eq.s32.totalorder %s20, 1
    %p206 = scmp.ne.s32.totalorder %s201, %s203
    %p207 = scmp.eq.s32.totalorder %s20, 0
    %p208 = por %p206, %p207
    %p209 = scmp.ne.s32.totalorder %s201, %s203
    %p210 = scmp.eq.s32.totalorder %s25, 1
    %p211 = por %p209, %p210
    %p212 = scmp.ne.s32.totalorder %s203, %s204
    %p213 = scmp.eq.s32.totalorder %s25, 0
    %p214 = por %p212, %p213
    %p215 = scmp.ne.s32.totalorder %s203, %s204
    %p216 = scmp.eq.s32.totalorder %s26, 1
    %p217 = por %p215, %p216
    %p219 = scmp.ne.s32.totalorder %s204, %s218
    %p220 = scmp.eq.s32.totalorder %s26, 0
    %p221 = por %p219, %p220
    %s223 = sadd.s32 %s222, 1
    %p226 = scmp.eq.s32.totalorder %s20, 1
    %p227 = scmp.ne.s32.totalorder %s222, %s224
    %p228 = scmp.eq.s32.totalorder %s20, 0
    %p229 = por %p227, %p228
    %p230 = scmp.ne.s32.totalorder %s222, %s224
    %p231 = scmp.eq.s32.totalorder %s25, 1
    %p232 = por %p230, %p231
    %p233 = scmp.ne.s32.totalorder %s224, %s225
    %p234 = scmp.eq.s32.totalorder %s25, 0
    %p235 = por %p233, %p234
    %p236 = scmp.ne.s32.totalorder %s224, %s225
    %p237 = scmp.eq.s32.totalorder %s26, 1
    %p238 = por %p236, %p237
    %p240 = scmp.ne.s32.totalorder %s225, %s239
    %p241 = scmp.eq.s32.totalorder %s26, 0
    %p242 = por %p240, %p241
    %s244 = sadd.s32 %s243, 1
    %p247 = scmp.eq.s32.totalorder %s20, 1
    %p248 = scmp.ne.s32.totalorder %s243, %s245
    %p249 = scmp.eq.s32.totalorder %s20, 0
    %p250 = por %p248, %p249
    %p251 = scmp.ne.s32.totalorder %s243, %s245
    %p252 = scmp.eq.s32.totalorder %s25, 1
    %p253 = por %p251, %p252
    %p254 = scmp.ne.s32.totalorder %s245, %s246
    %p255 = scmp.eq.s32.totalorder %s25, 0
    %p256 = por %p254, %p255
    %p257 = scmp.ne.s32.totalorder %s245, %s246
    %p258 = scmp.eq.s32.totalorder %s26, 1
    %p259 = por %p257, %p258
    %p261 = scmp.ne.s32.totalorder %s246, %s260
    %p262 = scmp.eq.s32.totalorder %s26, 0
    %p263 = por %p261, %p262
    %s265 = sadd.s32 %s264, 1
    %p268 = scmp.eq.s32.totalorder %s20, 1
    %p269 = scmp.ne.s32.totalorder %s264, %s266
    %p270 = scmp.eq.s32.totalorder %s20, 0
    %p271 = por %p269, %p270
    %p272 = scmp.ne.s32.totalorder %s264, %s266
    %p273 = scmp.eq.s32.totalorder %s25, 1
    %p274 = por %p272, %p273
    %p275 = scmp.ne.s32.totalorder %s266, %s267
    %p276 = scmp.eq.s32.totalorder %s25, 0
    %p277 = por %p275, %p276
    %p278 = scmp.ne.s32.totalorder %s266, %s267
    %p279 = scmp.eq.s32.totalorder %s26, 1
    %p280 = por %p278, %p279
    %p282 = scmp.ne.s32.totalorder %s267, %s281
    %p283 = scmp.eq.s32.totalorder %s26, 0
    %p284 = por %p282, %p283
    %s286 = sadd.s32 %s285, 1
    %p289 = scmp.eq.s32.totalorder %s20, 1
    %p290 = scmp.ne.s32.totalorder %s285, %s287
    %p291 = scmp.eq.s32.totalorder %s20, 0
    %p292 = por %p290, %p291
    %p293 = scmp.ne.s32.totalorder %s285, %s287
    %p294 = scmp.eq.s32.totalorder %s25, 1
    %p295 = por %p293, %p294
    %p296 = scmp.ne.s32.totalorder %s287, %s288
    %p297 = scmp.eq.s32.totalorder %s25, 0
    %p298 = por %p296, %p297
    %p299 = scmp.ne.s32.totalorder %s287, %s288
    %p300 = scmp.eq.s32.totalorder %s26, 1
    %p301 = por %p299, %p300
    %p303 = scmp.ne.s32.totalorder %s288, %s302
    %p304 = scmp.eq.s32.totalorder %s26, 0
    %p305 = por %p303, %p304
    %s307 = sadd.s32 %s306, 1
    %p310 = scmp.eq.s32.totalorder %s20, 1
    %p311 = scmp.ne.s32.totalorder %s306, %s308
    %p312 = scmp.eq.s32.totalorder %s20, 0
    %p313 = por %p311, %p312
    %p314 = scmp.ne.s32.totalorder %s306, %s308
    %p315 = scmp.eq.s32.totalorder %s25, 1
    %p316 = por %p314, %p315
    %p317 = scmp.ne.s32.totalorder %s308, %s309
    %p318 = scmp.eq.s32.totalorder %s25, 0
    %p319 = por %p317, %p318
    %p320 = scmp.ne.s32.totalorder %s308, %s309
    %p321 = scmp.eq.s32.totalorder %s26, 1
    %p322 = por %p320, %p321
    %p324 = scmp.ne.s32.totalorder %s309, %s323
    %p325 = scmp.eq.s32.totalorder %s26, 0
    %p326 = por %p324, %p325
    %s327 = ssub.s32 %s20, %s27
    %p328 = scmp.eq.s32.totalorder %s327, 0
    %s330 = sadd.s32 %s329, 1
    %s331 = scalar_select %p328, %s329, %s330
    %p334 = pneg %p328
    %p335 = scmp.eq.s32.totalorder %s20, 1
    %p336 = por %p334, %p335
    %p337 = scmp.ne.s32.totalorder %s329, %s332
    %p338 = scmp.eq.s32.totalorder %s20, 0
    %p339 = por %p337, %p338
    %p340 = scmp.ne.s32.totalorder %s329, %s332
    %p341 = scmp.eq.s32.totalorder %s25, 1
    %p342 = por %p340, %p341
    %p343 = scmp.ne.s32.totalorder %s332, %s333
    %p344 = scmp.eq.s32.totalorder %s25, 0
    %p345 = por %p343, %p344
    %p346 = scmp.ne.s32.totalorder %s332, %s333
    %p347 = scmp.eq.s32.totalorder %s26, 1
    %p348 = por %p346, %p347
    %p350 = scmp.ne.s32.totalorder %s333, %s349
    %p351 = scmp.eq.s32.totalorder %s26, 0
    %p352 = por %p350, %p351
    %p353 = scmp.le.s32.totalorder 1, %s20
    %p354 = scmp.lt.s32.totalorder %s20, 3
    %p355 = pnand %p353, %p354
    %p356 = pneg %p355
    // Predicated region
    $region9: #{lgt_group_forward.3} parent=5 // pred_check
      _
    $region10: #{lgt_group_forward.3} parent=5 // pred_check_branch
      %358 = sbr.rel (%p355) target = $region12
    $region11: #{lgt_group_forward.3} parent=5 // pred_region
      %s359 = ssub.s32 %s20, 1
      // Predicated region
      $region13: #{lgt_group_forward.3} parent=11 // pred_check
        %p360 = pneg %p67
      $region14: #{lgt_group_forward.3} parent=11 // pred_check_branch
        %362 = sbr.rel (%p360) target = $region16
      $region15: #{lgt_group_forward.3} parent=11 // pred_region
        _
      $region16: #{lgt_group_forward.3} parent=11 // pred_fallthru
        _
      // Predicated region
      $region17: #{lgt_group_forward.3} parent=11 // pred_check
        %p363 = pneg %p88
      $region18: #{lgt_group_forward.3} parent=11 // pred_check_branch
        %365 = sbr.rel (%p363) target = $region20
      $region19: #{lgt_group_forward.3} parent=11 // pred_region
        _
      $region20: #{lgt_group_forward.3} parent=11 // pred_fallthru
        _
      // Predicated region
      $region21: #{lgt_group_forward.3} parent=11 // pred_check
        %p366 = pneg %p109
      $region22: #{lgt_group_forward.3} parent=11 // pred_check_branch
        %368 = sbr.rel (%p366) target = $region24
      $region23: #{lgt_group_forward.3} parent=11 // pred_region
        _
      $region24: #{lgt_group_forward.3} parent=11 // pred_fallthru
        _
      // Predicated region
      $region25: #{lgt_group_forward.3} parent=11 // pred_check
        %p369 = pneg %p130
      $region26: #{lgt_group_forward.3} parent=11 // pred_check_branch
        %371 = sbr.rel (%p369) target = $region28
      $region27: #{lgt_group_forward.3} parent=11 // pred_region
        _
      $region28: #{lgt_group_forward.3} parent=11 // pred_fallthru
        _
      // Predicated region
      $region29: #{lgt_group_forward.3} parent=11 // pred_check
        %p372 = pneg %p151
      $region30: #{lgt_group_forward.3} parent=11 // pred_check_branch
        %374 = sbr.rel (%p372) target = $region32
      $region31: #{lgt_group_forward.3} parent=11 // pred_region
        _
      $region32: #{lgt_group_forward.3} parent=11 // pred_fallthru
        _
      // Predicated region
      $region33: #{lgt_group_forward.3} parent=11 // pred_check
        %p375 = pneg %p172
      $region34: #{lgt_group_forward.3} parent=11 // pred_check_branch
        %377 = sbr.rel (%p375) target = $region36
      $region35: #{lgt_group_forward.3} parent=11 // pred_region
        _
      $region36: #{lgt_group_forward.3} parent=11 // pred_fallthru
        _
      // Predicated region
      $region37: #{lgt_group_forward.3} parent=11 // pred_check
        %p378 = pneg %p193
      $region38: #{lgt_group_forward.3} parent=11 // pred_check_branch
        %380 = sbr.rel (%p378) target = $region40
      $region39: #{lgt_group_forward.3} parent=11 // pred_region
        _
      $region40: #{lgt_group_forward.3} parent=11 // pred_fallthru
        _
      // Predicated region
      $region41: #{lgt_group_forward.3} parent=11 // pred_check
        %p381 = pneg %p214
      $region42: #{lgt_group_forward.3} parent=11 // pred_check_branch
        %383 = sbr.rel (%p381) target = $region44
      $region43: #{lgt_group_forward.3} parent=11 // pred_region
        _
      $region44: #{lgt_group_forward.3} parent=11 // pred_fallthru
        _
      // Predicated region
      $region45: #{lgt_group_forward.3} parent=11 // pred_check
        %p384 = pneg %p235
      $region46: #{lgt_group_forward.3} parent=11 // pred_check_branch
        %386 = sbr.rel (%p384) target = $region48
      $region47: #{lgt_group_forward.3} parent=11 // pred_region
        _
      $region48: #{lgt_group_forward.3} parent=11 // pred_fallthru
        _
      // Predicated region
      $region49: #{lgt_group_forward.3} parent=11 // pred_check
        %p387 = pneg %p256
      $region50: #{lgt_group_forward.3} parent=11 // pred_check_branch
        %389 = sbr.rel (%p387) target = $region52
      $region51: #{lgt_group_forward.3} parent=11 // pred_region
        _
      $region52: #{lgt_group_forward.3} parent=11 // pred_fallthru
        _
      // Predicated region
      $region53: #{lgt_group_forward.3} parent=11 // pred_check
        %p390 = pneg %p277
      $region54: #{lgt_group_forward.3} parent=11 // pred_check_branch
        %392 = sbr.rel (%p390) target = $region56
      $region55: #{lgt_group_forward.3} parent=11 // pred_region
        _
      $region56: #{lgt_group_forward.3} parent=11 // pred_fallthru
        _
      // Predicated region
      $region57: #{lgt_group_forward.3} parent=11 // pred_check
        %p393 = pneg %p298
      $region58: #{lgt_group_forward.3} parent=11 // pred_check_branch
        %395 = sbr.rel (%p393) target = $region60
      $region59: #{lgt_group_forward.3} parent=11 // pred_region
        _
      $region60: #{lgt_group_forward.3} parent=11 // pred_fallthru
        _
      // Predicated region
      $region61: #{lgt_group_forward.3} parent=11 // pred_check
        %p396 = pneg %p319
      $region62: #{lgt_group_forward.3} parent=11 // pred_check_branch
        %398 = sbr.rel (%p396) target = $region64
      $region63: #{lgt_group_forward.3} parent=11 // pred_region
        _
      $region64: #{lgt_group_forward.3} parent=11 // pred_fallthru
        _
    $region12: #{lgt_group_forward.3} parent=5 // pred_fallthru
      _
    %p399 = scmp.lt.s32.totalorder %s20, 2
    // Predicated region
    $region65: #{lgt_group_forward.3} parent=5 // pred_check
      %p400 = pneg %p399
    $region66: #{lgt_group_forward.3} parent=5 // pred_check_branch
      %402 = sbr.rel (%p400) target = $region68
    $region67: #{lgt_group_forward.3} parent=5 // pred_region
      // Predicated region
      $region69: #{lgt_group_forward.3} parent=67 // pred_check
        %p403 = pneg %p40
      $region70: #{lgt_group_forward.3} parent=67 // pred_check_branch
        %405 = sbr.rel (%p403) target = $region72
      $region71: #{lgt_group_forward.3} parent=67 // pred_region
        %p406 = scmp.lt.s32.totalorder %s20, 1
        %s407 = scalar_select %p406, %s20, 1
        %s408 = smul.addr %s407, 6
        %s409 = smul.addr %s408, 8
        %s410 = scalar_lea.vmem %s0, %s409
      $region72: #{lgt_group_forward.3} parent=67 // pred_fallthru
        _
    $region68: #{lgt_group_forward.3} parent=5 // pred_fallthru
      _
    %p411 = scmp.le.s32.totalorder 1, %s20
    %p412 = scmp.lt.s32.totalorder %s20, 3
    %p413 = pnand %p411, %p412
    %p414 = pneg %p413
    // Predicated region
    $region73: #{lgt_group_forward.3} parent=5 // pred_check
      _
    $region74: #{lgt_group_forward.3} parent=5 // pred_check_branch
      %416 = sbr.rel (%p413) target = $region76
    $region75: #{lgt_group_forward.3} parent=5 // pred_region
      %s417 = ssub.s32 %s20, 1
      %p418 = scmp.lt.s32.totalorder %s25, 1
      %s419 = scalar_select %p418, %s25, 1
      %s420 = smul.addr %s419, 6
      %s421 = smul.addr %s420, 8
      %s422 = scalar_lea.vmem %s0, %s421
      %p423 = pneg %p46
      %p424 = pneg %p43
      %p425 = pneg %p67
      %p426 = pneg %p64
      %p427 = pneg %p88
      %p428 = pneg %p85
      %p429 = pneg %p109
      %p430 = pneg %p106
      %p431 = pneg %p130
      %p432 = pneg %p127
      %p433 = pneg %p151
      %p434 = pneg %p148
      %p435 = pneg %p172
      %p436 = pneg %p169
      %p437 = pneg %p193
      %p438 = pneg %p190
      %p439 = pneg %p214
      %p440 = pneg %p211
      %p441 = pneg %p235
      %p442 = pneg %p232
      %p443 = pneg %p256
      %p444 = pneg %p253
      %p445 = pneg %p277
      %p446 = pneg %p274
      %p447 = pneg %p298
      %p448 = pneg %p295
      %p449 = pneg %p319
      %p450 = pneg %p316
      %p451 = pneg %p345
      %p452 = pneg %p342
      %p453 = scmp.lt.s32.totalorder %s25, 1
      %s454 = scalar_select %p453, %s25, 1
      %s455 = smul.addr %s454, 6
      %s456 = smul.addr %s455, 8
      %s457 = scalar_lea.vmem %s14, %s456
      %p458 = scmp.lt.s32.totalorder %s25, 1
      %s459 = scalar_select %p458, %s25, 1
      %s460 = smul.addr %s459, 6
      %s461 = smul.addr %s460, 8
      %s462 = scalar_lea.vmem %s0, %s461
      %p463 = scmp.lt.s32.totalorder %s25, 1
      %s464 = scalar_select %p463, %s25, 1
      %s465 = smul.addr %s464, 6
      %s466 = smul.addr %s465, 8
      %s467 = scalar_lea.vmem %s14, %s466
      %v468 = vld [vmem:[%s462] sm:$0xff]
      %v469 = vld [vmem:[%s462 + $0x8] sm:$0xff]
      %v470 = vld [vmem:[%s462 + $0x10] sm:$0xff]
      %v471 = vld [vmem:[%s462 + $0x18] sm:$0xff]
      %v472 = vld [vmem:[%s462 + $0x20] sm:$0xf]
      %v473 = vld [vmem:[%s462 + $0x28] sm:$0xf]
      %v474 = vld [vmem:[%s1] sm:$0xff]
      %v475 = vld [vmem:[%s1 + $0x8] sm:$0xff]
      %v476 = vld [vmem:[%s1 + $0x10] sm:$0xff]
      %v477 = vld [vmem:[%s1 + $0x18] sm:$0xff]
      %v478 = vld [vmem:[%s1 + $0x20] sm:$0xff]
      %v479 = vld [vmem:[%s2] sm:$0xff]
      %v480 = vld [vmem:[%s2 + $0x8] sm:$0xff]
      %v481 = vld [vmem:[%s2 + $0x10] sm:$0xff]
      %v482 = vld [vmem:[%s2 + $0x18] sm:$0xff]
      %v483 = vld [vmem:[%s2 + $0x20] sm:$0xff]
      %485 = vset.pattern.permute.xlu0 0
      %486 = vperm.xlu0 %485, %v479
      %v487 = vpop.permute.xlu0 %486
      %490 = vset.pattern.permute.xlu0 0
      %491 = vperm.xlu0 %490, %v480
      %v492 = vpop.permute.xlu0 %491
      %495 = vset.pattern.permute.xlu0 0
      %496 = vperm.xlu0 %495, %v481
      %v497 = vpop.permute.xlu0 %496
      %500 = vset.pattern.permute.xlu0 0
      %501 = vperm.xlu0 %500, %v482
      %v502 = vpop.permute.xlu0 %501
      %505 = vset.pattern.permute.xlu0 0
      %506 = vperm.xlu0 %505, %v483
      %v507 = vpop.permute.xlu0 %506
      %vm509 = vcmask 162816
      %v511 = vsel %vm509, %v474, 0
      %v514 = vsel %vm509, %v475, 0
      %v517 = vsel %vm509, %v476, 0
      %v520 = vsel %vm509, %v477, 0
      %v523 = vsel %vm509, %v478, 0
      %vm525 = vcmask 1043456
      %v527 = vsel %vm525, %v472, 0
      %v530 = vsel %vm525, %v473, 0
      %532 = vmatprep.subr.mxu0 %v469
      %533 = vmatpush1.msra.mxu0 %v468
      %534 = vmatprep.subr.mxu0 %v471
      %535 = vmatpush1.msra.mxu0 %v470
      %536 = vmatprep.subr.mxu0 %v530
      %537 = vmatpush1.msra.mxu0 %v527
      %538 = vmatprep.subr.mxu0 0.0
      %539 = vmatpush1.msra.mxu0 0.0
      %540 = vmatprep.subr.mxu0 0.0
      %541 = vmatpush1.msra.mxu0 0.0
      %542 = vmatprep.subr.mxu0 0.0
      %543 = vmatpush1.msra.mxu0 0.0
      %544 = vmatprep.subr.mxu0 0.0
      %545 = vmatpush1.msra.mxu0 0.0
      %546 = vmatprep.subr.mxu0 0.0
      %547 = vmatpush1.msra.mxu0 0.0
      %548 = vmatprep.subr.mxu0 0.0
      %549 = vmatpush1.msra.mxu0 0.0
      %550 = vmatprep.subr.mxu0 0.0
      %551 = vmatpush1.msra.mxu0 0.0
      %552 = vmatprep.subr.mxu0 0.0
      %553 = vmatpush1.msra.mxu0 0.0
      %554 = vmatprep.subr.mxu0 0.0
      %555 = vmatpush1.msra.mxu0 0.0
      %556 = vmatprep.subr.mxu0 0.0
      %557 = vmatpush1.msra.mxu0 0.0
      %558 = vmatprep.subr.mxu0 0.0
      %559 = vmatpush1.msra.mxu0 0.0
      %560 = vmatprep.subr.mxu0 0.0
      %561 = vmatpush1.msra.mxu0 0.0
      %562 = vmatprep.subr.mxu0 0.0
      %563 = vmatpush1.msra.mxu0 0.0
      %564 = vmatprep.subr.mxu0 0.0
      %565 = vmatpush1.msra.mxu0 0.0
      %566 = vmatprep.subr.mxu0 0.0
      %567 = vmatpush1.msra.mxu0 0.0
      %568 = vmatprep.subr.mxu0 0.0
      %569 = vmatpush1.msra.mxu0 0.0
      %570 = vmatprep.subr.mxu0 0.0
      %571 = vmatpush1.msra.mxu0 0.0
      %572 = vmatprep.subr.mxu0 0.0
      %573 = vmatpush1.msra.mxu0 0.0
      %574 = vmatprep.subr.mxu0 0.0
      %575 = vmatpush1.msra.mxu0 0.0
      %576 = vmatprep.subr.mxu0 0.0
      %577 = vmatpush1.msra.mxu0 0.0
      %578 = vmatprep.subr.mxu0 0.0
      %579 = vmatpush1.msra.mxu0 0.0
      %580 = vmatprep.subr.mxu0 0.0
      %581 = vmatpush1.msra.mxu0 0.0
      %582 = vmatprep.subr.mxu0 0.0
      %583 = vmatpush1.msra.mxu0 0.0
      %584 = vmatprep.subr.mxu0 0.0
      %585 = vmatpush1.msra.mxu0 0.0
      %586 = vmatprep.subr.mxu0 0.0
      %587 = vmatpush1.msra.mxu0 0.0
      %588 = vmatprep.subr.mxu0 0.0
      %589 = vmatpush1.msra.mxu0 0.0
      %590 = vmatprep.subr.mxu0 0.0
      %591 = vmatpush1.msra.mxu0 0.0
      %592 = vmatprep.subr.mxu0 0.0
      %593 = vmatpush1.msra.mxu0 0.0
      %594 = vmatprep.subr.mxu0 0.0
      %595 = vmatpush1.msra.mxu0 0.0
      %596 = vmatprep.mubr.f32.mxu0 0.0
      %597 = vmatmul.mubr.f32.gmra.mrb[0].mxu0 %v511
      %v598 = vpop.f32.mrb[0].mxu0
      %v599 = vadd.f32 %v487, %v598
      %v600 = vpop.f32.mrb[0].mxu0
      %v601 = vadd.f32 %v487, %v600
      %602 = vmatprep.mubr.f32.mxu0 0.0
      %603 = vmatmul.mubr.f32.gmra.mrb[0].mxu0 %v514
      %v604 = vpop.f32.mrb[0].mxu0
      %v605 = vadd.f32 %v492, %v604
      %v606 = vpop.f32.mrb[0].mxu0
      %v607 = vadd.f32 %v492, %v606
      %608 = vmatprep.mubr.f32.mxu0 0.0
      %609 = vmatmul.mubr.f32.gmra.mrb[0].mxu0 %v517
      %v610 = vpop.f32.mrb[0].mxu0
      %v611 = vadd.f32 %v497, %v610
      %v612 = vpop.f32.mrb[0].mxu0
      %v613 = vadd.f32 %v497, %v612
      %614 = vmatprep.mubr.f32.mxu0 0.0
      %615 = vmatmul.mubr.f32.gmra.mrb[0].mxu0 %v520
      %v616 = vpop.f32.mrb[0].mxu0
      %v617 = vadd.f32 %v502, %v616
      %v618 = vpop.f32.mrb[0].mxu0
      %v619 = vadd.f32 %v502, %v618
      %620 = vmatprep.mubr.f32.mxu0 0.0
      %621 = vmatmul.mubr.f32.gmra.mrb[0].mxu0 %v523
      %v622 = vpop.f32.mrb[0].mxu0
      %v623 = vadd.f32 %v507, %v622
      %v624 = vpop.f32.mrb[0].mxu0
      %v625 = vadd.f32 %v507, %v624
      %626 = vdwg.mxu0
      %v627 = vld [vmem:[%s5] sm:$0xff]
      %v628 = vld [vmem:[%s5 + $0x8] sm:$0xff]
      %v629 = vld [vmem:[%s5 + $0x10] sm:$0xf]
      %v630 = vld [vmem:[%s6] sm:$0xff]
      %v631 = vld [vmem:[%s6 + $0x8] sm:$0xff]
      %v632 = vld [vmem:[%s6 + $0x10] sm:$0xf]
      %634 = vset.pattern.permute.xlu0 0
      %635 = vperm.xlu0 %634, %v630
      %v636 = vpop.permute.xlu0 %635
      %639 = vset.pattern.permute.xlu0 0
      %640 = vperm.xlu0 %639, %v631
      %v641 = vpop.permute.xlu0 %640
      %644 = vset.pattern.permute.xlu0 0
      %645 = vperm.xlu0 %644, %v632
      %v646 = vpop.permute.xlu0 %645
      %v648 = vadd.f32 %v636, %v468
      %v649 = vadd.f32 %v636, %v469
      %v650 = vadd.f32 %v641, %v470
      %v651 = vadd.f32 %v641, %v471
      %v652 = vadd.f32 %v646, %v472
      %v653 = vadd.f32 %v646, %v473
      %v654 = vld [vmem:[%s3] sm:$0xff]
      %v655 = vld [vmem:[%s3 + $0x8] sm:$0xff]
      %v656 = vld [vmem:[%s3 + $0x10] sm:$0xff]
      %v657 = vld [vmem:[%s3 + $0x18] sm:$0xff]
      %v658 = vld [vmem:[%s3 + $0x20] sm:$0xff]
      %v659 = vld [vmem:[%s3 + $0x28] sm:$0xff]
      %v660 = vld [vmem:[%s3 + $0x30] sm:$0xff]
      %v661 = vld [vmem:[%s3 + $0x38] sm:$0xff]
      %v662 = vld [vmem:[%s3 + $0x40] sm:$0xff]
      %v663 = vld [vmem:[%s3 + $0x48] sm:$0xff]
      %v664 = vld [vmem:[%s3 + $0x50] sm:$0xff]
      %v665 = vld [vmem:[%s3 + $0x58] sm:$0xff]
      %v666 = vld [vmem:[%s3 + $0x60] sm:$0xff]
      %v667 = vld [vmem:[%s3 + $0x68] sm:$0xff]
      %v668 = vld [vmem:[%s3 + $0x70] sm:$0xff]
      %v669 = vld [vmem:[%s3 + $0x78] sm:$0xff]
      %v670 = vld [vmem:[%s3 + $0x80] sm:$0xff]
      %v671 = vld [vmem:[%s3 + $0x88] sm:$0xff]
      %v672 = vld [vmem:[%s3 + $0x90] sm:$0xff]
      %v673 = vld [vmem:[%s3 + $0x98] sm:$0xff]
      %v674 = vld [vmem:[%s3 + $0xa0] sm:$0xff]
      %v675 = vld [vmem:[%s3 + $0xa8] sm:$0xff]
      %v676 = vld [vmem:[%s3 + $0xb0] sm:$0xff]
      %v677 = vld [vmem:[%s3 + $0xb8] sm:$0xff]
      %v678 = vld [vmem:[%s3 + $0xc0] sm:$0xff]
      %v679 = vld [vmem:[%s3 + $0xc8] sm:$0xff]
      %v680 = vld [vmem:[%s3 + $0xd0] sm:$0xff]
      %v681 = vld [vmem:[%s3 + $0xd8] sm:$0xff]
      %v682 = vld [vmem:[%s3 + $0xe0] sm:$0xff]
      %v683 = vld [vmem:[%s3 + $0xe8] sm:$0xff]
      %v684 = vld [vmem:[%s3 + $0xf0] sm:$0xff]
      %v685 = vld [vmem:[%s3 + $0xf8] sm:$0xff]
      %v686 = vld [vmem:[%s4] sm:$0x3]
      %687 = vset.pattern.permute.xlu0 0
      %688 = vperm.xlu0 %687, %v654
      %v689 = vpop.permute.xlu0 %688
      %690 = vset.pattern.permute.xlu0 0
      %691 = vperm.xlu0 %690, %v655
      %v692 = vpop.permute.xlu0 %691
      %693 = vset.pattern.permute.xlu0 0
      %694 = vperm.xlu0 %693, %v656
      %v695 = vpop.permute.xlu0 %694
      %696 = vset.pattern.permute.xlu0 0
      %697 = vperm.xlu0 %696, %v657
      %v698 = vpop.permute.xlu0 %697
      %699 = vset.pattern.permute.xlu0 0
      %700 = vperm.xlu0 %699, %v658
      %v701 = vpop.permute.xlu0 %700
      %702 = vset.pattern.permute.xlu0 0
      %703 = vperm.xlu0 %702, %v659
      %v704 = vpop.permute.xlu0 %703
      %705 = vset.pattern.permute.xlu0 0
      %706 = vperm.xlu0 %705, %v660
      %v707 = vpop.permute.xlu0 %706
      %708 = vset.pattern.permute.xlu0 0
      %709 = vperm.xlu0 %708, %v661
      %v710 = vpop.permute.xlu0 %709
      %711 = vset.pattern.permute.xlu0 0
      %712 = vperm.xlu0 %711, %v662
      %v713 = vpop.permute.xlu0 %712
      %714 = vset.pattern.permute.xlu0 0
      %715 = vperm.xlu0 %714, %v663
      %v716 = vpop.permute.xlu0 %715
      %717 = vset.pattern.permute.xlu0 0
      %718 = vperm.xlu0 %717, %v664
      %v719 = vpop.permute.xlu0 %718
      %720 = vset.pattern.permute.xlu0 0
      %721 = vperm.xlu0 %720, %v665
      %v722 = vpop.permute.xlu0 %721
      %723 = vset.pattern.permute.xlu0 0
      %724 = vperm.xlu0 %723, %v666
      %v725 = vpop.permute.xlu0 %724
      %726 = vset.pattern.permute.xlu0 0
      %727 = vperm.xlu0 %726, %v667
      %v728 = vpop.permute.xlu0 %727
      %729 = vset.pattern.permute.xlu0 0
      %730 = vperm.xlu0 %729, %v668
      %v731 = vpop.permute.xlu0 %730
      %732 = vset.pattern.permute.xlu0 0
      %733 = vperm.xlu0 %732, %v669
      %v734 = vpop.permute.xlu0 %733
      %735 = vset.pattern.permute.xlu0 0
      %736 = vperm.xlu0 %735, %v670
      %v737 = vpop.permute.xlu0 %736
      %738 = vset.pattern.permute.xlu0 0
      %739 = vperm.xlu0 %738, %v671
      %v740 = vpop.permute.xlu0 %739
      %741 = vset.pattern.permute.xlu0 0
      %742 = vperm.xlu0 %741, %v672
      %v743 = vpop.permute.xlu0 %742
      %744 = vset.pattern.permute.xlu0 0
      %745 = vperm.xlu0 %744, %v673
      %v746 = vpop.permute.xlu0 %745
      %747 = vset.pattern.permute.xlu0 0
      %748 = vperm.xlu0 %747, %v674
      %v749 = vpop.permute.xlu0 %748
      %750 = vset.pattern.permute.xlu0 0
      %751 = vperm.xlu0 %750, %v675
      %v752 = vpop.permute.xlu0 %751
      %753 = vset.pattern.permute.xlu0 0
      %754 = vperm.xlu0 %753, %v676
      %v755 = vpop.permute.xlu0 %754
      %756 = vset.pattern.permute.xlu0 0
      %757 = vperm.xlu0 %756, %v677
      %v758 = vpop.permute.xlu0 %757
      %759 = vset.pattern.permute.xlu0 0
      %760 = vperm.xlu0 %759, %v678
      %v761 = vpop.permute.xlu0 %760
      %762 = vset.pattern.permute.xlu0 0
      %763 = vperm.xlu0 %762, %v679
      %v764 = vpop.permute.xlu0 %763
      %765 = vset.pattern.permute.xlu0 0
      %766 = vperm.xlu0 %765, %v680
      %v767 = vpop.permute.xlu0 %766
      %768 = vset.pattern.permute.xlu0 0
      %769 = vperm.xlu0 %768, %v681
      %v770 = vpop.permute.xlu0 %769
      %771 = vset.pattern.permute.xlu0 0
      %772 = vperm.xlu0 %771, %v682
      %v773 = vpop.permute.xlu0 %772
      %774 = vset.pattern.permute.xlu0 0
      %775 = vperm.xlu0 %774, %v683
      %v776 = vpop.permute.xlu0 %775
      %777 = vset.pattern.permute.xlu0 0
      %778 = vperm.xlu0 %777, %v684
      %v779 = vpop.permute.xlu0 %778
      %780 = vset.pattern.permute.xlu0 0
      %781 = vperm.xlu0 %780, %v685
      %v782 = vpop.permute.xlu0 %781
      %v783 = vlaneseq
      %v784 = vshrl.u32 %v783, 7
      %v785 = vsub.s32 0, %v784
      %v786 = vrot.slane %v686, %v785
      %v787 = vlaneseq
      %v788 = vshrl.u32 %v787, 7
      %v789 = vsub.s32 1, %v788
      %v790 = vrot.slane %v686, %v789
      %vm791 = vcmp.eq.s32.totalorder %v689, %v786
      %vm792 = vcmp.eq.s32.totalorder %v689, %v790
      %vm793 = vcmp.eq.s32.totalorder %v692, %v786
      %vm794 = vcmp.eq.s32.totalorder %v692, %v790
      %vm795 = vcmp.eq.s32.totalorder %v695, %v786
      %vm796 = vcmp.eq.s32.totalorder %v695, %v790
      %vm797 = vcmp.eq.s32.totalorder %v698, %v786
      %vm798 = vcmp.eq.s32.totalorder %v698, %v790
      %vm799 = vcmp.eq.s32.totalorder %v701, %v786
      %vm800 = vcmp.eq.s32.totalorder %v701, %v790
      %vm801 = vcmp.eq.s32.totalorder %v704, %v786
      %vm802 = vcmp.eq.s32.totalorder %v704, %v790
      %vm803 = vcmp.eq.s32.totalorder %v707, %v786
      %vm804 = vcmp.eq.s32.totalorder %v707, %v790
      %vm805 = vcmp.eq.s32.totalorder %v710, %v786
      %vm806 = vcmp.eq.s32.totalorder %v710, %v790
      %vm807 = vcmp.eq.s32.totalorder %v713, %v786
      %vm808 = vcmp.eq.s32.totalorder %v713, %v790
      %vm809 = vcmp.eq.s32.totalorder %v716, %v786
      %vm810 = vcmp.eq.s32.totalorder %v716, %v790
      %vm811 = vcmp.eq.s32.totalorder %v719, %v786
      %vm812 = vcmp.eq.s32.totalorder %v719, %v790
      %vm813 = vcmp.eq.s32.totalorder %v722, %v786
      %vm814 = vcmp.eq.s32.totalorder %v722, %v790
      %vm815 = vcmp.eq.s32.totalorder %v725, %v786
      %vm816 = vcmp.eq.s32.totalorder %v725, %v790
      %vm817 = vcmp.eq.s32.totalorder %v728, %v786
      %vm818 = vcmp.eq.s32.totalorder %v728, %v790
      %vm819 = vcmp.eq.s32.totalorder %v731, %v786
      %vm820 = vcmp.eq.s32.totalorder %v731, %v790
      %vm821 = vcmp.eq.s32.totalorder %v734, %v786
      %vm822 = vcmp.eq.s32.totalorder %v734, %v790
      %vm823 = vcmp.eq.s32.totalorder %v737, %v786
      %vm824 = vcmp.eq.s32.totalorder %v737, %v790
      %vm825 = vcmp.eq.s32.totalorder %v740, %v786
      %vm826 = vcmp.eq.s32.totalorder %v740, %v790
      %vm827 = vcmp.eq.s32.totalorder %v743, %v786
      %vm828 = vcmp.eq.s32.totalorder %v743, %v790
      %vm829 = vcmp.eq.s32.totalorder %v746, %v786
      %vm830 = vcmp.eq.s32.totalorder %v746, %v790
      %vm831 = vcmp.eq.s32.totalorder %v749, %v786
      %vm832 = vcmp.eq.s32.totalorder %v749, %v790
      %vm833 = vcmp.eq.s32.totalorder %v752, %v786
      %vm834 = vcmp.eq.s32.totalorder %v752, %v790
      %vm835 = vcmp.eq.s32.totalorder %v755, %v786
      %vm836 = vcmp.eq.s32.totalorder %v755, %v790
      %vm837 = vcmp.eq.s32.totalorder %v758, %v786
      %vm838 = vcmp.eq.s32.totalorder %v758, %v790
      %vm839 = vcmp.eq.s32.totalorder %v761, %v786
      %vm840 = vcmp.eq.s32.totalorder %v761, %v790
      %vm841 = vcmp.eq.s32.totalorder %v764, %v786
      %vm842 = vcmp.eq.s32.totalorder %v764, %v790
      %vm843 = vcmp.eq.s32.totalorder %v767, %v786
      %vm844 = vcmp.eq.s32.totalorder %v767, %v790
      %vm845 = vcmp.eq.s32.totalorder %v770, %v786
      %vm846 = vcmp.eq.s32.totalorder %v770, %v790
      %vm847 = vcmp.eq.s32.totalorder %v773, %v786
      %vm848 = vcmp.eq.s32.totalorder %v773, %v790
      %vm849 = vcmp.eq.s32.totalorder %v776, %v786
      %vm850 = vcmp.eq.s32.totalorder %v776, %v790
      %vm851 = vcmp.eq.s32.totalorder %v779, %v786
      %vm852 = vcmp.eq.s32.totalorder %v779, %v790
      %vm853 = vcmp.eq.s32.totalorder %v782, %v786
      %vm854 = vcmp.eq.s32.totalorder %v782, %v790
      %855 = vxpose.xlu0.b32.start [1/16] %v599, 128
      %856 = vxpose.xlu0.b32.cont [2/16] %v605, 128
      %857 = vxpose.xlu0.b32.cont [3/16] 0.0, 128
      %858 = vxpose.xlu0.b32.cont [4/16] 0.0, 128
      %859 = vxpose.xlu0.b32.cont [5/16] 0.0, 128
      %860 = vxpose.xlu0.b32.cont [6/16] 0.0, 128
      %861 = vxpose.xlu0.b32.cont [7/16] 0.0, 128
      %862 = vxpose.xlu0.b32.cont [8/16] 0.0, 128
      %863 = vxpose.xlu0.b32.cont [9/16] 0.0, 128
      %864 = vxpose.xlu0.b32.cont [10/16] 0.0, 128
      %865 = vxpose.xlu0.b32.cont [11/16] 0.0, 128
      %866 = vxpose.xlu0.b32.cont [12/16] 0.0, 128
      %867 = vxpose.xlu0.b32.cont [13/16] 0.0, 128
      %868 = vxpose.xlu0.b32.cont [14/16] 0.0, 128
      %869 = vxpose.xlu0.b32.cont [15/16] 0.0, 128
      %870 = vxpose.xlu0.b32.end [16/16] 0.0, 128
      %v871 = vpop.trf.xlu0
      %v872 = vpop.trf.xlu0
      %v873 = vpop.trf.xlu0
      %v874 = vpop.trf.xlu0
      %v875 = vpop.trf.xlu0
      %v876 = vpop.trf.xlu0
      %v877 = vpop.trf.xlu0
      %v878 = vpop.trf.xlu0
      %v879 = vpop.trf.xlu0
      %v880 = vpop.trf.xlu0
      %v881 = vpop.trf.xlu0
      %v882 = vpop.trf.xlu0
      %v883 = vpop.trf.xlu0
      %v884 = vpop.trf.xlu0
      %v885 = vpop.trf.xlu0
      %v886 = vpop.trf.xlu0
      %887 = vxpose.xlu0.b32.start [1/16] %v601, 128
      %888 = vxpose.xlu0.b32.cont [2/16] %v607, 128
      %889 = vxpose.xlu0.b32.cont [3/16] 0.0, 128
      %890 = vxpose.xlu0.b32.cont [4/16] 0.0, 128
      %891 = vxpose.xlu0.b32.cont [5/16] 0.0, 128
      %892 = vxpose.xlu0.b32.cont [6/16] 0.0, 128
      %893 = vxpose.xlu0.b32.cont [7/16] 0.0, 128
      %894 = vxpose.xlu0.b32.cont [8/16] 0.0, 128
      %895 = vxpose.xlu0.b32.cont [9/16] 0.0, 128
      %896 = vxpose.xlu0.b32.cont [10/16] 0.0, 128
      %897 = vxpose.xlu0.b32.cont [11/16] 0.0, 128
      %898 = vxpose.xlu0.b32.cont [12/16] 0.0, 128
      %899 = vxpose.xlu0.b32.cont [13/16] 0.0, 128
      %900 = vxpose.xlu0.b32.cont [14/16] 0.0, 128
      %901 = vxpose.xlu0.b32.cont [15/16] 0.0, 128
      %902 = vxpose.xlu0.b32.end [16/16] 0.0, 128
      %v903 = vpop.trf.xlu0
      %v904 = vpop.trf.xlu0
      %v905 = vpop.trf.xlu0
      %v906 = vpop.trf.xlu0
      %v907 = vpop.trf.xlu0
      %v908 = vpop.trf.xlu0
      %v909 = vpop.trf.xlu0
      %v910 = vpop.trf.xlu0
      %v911 = vpop.trf.xlu0
      %v912 = vpop.trf.xlu0
      %v913 = vpop.trf.xlu0
      %v914 = vpop.trf.xlu0
      %v915 = vpop.trf.xlu0
      %v916 = vpop.trf.xlu0
      %v917 = vpop.trf.xlu0
      %v918 = vpop.trf.xlu0
      %vm919 = vcmask 80896
      %v921 = vsel %vm919, %v871, 0
      %v924 = vsel %vm919, %v872, 0
      %v927 = vsel %vm919, %v873, 0
      %v930 = vsel %vm919, %v874, 0
      %v933 = vsel %vm919, %v875, 0
      %v936 = vsel %vm919, %v876, 0
      %v939 = vsel %vm919, %v877, 0
      %v942 = vsel %vm919, %v878, 0
      %v945 = vsel %vm919, %v879, 0
      %v948 = vsel %vm919, %v880, 0
      %v951 = vsel %vm919, %v881, 0
      %v954 = vsel %vm919, %v882, 0
      %v957 = vsel %vm919, %v883, 0
      %v960 = vsel %vm919, %v884, 0
      %v963 = vsel %vm919, %v885, 0
      %v966 = vsel %vm919, %v886, 0
      %v969 = vsel %vm919, %v903, 0
      %v972 = vsel %vm919, %v904, 0
      %v975 = vsel %vm919, %v905, 0
      %v978 = vsel %vm919, %v906, 0
      %v981 = vsel %vm919, %v907, 0
      %v984 = vsel %vm919, %v908, 0
      %v987 = vsel %vm919, %v909, 0
      %v990 = vsel %vm919, %v910, 0
      %v993 = vsel %vm919, %v911, 0
      %v996 = vsel %vm919, %v912, 0
      %v999 = vsel %vm919, %v913, 0
      %v1002 = vsel %vm919, %v914, 0
      %v1005 = vsel %vm919, %v915, 0
      %v1008 = vsel %vm919, %v916, 0
      %v1011 = vsel %vm919, %v917, 0
      %v1014 = vsel %vm919, %v918, 0
      %vm1016 = vcmask 1041408
      %v1018 = vsel %vm1016, %v605, 0
      %v1021 = vsel %vm1016, %v607, 0
      %1023 = vmatprep.subr.mxu0 %v601
      %1024 = vmatpush1.msra.mxu0 %v599
      %1025 = vmatprep.subr.mxu0 %v1021
      %1026 = vmatpush1.msra.mxu0 %v1018
      %1027 = vmatprep.subr.mxu0 0.0
      %1028 = vmatpush1.msra.mxu0 0.0
      %1029 = vmatprep.subr.mxu0 0.0
      %1030 = vmatpush1.msra.mxu0 0.0
      %1031 = vmatprep.subr.mxu0 0.0
      %1032 = vmatpush1.msra.mxu0 0.0
      %1033 = vmatprep.subr.mxu0 0.0
      %1034 = vmatpush1.msra.mxu0 0.0
      %1035 = vmatprep.subr.mxu0 0.0
      %1036 = vmatpush1.msra.mxu0 0.0
      %1037 = vmatprep.subr.mxu0 0.0
      %1038 = vmatpush1.msra.mxu0 0.0
      %1039 = vmatprep.subr.mxu0 0.0
      %1040 = vmatpush1.msra.mxu0 0.0
      %1041 = vmatprep.subr.mxu0 0.0
      %1042 = vmatpush1.msra.mxu0 0.0
      %1043 = vmatprep.subr.mxu0 0.0
      %1044 = vmatpush1.msra.mxu0 0.0
      %1045 = vmatprep.subr.mxu0 0.0
      %1046 = vmatpush1.msra.mxu0 0.0
      %1047 = vmatprep.subr.mxu0 0.0
      %1048 = vmatpush1.msra.mxu0 0.0
      %1049 = vmatprep.subr.mxu0 0.0
      %1050 = vmatpush1.msra.mxu0 0.0
      %1051 = vmatprep.subr.mxu0 0.0
      %1052 = vmatpush1.msra.mxu0 0.0
      %1053 = vmatprep.subr.mxu0 0.0
      %1054 = vmatpush1.msra.mxu0 0.0
      %1055 = vmatprep.subr.mxu0 0.0
      %1056 = vmatpush1.msra.mxu0 0.0
      %1057 = vmatprep.subr.mxu0 0.0
      %1058 = vmatpush1.msra.mxu0 0.0
      %1059 = vmatprep.subr.mxu0 0.0
      %1060 = vmatpush1.msra.mxu0 0.0
      %1061 = vmatprep.subr.mxu0 0.0
      %1062 = vmatpush1.msra.mxu0 0.0
      %1063 = vmatprep.subr.mxu0 0.0
      %1064 = vmatpush1.msra.mxu0 0.0
      %1065 = vmatprep.subr.mxu0 0.0
      %1066 = vmatpush1.msra.mxu0 0.0
      %1067 = vmatprep.subr.mxu0 0.0
      %1068 = vmatpush1.msra.mxu0 0.0
      %1069 = vmatprep.subr.mxu0 0.0
      %1070 = vmatpush1.msra.mxu0 0.0
      %1071 = vmatprep.subr.mxu0 0.0
      %1072 = vmatpush1.msra.mxu0 0.0
      %1073 = vmatprep.subr.mxu0 0.0
      %1074 = vmatpush1.msra.mxu0 0.0
      %1075 = vmatprep.subr.mxu0 0.0
      %1076 = vmatpush1.msra.mxu0 0.0
      %1077 = vmatprep.subr.mxu0 0.0
      %1078 = vmatpush1.msra.mxu0 0.0
      %1079 = vmatprep.subr.mxu0 0.0
      %1080 = vmatpush1.msra.mxu0 0.0
      %1081 = vmatprep.subr.mxu0 0.0
      %1082 = vmatpush1.msra.mxu0 0.0
      %1083 = vmatprep.subr.mxu0 0.0
      %1084 = vmatpush1.msra.mxu0 0.0
      %1085 = vmatprep.subr.mxu0 0.0
      %1086 = vmatpush1.msra.mxu0 0.0
      %1087 = vmatprep.mubr.f32.mxu0 0.0
      %1088 = vmatmul.mubr.f32.gmra.mrb[0].mxu0 %v921
      %v1089 = vpop.f32.mrb[0].mxu0
      %v1090 = vadd.f32 0.0, %v1089
      %v1091 = vpop.f32.mrb[0].mxu0
      %v1092 = vadd.f32 0.0, %v1091
      %1093 = vmatprep.mubr.f32.mxu0 0.0
      %1094 = vmatmul.mubr.f32.gmra.mrb[0].mxu0 %v924
      %v1095 = vpop.f32.mrb[0].mxu0
      %v1096 = vadd.f32 0.0, %v1095
      %v1097 = vpop.f32.mrb[0].mxu0
      %v1098 = vadd.f32 0.0, %v1097
      %1099 = vmatprep.mubr.f32.mxu0 0.0
      %1100 = vmatmul.mubr.f32.gmra.mrb[0].mxu0 %v927
      %v1101 = vpop.f32.mrb[0].mxu0
      %v1102 = vadd.f32 0.0, %v1101
      %v1103 = vpop.f32.mrb[0].mxu0
      %v1104 = vadd.f32 0.0, %v1103
      %1105 = vmatprep.mubr.f32.mxu0 0.0
      %1106 = vmatmul.mubr.f32.gmra.mrb[0].mxu0 %v930
      %v1107 = vpop.f32.mrb[0].mxu0
      %v1108 = vadd.f32 0.0, %v1107
      %v1109 = vpop.f32.mrb[0].mxu0
      %v1110 = vadd.f32 0.0, %v1109
      %1111 = vmatprep.mubr.f32.mxu0 0.0
      %1112 = vmatmul.mubr.f32.gmra.mrb[0].mxu0 %v933
      %v1113 = vpop.f32.mrb[0].mxu0
      %v1114 = vadd.f32 0.0, %v1113
      %v1115 = vpop.f32.mrb[0].mxu0
      %v1116 = vadd.f32 0.0, %v1115
      %1117 = vmatprep.mubr.f32.mxu0 0.0
      %1118 = vmatmul.mubr.f32.gmra.mrb[0].mxu0 %v936
      %v1119 = vpop.f32.mrb[0].mxu0
      %v1120 = vadd.f32 0.0, %v1119
      %v1121 = vpop.f32.mrb[0].mxu0
      %v1122 = vadd.f32 0.0, %v1121
      %1123 = vmatprep.mubr.f32.mxu0 0.0
      %1124 = vmatmul.mubr.f32.gmra.mrb[0].mxu0 %v939
      %v1125 = vpop.f32.mrb[0].mxu0
      %v1126 = vadd.f32 0.0, %v1125
      %v1127 = vpop.f32.mrb[0].mxu0
      %v1128 = vadd.f32 0.0, %v1127
      %1129 = vmatprep.mubr.f32.mxu0 0.0
      %1130 = vmatmul.mubr.f32.gmra.mrb[0].mxu0 %v942
      %v1131 = vpop.f32.mrb[0].mxu0
      %v1132 = vadd.f32 0.0, %v1131
      %v1133 = vpop.f32.mrb[0].mxu0
      %v1134 = vadd.f32 0.0, %v1133
      %1135 = vmatprep.mubr.f32.mxu0 0.0
      %1136 = vmatmul.mubr.f32.gmra.mrb[0].mxu0 %v945
      %v1137 = vpop.f32.mrb[0].mxu0
      %v1138 = vadd.f32 0.0, %v1137
      %v1139 = vpop.f32.mrb[0].mxu0
      %v1140 = vadd.f32 0.0, %v1139
      %1141 = vmatprep.mubr.f32.mxu0 0.0
      %1142 = vmatmul.mubr.f32.gmra.mrb[0].mxu0 %v948
      %v1143 = vpop.f32.mrb[0].mxu0
      %v1144 = vadd.f32 0.0, %v1143
      %v1145 = vpop.f32.mrb[0].mxu0
      %v1146 = vadd.f32 0.0, %v1145
      %1147 = vmatprep.mubr.f32.mxu0 0.0
      %1148 = vmatmul.mubr.f32.gmra.mrb[0].mxu0 %v951
      %v1149 = vpop.f32.mrb[0].mxu0
      %v1150 = vadd.f32 0.0, %v1149
      %v1151 = vpop.f32.mrb[0].mxu0
      %v1152 = vadd.f32 0.0, %v1151
      %1153 = vmatprep.mubr.f32.mxu0 0.0
      %1154 = vmatmul.mubr.f32.gmra.mrb[0].mxu0 %v954
      %v1155 = vpop.f32.mrb[0].mxu0
      %v1156 = vadd.f32 0.0, %v1155
      %v1157 = vpop.f32.mrb[0].mxu0
      %v1158 = vadd.f32 0.0, %v1157
      %1159 = vmatprep.mubr.f32.mxu0 0.0
      %1160 = vmatmul.mubr.f32.gmra.mrb[0].mxu0 %v957
      %v1161 = vpop.f32.mrb[0].mxu0
      %v1162 = vadd.f32 0.0, %v1161
      %v1163 = vpop.f32.mrb[0].mxu0
      %v1164 = vadd.f32 0.0, %v1163
      %1165 = vmatprep.mubr.f32.mxu0 0.0
      %1166 = vmatmul.mubr.f32.gmra.mrb[0].mxu0 %v960
      %v1167 = vpop.f32.mrb[0].mxu0
      %v1168 = vadd.f32 0.0, %v1167
      %v1169 = vpop.f32.mrb[0].mxu0
      %v1170 = vadd.f32 0.0, %v1169
      %1171 = vmatprep.mubr.f32.mxu0 0.0
      %1172 = vmatmul.mubr.f32.gmra.mrb[0].mxu0 %v963
      %v1173 = vpop.f32.mrb[0].mxu0
      %v1174 = vadd.f32 0.0, %v1173
      %v1175 = vpop.f32.mrb[0].mxu0
      %v1176 = vadd.f32 0.0, %v1175
      %1177 = vmatprep.mubr.f32.mxu0 0.0
      %1178 = vmatmul.mubr.f32.gmra.mrb[0].mxu0 %v966
      %v1179 = vpop.f32.mrb[0].mxu0
      %v1180 = vadd.f32 0.0, %v1179
      %v1181 = vpop.f32.mrb[0].mxu0
      %v1182 = vadd.f32 0.0, %v1181
      %1183 = vmatprep.mubr.f32.mxu0 0.0
      %1184 = vmatmul.mubr.f32.gmra.mrb[0].mxu0 %v969
      %v1185 = vpop.f32.mrb[0].mxu0
      %v1186 = vadd.f32 0.0, %v1185
      %v1187 = vpop.f32.mrb[0].mxu0
      %v1188 = vadd.f32 0.0, %v1187
      %1189 = vmatprep.mubr.f32.mxu0 0.0
      %1190 = vmatmul.mubr.f32.gmra.mrb[0].mxu0 %v972
      %v1191 = vpop.f32.mrb[0].mxu0
      %v1192 = vadd.f32 0.0, %v1191
      %v1193 = vpop.f32.mrb[0].mxu0
      %v1194 = vadd.f32 0.0, %v1193
      %1195 = vmatprep.mubr.f32.mxu0 0.0
      %1196 = vmatmul.mubr.f32.gmra.mrb[0].mxu0 %v975
      %v1197 = vpop.f32.mrb[0].mxu0
      %v1198 = vadd.f32 0.0, %v1197
      %v1199 = vpop.f32.mrb[0].mxu0
      %v1200 = vadd.f32 0.0, %v1199
      %1201 = vmatprep.mubr.f32.mxu0 0.0
      %1202 = vmatmul.mubr.f32.gmra.mrb[0].mxu0 %v978
      %v1203 = vpop.f32.mrb[0].mxu0
      %v1204 = vadd.f32 0.0, %v1203
      %v1205 = vpop.f32.mrb[0].mxu0
      %v1206 = vadd.f32 0.0, %v1205
      %1207 = vmatprep.mubr.f32.mxu0 0.0
      %1208 = vmatmul.mubr.f32.gmra.mrb[0].mxu0 %v981
      %v1209 = vpop.f32.mrb[0].mxu0
      %v1210 = vadd.f32 0.0, %v1209
      %v1211 = vpop.f32.mrb[0].mxu0
      %v1212 = vadd.f32 0.0, %v1211
      %1213 = vmatprep.mubr.f32.mxu0 0.0
      %1214 = vmatmul.mubr.f32.gmra.mrb[0].mxu0 %v984
      %v1215 = vpop.f32.mrb[0].mxu0
      %v1216 = vadd.f32 0.0, %v1215
      %v1217 = vpop.f32.mrb[0].mxu0
      %v1218 = vadd.f32 0.0, %v1217
      %1219 = vmatprep.mubr.f32.mxu0 0.0
      %1220 = vmatmul.mubr.f32.gmra.mrb[0].mxu0 %v987
      %v1221 = vpop.f32.mrb[0].mxu0
      %v1222 = vadd.f32 0.0, %v1221
      %v1223 = vpop.f32.mrb[0].mxu0
      %v1224 = vadd.f32 0.0, %v1223
      %1225 = vmatprep.mubr.f32.mxu0 0.0
      %1226 = vmatmul.mubr.f32.gmra.mrb[0].mxu0 %v990
      %v1227 = vpop.f32.mrb[0].mxu0
      %v1228 = vadd.f32 0.0, %v1227
      %v1229 = vpop.f32.mrb[0].mxu0
      %v1230 = vadd.f32 0.0, %v1229
      %1231 = vmatprep.mubr.f32.mxu0 0.0
      %1232 = vmatmul.mubr.f32.gmra.mrb[0].mxu0 %v993
      %v1233 = vpop.f32.mrb[0].mxu0
      %v1234 = vadd.f32 0.0, %v1233
      %v1235 = vpop.f32.mrb[0].mxu0
      %v1236 = vadd.f32 0.0, %v1235
      %1237 = vmatprep.mubr.f32.mxu0 0.0
      %1238 = vmatmul.mubr.f32.gmra.mrb[0].mxu0 %v996
      %v1239 = vpop.f32.mrb[0].mxu0
      %v1240 = vadd.f32 0.0, %v1239
      %v1241 = vpop.f32.mrb[0].mxu0
      %v1242 = vadd.f32 0.0, %v1241
      %1243 = vmatprep.mubr.f32.mxu0 0.0
      %1244 = vmatmul.mubr.f32.gmra.mrb[0].mxu0 %v999
      %v1245 = vpop.f32.mrb[0].mxu0
      %v1246 = vadd.f32 0.0, %v1245
      %v1247 = vpop.f32.mrb[0].mxu0
      %v1248 = vadd.f32 0.0, %v1247
      %1249 = vmatprep.mubr.f32.mxu0 0.0
      %1250 = vmatmul.mubr.f32.gmra.mrb[0].mxu0 %v1002
      %v1251 = vpop.f32.mrb[0].mxu0
      %v1252 = vadd.f32 0.0, %v1251
      %v1253 = vpop.f32.mrb[0].mxu0
      %v1254 = vadd.f32 0.0, %v1253
      %1255 = vmatprep.mubr.f32.mxu0 0.0
      %1256 = vmatmul.mubr.f32.gmra.mrb[0].mxu0 %v1005
      %v1257 = vpop.f32.mrb[0].mxu0
      %v1258 = vadd.f32 0.0, %v1257
      %v1259 = vpop.f32.mrb[0].mxu0
      %v1260 = vadd.f32 0.0, %v1259
      %1261 = vmatprep.mubr.f32.mxu0 0.0
      %1262 = vmatmul.mubr.f32.gmra.mrb[0].mxu0 %v1008
      %v1263 = vpop.f32.mrb[0].mxu0
      %v1264 = vadd.f32 0.0, %v1263
      %v1265 = vpop.f32.mrb[0].mxu0
      %v1266 = vadd.f32 0.0, %v1265
      %1267 = vmatprep.mubr.f32.mxu0 0.0
      %1268 = vmatmul.mubr.f32.gmra.mrb[0].mxu0 %v1011
      %v1269 = vpop.f32.mrb[0].mxu0
      %v1270 = vadd.f32 0.0, %v1269
      %v1271 = vpop.f32.mrb[0].mxu0
      %v1272 = vadd.f32 0.0, %v1271
      %1273 = vmatprep.mubr.f32.mxu0 0.0
      %1274 = vmatmul.mubr.f32.gmra.mrb[0].mxu0 %v1014
      %v1275 = vpop.f32.mrb[0].mxu0
      %v1276 = vadd.f32 0.0, %v1275
      %v1277 = vpop.f32.mrb[0].mxu0
      %v1278 = vadd.f32 0.0, %v1277
      %1279 = vdwg.mxu0
      %v1280 = vsel %vm791, %v1090, -1e+30
      %v1281 = vsel %vm792, %v1092, -1e+30
      %v1282 = vsel %vm793, %v1096, -1e+30
      %v1283 = vsel %vm794, %v1098, -1e+30
      %v1284 = vsel %vm795, %v1102, -1e+30
      %v1285 = vsel %vm796, %v1104, -1e+30
      %v1286 = vsel %vm797, %v1108, -1e+30
      %v1287 = vsel %vm798, %v1110, -1e+30
      %v1288 = vsel %vm799, %v1114, -1e+30
      %v1289 = vsel %vm800, %v1116, -1e+30
      %v1290 = vsel %vm801, %v1120, -1e+30
      %v1291 = vsel %vm802, %v1122, -1e+30
      %v1292 = vsel %vm803, %v1126, -1e+30
      %v1293 = vsel %vm804, %v1128, -1e+30
      %v1294 = vsel %vm805, %v1132, -1e+30
      %v1295 = vsel %vm806, %v1134, -1e+30
      %v1296 = vsel %vm807, %v1138, -1e+30
      %v1297 = vsel %vm808, %v1140, -1e+30
      %v1298 = vsel %vm809, %v1144, -1e+30
      %v1299 = vsel %vm810, %v1146, -1e+30
      %v1300 = vsel %vm811, %v1150, -1e+30
      %v1301 = vsel %vm812, %v1152, -1e+30
      %v1302 = vsel %vm813, %v1156, -1e+30
      %v1303 = vsel %vm814, %v1158, -1e+30
      %v1304 = vsel %vm815, %v1162, -1e+30
      %v1305 = vsel %vm816, %v1164, -1e+30
      %v1306 = vsel %vm817, %v1168, -1e+30
      %v1307 = vsel %vm818, %v1170, -1e+30
      %v1308 = vsel %vm819, %v1174, -1e+30
      %v1309 = vsel %vm820, %v1176, -1e+30
      %v1310 = vsel %vm821, %v1180, -1e+30
      %v1311 = vsel %vm822, %v1182, -1e+30
      %v1312 = vsel %vm823, %v1186, -1e+30
      %v1313 = vsel %vm824, %v1188, -1e+30
      %v1314 = vsel %vm825, %v1192, -1e+30
      %v1315 = vsel %vm826, %v1194, -1e+30
      %v1316 = vsel %vm827, %v1198, -1e+30
      %v1317 = vsel %vm828, %v1200, -1e+30
      %v1318 = vsel %vm829, %v1204, -1e+30
      %v1319 = vsel %vm830, %v1206, -1e+30
      %v1320 = vsel %vm831, %v1210, -1e+30
      %v1321 = vsel %vm832, %v1212, -1e+30
      %v1322 = vsel %vm833, %v1216, -1e+30
      %v1323 = vsel %vm834, %v1218, -1e+30
      %v1324 = vsel %vm835, %v1222, -1e+30
      %v1325 = vsel %vm836, %v1224, -1e+30
      %v1326 = vsel %vm837, %v1228, -1e+30
      %v1327 = vsel %vm838, %v1230, -1e+30
      %v1328 = vsel %vm839, %v1234, -1e+30
      %v1329 = vsel %vm840, %v1236, -1e+30
      %v1330 = vsel %vm841, %v1240, -1e+30
      %v1331 = vsel %vm842, %v1242, -1e+30
      %v1332 = vsel %vm843, %v1246, -1e+30
      %v1333 = vsel %vm844, %v1248, -1e+30
      %v1334 = vsel %vm845, %v1252, -1e+30
      %v1335 = vsel %vm846, %v1254, -1e+30
      %v1336 = vsel %vm847, %v1258, -1e+30
      %v1337 = vsel %vm848, %v1260, -1e+30
      %v1338 = vsel %vm849, %v1264, -1e+30
      %v1339 = vsel %vm850, %v1266, -1e+30
      %v1340 = vsel %vm851, %v1270, -1e+30
      %v1341 = vsel %vm852, %v1272, -1e+30
      %v1342 = vsel %vm853, %v1276, -1e+30
      %v1343 = vsel %vm854, %v1278, -1e+30
      %v1344 = vmax.f32 %v1280, %v1281
      %1345 = vmax.xlane.f32.xlu0 %v1344
      %v1346 = vpop.xlane.xlu0 %1345
      %v1347 = vmax.f32 %v1282, %v1283
      %1348 = vmax.xlane.f32.xlu0 %v1347
      %v1349 = vpop.xlane.xlu0 %1348
      %v1350 = vmax.f32 %v1284, %v1285
      %1351 = vmax.xlane.f32.xlu0 %v1350
      %v1352 = vpop.xlane.xlu0 %1351
      %v1353 = vmax.f32 %v1286, %v1287
      %1354 = vmax.xlane.f32.xlu0 %v1353
      %v1355 = vpop.xlane.xlu0 %1354
      %v1356 = vmax.f32 %v1288, %v1289
      %1357 = vmax.xlane.f32.xlu0 %v1356
      %v1358 = vpop.xlane.xlu0 %1357
      %v1359 = vmax.f32 %v1290, %v1291
      %1360 = vmax.xlane.f32.xlu0 %v1359
      %v1361 = vpop.xlane.xlu0 %1360
      %v1362 = vmax.f32 %v1292, %v1293
      %1363 = vmax.xlane.f32.xlu0 %v1362
      %v1364 = vpop.xlane.xlu0 %1363
      %v1365 = vmax.f32 %v1294, %v1295
      %1366 = vmax.xlane.f32.xlu0 %v1365
      %v1367 = vpop.xlane.xlu0 %1366
      %v1368 = vmax.f32 %v1296, %v1297
      %1369 = vmax.xlane.f32.xlu0 %v1368
      %v1370 = vpop.xlane.xlu0 %1369
      %v1371 = vmax.f32 %v1298, %v1299
      %1372 = vmax.xlane.f32.xlu0 %v1371
      %v1373 = vpop.xlane.xlu0 %1372
      %v1374 = vmax.f32 %v1300, %v1301
      %1375 = vmax.xlane.f32.xlu0 %v1374
      %v1376 = vpop.xlane.xlu0 %1375
      %v1377 = vmax.f32 %v1302, %v1303
      %1378 = vmax.xlane.f32.xlu0 %v1377
      %v1379 = vpop.xlane.xlu0 %1378
      %v1380 = vmax.f32 %v1304, %v1305
      %1381 = vmax.xlane.f32.xlu0 %v1380
      %v1382 = vpop.xlane.xlu0 %1381
      %v1383 = vmax.f32 %v1306, %v1307
      %1384 = vmax.xlane.f32.xlu0 %v1383
      %v1385 = vpop.xlane.xlu0 %1384
      %v1386 = vmax.f32 %v1308, %v1309
      %1387 = vmax.xlane.f32.xlu0 %v1386
      %v1388 = vpop.xlane.xlu0 %1387
      %v1389 = vmax.f32 %v1310, %v1311
      %1390 = vmax.xlane.f32.xlu0 %v1389
      %v1391 = vpop.xlane.xlu0 %1390
      %v1392 = vmax.f32 %v1312, %v1313
      %1393 = vmax.xlane.f32.xlu0 %v1392
      %v1394 = vpop.xlane.xlu0 %1393
      %v1395 = vmax.f32 %v1314, %v1315
      %1396 = vmax.xlane.f32.xlu0 %v1395
      %v1397 = vpop.xlane.xlu0 %1396
      %v1398 = vmax.f32 %v1316, %v1317
      %1399 = vmax.xlane.f32.xlu0 %v1398
      %v1400 = vpop.xlane.xlu0 %1399
      %v1401 = vmax.f32 %v1318, %v1319
      %1402 = vmax.xlane.f32.xlu0 %v1401
      %v1403 = vpop.xlane.xlu0 %1402
      %v1404 = vmax.f32 %v1320, %v1321
      %1405 = vmax.xlane.f32.xlu0 %v1404
      %v1406 = vpop.xlane.xlu0 %1405
      %v1407 = vmax.f32 %v1322, %v1323
      %1408 = vmax.xlane.f32.xlu0 %v1407
      %v1409 = vpop.xlane.xlu0 %1408
      %v1410 = vmax.f32 %v1324, %v1325
      %1411 = vmax.xlane.f32.xlu0 %v1410
      %v1412 = vpop.xlane.xlu0 %1411
      %v1413 = vmax.f32 %v1326, %v1327
      %1414 = vmax.xlane.f32.xlu0 %v1413
      %v1415 = vpop.xlane.xlu0 %1414
      %v1416 = vmax.f32 %v1328, %v1329
      %1417 = vmax.xlane.f32.xlu0 %v1416
      %v1418 = vpop.xlane.xlu0 %1417
      %v1419 = vmax.f32 %v1330, %v1331
      %1420 = vmax.xlane.f32.xlu0 %v1419
      %v1421 = vpop.xlane.xlu0 %1420
      %v1422 = vmax.f32 %v1332, %v1333
      %1423 = vmax.xlane.f32.xlu0 %v1422
      %v1424 = vpop.xlane.xlu0 %1423
      %v1425 = vmax.f32 %v1334, %v1335
      %1426 = vmax.xlane.f32.xlu0 %v1425
      %v1427 = vpop.xlane.xlu0 %1426
      %v1428 = vmax.f32 %v1336, %v1337
      %1429 = vmax.xlane.f32.xlu0 %v1428
      %v1430 = vpop.xlane.xlu0 %1429
      %v1431 = vmax.f32 %v1338, %v1339
      %1432 = vmax.xlane.f32.xlu0 %v1431
      %v1433 = vpop.xlane.xlu0 %1432
      %v1434 = vmax.f32 %v1340, %v1341
      %1435 = vmax.xlane.f32.xlu0 %v1434
      %v1436 = vpop.xlane.xlu0 %1435
      %v1437 = vmax.f32 %v1342, %v1343
      %1438 = vmax.xlane.f32.xlu0 %v1437
      %v1439 = vpop.xlane.xlu0 %1438
      %v1440 = vsub.f32 %v1280, %v1346
      %v1441 = vsub.f32 %v1281, %v1346
      %v1442 = vsub.f32 %v1282, %v1349
      %v1443 = vsub.f32 %v1283, %v1349
      %v1444 = vsub.f32 %v1284, %v1352
      %v1445 = vsub.f32 %v1285, %v1352
      %v1446 = vsub.f32 %v1286, %v1355
      %v1447 = vsub.f32 %v1287, %v1355
      %v1448 = vsub.f32 %v1288, %v1358
      %v1449 = vsub.f32 %v1289, %v1358
      %v1450 = vsub.f32 %v1290, %v1361
      %v1451 = vsub.f32 %v1291, %v1361
      %v1452 = vsub.f32 %v1292, %v1364
      %v1453 = vsub.f32 %v1293, %v1364
      %v1454 = vsub.f32 %v1294, %v1367
      %v1455 = vsub.f32 %v1295, %v1367
      %v1456 = vsub.f32 %v1296, %v1370
      %v1457 = vsub.f32 %v1297, %v1370
      %v1458 = vsub.f32 %v1298, %v1373
      %v1459 = vsub.f32 %v1299, %v1373
      %v1460 = vsub.f32 %v1300, %v1376
      %v1461 = vsub.f32 %v1301, %v1376
      %v1462 = vsub.f32 %v1302, %v1379
      %v1463 = vsub.f32 %v1303, %v1379
      %v1464 = vsub.f32 %v1304, %v1382
      %v1465 = vsub.f32 %v1305, %v1382
      %v1466 = vsub.f32 %v1306, %v1385
      %v1467 = vsub.f32 %v1307, %v1385
      %v1468 = vsub.f32 %v1308, %v1388
      %v1469 = vsub.f32 %v1309, %v1388
      %v1470 = vsub.f32 %v1310, %v1391
      %v1471 = vsub.f32 %v1311, %v1391
      %v1472 = vsub.f32 %v1312, %v1394
      %v1473 = vsub.f32 %v1313, %v1394
      %v1474 = vsub.f32 %v1314, %v1397
      %v1475 = vsub.f32 %v1315, %v1397
      %v1476 = vsub.f32 %v1316, %v1400
      %v1477 = vsub.f32 %v1317, %v1400
      %v1478 = vsub.f32 %v1318, %v1403
      %v1479 = vsub.f32 %v1319, %v1403
      %v1480 = vsub.f32 %v1320, %v1406
      %v1481 = vsub.f32 %v1321, %v1406
      %v1482 = vsub.f32 %v1322, %v1409
      %v1483 = vsub.f32 %v1323, %v1409
      %v1484 = vsub.f32 %v1324, %v1412
      %v1485 = vsub.f32 %v1325, %v1412
      %v1486 = vsub.f32 %v1326, %v1415
      %v1487 = vsub.f32 %v1327, %v1415
      %v1488 = vsub.f32 %v1328, %v1418
      %v1489 = vsub.f32 %v1329, %v1418
      %v1490 = vsub.f32 %v1330, %v1421
      %v1491 = vsub.f32 %v1331, %v1421
      %v1492 = vsub.f32 %v1332, %v1424
      %v1493 = vsub.f32 %v1333, %v1424
      %v1494 = vsub.f32 %v1334, %v1427
      %v1495 = vsub.f32 %v1335, %v1427
      %v1496 = vsub.f32 %v1336, %v1430
      %v1497 = vsub.f32 %v1337, %v1430
      %v1498 = vsub.f32 %v1338, %v1433
      %v1499 = vsub.f32 %v1339, %v1433
      %v1500 = vsub.f32 %v1340, %v1436
      %v1501 = vsub.f32 %v1341, %v1436
      %v1502 = vsub.f32 %v1342, %v1439
      %v1503 = vsub.f32 %v1343, %v1439
      %v1504 = vmul.f32 %v1440, 1.442695
      %v1505 = vpow.pop %v1504
      %v1506 = vmul.f32 %v1441, 1.442695
      %v1507 = vpow.pop %v1506
      %v1508 = vmul.f32 %v1442, 1.442695
      %v1509 = vpow.pop %v1508
      %v1510 = vmul.f32 %v1443, 1.442695
      %v1511 = vpow.pop %v1510
      %v1512 = vmul.f32 %v1444, 1.442695
      %v1513 = vpow.pop %v1512
      %v1514 = vmul.f32 %v1445, 1.442695
      %v1515 = vpow.pop %v1514
      %v1516 = vmul.f32 %v1446, 1.442695
      %v1517 = vpow.pop %v1516
      %v1518 = vmul.f32 %v1447, 1.442695
      %v1519 = vpow.pop %v1518
      %v1520 = vmul.f32 %v1448, 1.442695
      %v1521 = vpow.pop %v1520
      %v1522 = vmul.f32 %v1449, 1.442695
      %v1523 = vpow.pop %v1522
      %v1524 = vmul.f32 %v1450, 1.442695
      %v1525 = vpow.pop %v1524
      %v1526 = vmul.f32 %v1451, 1.442695
      %v1527 = vpow.pop %v1526
      %v1528 = vmul.f32 %v1452, 1.442695
      %v1529 = vpow.pop %v1528
      %v1530 = vmul.f32 %v1453, 1.442695
      %v1531 = vpow.pop %v1530
      %v1532 = vmul.f32 %v1454, 1.442695
      %v1533 = vpow.pop %v1532
      %v1534 = vmul.f32 %v1455, 1.442695
      %v1535 = vpow.pop %v1534
      %v1536 = vmul.f32 %v1456, 1.442695
      %v1537 = vpow.pop %v1536
      %v1538 = vmul.f32 %v1457, 1.442695
      %v1539 = vpow.pop %v1538
      %v1540 = vmul.f32 %v1458, 1.442695
      %v1541 = vpow.pop %v1540
      %v1542 = vmul.f32 %v1459, 1.442695
      %v1543 = vpow.pop %v1542
      %v1544 = vmul.f32 %v1460, 1.442695
      %v1545 = vpow.pop %v1544
      %v1546 = vmul.f32 %v1461, 1.442695
      %v1547 = vpow.pop %v1546
      %v1548 = vmul.f32 %v1462, 1.442695
      %v1549 = vpow.pop %v1548
      %v1550 = vmul.f32 %v1463, 1.442695
      %v1551 = vpow.pop %v1550
      %v1552 = vmul.f32 %v1464, 1.442695
      %v1553 = vpow.pop %v1552
      %v1554 = vmul.f32 %v1465, 1.442695
      %v1555 = vpow.pop %v1554
      %v1556 = vmul.f32 %v1466, 1.442695
      %v1557 = vpow.pop %v1556
      %v1558 = vmul.f32 %v1467, 1.442695
      %v1559 = vpow.pop %v1558
      %v1560 = vmul.f32 %v1468, 1.442695
      %v1561 = vpow.pop %v1560
      %v1562 = vmul.f32 %v1469, 1.442695
      %v1563 = vpow.pop %v1562
      %v1564 = vmul.f32 %v1470, 1.442695
      %v1565 = vpow.pop %v1564
      %v1566 = vmul.f32 %v1471, 1.442695
      %v1567 = vpow.pop %v1566
      %v1568 = vmul.f32 %v1472, 1.442695
      %v1569 = vpow.pop %v1568
      %v1570 = vmul.f32 %v1473, 1.442695
      %v1571 = vpow.pop %v1570
      %v1572 = vmul.f32 %v1474, 1.442695
      %v1573 = vpow.pop %v1572
      %v1574 = vmul.f32 %v1475, 1.442695
      %v1575 = vpow.pop %v1574
      %v1576 = vmul.f32 %v1476, 1.442695
      %v1577 = vpow.pop %v1576
      %v1578 = vmul.f32 %v1477, 1.442695
      %v1579 = vpow.pop %v1578
      %v1580 = vmul.f32 %v1478, 1.442695
      %v1581 = vpow.pop %v1580
      %v1582 = vmul.f32 %v1479, 1.442695
      %v1583 = vpow.pop %v1582
      %v1584 = vmul.f32 %v1480, 1.442695
      %v1585 = vpow.pop %v1584
      %v1586 = vmul.f32 %v1481, 1.442695
      %v1587 = vpow.pop %v1586
      %v1588 = vmul.f32 %v1482, 1.442695
      %v1589 = vpow.pop %v1588
      %v1590 = vmul.f32 %v1483, 1.442695
      %v1591 = vpow.pop %v1590
      %v1592 = vmul.f32 %v1484, 1.442695
      %v1593 = vpow.pop %v1592
      %v1594 = vmul.f32 %v1485, 1.442695
      %v1595 = vpow.pop %v1594
      %v1596 = vmul.f32 %v1486, 1.442695
      %v1597 = vpow.pop %v1596
      %v1598 = vmul.f32 %v1487, 1.442695
      %v1599 = vpow.pop %v1598
      %v1600 = vmul.f32 %v1488, 1.442695
      %v1601 = vpow.pop %v1600
      %v1602 = vmul.f32 %v1489, 1.442695
      %v1603 = vpow.pop %v1602
      %v1604 = vmul.f32 %v1490, 1.442695
      %v1605 = vpow.pop %v1604
      %v1606 = vmul.f32 %v1491, 1.442695
      %v1607 = vpow.pop %v1606
      %v1608 = vmul.f32 %v1492, 1.442695
      %v1609 = vpow.pop %v1608
      %v1610 = vmul.f32 %v1493, 1.442695
      %v1611 = vpow.pop %v1610
      %v1612 = vmul.f32 %v1494, 1.442695
      %v1613 = vpow.pop %v1612
      %v1614 = vmul.f32 %v1495, 1.442695
      %v1615 = vpow.pop %v1614
      %v1616 = vmul.f32 %v1496, 1.442695
      %v1617 = vpow.pop %v1616
      %v1618 = vmul.f32 %v1497, 1.442695
      %v1619 = vpow.pop %v1618
      %v1620 = vmul.f32 %v1498, 1.442695
      %v1621 = vpow.pop %v1620
      %v1622 = vmul.f32 %v1499, 1.442695
      %v1623 = vpow.pop %v1622
      %v1624 = vmul.f32 %v1500, 1.442695
      %v1625 = vpow.pop %v1624
      %v1626 = vmul.f32 %v1501, 1.442695
      %v1627 = vpow.pop %v1626
      %v1628 = vmul.f32 %v1502, 1.442695
      %v1629 = vpow.pop %v1628
      %v1630 = vmul.f32 %v1503, 1.442695
      %v1631 = vpow.pop %v1630
      %v1632 = vadd.f32 %v1505, %v1507
      %1633 = vadd.xlane.f32.xlu0 %v1632
      %v1634 = vpop.xlane.xlu0 %1633
      %v1635 = vadd.f32 %v1509, %v1511
      %1636 = vadd.xlane.f32.xlu0 %v1635
      %v1637 = vpop.xlane.xlu0 %1636
      %v1638 = vadd.f32 %v1513, %v1515
      %1639 = vadd.xlane.f32.xlu0 %v1638
      %v1640 = vpop.xlane.xlu0 %1639
      %v1641 = vadd.f32 %v1517, %v1519
      %1642 = vadd.xlane.f32.xlu0 %v1641
      %v1643 = vpop.xlane.xlu0 %1642
      %v1644 = vadd.f32 %v1521, %v1523
      %1645 = vadd.xlane.f32.xlu0 %v1644
      %v1646 = vpop.xlane.xlu0 %1645
      %v1647 = vadd.f32 %v1525, %v1527
      %1648 = vadd.xlane.f32.xlu0 %v1647
      %v1649 = vpop.xlane.xlu0 %1648
      %v1650 = vadd.f32 %v1529, %v1531
      %1651 = vadd.xlane.f32.xlu0 %v1650
      %v1652 = vpop.xlane.xlu0 %1651
      %v1653 = vadd.f32 %v1533, %v1535
      %1654 = vadd.xlane.f32.xlu0 %v1653
      %v1655 = vpop.xlane.xlu0 %1654
      %v1656 = vadd.f32 %v1537, %v1539
      %1657 = vadd.xlane.f32.xlu0 %v1656
      %v1658 = vpop.xlane.xlu0 %1657
      %v1659 = vadd.f32 %v1541, %v1543
      %1660 = vadd.xlane.f32.xlu0 %v1659
      %v1661 = vpop.xlane.xlu0 %1660
      %v1662 = vadd.f32 %v1545, %v1547
      %1663 = vadd.xlane.f32.xlu0 %v1662
      %v1664 = vpop.xlane.xlu0 %1663
      %v1665 = vadd.f32 %v1549, %v1551
      %1666 = vadd.xlane.f32.xlu0 %v1665
      %v1667 = vpop.xlane.xlu0 %1666
      %v1668 = vadd.f32 %v1553, %v1555
      %1669 = vadd.xlane.f32.xlu0 %v1668
      %v1670 = vpop.xlane.xlu0 %1669
      %v1671 = vadd.f32 %v1557, %v1559
      %1672 = vadd.xlane.f32.xlu0 %v1671
      %v1673 = vpop.xlane.xlu0 %1672
      %v1674 = vadd.f32 %v1561, %v1563
      %1675 = vadd.xlane.f32.xlu0 %v1674
      %v1676 = vpop.xlane.xlu0 %1675
      %v1677 = vadd.f32 %v1565, %v1567
      %1678 = vadd.xlane.f32.xlu0 %v1677
      %v1679 = vpop.xlane.xlu0 %1678
      %v1680 = vadd.f32 %v1569, %v1571
      %1681 = vadd.xlane.f32.xlu0 %v1680
      %v1682 = vpop.xlane.xlu0 %1681
      %v1683 = vadd.f32 %v1573, %v1575
      %1684 = vadd.xlane.f32.xlu0 %v1683
      %v1685 = vpop.xlane.xlu0 %1684
      %v1686 = vadd.f32 %v1577, %v1579
      %1687 = vadd.xlane.f32.xlu0 %v1686
      %v1688 = vpop.xlane.xlu0 %1687
      %v1689 = vadd.f32 %v1581, %v1583
      %1690 = vadd.xlane.f32.xlu0 %v1689
      %v1691 = vpop.xlane.xlu0 %1690
      %v1692 = vadd.f32 %v1585, %v1587
      %1693 = vadd.xlane.f32.xlu0 %v1692
      %v1694 = vpop.xlane.xlu0 %1693
      %v1695 = vadd.f32 %v1589, %v1591
      %1696 = vadd.xlane.f32.xlu0 %v1695
      %v1697 = vpop.xlane.xlu0 %1696
      %v1698 = vadd.f32 %v1593, %v1595
      %1699 = vadd.xlane.f32.xlu0 %v1698
      %v1700 = vpop.xlane.xlu0 %1699
      %v1701 = vadd.f32 %v1597, %v1599
      %1702 = vadd.xlane.f32.xlu0 %v1701
      %v1703 = vpop.xlane.xlu0 %1702
      %v1704 = vadd.f32 %v1601, %v1603
      %1705 = vadd.xlane.f32.xlu0 %v1704
      %v1706 = vpop.xlane.xlu0 %1705
      %v1707 = vadd.f32 %v1605, %v1607
      %1708 = vadd.xlane.f32.xlu0 %v1707
      %v1709 = vpop.xlane.xlu0 %1708
      %v1710 = vadd.f32 %v1609, %v1611
      %1711 = vadd.xlane.f32.xlu0 %v1710
      %v1712 = vpop.xlane.xlu0 %1711
      %v1713 = vadd.f32 %v1613, %v1615
      %1714 = vadd.xlane.f32.xlu0 %v1713
      %v1715 = vpop.xlane.xlu0 %1714
      %v1716 = vadd.f32 %v1617, %v1619
      %1717 = vadd.xlane.f32.xlu0 %v1716
      %v1718 = vpop.xlane.xlu0 %1717
      %v1719 = vadd.f32 %v1621, %v1623
      %1720 = vadd.xlane.f32.xlu0 %v1719
      %v1721 = vpop.xlane.xlu0 %1720
      %v1722 = vadd.f32 %v1625, %v1627
      %1723 = vadd.xlane.f32.xlu0 %v1722
      %v1724 = vpop.xlane.xlu0 %1723
      %v1725 = vadd.f32 %v1629, %v1631
      %1726 = vadd.xlane.f32.xlu0 %v1725
      %v1727 = vpop.xlane.xlu0 %1726
      %v1728 = vrcp.pop %v1634
      %v1729 = vrcp.pop %v1637
      %v1730 = vrcp.pop %v1640
      %v1731 = vrcp.pop %v1643
      %v1732 = vrcp.pop %v1646
      %v1733 = vrcp.pop %v1649
      %v1734 = vrcp.pop %v1652
      %v1735 = vrcp.pop %v1655
      %v1736 = vrcp.pop %v1658
      %v1737 = vrcp.pop %v1661
      %v1738 = vrcp.pop %v1664
      %v1739 = vrcp.pop %v1667
      %v1740 = vrcp.pop %v1670
      %v1741 = vrcp.pop %v1673
      %v1742 = vrcp.pop %v1676
      %v1743 = vrcp.pop %v1679
      %v1744 = vrcp.pop %v1682
      %v1745 = vrcp.pop %v1685
      %v1746 = vrcp.pop %v1688
      %v1747 = vrcp.pop %v1691
      %v1748 = vrcp.pop %v1694
      %v1749 = vrcp.pop %v1697
      %v1750 = vrcp.pop %v1700
      %v1751 = vrcp.pop %v1703
      %v1752 = vrcp.pop %v1706
      %v1753 = vrcp.pop %v1709
      %v1754 = vrcp.pop %v1712
      %v1755 = vrcp.pop %v1715
      %v1756 = vrcp.pop %v1718
      %v1757 = vrcp.pop %v1721
      %v1758 = vrcp.pop %v1724
      %v1759 = vrcp.pop %v1727
      %v1760 = vmul.f32 %v1634, %v1728
      %v1761 = vmul.f32 %v1637, %v1729
      %v1762 = vmul.f32 %v1640, %v1730
      %v1763 = vmul.f32 %v1643, %v1731
      %v1764 = vmul.f32 %v1646, %v1732
      %v1765 = vmul.f32 %v1649, %v1733
      %v1766 = vmul.f32 %v1652, %v1734
      %v1767 = vmul.f32 %v1655, %v1735
      %v1768 = vmul.f32 %v1658, %v1736
      %v1769 = vmul.f32 %v1661, %v1737
      %v1770 = vmul.f32 %v1664, %v1738
      %v1771 = vmul.f32 %v1667, %v1739
      %v1772 = vmul.f32 %v1670, %v1740
      %v1773 = vmul.f32 %v1673, %v1741
      %v1774 = vmul.f32 %v1676, %v1742
      %v1775 = vmul.f32 %v1679, %v1743
      %v1776 = vmul.f32 %v1682, %v1744
      %v1777 = vmul.f32 %v1685, %v1745
      %v1778 = vmul.f32 %v1688, %v1746
      %v1779 = vmul.f32 %v1691, %v1747
      %v1780 = vmul.f32 %v1694, %v1748
      %v1781 = vmul.f32 %v1697, %v1749
      %v1782 = vmul.f32 %v1700, %v1750
      %v1783 = vmul.f32 %v1703, %v1751
      %v1784 = vmul.f32 %v1706, %v1752
      %v1785 = vmul.f32 %v1709, %v1753
      %v1786 = vmul.f32 %v1712, %v1754
      %v1787 = vmul.f32 %v1715, %v1755
      %v1788 = vmul.f32 %v1718, %v1756
      %v1789 = vmul.f32 %v1721, %v1757
      %v1790 = vmul.f32 %v1724, %v1758
      %v1791 = vmul.f32 %v1727, %v1759
      %v1792 = vsub.f32 2.0, %v1760
      %v1793 = vsub.f32 2.0, %v1761
      %v1794 = vsub.f32 2.0, %v1762
      %v1795 = vsub.f32 2.0, %v1763
      %v1796 = vsub.f32 2.0, %v1764
      %v1797 = vsub.f32 2.0, %v1765
      %v1798 = vsub.f32 2.0, %v1766
      %v1799 = vsub.f32 2.0, %v1767
      %v1800 = vsub.f32 2.0, %v1768
      %v1801 = vsub.f32 2.0, %v1769
      %v1802 = vsub.f32 2.0, %v1770
      %v1803 = vsub.f32 2.0, %v1771
      %v1804 = vsub.f32 2.0, %v1772
      %v1805 = vsub.f32 2.0, %v1773
      %v1806 = vsub.f32 2.0, %v1774
      %v1807 = vsub.f32 2.0, %v1775
      %v1808 = vsub.f32 2.0, %v1776
      %v1809 = vsub.f32 2.0, %v1777
      %v1810 = vsub.f32 2.0, %v1778
      %v1811 = vsub.f32 2.0, %v1779
      %v1812 = vsub.f32 2.0, %v1780
      %v1813 = vsub.f32 2.0, %v1781
      %v1814 = vsub.f32 2.0, %v1782
      %v1815 = vsub.f32 2.0, %v1783
      %v1816 = vsub.f32 2.0, %v1784
      %v1817 = vsub.f32 2.0, %v1785
      %v1818 = vsub.f32 2.0, %v1786
      %v1819 = vsub.f32 2.0, %v1787
      %v1820 = vsub.f32 2.0, %v1788
      %v1821 = vsub.f32 2.0, %v1789
      %v1822 = vsub.f32 2.0, %v1790
      %v1823 = vsub.f32 2.0, %v1791
      %v1824 = vmul.f32 %v1728, %v1792
      %v1825 = vmul.f32 %v1729, %v1793
      %v1826 = vmul.f32 %v1730, %v1794
      %v1827 = vmul.f32 %v1731, %v1795
      %v1828 = vmul.f32 %v1732, %v1796
      %v1829 = vmul.f32 %v1733, %v1797
      %v1830 = vmul.f32 %v1734, %v1798
      %v1831 = vmul.f32 %v1735, %v1799
      %v1832 = vmul.f32 %v1736, %v1800
      %v1833 = vmul.f32 %v1737, %v1801
      %v1834 = vmul.f32 %v1738, %v1802
      %v1835 = vmul.f32 %v1739, %v1803
      %v1836 = vmul.f32 %v1740, %v1804
      %v1837 = vmul.f32 %v1741, %v1805
      %v1838 = vmul.f32 %v1742, %v1806
      %v1839 = vmul.f32 %v1743, %v1807
      %v1840 = vmul.f32 %v1744, %v1808
      %v1841 = vmul.f32 %v1745, %v1809
      %v1842 = vmul.f32 %v1746, %v1810
      %v1843 = vmul.f32 %v1747, %v1811
      %v1844 = vmul.f32 %v1748, %v1812
      %v1845 = vmul.f32 %v1749, %v1813
      %v1846 = vmul.f32 %v1750, %v1814
      %v1847 = vmul.f32 %v1751, %v1815
      %v1848 = vmul.f32 %v1752, %v1816
      %v1849 = vmul.f32 %v1753, %v1817
      %v1850 = vmul.f32 %v1754, %v1818
      %v1851 = vmul.f32 %v1755, %v1819
      %v1852 = vmul.f32 %v1756, %v1820
      %v1853 = vmul.f32 %v1757, %v1821
      %v1854 = vmul.f32 %v1758, %v1822
      %v1855 = vmul.f32 %v1759, %v1823
      %v1856 = vmul.f32 %v1505, %v1824
      %v1857 = vmul.f32 %v1507, %v1824
      %v1858 = vmul.f32 %v1509, %v1825
      %v1859 = vmul.f32 %v1511, %v1825
      %v1860 = vmul.f32 %v1513, %v1826
      %v1861 = vmul.f32 %v1515, %v1826
      %v1862 = vmul.f32 %v1517, %v1827
      %v1863 = vmul.f32 %v1519, %v1827
      %v1864 = vmul.f32 %v1521, %v1828
      %v1865 = vmul.f32 %v1523, %v1828
      %v1866 = vmul.f32 %v1525, %v1829
      %v1867 = vmul.f32 %v1527, %v1829
      %v1868 = vmul.f32 %v1529, %v1830
      %v1869 = vmul.f32 %v1531, %v1830
      %v1870 = vmul.f32 %v1533, %v1831
      %v1871 = vmul.f32 %v1535, %v1831
      %v1872 = vmul.f32 %v1537, %v1832
      %v1873 = vmul.f32 %v1539, %v1832
      %v1874 = vmul.f32 %v1541, %v1833
      %v1875 = vmul.f32 %v1543, %v1833
      %v1876 = vmul.f32 %v1545, %v1834
      %v1877 = vmul.f32 %v1547, %v1834
      %v1878 = vmul.f32 %v1549, %v1835
      %v1879 = vmul.f32 %v1551, %v1835
      %v1880 = vmul.f32 %v1553, %v1836
      %v1881 = vmul.f32 %v1555, %v1836
      %v1882 = vmul.f32 %v1557, %v1837
      %v1883 = vmul.f32 %v1559, %v1837
      %v1884 = vmul.f32 %v1561, %v1838
      %v1885 = vmul.f32 %v1563, %v1838
      %v1886 = vmul.f32 %v1565, %v1839
      %v1887 = vmul.f32 %v1567, %v1839
      %v1888 = vmul.f32 %v1569, %v1840
      %v1889 = vmul.f32 %v1571, %v1840
      %v1890 = vmul.f32 %v1573, %v1841
      %v1891 = vmul.f32 %v1575, %v1841
      %v1892 = vmul.f32 %v1577, %v1842
      %v1893 = vmul.f32 %v1579, %v1842
      %v1894 = vmul.f32 %v1581, %v1843
      %v1895 = vmul.f32 %v1583, %v1843
      %v1896 = vmul.f32 %v1585, %v1844
      %v1897 = vmul.f32 %v1587, %v1844
      %v1898 = vmul.f32 %v1589, %v1845
      %v1899 = vmul.f32 %v1591, %v1845
      %v1900 = vmul.f32 %v1593, %v1846
      %v1901 = vmul.f32 %v1595, %v1846
      %v1902 = vmul.f32 %v1597, %v1847
      %v1903 = vmul.f32 %v1599, %v1847
      %v1904 = vmul.f32 %v1601, %v1848
      %v1905 = vmul.f32 %v1603, %v1848
      %v1906 = vmul.f32 %v1605, %v1849
      %v1907 = vmul.f32 %v1607, %v1849
      %v1908 = vmul.f32 %v1609, %v1850
      %v1909 = vmul.f32 %v1611, %v1850
      %v1910 = vmul.f32 %v1613, %v1851
      %v1911 = vmul.f32 %v1615, %v1851
      %v1912 = vmul.f32 %v1617, %v1852
      %v1913 = vmul.f32 %v1619, %v1852
      %v1914 = vmul.f32 %v1621, %v1853
      %v1915 = vmul.f32 %v1623, %v1853
      %v1916 = vmul.f32 %v1625, %v1854
      %v1917 = vmul.f32 %v1627, %v1854
      %v1918 = vmul.f32 %v1629, %v1855
      %v1919 = vmul.f32 %v1631, %v1855
      %v1924 = vrot.slane %v611, 4
      %v1925 = vrot.slane %v617, 4
      %v1926 = vsel %vm525, %v1924, %v1925
      %v1927 = vrot.slane %v613, 4
      %v1928 = vrot.slane %v619, 4
      %v1929 = vsel %vm525, %v1927, %v1928
      %1934 = vmatprep.subr.mxu0 %v1857
      %1935 = vmatpush1.xpose.msra.mxu0 %v1856
      %1936 = vmatprep.subr.mxu0 %v1859
      %1937 = vmatpush1.xpose.msra.mxu0 %v1858
      %1938 = vmatprep.subr.mxu0 %v1861
      %1939 = vmatpush1.xpose.msra.mxu0 %v1860
      %1940 = vmatprep.subr.mxu0 %v1863
      %1941 = vmatpush1.xpose.msra.mxu0 %v1862
      %1942 = vmatprep.subr.mxu0 %v1865
      %1943 = vmatpush1.xpose.msra.mxu0 %v1864
      %1944 = vmatprep.subr.mxu0 %v1867
      %1945 = vmatpush1.xpose.msra.mxu0 %v1866
      %1946 = vmatprep.subr.mxu0 %v1869
      %1947 = vmatpush1.xpose.msra.mxu0 %v1868
      %1948 = vmatprep.subr.mxu0 %v1871
      %1949 = vmatpush1.xpose.msra.mxu0 %v1870
      %1950 = vmatprep.subr.mxu0 %v1873
      %1951 = vmatpush1.xpose.msra.mxu0 %v1872
      %1952 = vmatprep.subr.mxu0 %v1875
      %1953 = vmatpush1.xpose.msra.mxu0 %v1874
      %1954 = vmatprep.subr.mxu0 %v1877
      %1955 = vmatpush1.xpose.msra.mxu0 %v1876
      %1956 = vmatprep.subr.mxu0 %v1879
      %1957 = vmatpush1.xpose.msra.mxu0 %v1878
      %1958 = vmatprep.subr.mxu0 %v1881
      %1959 = vmatpush1.xpose.msra.mxu0 %v1880
      %1960 = vmatprep.subr.mxu0 %v1883
      %1961 = vmatpush1.xpose.msra.mxu0 %v1882
      %1962 = vmatprep.subr.mxu0 %v1885
      %1963 = vmatpush1.xpose.msra.mxu0 %v1884
      %1964 = vmatprep.subr.mxu0 %v1887
      %1965 = vmatpush1.xpose.msra.mxu0 %v1886
      %1966 = vmatprep.subr.mxu0 %v1889
      %1967 = vmatpush1.xpose.msra.mxu0 %v1888
      %1968 = vmatprep.subr.mxu0 %v1891
      %1969 = vmatpush1.xpose.msra.mxu0 %v1890
      %1970 = vmatprep.subr.mxu0 %v1893
      %1971 = vmatpush1.xpose.msra.mxu0 %v1892
      %1972 = vmatprep.subr.mxu0 %v1895
      %1973 = vmatpush1.xpose.msra.mxu0 %v1894
      %1974 = vmatprep.subr.mxu0 %v1897
      %1975 = vmatpush1.xpose.msra.mxu0 %v1896
      %1976 = vmatprep.subr.mxu0 %v1899
      %1977 = vmatpush1.xpose.msra.mxu0 %v1898
      %1978 = vmatprep.subr.mxu0 %v1901
      %1979 = vmatpush1.xpose.msra.mxu0 %v1900
      %1980 = vmatprep.subr.mxu0 %v1903
      %1981 = vmatpush1.xpose.msra.mxu0 %v1902
      %1982 = vmatprep.subr.mxu0 %v1905
      %1983 = vmatpush1.xpose.msra.mxu0 %v1904
      %1984 = vmatprep.subr.mxu0 %v1907
      %1985 = vmatpush1.xpose.msra.mxu0 %v1906
      %1986 = vmatprep.subr.mxu0 %v1909
      %1987 = vmatpush1.xpose.msra.mxu0 %v1908
      %1988 = vmatprep.subr.mxu0 %v1911
      %1989 = vmatpush1.xpose.msra.mxu0 %v1910
      %1990 = vmatprep.subr.mxu0 %v1913
      %1991 = vmatpush1.xpose.msra.mxu0 %v1912
      %1992 = vmatprep.subr.mxu0 %v1915
      %1993 = vmatpush1.xpose.msra.mxu0 %v1914
      %1994 = vmatprep.subr.mxu0 %v1917
      %1995 = vmatpush1.xpose.msra.mxu0 %v1916
      %1996 = vmatprep.subr.mxu0 %v1919
      %1997 = vmatpush1.xpose.msra.mxu0 %v1918
      %1998 = vmatprep.mubr.f32.mxu0 %v1929
      %1999 = vmatmul.mubr.f32.gmra.mrb[0].mxu0 %v1926
      %v2000 = vpop.f32.mrb[0].mxu0
      %v2001 = vadd.f32 0.0, %v2000
      %v2002 = vpop.f32.mrb[0].mxu0
      %v2003 = vadd.f32 0.0, %v2002
      %2004 = vmatprep.mubr.f32.mxu0 %v1928
      %2005 = vmatmul.mubr.f32.gmra.mrb[0].mxu0 %v1925
      %v2006 = vpop.f32.mrb[0].mxu0
      %v2007 = vadd.f32 0.0, %v2006
      %v2008 = vpop.f32.mrb[0].mxu0
      %v2009 = vadd.f32 0.0, %v2008
      %2010 = vdwg.mxu0
      %v2012 = vsel %vm919, %v627, 0
      %v2015 = vsel %vm919, %v628, 0
      %v2018 = vsel %vm919, %v629, 0
      %v2021 = vsel %vm1016, %v2007, 0
      %v2024 = vsel %vm1016, %v2009, 0
      %2026 = vmatprep.subr.mxu0 %v2003
      %2027 = vmatpush1.msra.mxu0 %v2001
      %2028 = vmatprep.subr.mxu0 %v2024
      %2029 = vmatpush1.msra.mxu0 %v2021
      %2030 = vmatprep.subr.mxu0 0.0
      %2031 = vmatpush1.msra.mxu0 0.0
      %2032 = vmatprep.subr.mxu0 0.0
      %2033 = vmatpush1.msra.mxu0 0.0
      %2034 = vmatprep.subr.mxu0 0.0
      %2035 = vmatpush1.msra.mxu0 0.0
      %2036 = vmatprep.subr.mxu0 0.0
      %2037 = vmatpush1.msra.mxu0 0.0
      %2038 = vmatprep.subr.mxu0 0.0
      %2039 = vmatpush1.msra.mxu0 0.0
      %2040 = vmatprep.subr.mxu0 0.0
      %2041 = vmatpush1.msra.mxu0 0.0
      %2042 = vmatprep.subr.mxu0 0.0
      %2043 = vmatpush1.msra.mxu0 0.0
      %2044 = vmatprep.subr.mxu0 0.0
      %2045 = vmatpush1.msra.mxu0 0.0
      %2046 = vmatprep.subr.mxu0 0.0
      %2047 = vmatpush1.msra.mxu0 0.0
      %2048 = vmatprep.subr.mxu0 0.0
      %2049 = vmatpush1.msra.mxu0 0.0
      %2050 = vmatprep.subr.mxu0 0.0
      %2051 = vmatpush1.msra.mxu0 0.0
      %2052 = vmatprep.subr.mxu0 0.0
      %2053 = vmatpush1.msra.mxu0 0.0
      %2054 = vmatprep.subr.mxu0 0.0
      %2055 = vmatpush1.msra.mxu0 0.0
      %2056 = vmatprep.subr.mxu0 0.0
      %2057 = vmatpush1.msra.mxu0 0.0
      %2058 = vmatprep.subr.mxu0 0.0
      %2059 = vmatpush1.msra.mxu0 0.0
      %2060 = vmatprep.subr.mxu0 0.0
      %2061 = vmatpush1.msra.mxu0 0.0
      %2062 = vmatprep.subr.mxu0 0.0
      %2063 = vmatpush1.msra.mxu0 0.0
      %2064 = vmatprep.subr.mxu0 0.0
      %2065 = vmatpush1.msra.mxu0 0.0
      %2066 = vmatprep.subr.mxu0 0.0
      %2067 = vmatpush1.msra.mxu0 0.0
      %2068 = vmatprep.subr.mxu0 0.0
      %2069 = vmatpush1.msra.mxu0 0.0
      %2070 = vmatprep.subr.mxu0 0.0
      %2071 = vmatpush1.msra.mxu0 0.0
      %2072 = vmatprep.subr.mxu0 0.0
      %2073 = vmatpush1.msra.mxu0 0.0
      %2074 = vmatprep.subr.mxu0 0.0
      %2075 = vmatpush1.msra.mxu0 0.0
      %2076 = vmatprep.subr.mxu0 0.0
      %2077 = vmatpush1.msra.mxu0 0.0
      %2078 = vmatprep.subr.mxu0 0.0
      %2079 = vmatpush1.msra.mxu0 0.0
      %2080 = vmatprep.subr.mxu0 0.0
      %2081 = vmatpush1.msra.mxu0 0.0
      %2082 = vmatprep.subr.mxu0 0.0
      %2083 = vmatpush1.msra.mxu0 0.0
      %2084 = vmatprep.subr.mxu0 0.0
      %2085 = vmatpush1.msra.mxu0 0.0
      %2086 = vmatprep.subr.mxu0 0.0
      %2087 = vmatpush1.msra.mxu0 0.0
      %2088 = vmatprep.subr.mxu0 0.0
      %2089 = vmatpush1.msra.mxu0 0.0
      %2090 = vmatprep.mubr.f32.mxu0 0.0
      %2091 = vmatmul.mubr.f32.gmra.mrb[0].mxu0 %v2012
      %v2092 = vpop.f32.mrb[0].mxu0
      %v2093 = vadd.f32 0.0, %v2092
      %v2094 = vpop.f32.mrb[0].mxu0
      %v2095 = vadd.f32 0.0, %v2094
      %2096 = vmatprep.mubr.f32.mxu0 0.0
      %2097 = vmatmul.mubr.f32.gmra.mrb[0].mxu0 %v2015
      %v2098 = vpop.f32.mrb[0].mxu0
      %v2099 = vadd.f32 0.0, %v2098
      %v2100 = vpop.f32.mrb[0].mxu0
      %v2101 = vadd.f32 0.0, %v2100
      %2102 = vmatprep.mubr.f32.mxu0 0.0
      %2103 = vmatmul.mubr.f32.gmra.mrb[0].mxu0 %v2018
      %v2104 = vpop.f32.mrb[0].mxu0
      %v2105 = vadd.f32 0.0, %v2104
      %v2106 = vpop.f32.mrb[0].mxu0
      %v2107 = vadd.f32 0.0, %v2106
      %2108 = vdwg.mxu0
      %v2109 = vadd.f32 %v648, %v2093
      %v2110 = vadd.f32 %v649, %v2095
      %v2111 = vadd.f32 %v650, %v2099
      %v2112 = vadd.f32 %v651, %v2101
      %v2113 = vadd.f32 %v652, %v2105
      %v2114 = vadd.f32 %v653, %v2107
      %vm2115 = vcmask 1045504
      %v2116 = vrot.slane %v605, 2
      %v2117 = vrot.slane %v611, 2
      %v2118 = vsel %vm2115, %v2116, %v2117
      %v2119 = vrot.slane %v607, 2
      %v2120 = vrot.slane %v613, 2
      %v2121 = vsel %vm2115, %v2119, %v2120
      %2126 = vxpose.xlu0.b32.start [1/16] %v2118, 128
      %2127 = vxpose.xlu0.b32.cont [2/16] %v2117, 128
      %2128 = vxpose.xlu0.b32.cont [3/16] 0.0, 128
      %2129 = vxpose.xlu0.b32.cont [4/16] 0.0, 128
      %2130 = vxpose.xlu0.b32.cont [5/16] 0.0, 128
      %2131 = vxpose.xlu0.b32.cont [6/16] 0.0, 128
      %2132 = vxpose.xlu0.b32.cont [7/16] 0.0, 128
      %2133 = vxpose.xlu0.b32.cont [8/16] 0.0, 128
      %2134 = vxpose.xlu0.b32.cont [9/16] 0.0, 128
      %2135 = vxpose.xlu0.b32.cont [10/16] 0.0, 128
      %2136 = vxpose.xlu0.b32.cont [11/16] 0.0, 128
      %2137 = vxpose.xlu0.b32.cont [12/16] 0.0, 128
      %2138 = vxpose.xlu0.b32.cont [13/16] 0.0, 128
      %2139 = vxpose.xlu0.b32.cont [14/16] 0.0, 128
      %2140 = vxpose.xlu0.b32.cont [15/16] 0.0, 128
      %2141 = vxpose.xlu0.b32.end [16/16] 0.0, 128
      %v2142 = vpop.trf.xlu0
      %v2143 = vpop.trf.xlu0
      %v2144 = vpop.trf.xlu0
      %v2145 = vpop.trf.xlu0
      %v2146 = vpop.trf.xlu0
      %v2147 = vpop.trf.xlu0
      %v2148 = vpop.trf.xlu0
      %v2149 = vpop.trf.xlu0
      %v2150 = vpop.trf.xlu0
      %v2151 = vpop.trf.xlu0
      %v2152 = vpop.trf.xlu0
      %v2153 = vpop.trf.xlu0
      %v2154 = vpop.trf.xlu0
      %v2155 = vpop.trf.xlu0
      %v2156 = vpop.trf.xlu0
      %v2157 = vpop.trf.xlu0
      %2158 = vxpose.xlu0.b32.start [1/16] %v2121, 128
      %2159 = vxpose.xlu0.b32.cont [2/16] %v2120, 128
      %2160 = vxpose.xlu0.b32.cont [3/16] 0.0, 128
      %2161 = vxpose.xlu0.b32.cont [4/16] 0.0, 128
      %2162 = vxpose.xlu0.b32.cont [5/16] 0.0, 128
      %2163 = vxpose.xlu0.b32.cont [6/16] 0.0, 128
      %2164 = vxpose.xlu0.b32.cont [7/16] 0.0, 128
      %2165 = vxpose.xlu0.b32.cont [8/16] 0.0, 128
      %2166 = vxpose.xlu0.b32.cont [9/16] 0.0, 128
      %2167 = vxpose.xlu0.b32.cont [10/16] 0.0, 128
      %2168 = vxpose.xlu0.b32.cont [11/16] 0.0, 128
      %2169 = vxpose.xlu0.b32.cont [12/16] 0.0, 128
      %2170 = vxpose.xlu0.b32.cont [13/16] 0.0, 128
      %2171 = vxpose.xlu0.b32.cont [14/16] 0.0, 128
      %2172 = vxpose.xlu0.b32.cont [15/16] 0.0, 128
      %2173 = vxpose.xlu0.b32.end [16/16] 0.0, 128
      %v2174 = vpop.trf.xlu0
      %v2175 = vpop.trf.xlu0
      %v2176 = vpop.trf.xlu0
      %v2177 = vpop.trf.xlu0
      %v2178 = vpop.trf.xlu0
      %v2179 = vpop.trf.xlu0
      %v2180 = vpop.trf.xlu0
      %v2181 = vpop.trf.xlu0
      %v2182 = vpop.trf.xlu0
      %v2183 = vpop.trf.xlu0
      %v2184 = vpop.trf.xlu0
      %v2185 = vpop.trf.xlu0
      %v2186 = vpop.trf.xlu0
      %v2187 = vpop.trf.xlu0
      %v2188 = vpop.trf.xlu0
      %v2189 = vpop.trf.xlu0
      %v2191 = vsel %vm919, %v2142, 0
      %v2194 = vsel %vm919, %v2143, 0
      %v2197 = vsel %vm919, %v2144, 0
      %v2200 = vsel %vm919, %v2145, 0
      %v2203 = vsel %vm919, %v2146, 0
      %v2206 = vsel %vm919, %v2147, 0
      %v2209 = vsel %vm919, %v2148, 0
      %v2212 = vsel %vm919, %v2149, 0
      %v2215 = vsel %vm919, %v2150, 0
      %v2218 = vsel %vm919, %v2151, 0
      %v2221 = vsel %vm919, %v2152, 0
      %v2224 = vsel %vm919, %v2153, 0
      %v2227 = vsel %vm919, %v2154, 0
      %v2230 = vsel %vm919, %v2155, 0
      %v2233 = vsel %vm919, %v2156, 0
      %v2236 = vsel %vm919, %v2157, 0
      %v2239 = vsel %vm919, %v2174, 0
      %v2242 = vsel %vm919, %v2175, 0
      %v2245 = vsel %vm919, %v2176, 0
      %v2248 = vsel %vm919, %v2177, 0
      %v2251 = vsel %vm919, %v2178, 0
      %v2254 = vsel %vm919, %v2179, 0
      %v2257 = vsel %vm919, %v2180, 0
      %v2260 = vsel %vm919, %v2181, 0
      %v2263 = vsel %vm919, %v2182, 0
      %v2266 = vsel %vm919, %v2183, 0
      %v2269 = vsel %vm919, %v2184, 0
      %v2272 = vsel %vm919, %v2185, 0
      %v2275 = vsel %vm919, %v2186, 0
      %v2278 = vsel %vm919, %v2187, 0
      %v2281 = vsel %vm919, %v2188, 0
      %v2284 = vsel %vm919, %v2189, 0
      %v2286 = vsel %vm1016, %v2117, 0
      %v2288 = vsel %vm1016, %v2120, 0
      %2290 = vmatprep.subr.mxu0 %v2121
      %2291 = vmatpush1.msra.mxu0 %v2118
      %2292 = vmatprep.subr.mxu0 %v2288
      %2293 = vmatpush1.msra.mxu0 %v2286
      %2294 = vmatprep.subr.mxu0 0.0
      %2295 = vmatpush1.msra.mxu0 0.0
      %2296 = vmatprep.subr.mxu0 0.0
      %2297 = vmatpush1.msra.mxu0 0.0
      %2298 = vmatprep.subr.mxu0 0.0
      %2299 = vmatpush1.msra.mxu0 0.0
      %2300 = vmatprep.subr.mxu0 0.0
      %2301 = vmatpush1.msra.mxu0 0.0
      %2302 = vmatprep.subr.mxu0 0.0
      %2303 = vmatpush1.msra.mxu0 0.0
      %2304 = vmatprep.subr.mxu0 0.0
      %2305 = vmatpush1.msra.mxu0 0.0
      %2306 = vmatprep.subr.mxu0 0.0
      %2307 = vmatpush1.msra.mxu0 0.0
      %2308 = vmatprep.subr.mxu0 0.0
      %2309 = vmatpush1.msra.mxu0 0.0
      %2310 = vmatprep.subr.mxu0 0.0
      %2311 = vmatpush1.msra.mxu0 0.0
      %2312 = vmatprep.subr.mxu0 0.0
      %2313 = vmatpush1.msra.mxu0 0.0
      %2314 = vmatprep.subr.mxu0 0.0
      %2315 = vmatpush1.msra.mxu0 0.0
      %2316 = vmatprep.subr.mxu0 0.0
      %2317 = vmatpush1.msra.mxu0 0.0
      %2318 = vmatprep.subr.mxu0 0.0
      %2319 = vmatpush1.msra.mxu0 0.0
      %2320 = vmatprep.subr.mxu0 0.0
      %2321 = vmatpush1.msra.mxu0 0.0
      %2322 = vmatprep.subr.mxu0 0.0
      %2323 = vmatpush1.msra.mxu0 0.0
      %2324 = vmatprep.subr.mxu0 0.0
      %2325 = vmatpush1.msra.mxu0 0.0
      %2326 = vmatprep.subr.mxu0 0.0
      %2327 = vmatpush1.msra.mxu0 0.0
      %2328 = vmatprep.subr.mxu0 0.0
      %2329 = vmatpush1.msra.mxu0 0.0
      %2330 = vmatprep.subr.mxu0 0.0
      %2331 = vmatpush1.msra.mxu0 0.0
      %2332 = vmatprep.subr.mxu0 0.0
      %2333 = vmatpush1.msra.mxu0 0.0
      %2334 = vmatprep.subr.mxu0 0.0
      %2335 = vmatpush1.msra.mxu0 0.0
      %2336 = vmatprep.subr.mxu0 0.0
      %2337 = vmatpush1.msra.mxu0 0.0
      %2338 = vmatprep.subr.mxu0 0.0
      %2339 = vmatpush1.msra.mxu0 0.0
      %2340 = vmatprep.subr.mxu0 0.0
      %2341 = vmatpush1.msra.mxu0 0.0
      %2342 = vmatprep.subr.mxu0 0.0
      %2343 = vmatpush1.msra.mxu0 0.0
      %2344 = vmatprep.subr.mxu0 0.0
      %2345 = vmatpush1.msra.mxu0 0.0
      %2346 = vmatprep.subr.mxu0 0.0
      %2347 = vmatpush1.msra.mxu0 0.0
      %2348 = vmatprep.subr.mxu0 0.0
      %2349 = vmatpush1.msra.mxu0 0.0
      %2350 = vmatprep.subr.mxu0 0.0
      %2351 = vmatpush1.msra.mxu0 0.0
      %2352 = vmatprep.subr.mxu0 0.0
      %2353 = vmatpush1.msra.mxu0 0.0
      %2354 = vmatprep.mubr.f32.mxu0 0.0
      %2355 = vmatmul.mubr.f32.gmra.mrb[0].mxu0 %v2191
      %v2356 = vpop.f32.mrb[0].mxu0
      %v2357 = vadd.f32 0.0, %v2356
      %v2358 = vpop.f32.mrb[0].mxu0
      %v2359 = vadd.f32 0.0, %v2358
      %2360 = vmatprep.mubr.f32.mxu0 0.0
      %2361 = vmatmul.mubr.f32.gmra.mrb[0].mxu0 %v2194
      %v2362 = vpop.f32.mrb[0].mxu0
      %v2363 = vadd.f32 0.0, %v2362
      %v2364 = vpop.f32.mrb[0].mxu0
      %v2365 = vadd.f32 0.0, %v2364
      %2366 = vmatprep.mubr.f32.mxu0 0.0
      %2367 = vmatmul.mubr.f32.gmra.mrb[0].mxu0 %v2197
      %v2368 = vpop.f32.mrb[0].mxu0
      %v2369 = vadd.f32 0.0, %v2368
      %v2370 = vpop.f32.mrb[0].mxu0
      %v2371 = vadd.f32 0.0, %v2370
      %2372 = vmatprep.mubr.f32.mxu0 0.0
      %2373 = vmatmul.mubr.f32.gmra.mrb[0].mxu0 %v2200
      %v2374 = vpop.f32.mrb[0].mxu0
      %v2375 = vadd.f32 0.0, %v2374
      %v2376 = vpop.f32.mrb[0].mxu0
      %v2377 = vadd.f32 0.0, %v2376
      %2378 = vmatprep.mubr.f32.mxu0 0.0
      %2379 = vmatmul.mubr.f32.gmra.mrb[0].mxu0 %v2203
      %v2380 = vpop.f32.mrb[0].mxu0
      %v2381 = vadd.f32 0.0, %v2380
      %v2382 = vpop.f32.mrb[0].mxu0
      %v2383 = vadd.f32 0.0, %v2382
      %2384 = vmatprep.mubr.f32.mxu0 0.0
      %2385 = vmatmul.mubr.f32.gmra.mrb[0].mxu0 %v2206
      %v2386 = vpop.f32.mrb[0].mxu0
      %v2387 = vadd.f32 0.0, %v2386
      %v2388 = vpop.f32.mrb[0].mxu0
      %v2389 = vadd.f32 0.0, %v2388
      %2390 = vmatprep.mubr.f32.mxu0 0.0
      %2391 = vmatmul.mubr.f32.gmra.mrb[0].mxu0 %v2209
      %v2392 = vpop.f32.mrb[0].mxu0
      %v2393 = vadd.f32 0.0, %v2392
      %v2394 = vpop.f32.mrb[0].mxu0
      %v2395 = vadd.f32 0.0, %v2394
      %2396 = vmatprep.mubr.f32.mxu0 0.0
      %2397 = vmatmul.mubr.f32.gmra.mrb[0].mxu0 %v2212
      %v2398 = vpop.f32.mrb[0].mxu0
      %v2399 = vadd.f32 0.0, %v2398
      %v2400 = vpop.f32.mrb[0].mxu0
      %v2401 = vadd.f32 0.0, %v2400
      %2402 = vmatprep.mubr.f32.mxu0 0.0
      %2403 = vmatmul.mubr.f32.gmra.mrb[0].mxu0 %v2215
      %v2404 = vpop.f32.mrb[0].mxu0
      %v2405 = vadd.f32 0.0, %v2404
      %v2406 = vpop.f32.mrb[0].mxu0
      %v2407 = vadd.f32 0.0, %v2406
      %2408 = vmatprep.mubr.f32.mxu0 0.0
      %2409 = vmatmul.mubr.f32.gmra.mrb[0].mxu0 %v2218
      %v2410 = vpop.f32.mrb[0].mxu0
      %v2411 = vadd.f32 0.0, %v2410
      %v2412 = vpop.f32.mrb[0].mxu0
      %v2413 = vadd.f32 0.0, %v2412
      %2414 = vmatprep.mubr.f32.mxu0 0.0
      %2415 = vmatmul.mubr.f32.gmra.mrb[0].mxu0 %v2221
      %v2416 = vpop.f32.mrb[0].mxu0
      %v2417 = vadd.f32 0.0, %v2416
      %v2418 = vpop.f32.mrb[0].mxu0
      %v2419 = vadd.f32 0.0, %v2418
      %2420 = vmatprep.mubr.f32.mxu0 0.0
      %2421 = vmatmul.mubr.f32.gmra.mrb[0].mxu0 %v2224
      %v2422 = vpop.f32.mrb[0].mxu0
      %v2423 = vadd.f32 0.0, %v2422
      %v2424 = vpop.f32.mrb[0].mxu0
      %v2425 = vadd.f32 0.0, %v2424
      %2426 = vmatprep.mubr.f32.mxu0 0.0
      %2427 = vmatmul.mubr.f32.gmra.mrb[0].mxu0 %v2227
      %v2428 = vpop.f32.mrb[0].mxu0
      %v2429 = vadd.f32 0.0, %v2428
      %v2430 = vpop.f32.mrb[0].mxu0
      %v2431 = vadd.f32 0.0, %v2430
      %2432 = vmatprep.mubr.f32.mxu0 0.0
      %2433 = vmatmul.mubr.f32.gmra.mrb[0].mxu0 %v2230
      %v2434 = vpop.f32.mrb[0].mxu0
      %v2435 = vadd.f32 0.0, %v2434
      %v2436 = vpop.f32.mrb[0].mxu0
      %v2437 = vadd.f32 0.0, %v2436
      %2438 = vmatprep.mubr.f32.mxu0 0.0
      %2439 = vmatmul.mubr.f32.gmra.mrb[0].mxu0 %v2233
      %v2440 = vpop.f32.mrb[0].mxu0
      %v2441 = vadd.f32 0.0, %v2440
      %v2442 = vpop.f32.mrb[0].mxu0
      %v2443 = vadd.f32 0.0, %v2442
      %2444 = vmatprep.mubr.f32.mxu0 0.0
      %2445 = vmatmul.mubr.f32.gmra.mrb[0].mxu0 %v2236
      %v2446 = vpop.f32.mrb[0].mxu0
      %v2447 = vadd.f32 0.0, %v2446
      %v2448 = vpop.f32.mrb[0].mxu0
      %v2449 = vadd.f32 0.0, %v2448
      %2450 = vmatprep.mubr.f32.mxu0 0.0
      %2451 = vmatmul.mubr.f32.gmra.mrb[0].mxu0 %v2239
      %v2452 = vpop.f32.mrb[0].mxu0
      %v2453 = vadd.f32 0.0, %v2452
      %v2454 = vpop.f32.mrb[0].mxu0
      %v2455 = vadd.f32 0.0, %v2454
      %2456 = vmatprep.mubr.f32.mxu0 0.0
      %2457 = vmatmul.mubr.f32.gmra.mrb[0].mxu0 %v2242
      %v2458 = vpop.f32.mrb[0].mxu0
      %v2459 = vadd.f32 0.0, %v2458
      %v2460 = vpop.f32.mrb[0].mxu0
      %v2461 = vadd.f32 0.0, %v2460
      %2462 = vmatprep.mubr.f32.mxu0 0.0
      %2463 = vmatmul.mubr.f32.gmra.mrb[0].mxu0 %v2245
      %v2464 = vpop.f32.mrb[0].mxu0
      %v2465 = vadd.f32 0.0, %v2464
      %v2466 = vpop.f32.mrb[0].mxu0
      %v2467 = vadd.f32 0.0, %v2466
      %2468 = vmatprep.mubr.f32.mxu0 0.0
      %2469 = vmatmul.mubr.f32.gmra.mrb[0].mxu0 %v2248
      %v2470 = vpop.f32.mrb[0].mxu0
      %v2471 = vadd.f32 0.0, %v2470
      %v2472 = vpop.f32.mrb[0].mxu0
      %v2473 = vadd.f32 0.0, %v2472
      %2474 = vmatprep.mubr.f32.mxu0 0.0
      %2475 = vmatmul.mubr.f32.gmra.mrb[0].mxu0 %v2251
      %v2476 = vpop.f32.mrb[0].mxu0
      %v2477 = vadd.f32 0.0, %v2476
      %v2478 = vpop.f32.mrb[0].mxu0
      %v2479 = vadd.f32 0.0, %v2478
      %2480 = vmatprep.mubr.f32.mxu0 0.0
      %2481 = vmatmul.mubr.f32.gmra.mrb[0].mxu0 %v2254
      %v2482 = vpop.f32.mrb[0].mxu0
      %v2483 = vadd.f32 0.0, %v2482
      %v2484 = vpop.f32.mrb[0].mxu0
      %v2485 = vadd.f32 0.0, %v2484
      %2486 = vmatprep.mubr.f32.mxu0 0.0
      %2487 = vmatmul.mubr.f32.gmra.mrb[0].mxu0 %v2257
      %v2488 = vpop.f32.mrb[0].mxu0
      %v2489 = vadd.f32 0.0, %v2488
      %v2490 = vpop.f32.mrb[0].mxu0
      %v2491 = vadd.f32 0.0, %v2490
      %2492 = vmatprep.mubr.f32.mxu0 0.0
      %2493 = vmatmul.mubr.f32.gmra.mrb[0].mxu0 %v2260
      %v2494 = vpop.f32.mrb[0].mxu0
      %v2495 = vadd.f32 0.0, %v2494
      %v2496 = vpop.f32.mrb[0].mxu0
      %v2497 = vadd.f32 0.0, %v2496
      %2498 = vmatprep.mubr.f32.mxu0 0.0
      %2499 = vmatmul.mubr.f32.gmra.mrb[0].mxu0 %v2263
      %v2500 = vpop.f32.mrb[0].mxu0
      %v2501 = vadd.f32 0.0, %v2500
      %v2502 = vpop.f32.mrb[0].mxu0
      %v2503 = vadd.f32 0.0, %v2502
      %2504 = vmatprep.mubr.f32.mxu0 0.0
      %2505 = vmatmul.mubr.f32.gmra.mrb[0].mxu0 %v2266
      %v2506 = vpop.f32.mrb[0].mxu0
      %v2507 = vadd.f32 0.0, %v2506
      %v2508 = vpop.f32.mrb[0].mxu0
      %v2509 = vadd.f32 0.0, %v2508
      %2510 = vmatprep.mubr.f32.mxu0 0.0
      %2511 = vmatmul.mubr.f32.gmra.mrb[0].mxu0 %v2269
      %v2512 = vpop.f32.mrb[0].mxu0
      %v2513 = vadd.f32 0.0, %v2512
      %v2514 = vpop.f32.mrb[0].mxu0
      %v2515 = vadd.f32 0.0, %v2514
      %2516 = vmatprep.mubr.f32.mxu0 0.0
      %2517 = vmatmul.mubr.f32.gmra.mrb[0].mxu0 %v2272
      %v2518 = vpop.f32.mrb[0].mxu0
      %v2519 = vadd.f32 0.0, %v2518
      %v2520 = vpop.f32.mrb[0].mxu0
      %v2521 = vadd.f32 0.0, %v2520
      %2522 = vmatprep.mubr.f32.mxu0 0.0
      %2523 = vmatmul.mubr.f32.gmra.mrb[0].mxu0 %v2275
      %v2524 = vpop.f32.mrb[0].mxu0
      %v2525 = vadd.f32 0.0, %v2524
      %v2526 = vpop.f32.mrb[0].mxu0
      %v2527 = vadd.f32 0.0, %v2526
      %2528 = vmatprep.mubr.f32.mxu0 0.0
      %2529 = vmatmul.mubr.f32.gmra.mrb[0].mxu0 %v2278
      %v2530 = vpop.f32.mrb[0].mxu0
      %v2531 = vadd.f32 0.0, %v2530
      %v2532 = vpop.f32.mrb[0].mxu0
      %v2533 = vadd.f32 0.0, %v2532
      %2534 = vmatprep.mubr.f32.mxu0 0.0
      %2535 = vmatmul.mubr.f32.gmra.mrb[0].mxu0 %v2281
      %v2536 = vpop.f32.mrb[0].mxu0
      %v2537 = vadd.f32 0.0, %v2536
      %v2538 = vpop.f32.mrb[0].mxu0
      %v2539 = vadd.f32 0.0, %v2538
      %2540 = vmatprep.mubr.f32.mxu0 0.0
      %2541 = vmatmul.mubr.f32.gmra.mrb[0].mxu0 %v2284
      %v2542 = vpop.f32.mrb[0].mxu0
      %v2543 = vadd.f32 0.0, %v2542
      %v2544 = vpop.f32.mrb[0].mxu0
      %v2545 = vadd.f32 0.0, %v2544
      %2546 = vdwg.mxu0
      %v2547 = vsel %vm791, %v2357, -1e+30
      %v2548 = vsel %vm792, %v2359, -1e+30
      %v2549 = vsel %vm793, %v2363, -1e+30
      %v2550 = vsel %vm794, %v2365, -1e+30
      %v2551 = vsel %vm795, %v2369, -1e+30
      %v2552 = vsel %vm796, %v2371, -1e+30
      %v2553 = vsel %vm797, %v2375, -1e+30
      %v2554 = vsel %vm798, %v2377, -1e+30
      %v2555 = vsel %vm799, %v2381, -1e+30
      %v2556 = vsel %vm800, %v2383, -1e+30
      %v2557 = vsel %vm801, %v2387, -1e+30
      %v2558 = vsel %vm802, %v2389, -1e+30
      %v2559 = vsel %vm803, %v2393, -1e+30
      %v2560 = vsel %vm804, %v2395, -1e+30
      %v2561 = vsel %vm805, %v2399, -1e+30
      %v2562 = vsel %vm806, %v2401, -1e+30
      %v2563 = vsel %vm807, %v2405, -1e+30
      %v2564 = vsel %vm808, %v2407, -1e+30
      %v2565 = vsel %vm809, %v2411, -1e+30
      %v2566 = vsel %vm810, %v2413, -1e+30
      %v2567 = vsel %vm811, %v2417, -1e+30
      %v2568 = vsel %vm812, %v2419, -1e+30
      %v2569 = vsel %vm813, %v2423, -1e+30
      %v2570 = vsel %vm814, %v2425, -1e+30
      %v2571 = vsel %vm815, %v2429, -1e+30
      %v2572 = vsel %vm816, %v2431, -1e+30
      %v2573 = vsel %vm817, %v2435, -1e+30
      %v2574 = vsel %vm818, %v2437, -1e+30
      %v2575 = vsel %vm819, %v2441, -1e+30
      %v2576 = vsel %vm820, %v2443, -1e+30
      %v2577 = vsel %vm821, %v2447, -1e+30
      %v2578 = vsel %vm822, %v2449, -1e+30
      %v2579 = vsel %vm823, %v2453, -1e+30
      %v2580 = vsel %vm824, %v2455, -1e+30
      %v2581 = vsel %vm825, %v2459, -1e+30
      %v2582 = vsel %vm826, %v2461, -1e+30
      %v2583 = vsel %vm827, %v2465, -1e+30
      %v2584 = vsel %vm828, %v2467, -1e+30
      %v2585 = vsel %vm829, %v2471, -1e+30
      %v2586 = vsel %vm830, %v2473, -1e+30
      %v2587 = vsel %vm831, %v2477, -1e+30
      %v2588 = vsel %vm832, %v2479, -1e+30
      %v2589 = vsel %vm833, %v2483, -1e+30
      %v2590 = vsel %vm834, %v2485, -1e+30
      %v2591 = vsel %vm835, %v2489, -1e+30
      %v2592 = vsel %vm836, %v2491, -1e+30
      %v2593 = vsel %vm837, %v2495, -1e+30
      %v2594 = vsel %vm838, %v2497, -1e+30
      %v2595 = vsel %vm839, %v2501, -1e+30
      %v2596 = vsel %vm840, %v2503, -1e+30
      %v2597 = vsel %vm841, %v2507, -1e+30
      %v2598 = vsel %vm842, %v2509, -1e+30
      %v2599 = vsel %vm843, %v2513, -1e+30
      %v2600 = vsel %vm844, %v2515, -1e+30
      %v2601 = vsel %vm845, %v2519, -1e+30
      %v2602 = vsel %vm846, %v2521, -1e+30
      %v2603 = vsel %vm847, %v2525, -1e+30
      %v2604 = vsel %vm848, %v2527, -1e+30
      %v2605 = vsel %vm849, %v2531, -1e+30
      %v2606 = vsel %vm850, %v2533, -1e+30
      %v2607 = vsel %vm851, %v2537, -1e+30
      %v2608 = vsel %vm852, %v2539, -1e+30
      %v2609 = vsel %vm853, %v2543, -1e+30
      %v2610 = vsel %vm854, %v2545, -1e+30
      %v2611 = vmax.f32 %v2547, %v2548
      %2612 = vmax.xlane.f32.xlu0 %v2611
      %v2613 = vpop.xlane.xlu0 %2612
      %v2614 = vmax.f32 %v2549, %v2550
      %2615 = vmax.xlane.f32.xlu0 %v2614
      %v2616 = vpop.xlane.xlu0 %2615
      %v2617 = vmax.f32 %v2551, %v2552
      %2618 = vmax.xlane.f32.xlu0 %v2617
      %v2619 = vpop.xlane.xlu0 %2618
      %v2620 = vmax.f32 %v2553, %v2554
      %2621 = vmax.xlane.f32.xlu0 %v2620
      %v2622 = vpop.xlane.xlu0 %2621
      %v2623 = vmax.f32 %v2555, %v2556
      %2624 = vmax.xlane.f32.xlu0 %v2623
      %v2625 = vpop.xlane.xlu0 %2624
      %v2626 = vmax.f32 %v2557, %v2558
      %2627 = vmax.xlane.f32.xlu0 %v2626
      %v2628 = vpop.xlane.xlu0 %2627
      %v2629 = vmax.f32 %v2559, %v2560
      %2630 = vmax.xlane.f32.xlu0 %v2629
      %v2631 = vpop.xlane.xlu0 %2630
      %v2632 = vmax.f32 %v2561, %v2562
      %2633 = vmax.xlane.f32.xlu0 %v2632
      %v2634 = vpop.xlane.xlu0 %2633
      %v2635 = vmax.f32 %v2563, %v2564
      %2636 = vmax.xlane.f32.xlu0 %v2635
      %v2637 = vpop.xlane.xlu0 %2636
      %v2638 = vmax.f32 %v2565, %v2566
      %2639 = vmax.xlane.f32.xlu0 %v2638
      %v2640 = vpop.xlane.xlu0 %2639
      %v2641 = vmax.f32 %v2567, %v2568
      %2642 = vmax.xlane.f32.xlu0 %v2641
      %v2643 = vpop.xlane.xlu0 %2642
      %v2644 = vmax.f32 %v2569, %v2570
      %2645 = vmax.xlane.f32.xlu0 %v2644
      %v2646 = vpop.xlane.xlu0 %2645
      %v2647 = vmax.f32 %v2571, %v2572
      %2648 = vmax.xlane.f32.xlu0 %v2647
      %v2649 = vpop.xlane.xlu0 %2648
      %v2650 = vmax.f32 %v2573, %v2574
      %2651 = vmax.xlane.f32.xlu0 %v2650
      %v2652 = vpop.xlane.xlu0 %2651
      %v2653 = vmax.f32 %v2575, %v2576
      %2654 = vmax.xlane.f32.xlu0 %v2653
      %v2655 = vpop.xlane.xlu0 %2654
      %v2656 = vmax.f32 %v2577, %v2578
      %2657 = vmax.xlane.f32.xlu0 %v2656
      %v2658 = vpop.xlane.xlu0 %2657
      %v2659 = vmax.f32 %v2579, %v2580
      %2660 = vmax.xlane.f32.xlu0 %v2659
      %v2661 = vpop.xlane.xlu0 %2660
      %v2662 = vmax.f32 %v2581, %v2582
      %2663 = vmax.xlane.f32.xlu0 %v2662
      %v2664 = vpop.xlane.xlu0 %2663
      %v2665 = vmax.f32 %v2583, %v2584
      %2666 = vmax.xlane.f32.xlu0 %v2665
      %v2667 = vpop.xlane.xlu0 %2666
      %v2668 = vmax.f32 %v2585, %v2586
      %2669 = vmax.xlane.f32.xlu0 %v2668
      %v2670 = vpop.xlane.xlu0 %2669
      %v2671 = vmax.f32 %v2587, %v2588
      %2672 = vmax.xlane.f32.xlu0 %v2671
      %v2673 = vpop.xlane.xlu0 %2672
      %v2674 = vmax.f32 %v2589, %v2590
      %2675 = vmax.xlane.f32.xlu0 %v2674
      %v2676 = vpop.xlane.xlu0 %2675
      %v2677 = vmax.f32 %v2591, %v2592
      %2678 = vmax.xlane.f32.xlu0 %v2677
      %v2679 = vpop.xlane.xlu0 %2678
      %v2680 = vmax.f32 %v2593, %v2594
      %2681 = vmax.xlane.f32.xlu0 %v2680
      %v2682 = vpop.xlane.xlu0 %2681
      %v2683 = vmax.f32 %v2595, %v2596
      %2684 = vmax.xlane.f32.xlu0 %v2683
      %v2685 = vpop.xlane.xlu0 %2684
      %v2686 = vmax.f32 %v2597, %v2598
      %2687 = vmax.xlane.f32.xlu0 %v2686
      %v2688 = vpop.xlane.xlu0 %2687
      %v2689 = vmax.f32 %v2599, %v2600
      %2690 = vmax.xlane.f32.xlu0 %v2689
      %v2691 = vpop.xlane.xlu0 %2690
      %v2692 = vmax.f32 %v2601, %v2602
      %2693 = vmax.xlane.f32.xlu0 %v2692
      %v2694 = vpop.xlane.xlu0 %2693
      %v2695 = vmax.f32 %v2603, %v2604
      %2696 = vmax.xlane.f32.xlu0 %v2695
      %v2697 = vpop.xlane.xlu0 %2696
      %v2698 = vmax.f32 %v2605, %v2606
      %2699 = vmax.xlane.f32.xlu0 %v2698
      %v2700 = vpop.xlane.xlu0 %2699
      %v2701 = vmax.f32 %v2607, %v2608
      %2702 = vmax.xlane.f32.xlu0 %v2701
      %v2703 = vpop.xlane.xlu0 %2702
      %v2704 = vmax.f32 %v2609, %v2610
      %2705 = vmax.xlane.f32.xlu0 %v2704
      %v2706 = vpop.xlane.xlu0 %2705
      %v2707 = vsub.f32 %v2547, %v2613
      %v2708 = vsub.f32 %v2548, %v2613
      %v2709 = vsub.f32 %v2549, %v2616
      %v2710 = vsub.f32 %v2550, %v2616
      %v2711 = vsub.f32 %v2551, %v2619
      %v2712 = vsub.f32 %v2552, %v2619
      %v2713 = vsub.f32 %v2553, %v2622
      %v2714 = vsub.f32 %v2554, %v2622
      %v2715 = vsub.f32 %v2555, %v2625
      %v2716 = vsub.f32 %v2556, %v2625
      %v2717 = vsub.f32 %v2557, %v2628
      %v2718 = vsub.f32 %v2558, %v2628
      %v2719 = vsub.f32 %v2559, %v2631
      %v2720 = vsub.f32 %v2560, %v2631
      %v2721 = vsub.f32 %v2561, %v2634
      %v2722 = vsub.f32 %v2562, %v2634
      %v2723 = vsub.f32 %v2563, %v2637
      %v2724 = vsub.f32 %v2564, %v2637
      %v2725 = vsub.f32 %v2565, %v2640
      %v2726 = vsub.f32 %v2566, %v2640
      %v2727 = vsub.f32 %v2567, %v2643
      %v2728 = vsub.f32 %v2568, %v2643
      %v2729 = vsub.f32 %v2569, %v2646
      %v2730 = vsub.f32 %v2570, %v2646
      %v2731 = vsub.f32 %v2571, %v2649
      %v2732 = vsub.f32 %v2572, %v2649
      %v2733 = vsub.f32 %v2573, %v2652
      %v2734 = vsub.f32 %v2574, %v2652
      %v2735 = vsub.f32 %v2575, %v2655
      %v2736 = vsub.f32 %v2576, %v2655
      %v2737 = vsub.f32 %v2577, %v2658
      %v2738 = vsub.f32 %v2578, %v2658
      %v2739 = vsub.f32 %v2579, %v2661
      %v2740 = vsub.f32 %v2580, %v2661
      %v2741 = vsub.f32 %v2581, %v2664
      %v2742 = vsub.f32 %v2582, %v2664
      %v2743 = vsub.f32 %v2583, %v2667
      %v2744 = vsub.f32 %v2584, %v2667
      %v2745 = vsub.f32 %v2585, %v2670
      %v2746 = vsub.f32 %v2586, %v2670
      %v2747 = vsub.f32 %v2587, %v2673
      %v2748 = vsub.f32 %v2588, %v2673
      %v2749 = vsub.f32 %v2589, %v2676
      %v2750 = vsub.f32 %v2590, %v2676
      %v2751 = vsub.f32 %v2591, %v2679
      %v2752 = vsub.f32 %v2592, %v2679
      %v2753 = vsub.f32 %v2593, %v2682
      %v2754 = vsub.f32 %v2594, %v2682
      %v2755 = vsub.f32 %v2595, %v2685
      %v2756 = vsub.f32 %v2596, %v2685
      %v2757 = vsub.f32 %v2597, %v2688
      %v2758 = vsub.f32 %v2598, %v2688
      %v2759 = vsub.f32 %v2599, %v2691
      %v2760 = vsub.f32 %v2600, %v2691
      %v2761 = vsub.f32 %v2601, %v2694
      %v2762 = vsub.f32 %v2602, %v2694
      %v2763 = vsub.f32 %v2603, %v2697
      %v2764 = vsub.f32 %v2604, %v2697
      %v2765 = vsub.f32 %v2605, %v2700
      %v2766 = vsub.f32 %v2606, %v2700
      %v2767 = vsub.f32 %v2607, %v2703
      %v2768 = vsub.f32 %v2608, %v2703
      %v2769 = vsub.f32 %v2609, %v2706
      %v2770 = vsub.f32 %v2610, %v2706
      %v2771 = vmul.f32 %v2707, 1.442695
      %v2772 = vpow.pop %v2771
      %v2773 = vmul.f32 %v2708, 1.442695
      %v2774 = vpow.pop %v2773
      %v2775 = vmul.f32 %v2709, 1.442695
      %v2776 = vpow.pop %v2775
      %v2777 = vmul.f32 %v2710, 1.442695
      %v2778 = vpow.pop %v2777
      %v2779 = vmul.f32 %v2711, 1.442695
      %v2780 = vpow.pop %v2779
      %v2781 = vmul.f32 %v2712, 1.442695
      %v2782 = vpow.pop %v2781
      %v2783 = vmul.f32 %v2713, 1.442695
      %v2784 = vpow.pop %v2783
      %v2785 = vmul.f32 %v2714, 1.442695
      %v2786 = vpow.pop %v2785
      %v2787 = vmul.f32 %v2715, 1.442695
      %v2788 = vpow.pop %v2787
      %v2789 = vmul.f32 %v2716, 1.442695
      %v2790 = vpow.pop %v2789
      %v2791 = vmul.f32 %v2717, 1.442695
      %v2792 = vpow.pop %v2791
      %v2793 = vmul.f32 %v2718, 1.442695
      %v2794 = vpow.pop %v2793
      %v2795 = vmul.f32 %v2719, 1.442695
      %v2796 = vpow.pop %v2795
      %v2797 = vmul.f32 %v2720, 1.442695
      %v2798 = vpow.pop %v2797
      %v2799 = vmul.f32 %v2721, 1.442695
      %v2800 = vpow.pop %v2799
      %v2801 = vmul.f32 %v2722, 1.442695
      %v2802 = vpow.pop %v2801
      %v2803 = vmul.f32 %v2723, 1.442695
      %v2804 = vpow.pop %v2803
      %v2805 = vmul.f32 %v2724, 1.442695
      %v2806 = vpow.pop %v2805
      %v2807 = vmul.f32 %v2725, 1.442695
      %v2808 = vpow.pop %v2807
      %v2809 = vmul.f32 %v2726, 1.442695
      %v2810 = vpow.pop %v2809
      %v2811 = vmul.f32 %v2727, 1.442695
      %v2812 = vpow.pop %v2811
      %v2813 = vmul.f32 %v2728, 1.442695
      %v2814 = vpow.pop %v2813
      %v2815 = vmul.f32 %v2729, 1.442695
      %v2816 = vpow.pop %v2815
      %v2817 = vmul.f32 %v2730, 1.442695
      %v2818 = vpow.pop %v2817
      %v2819 = vmul.f32 %v2731, 1.442695
      %v2820 = vpow.pop %v2819
      %v2821 = vmul.f32 %v2732, 1.442695
      %v2822 = vpow.pop %v2821
      %v2823 = vmul.f32 %v2733, 1.442695
      %v2824 = vpow.pop %v2823
      %v2825 = vmul.f32 %v2734, 1.442695
      %v2826 = vpow.pop %v2825
      %v2827 = vmul.f32 %v2735, 1.442695
      %v2828 = vpow.pop %v2827
      %v2829 = vmul.f32 %v2736, 1.442695
      %v2830 = vpow.pop %v2829
      %v2831 = vmul.f32 %v2737, 1.442695
      %v2832 = vpow.pop %v2831
      %v2833 = vmul.f32 %v2738, 1.442695
      %v2834 = vpow.pop %v2833
      %v2835 = vmul.f32 %v2739, 1.442695
      %v2836 = vpow.pop %v2835
      %v2837 = vmul.f32 %v2740, 1.442695
      %v2838 = vpow.pop %v2837
      %v2839 = vmul.f32 %v2741, 1.442695
      %v2840 = vpow.pop %v2839
      %v2841 = vmul.f32 %v2742, 1.442695
      %v2842 = vpow.pop %v2841
      %v2843 = vmul.f32 %v2743, 1.442695
      %v2844 = vpow.pop %v2843
      %v2845 = vmul.f32 %v2744, 1.442695
      %v2846 = vpow.pop %v2845
      %v2847 = vmul.f32 %v2745, 1.442695
      %v2848 = vpow.pop %v2847
      %v2849 = vmul.f32 %v2746, 1.442695
      %v2850 = vpow.pop %v2849
      %v2851 = vmul.f32 %v2747, 1.442695
      %v2852 = vpow.pop %v2851
      %v2853 = vmul.f32 %v2748, 1.442695
      %v2854 = vpow.pop %v2853
      %v2855 = vmul.f32 %v2749, 1.442695
      %v2856 = vpow.pop %v2855
      %v2857 = vmul.f32 %v2750, 1.442695
      %v2858 = vpow.pop %v2857
      %v2859 = vmul.f32 %v2751, 1.442695
      %v2860 = vpow.pop %v2859
      %v2861 = vmul.f32 %v2752, 1.442695
      %v2862 = vpow.pop %v2861
      %v2863 = vmul.f32 %v2753, 1.442695
      %v2864 = vpow.pop %v2863
      %v2865 = vmul.f32 %v2754, 1.442695
      %v2866 = vpow.pop %v2865
      %v2867 = vmul.f32 %v2755, 1.442695
      %v2868 = vpow.pop %v2867
      %v2869 = vmul.f32 %v2756, 1.442695
      %v2870 = vpow.pop %v2869
      %v2871 = vmul.f32 %v2757, 1.442695
      %v2872 = vpow.pop %v2871
      %v2873 = vmul.f32 %v2758, 1.442695
      %v2874 = vpow.pop %v2873
      %v2875 = vmul.f32 %v2759, 1.442695
      %v2876 = vpow.pop %v2875
      %v2877 = vmul.f32 %v2760, 1.442695
      %v2878 = vpow.pop %v2877
      %v2879 = vmul.f32 %v2761, 1.442695
      %v2880 = vpow.pop %v2879
      %v2881 = vmul.f32 %v2762, 1.442695
      %v2882 = vpow.pop %v2881
      %v2883 = vmul.f32 %v2763, 1.442695
      %v2884 = vpow.pop %v2883
      %v2885 = vmul.f32 %v2764, 1.442695
      %v2886 = vpow.pop %v2885
      %v2887 = vmul.f32 %v2765, 1.442695
      %v2888 = vpow.pop %v2887
      %v2889 = vmul.f32 %v2766, 1.442695
      %v2890 = vpow.pop %v2889
      %v2891 = vmul.f32 %v2767, 1.442695
      %v2892 = vpow.pop %v2891
      %v2893 = vmul.f32 %v2768, 1.442695
      %v2894 = vpow.pop %v2893
      %v2895 = vmul.f32 %v2769, 1.442695
      %v2896 = vpow.pop %v2895
      %v2897 = vmul.f32 %v2770, 1.442695
      %v2898 = vpow.pop %v2897
      %v2899 = vadd.f32 %v2772, %v2774
      %2900 = vadd.xlane.f32.xlu0 %v2899
      %v2901 = vpop.xlane.xlu0 %2900
      %v2902 = vadd.f32 %v2776, %v2778
      %2903 = vadd.xlane.f32.xlu0 %v2902
      %v2904 = vpop.xlane.xlu0 %2903
      %v2905 = vadd.f32 %v2780, %v2782
      %2906 = vadd.xlane.f32.xlu0 %v2905
      %v2907 = vpop.xlane.xlu0 %2906
      %v2908 = vadd.f32 %v2784, %v2786
      %2909 = vadd.xlane.f32.xlu0 %v2908
      %v2910 = vpop.xlane.xlu0 %2909
      %v2911 = vadd.f32 %v2788, %v2790
      %2912 = vadd.xlane.f32.xlu0 %v2911
      %v2913 = vpop.xlane.xlu0 %2912
      %v2914 = vadd.f32 %v2792, %v2794
      %2915 = vadd.xlane.f32.xlu0 %v2914
      %v2916 = vpop.xlane.xlu0 %2915
      %v2917 = vadd.f32 %v2796, %v2798
      %2918 = vadd.xlane.f32.xlu0 %v2917
      %v2919 = vpop.xlane.xlu0 %2918
      %v2920 = vadd.f32 %v2800, %v2802
      %2921 = vadd.xlane.f32.xlu0 %v2920
      %v2922 = vpop.xlane.xlu0 %2921
      %v2923 = vadd.f32 %v2804, %v2806
      %2924 = vadd.xlane.f32.xlu0 %v2923
      %v2925 = vpop.xlane.xlu0 %2924
      %v2926 = vadd.f32 %v2808, %v2810
      %2927 = vadd.xlane.f32.xlu0 %v2926
      %v2928 = vpop.xlane.xlu0 %2927
      %v2929 = vadd.f32 %v2812, %v2814
      %2930 = vadd.xlane.f32.xlu0 %v2929
      %v2931 = vpop.xlane.xlu0 %2930
      %v2932 = vadd.f32 %v2816, %v2818
      %2933 = vadd.xlane.f32.xlu0 %v2932
      %v2934 = vpop.xlane.xlu0 %2933
      %v2935 = vadd.f32 %v2820, %v2822
      %2936 = vadd.xlane.f32.xlu0 %v2935
      %v2937 = vpop.xlane.xlu0 %2936
      %v2938 = vadd.f32 %v2824, %v2826
      %2939 = vadd.xlane.f32.xlu0 %v2938
      %v2940 = vpop.xlane.xlu0 %2939
      %v2941 = vadd.f32 %v2828, %v2830
      %2942 = vadd.xlane.f32.xlu0 %v2941
      %v2943 = vpop.xlane.xlu0 %2942
      %v2944 = vadd.f32 %v2832, %v2834
      %2945 = vadd.xlane.f32.xlu0 %v2944
      %v2946 = vpop.xlane.xlu0 %2945
      %v2947 = vadd.f32 %v2836, %v2838
      %2948 = vadd.xlane.f32.xlu0 %v2947
      %v2949 = vpop.xlane.xlu0 %2948
      %v2950 = vadd.f32 %v2840, %v2842
      %2951 = vadd.xlane.f32.xlu0 %v2950
      %v2952 = vpop.xlane.xlu0 %2951
      %v2953 = vadd.f32 %v2844, %v2846
      %2954 = vadd.xlane.f32.xlu0 %v2953
      %v2955 = vpop.xlane.xlu0 %2954
      %v2956 = vadd.f32 %v2848, %v2850
      %2957 = vadd.xlane.f32.xlu0 %v2956
      %v2958 = vpop.xlane.xlu0 %2957
      %v2959 = vadd.f32 %v2852, %v2854
      %2960 = vadd.xlane.f32.xlu0 %v2959
      %v2961 = vpop.xlane.xlu0 %2960
      %v2962 = vadd.f32 %v2856, %v2858
      %2963 = vadd.xlane.f32.xlu0 %v2962
      %v2964 = vpop.xlane.xlu0 %2963
      %v2965 = vadd.f32 %v2860, %v2862
      %2966 = vadd.xlane.f32.xlu0 %v2965
      %v2967 = vpop.xlane.xlu0 %2966
      %v2968 = vadd.f32 %v2864, %v2866
      %2969 = vadd.xlane.f32.xlu0 %v2968
      %v2970 = vpop.xlane.xlu0 %2969
      %v2971 = vadd.f32 %v2868, %v2870
      %2972 = vadd.xlane.f32.xlu0 %v2971
      %v2973 = vpop.xlane.xlu0 %2972
      %v2974 = vadd.f32 %v2872, %v2874
      %2975 = vadd.xlane.f32.xlu0 %v2974
      %v2976 = vpop.xlane.xlu0 %2975
      %v2977 = vadd.f32 %v2876, %v2878
      %2978 = vadd.xlane.f32.xlu0 %v2977
      %v2979 = vpop.xlane.xlu0 %2978
      %v2980 = vadd.f32 %v2880, %v2882
      %2981 = vadd.xlane.f32.xlu0 %v2980
      %v2982 = vpop.xlane.xlu0 %2981
      %v2983 = vadd.f32 %v2884, %v2886
      %2984 = vadd.xlane.f32.xlu0 %v2983
      %v2985 = vpop.xlane.xlu0 %2984
      %v2986 = vadd.f32 %v2888, %v2890
      %2987 = vadd.xlane.f32.xlu0 %v2986
      %v2988 = vpop.xlane.xlu0 %2987
      %v2989 = vadd.f32 %v2892, %v2894
      %2990 = vadd.xlane.f32.xlu0 %v2989
      %v2991 = vpop.xlane.xlu0 %2990
      %v2992 = vadd.f32 %v2896, %v2898
      %2993 = vadd.xlane.f32.xlu0 %v2992
      %v2994 = vpop.xlane.xlu0 %2993
      %v2995 = vrcp.pop %v2901
      %v2996 = vrcp.pop %v2904
      %v2997 = vrcp.pop %v2907
      %v2998 = vrcp.pop %v2910
      %v2999 = vrcp.pop %v2913
      %v3000 = vrcp.pop %v2916
      %v3001 = vrcp.pop %v2919
      %v3002 = vrcp.pop %v2922
      %v3003 = vrcp.pop %v2925
      %v3004 = vrcp.pop %v2928
      %v3005 = vrcp.pop %v2931
      %v3006 = vrcp.pop %v2934
      %v3007 = vrcp.pop %v2937
      %v3008 = vrcp.pop %v2940
      %v3009 = vrcp.pop %v2943
      %v3010 = vrcp.pop %v2946
      %v3011 = vrcp.pop %v2949
      %v3012 = vrcp.pop %v2952
      %v3013 = vrcp.pop %v2955
      %v3014 = vrcp.pop %v2958
      %v3015 = vrcp.pop %v2961
      %v3016 = vrcp.pop %v2964
      %v3017 = vrcp.pop %v2967
      %v3018 = vrcp.pop %v2970
      %v3019 = vrcp.pop %v2973
      %v3020 = vrcp.pop %v2976
      %v3021 = vrcp.pop %v2979
      %v3022 = vrcp.pop %v2982
      %v3023 = vrcp.pop %v2985
      %v3024 = vrcp.pop %v2988
      %v3025 = vrcp.pop %v2991
      %v3026 = vrcp.pop %v2994
      %v3027 = vmul.f32 %v2901, %v2995
      %v3028 = vmul.f32 %v2904, %v2996
      %v3029 = vmul.f32 %v2907, %v2997
      %v3030 = vmul.f32 %v2910, %v2998
      %v3031 = vmul.f32 %v2913, %v2999
      %v3032 = vmul.f32 %v2916, %v3000
      %v3033 = vmul.f32 %v2919, %v3001
      %v3034 = vmul.f32 %v2922, %v3002
      %v3035 = vmul.f32 %v2925, %v3003
      %v3036 = vmul.f32 %v2928, %v3004
      %v3037 = vmul.f32 %v2931, %v3005
      %v3038 = vmul.f32 %v2934, %v3006
      %v3039 = vmul.f32 %v2937, %v3007
      %v3040 = vmul.f32 %v2940, %v3008
      %v3041 = vmul.f32 %v2943, %v3009
      %v3042 = vmul.f32 %v2946, %v3010
      %v3043 = vmul.f32 %v2949, %v3011
      %v3044 = vmul.f32 %v2952, %v3012
      %v3045 = vmul.f32 %v2955, %v3013
      %v3046 = vmul.f32 %v2958, %v3014
      %v3047 = vmul.f32 %v2961, %v3015
      %v3048 = vmul.f32 %v2964, %v3016
      %v3049 = vmul.f32 %v2967, %v3017
      %v3050 = vmul.f32 %v2970, %v3018
      %v3051 = vmul.f32 %v2973, %v3019
      %v3052 = vmul.f32 %v2976, %v3020
      %v3053 = vmul.f32 %v2979, %v3021
      %v3054 = vmul.f32 %v2982, %v3022
      %v3055 = vmul.f32 %v2985, %v3023
      %v3056 = vmul.f32 %v2988, %v3024
      %v3057 = vmul.f32 %v2991, %v3025
      %v3058 = vmul.f32 %v2994, %v3026
      %v3059 = vsub.f32 2.0, %v3027
      %v3060 = vsub.f32 2.0, %v3028
      %v3061 = vsub.f32 2.0, %v3029
      %v3062 = vsub.f32 2.0, %v3030
      %v3063 = vsub.f32 2.0, %v3031
      %v3064 = vsub.f32 2.0, %v3032
      %v3065 = vsub.f32 2.0, %v3033
      %v3066 = vsub.f32 2.0, %v3034
      %v3067 = vsub.f32 2.0, %v3035
      %v3068 = vsub.f32 2.0, %v3036
      %v3069 = vsub.f32 2.0, %v3037
      %v3070 = vsub.f32 2.0, %v3038
      %v3071 = vsub.f32 2.0, %v3039
      %v3072 = vsub.f32 2.0, %v3040
      %v3073 = vsub.f32 2.0, %v3041
      %v3074 = vsub.f32 2.0, %v3042
      %v3075 = vsub.f32 2.0, %v3043
      %v3076 = vsub.f32 2.0, %v3044
      %v3077 = vsub.f32 2.0, %v3045
      %v3078 = vsub.f32 2.0, %v3046
      %v3079 = vsub.f32 2.0, %v3047
      %v3080 = vsub.f32 2.0, %v3048
      %v3081 = vsub.f32 2.0, %v3049
      %v3082 = vsub.f32 2.0, %v3050
      %v3083 = vsub.f32 2.0, %v3051
      %v3084 = vsub.f32 2.0, %v3052
      %v3085 = vsub.f32 2.0, %v3053
      %v3086 = vsub.f32 2.0, %v3054
      %v3087 = vsub.f32 2.0, %v3055
      %v3088 = vsub.f32 2.0, %v3056
      %v3089 = vsub.f32 2.0, %v3057
      %v3090 = vsub.f32 2.0, %v3058
      %v3091 = vmul.f32 %v2995, %v3059
      %v3092 = vmul.f32 %v2996, %v3060
      %v3093 = vmul.f32 %v2997, %v3061
      %v3094 = vmul.f32 %v2998, %v3062
      %v3095 = vmul.f32 %v2999, %v3063
      %v3096 = vmul.f32 %v3000, %v3064
      %v3097 = vmul.f32 %v3001, %v3065
      %v3098 = vmul.f32 %v3002, %v3066
      %v3099 = vmul.f32 %v3003, %v3067
      %v3100 = vmul.f32 %v3004, %v3068
      %v3101 = vmul.f32 %v3005, %v3069
      %v3102 = vmul.f32 %v3006, %v3070
      %v3103 = vmul.f32 %v3007, %v3071
      %v3104 = vmul.f32 %v3008, %v3072
      %v3105 = vmul.f32 %v3009, %v3073
      %v3106 = vmul.f32 %v3010, %v3074
      %v3107 = vmul.f32 %v3011, %v3075
      %v3108 = vmul.f32 %v3012, %v3076
      %v3109 = vmul.f32 %v3013, %v3077
      %v3110 = vmul.f32 %v3014, %v3078
      %v3111 = vmul.f32 %v3015, %v3079
      %v3112 = vmul.f32 %v3016, %v3080
      %v3113 = vmul.f32 %v3017, %v3081
      %v3114 = vmul.f32 %v3018, %v3082
      %v3115 = vmul.f32 %v3019, %v3083
      %v3116 = vmul.f32 %v3020, %v3084
      %v3117 = vmul.f32 %v3021, %v3085
      %v3118 = vmul.f32 %v3022, %v3086
      %v3119 = vmul.f32 %v3023, %v3087
      %v3120 = vmul.f32 %v3024, %v3088
      %v3121 = vmul.f32 %v3025, %v3089
      %v3122 = vmul.f32 %v3026, %v3090
      %v3123 = vmul.f32 %v2772, %v3091
      %v3124 = vmul.f32 %v2774, %v3091
      %v3125 = vmul.f32 %v2776, %v3092
      %v3126 = vmul.f32 %v2778, %v3092
      %v3127 = vmul.f32 %v2780, %v3093
      %v3128 = vmul.f32 %v2782, %v3093
      %v3129 = vmul.f32 %v2784, %v3094
      %v3130 = vmul.f32 %v2786, %v3094
      %v3131 = vmul.f32 %v2788, %v3095
      %v3132 = vmul.f32 %v2790, %v3095
      %v3133 = vmul.f32 %v2792, %v3096
      %v3134 = vmul.f32 %v2794, %v3096
      %v3135 = vmul.f32 %v2796, %v3097
      %v3136 = vmul.f32 %v2798, %v3097
      %v3137 = vmul.f32 %v2800, %v3098
      %v3138 = vmul.f32 %v2802, %v3098
      %v3139 = vmul.f32 %v2804, %v3099
      %v3140 = vmul.f32 %v2806, %v3099
      %v3141 = vmul.f32 %v2808, %v3100
      %v3142 = vmul.f32 %v2810, %v3100
      %v3143 = vmul.f32 %v2812, %v3101
      %v3144 = vmul.f32 %v2814, %v3101
      %v3145 = vmul.f32 %v2816, %v3102
      %v3146 = vmul.f32 %v2818, %v3102
      %v3147 = vmul.f32 %v2820, %v3103
      %v3148 = vmul.f32 %v2822, %v3103
      %v3149 = vmul.f32 %v2824, %v3104
      %v3150 = vmul.f32 %v2826, %v3104
      %v3151 = vmul.f32 %v2828, %v3105
      %v3152 = vmul.f32 %v2830, %v3105
      %v3153 = vmul.f32 %v2832, %v3106
      %v3154 = vmul.f32 %v2834, %v3106
      %v3155 = vmul.f32 %v2836, %v3107
      %v3156 = vmul.f32 %v2838, %v3107
      %v3157 = vmul.f32 %v2840, %v3108
      %v3158 = vmul.f32 %v2842, %v3108
      %v3159 = vmul.f32 %v2844, %v3109
      %v3160 = vmul.f32 %v2846, %v3109
      %v3161 = vmul.f32 %v2848, %v3110
      %v3162 = vmul.f32 %v2850, %v3110
      %v3163 = vmul.f32 %v2852, %v3111
      %v3164 = vmul.f32 %v2854, %v3111
      %v3165 = vmul.f32 %v2856, %v3112
      %v3166 = vmul.f32 %v2858, %v3112
      %v3167 = vmul.f32 %v2860, %v3113
      %v3168 = vmul.f32 %v2862, %v3113
      %v3169 = vmul.f32 %v2864, %v3114
      %v3170 = vmul.f32 %v2866, %v3114
      %v3171 = vmul.f32 %v2868, %v3115
      %v3172 = vmul.f32 %v2870, %v3115
      %v3173 = vmul.f32 %v2872, %v3116
      %v3174 = vmul.f32 %v2874, %v3116
      %v3175 = vmul.f32 %v2876, %v3117
      %v3176 = vmul.f32 %v2878, %v3117
      %v3177 = vmul.f32 %v2880, %v3118
      %v3178 = vmul.f32 %v2882, %v3118
      %v3179 = vmul.f32 %v2884, %v3119
      %v3180 = vmul.f32 %v2886, %v3119
      %v3181 = vmul.f32 %v2888, %v3120
      %v3182 = vmul.f32 %v2890, %v3120
      %v3183 = vmul.f32 %v2892, %v3121
      %v3184 = vmul.f32 %v2894, %v3121
      %v3185 = vmul.f32 %v2896, %v3122
      %v3186 = vmul.f32 %v2898, %v3122
      %v3189 = vrot.slane %v617, 6
      %v3190 = vrot.slane %v623, 6
      %v3191 = vsel %vm1016, %v3189, %v3190
      %v3192 = vrot.slane %v619, 6
      %v3193 = vrot.slane %v625, 6
      %v3194 = vsel %vm1016, %v3192, %v3193
      %3199 = vmatprep.subr.mxu0 %v3124
      %3200 = vmatpush1.xpose.msra.mxu0 %v3123
      %3201 = vmatprep.subr.mxu0 %v3126
      %3202 = vmatpush1.xpose.msra.mxu0 %v3125
      %3203 = vmatprep.subr.mxu0 %v3128
      %3204 = vmatpush1.xpose.msra.mxu0 %v3127
      %3205 = vmatprep.subr.mxu0 %v3130
      %3206 = vmatpush1.xpose.msra.mxu0 %v3129
      %3207 = vmatprep.subr.mxu0 %v3132
      %3208 = vmatpush1.xpose.msra.mxu0 %v3131
      %3209 = vmatprep.subr.mxu0 %v3134
      %3210 = vmatpush1.xpose.msra.mxu0 %v3133
      %3211 = vmatprep.subr.mxu0 %v3136
      %3212 = vmatpush1.xpose.msra.mxu0 %v3135
      %3213 = vmatprep.subr.mxu0 %v3138
      %3214 = vmatpush1.xpose.msra.mxu0 %v3137
      %3215 = vmatprep.subr.mxu0 %v3140
      %3216 = vmatpush1.xpose.msra.mxu0 %v3139
      %3217 = vmatprep.subr.mxu0 %v3142
      %3218 = vmatpush1.xpose.msra.mxu0 %v3141
      %3219 = vmatprep.subr.mxu0 %v3144
      %3220 = vmatpush1.xpose.msra.mxu0 %v3143
      %3221 = vmatprep.subr.mxu0 %v3146
      %3222 = vmatpush1.xpose.msra.mxu0 %v3145
      %3223 = vmatprep.subr.mxu0 %v3148
      %3224 = vmatpush1.xpose.msra.mxu0 %v3147
      %3225 = vmatprep.subr.mxu0 %v3150
      %3226 = vmatpush1.xpose.msra.mxu0 %v3149
      %3227 = vmatprep.subr.mxu0 %v3152
      %3228 = vmatpush1.xpose.msra.mxu0 %v3151
      %3229 = vmatprep.subr.mxu0 %v3154
      %3230 = vmatpush1.xpose.msra.mxu0 %v3153
      %3231 = vmatprep.subr.mxu0 %v3156
      %3232 = vmatpush1.xpose.msra.mxu0 %v3155
      %3233 = vmatprep.subr.mxu0 %v3158
      %3234 = vmatpush1.xpose.msra.mxu0 %v3157
      %3235 = vmatprep.subr.mxu0 %v3160
      %3236 = vmatpush1.xpose.msra.mxu0 %v3159
      %3237 = vmatprep.subr.mxu0 %v3162
      %3238 = vmatpush1.xpose.msra.mxu0 %v3161
      %3239 = vmatprep.subr.mxu0 %v3164
      %3240 = vmatpush1.xpose.msra.mxu0 %v3163
      %3241 = vmatprep.subr.mxu0 %v3166
      %3242 = vmatpush1.xpose.msra.mxu0 %v3165
      %3243 = vmatprep.subr.mxu0 %v3168
      %3244 = vmatpush1.xpose.msra.mxu0 %v3167
      %3245 = vmatprep.subr.mxu0 %v3170
      %3246 = vmatpush1.xpose.msra.mxu0 %v3169
      %3247 = vmatprep.subr.mxu0 %v3172
      %3248 = vmatpush1.xpose.msra.mxu0 %v3171
      %3249 = vmatprep.subr.mxu0 %v3174
      %3250 = vmatpush1.xpose.msra.mxu0 %v3173
      %3251 = vmatprep.subr.mxu0 %v3176
      %3252 = vmatpush1.xpose.msra.mxu0 %v3175
      %3253 = vmatprep.subr.mxu0 %v3178
      %3254 = vmatpush1.xpose.msra.mxu0 %v3177
      %3255 = vmatprep.subr.mxu0 %v3180
      %3256 = vmatpush1.xpose.msra.mxu0 %v3179
      %3257 = vmatprep.subr.mxu0 %v3182
      %3258 = vmatpush1.xpose.msra.mxu0 %v3181
      %3259 = vmatprep.subr.mxu0 %v3184
      %3260 = vmatpush1.xpose.msra.mxu0 %v3183
      %3261 = vmatprep.subr.mxu0 %v3186
      %3262 = vmatpush1.xpose.msra.mxu0 %v3185
      %3263 = vmatprep.mubr.f32.mxu0 %v3194
      %3264 = vmatmul.mubr.f32.gmra.mrb[0].mxu0 %v3191
      %v3265 = vpop.f32.mrb[0].mxu0
      %v3266 = vadd.f32 0.0, %v3265
      %v3267 = vpop.f32.mrb[0].mxu0
      %v3268 = vadd.f32 0.0, %v3267
      %3269 = vmatprep.mubr.f32.mxu0 %v3193
      %3270 = vmatmul.mubr.f32.gmra.mrb[0].mxu0 %v3190
      %v3271 = vpop.f32.mrb[0].mxu0
      %v3272 = vadd.f32 0.0, %v3271
      %v3273 = vpop.f32.mrb[0].mxu0
      %v3274 = vadd.f32 0.0, %v3273
      %3275 = vdwg.mxu0
      %3276 = vrot.lane.b32.xlu0 %v627, 118
      %v3277 = vpop.permute.xlu0 %3276
      %3278 = vrot.lane.b32.xlu0 %v628, 118
      %v3279 = vpop.permute.xlu0 %3278
      %3280 = vrot.lane.b32.xlu0 %v629, 118
      %v3281 = vpop.permute.xlu0 %3280
      %v3282 = vsel %vm919, %v3277, 0
      %v3284 = vsel %vm919, %v3279, 0
      %v3286 = vsel %vm919, %v3281, 0
      %v3289 = vsel %vm1016, %v3272, 0
      %v3292 = vsel %vm1016, %v3274, 0
      %3294 = vmatprep.subr.mxu0 %v3268
      %3295 = vmatpush1.msra.mxu0 %v3266
      %3296 = vmatprep.subr.mxu0 %v3292
      %3297 = vmatpush1.msra.mxu0 %v3289
      %3298 = vmatprep.subr.mxu0 0.0
      %3299 = vmatpush1.msra.mxu0 0.0
      %3300 = vmatprep.subr.mxu0 0.0
      %3301 = vmatpush1.msra.mxu0 0.0
      %3302 = vmatprep.subr.mxu0 0.0
      %3303 = vmatpush1.msra.mxu0 0.0
      %3304 = vmatprep.subr.mxu0 0.0
      %3305 = vmatpush1.msra.mxu0 0.0
      %3306 = vmatprep.subr.mxu0 0.0
      %3307 = vmatpush1.msra.mxu0 0.0
      %3308 = vmatprep.subr.mxu0 0.0
      %3309 = vmatpush1.msra.mxu0 0.0
      %3310 = vmatprep.subr.mxu0 0.0
      %3311 = vmatpush1.msra.mxu0 0.0
      %3312 = vmatprep.subr.mxu0 0.0
      %3313 = vmatpush1.msra.mxu0 0.0
      %3314 = vmatprep.subr.mxu0 0.0
      %3315 = vmatpush1.msra.mxu0 0.0
      %3316 = vmatprep.subr.mxu0 0.0
      %3317 = vmatpush1.msra.mxu0 0.0
      %3318 = vmatprep.subr.mxu0 0.0
      %3319 = vmatpush1.msra.mxu0 0.0
      %3320 = vmatprep.subr.mxu0 0.0
      %3321 = vmatpush1.msra.mxu0 0.0
      %3322 = vmatprep.subr.mxu0 0.0
      %3323 = vmatpush1.msra.mxu0 0.0
      %3324 = vmatprep.subr.mxu0 0.0
      %3325 = vmatpush1.msra.mxu0 0.0
      %3326 = vmatprep.subr.mxu0 0.0
      %3327 = vmatpush1.msra.mxu0 0.0
      %3328 = vmatprep.subr.mxu0 0.0
      %3329 = vmatpush1.msra.mxu0 0.0
      %3330 = vmatprep.subr.mxu0 0.0
      %3331 = vmatpush1.msra.mxu0 0.0
      %3332 = vmatprep.subr.mxu0 0.0
      %3333 = vmatpush1.msra.mxu0 0.0
      %3334 = vmatprep.subr.mxu0 0.0
      %3335 = vmatpush1.msra.mxu0 0.0
      %3336 = vmatprep.subr.mxu0 0.0
      %3337 = vmatpush1.msra.mxu0 0.0
      %3338 = vmatprep.subr.mxu0 0.0
      %3339 = vmatpush1.msra.mxu0 0.0
      %3340 = vmatprep.subr.mxu0 0.0
      %3341 = vmatpush1.msra.mxu0 0.0
      %3342 = vmatprep.subr.mxu0 0.0
      %3343 = vmatpush1.msra.mxu0 0.0
      %3344 = vmatprep.subr.mxu0 0.0
      %3345 = vmatpush1.msra.mxu0 0.0
      %3346 = vmatprep.subr.mxu0 0.0
      %3347 = vmatpush1.msra.mxu0 0.0
      %3348 = vmatprep.subr.mxu0 0.0
      %3349 = vmatpush1.msra.mxu0 0.0
      %3350 = vmatprep.subr.mxu0 0.0
      %3351 = vmatpush1.msra.mxu0 0.0
      %3352 = vmatprep.subr.mxu0 0.0
      %3353 = vmatpush1.msra.mxu0 0.0
      %3354 = vmatprep.subr.mxu0 0.0
      %3355 = vmatpush1.msra.mxu0 0.0
      %3356 = vmatprep.subr.mxu0 0.0
      %3357 = vmatpush1.msra.mxu0 0.0
      %3358 = vmatprep.mubr.f32.mxu0 0.0
      %3359 = vmatmul.mubr.f32.gmra.mrb[0].mxu0 %v3282
      %v3360 = vpop.f32.mrb[0].mxu0
      %v3361 = vadd.f32 0.0, %v3360
      %v3362 = vpop.f32.mrb[0].mxu0
      %v3363 = vadd.f32 0.0, %v3362
      %3364 = vmatprep.mubr.f32.mxu0 0.0
      %3365 = vmatmul.mubr.f32.gmra.mrb[0].mxu0 %v3284
      %v3366 = vpop.f32.mrb[0].mxu0
      %v3367 = vadd.f32 0.0, %v3366
      %v3368 = vpop.f32.mrb[0].mxu0
      %v3369 = vadd.f32 0.0, %v3368
      %3370 = vmatprep.mubr.f32.mxu0 0.0
      %3371 = vmatmul.mubr.f32.gmra.mrb[0].mxu0 %v3286
      %v3372 = vpop.f32.mrb[0].mxu0
      %v3373 = vadd.f32 0.0, %v3372
      %v3374 = vpop.f32.mrb[0].mxu0
      %v3375 = vadd.f32 0.0, %v3374
      %3376 = vdwg.mxu0
      %v3377 = vadd.f32 %v2109, %v3361
      %v3378 = vadd.f32 %v2110, %v3363
      %v3379 = vadd.f32 %v2111, %v3367
      %v3380 = vadd.f32 %v2112, %v3369
      %v3381 = vadd.f32 %v2113, %v3373
      %v3382 = vadd.f32 %v2114, %v3375
      %v3383 = vld [vmem:[%s11] sm:$0x3]
      %v3384 = vlaneseq
      %v3385 = vand.u32 %v3384, 127
      %v3386 = vadd.s32 %v3385, 128
      %v3387 = vld [vmem:[%s7] sm:$0xff]
      %v3388 = vld [vmem:[%s7 + $0x8] sm:$0xff]
      %v3389 = vld [vmem:[%s7 + $0x10] sm:$0xff]
      %v3390 = vld [vmem:[%s7 + $0x18] sm:$0xff]
      %v3391 = vld [vmem:[%s7 + $0x20] sm:$0xff]
      %v3392 = vld [vmem:[%s8] sm:$0xff]
      %v3393 = vld [vmem:[%s8 + $0x8] sm:$0xff]
      %v3394 = vld [vmem:[%s8 + $0x10] sm:$0xff]
      %v3395 = vld [vmem:[%s8 + $0x18] sm:$0xff]
      %v3396 = vld [vmem:[%s8 + $0x20] sm:$0xff]
      %v3397 = vld [vmem:[%s9] sm:$0xff]
      %v3398 = vld [vmem:[%s9 + $0x8] sm:$0xff]
      %v3399 = vld [vmem:[%s9 + $0x10] sm:$0xf]
      %v3400 = vld [vmem:[%s10] sm:$0xff]
      %v3401 = vld [vmem:[%s10 + $0x8] sm:$0xff]
      %v3402 = vld [vmem:[%s10 + $0x10] sm:$0xf]
      %v3403 = vld [vmem:[%s12] sm:$0xff]
      %v3404 = vld [vmem:[%s12 + $0x8] sm:$0xff]
      %v3405 = vld [vmem:[%s12 + $0x10] sm:$0xf]
      %v3406 = vld [vmem:[%s13] sm:$0xff]
      %v3407 = vld [vmem:[%s13 + $0x8] sm:$0xff]
      %v3408 = vld [vmem:[%s13 + $0x10] sm:$0xff]
      %v3409 = vld [vmem:[%s13 + $0x18] sm:$0xff]
      %v3410 = vld [vmem:[%s13 + $0x20] sm:$0xff]
      %vm3411 = vcmp.eq.s32.totalorder %v3383, 0
      %vm3412 = vcmp.eq.s32.totalorder %v3383, 15
      %vm3413 = vcmp.lt.s32.totalorder %v3385, 16
      %vm3414 = vcmp.lt.s32.totalorder %v3386, 16
      %vm3415 = vcmp.ge.s32.totalorder %v3385, 240
      %vm3416 = vcmp.ge.s32.totalorder %v3386, 240
      %3417 = vrot.lane.b32.xlu0 %v3377, 127
      %v3418 = vpop.permute.xlu0 %3417
      %3419 = vrot.lane.b32.xlu0 %v3379, 127
      %v3420 = vpop.permute.xlu0 %3419
      %3421 = vrot.lane.b32.xlu0 %v3381, 127
      %v3422 = vpop.permute.xlu0 %3421
      %3423 = vrot.lane.b32.xlu0 %v3378, 127
      %v3424 = vpop.permute.xlu0 %3423
      %3425 = vrot.lane.b32.xlu0 %v3380, 127
      %v3426 = vpop.permute.xlu0 %3425
      %3427 = vrot.lane.b32.xlu0 %v3382, 127
      %v3428 = vpop.permute.xlu0 %3427
      %vm3429 = vcmp.lt.s32.totalorder %v3385, 127
      %v3430 = vsel %vm3429, %v3418, %v3424
      %v3431 = vsel %vm3429, %v3420, %v3426
      %v3432 = vsel %vm3429, %v3422, %v3428
      %v3433 = vsel %vm3429, %v3424, %v3418
      %v3434 = vsel %vm3429, %v3426, %v3420
      %v3435 = vsel %vm3429, %v3428, %v3422
      %v3436 = vsel %vm3412, 1, 0
      %v3437 = vlaneseq
      %v3438 = vshrl.u32 %v3437, 7
      %v3439 = vsub.s32 0, %v3438
      %v3440 = vrot.slane %v3436, %v3439
      %v3441 = vlaneseq
      %v3442 = vshrl.u32 %v3441, 7
      %v3443 = vsub.s32 1, %v3442
      %v3444 = vrot.slane %v3436, %v3443
      %vm3445 = vcmp.eq.s32.totalorder %v3440, 1
      %vm3446 = vcmp.eq.s32.totalorder %v3444, 1
      %v3447 = vsel %vm3445, 0.0, %v3430
      %v3448 = vsel %vm3446, 0.0, %v3433
      %v3449 = vsel %vm3445, 0.0, %v3431
      %v3450 = vsel %vm3446, 0.0, %v3434
      %v3451 = vsel %vm3445, 0.0, %v3432
      %v3452 = vsel %vm3446, 0.0, %v3435
      %3453 = vrot.lane.b32.xlu0 %v3377, 1
      %v3454 = vpop.permute.xlu0 %3453
      %3455 = vrot.lane.b32.xlu0 %v3379, 1
      %v3456 = vpop.permute.xlu0 %3455
      %3457 = vrot.lane.b32.xlu0 %v3381, 1
      %v3458 = vpop.permute.xlu0 %3457
      %3459 = vrot.lane.b32.xlu0 %v3378, 1
      %v3460 = vpop.permute.xlu0 %3459
      %3461 = vrot.lane.b32.xlu0 %v3380, 1
      %v3462 = vpop.permute.xlu0 %3461
      %3463 = vrot.lane.b32.xlu0 %v3382, 1
      %v3464 = vpop.permute.xlu0 %3463
      %vm3465 = vcmp.lt.s32.totalorder %v3385, 1
      %v3466 = vsel %vm3465, %v3454, %v3460
      %v3467 = vsel %vm3465, %v3456, %v3462
      %v3468 = vsel %vm3465, %v3458, %v3464
      %v3469 = vsel %vm3465, %v3460, %v3454
      %v3470 = vsel %vm3465, %v3462, %v3456
      %v3471 = vsel %vm3465, %v3464, %v3458
      %v3472 = vsel %vm3411, 1, 0
      %v3473 = vlaneseq
      %v3474 = vshrl.u32 %v3473, 7
      %v3475 = vsub.s32 0, %v3474
      %v3476 = vrot.slane %v3472, %v3475
      %v3477 = vlaneseq
      %v3478 = vshrl.u32 %v3477, 7
      %v3479 = vsub.s32 1, %v3478
      %v3480 = vrot.slane %v3472, %v3479
      %vm3481 = vcmp.eq.s32.totalorder %v3476, 1
      %vm3482 = vcmp.eq.s32.totalorder %v3480, 1
      %v3483 = vsel %vm3481, 0.0, %v3469
      %v3484 = vsel %vm3482, 0.0, %v3466
      %v3485 = vsel %vm3481, 0.0, %v3470
      %v3486 = vsel %vm3482, 0.0, %v3467
      %v3487 = vsel %vm3481, 0.0, %v3471
      %v3488 = vsel %vm3482, 0.0, %v3468
      %3489 = vrot.lane.b32.xlu0 %v3377, 112
      %v3490 = vpop.permute.xlu0 %3489
      %3491 = vrot.lane.b32.xlu0 %v3379, 112
      %v3492 = vpop.permute.xlu0 %3491
      %3493 = vrot.lane.b32.xlu0 %v3381, 112
      %v3494 = vpop.permute.xlu0 %3493
      %3495 = vrot.lane.b32.xlu0 %v3378, 112
      %v3496 = vpop.permute.xlu0 %3495
      %3497 = vrot.lane.b32.xlu0 %v3380, 112
      %v3498 = vpop.permute.xlu0 %3497
      %3499 = vrot.lane.b32.xlu0 %v3382, 112
      %v3500 = vpop.permute.xlu0 %3499
      %vm3501 = vcmp.lt.s32.totalorder %v3385, 112
      %v3502 = vsel %vm3501, %v3490, %v3496
      %v3503 = vsel %vm3501, %v3492, %v3498
      %v3504 = vsel %vm3501, %v3494, %v3500
      %v3505 = vsel %vm3501, %v3496, %v3490
      %v3506 = vsel %vm3501, %v3498, %v3492
      %v3507 = vsel %vm3501, %v3500, %v3494
      %v3508 = vsel %vm3415, 1, 0
      %v3509 = vsel %vm3416, 1, 0
      %vm3510 = vcmp.eq.s32.totalorder %v3508, 1
      %vm3511 = vcmp.eq.s32.totalorder %v3509, 1
      %v3512 = vsel %vm3510, 0.0, %v3502
      %v3513 = vsel %vm3511, 0.0, %v3505
      %v3514 = vsel %vm3510, 0.0, %v3503
      %v3515 = vsel %vm3511, 0.0, %v3506
      %v3516 = vsel %vm3510, 0.0, %v3504
      %v3517 = vsel %vm3511, 0.0, %v3507
      %3518 = vrot.lane.b32.xlu0 %v3377, 16
      %v3519 = vpop.permute.xlu0 %3518
      %3520 = vrot.lane.b32.xlu0 %v3379, 16
      %v3521 = vpop.permute.xlu0 %3520
      %3522 = vrot.lane.b32.xlu0 %v3381, 16
      %v3523 = vpop.permute.xlu0 %3522
      %3524 = vrot.lane.b32.xlu0 %v3378, 16
      %v3525 = vpop.permute.xlu0 %3524
      %3526 = vrot.lane.b32.xlu0 %v3380, 16
      %v3527 = vpop.permute.xlu0 %3526
      %3528 = vrot.lane.b32.xlu0 %v3382, 16
      %v3529 = vpop.permute.xlu0 %3528
      %v3530 = vsel %vm3413, %v3519, %v3525
      %v3531 = vsel %vm3413, %v3521, %v3527
      %v3532 = vsel %vm3413, %v3523, %v3529
      %v3533 = vsel %vm3413, %v3525, %v3519
      %v3534 = vsel %vm3413, %v3527, %v3521
      %v3535 = vsel %vm3413, %v3529, %v3523
      %v3536 = vsel %vm3413, 1, 0
      %v3537 = vsel %vm3414, 1, 0
      %vm3538 = vcmp.eq.s32.totalorder %v3536, 1
      %vm3539 = vcmp.eq.s32.totalorder %v3537, 1
      %v3540 = vsel %vm3538, 0.0, %v3533
      %v3541 = vsel %vm3539, 0.0, %v3530
      %v3542 = vsel %vm3538, 0.0, %v3534
      %v3543 = vsel %vm3539, 0.0, %v3531
      %v3544 = vsel %vm3538, 0.0, %v3535
      %v3545 = vsel %vm3539, 0.0, %v3532
      %vm3546 = vcmp.eq.s32.totalorder %v3403, 0
      %vm3547 = vcmp.eq.s32.totalorder %v3404, 0
      %vm3548 = vcmp.eq.s32.totalorder %v3405, 0
      %vm3549 = vcmp.eq.s32.totalorder %v3403, 1
      %vm3550 = vcmp.eq.s32.totalorder %v3404, 1
      %vm3551 = vcmp.eq.s32.totalorder %v3405, 1
      %vm3552 = vcmp.eq.s32.totalorder %v3403, 2
      %vm3553 = vcmp.eq.s32.totalorder %v3404, 2
      %vm3554 = vcmp.eq.s32.totalorder %v3405, 2
      %vm3555 = vcmp.eq.s32.totalorder %v3403, 3
      %vm3556 = vcmp.eq.s32.totalorder %v3404, 3
      %vm3557 = vcmp.eq.s32.totalorder %v3405, 3
      %v3558 = vsel %vm3555, 1, 0
      %v3559 = vsel %vm3556, 1, 0
      %v3560 = vsel %vm3557, 1, 0
      %3561 = vset.pattern.permute.xlu0 0
      %3562 = vperm.xlu0 %3561, %v3558
      %v3563 = vpop.permute.xlu0 %3562
      %3564 = vset.pattern.permute.xlu0 0
      %3565 = vperm.xlu0 %3564, %v3559
      %v3566 = vpop.permute.xlu0 %3565
      %3567 = vset.pattern.permute.xlu0 0
      %3568 = vperm.xlu0 %3567, %v3560
      %v3569 = vpop.permute.xlu0 %3568
      %vm3570 = vcmp.eq.s32.totalorder %v3563, 1
      %vm3571 = vcmp.eq.s32.totalorder %v3566, 1
      %vm3572 = vcmp.eq.s32.totalorder %v3569, 1
      %v3573 = vsel %vm3570, %v3540, %v3377
      %v3574 = vsel %vm3570, %v3541, %v3378
      %v3575 = vsel %vm3571, %v3542, %v3379
      %v3576 = vsel %vm3571, %v3543, %v3380
      %v3577 = vsel %vm3572, %v3544, %v3381
      %v3578 = vsel %vm3572, %v3545, %v3382
      %v3579 = vsel %vm3552, 1, 0
      %v3580 = vsel %vm3553, 1, 0
      %v3581 = vsel %vm3554, 1, 0
      %3582 = vset.pattern.permute.xlu0 0
      %3583 = vperm.xlu0 %3582, %v3579
      %v3584 = vpop.permute.xlu0 %3583
      %3585 = vset.pattern.permute.xlu0 0
      %3586 = vperm.xlu0 %3585, %v3580
      %v3587 = vpop.permute.xlu0 %3586
      %3588 = vset.pattern.permute.xlu0 0
      %3589 = vperm.xlu0 %3588, %v3581
      %v3590 = vpop.permute.xlu0 %3589
      %vm3591 = vcmp.eq.s32.totalorder %v3584, 1
      %vm3592 = vcmp.eq.s32.totalorder %v3587, 1
      %vm3593 = vcmp.eq.s32.totalorder %v3590, 1
      %v3594 = vsel %vm3591, %v3512, %v3573
      %v3595 = vsel %vm3591, %v3513, %v3574
      %v3596 = vsel %vm3592, %v3514, %v3575
      %v3597 = vsel %vm3592, %v3515, %v3576
      %v3598 = vsel %vm3593, %v3516, %v3577
      %v3599 = vsel %vm3593, %v3517, %v3578
      %v3600 = vsel %vm3549, 1, 0
      %v3601 = vsel %vm3550, 1, 0
      %v3602 = vsel %vm3551, 1, 0
      %3603 = vset.pattern.permute.xlu0 0
      %3604 = vperm.xlu0 %3603, %v3600
      %v3605 = vpop.permute.xlu0 %3604
      %3606 = vset.pattern.permute.xlu0 0
      %3607 = vperm.xlu0 %3606, %v3601
      %v3608 = vpop.permute.xlu0 %3607
      %3609 = vset.pattern.permute.xlu0 0
      %3610 = vperm.xlu0 %3609, %v3602
      %v3611 = vpop.permute.xlu0 %3610
      %vm3612 = vcmp.eq.s32.totalorder %v3605, 1
      %vm3613 = vcmp.eq.s32.totalorder %v3608, 1
      %vm3614 = vcmp.eq.s32.totalorder %v3611, 1
      %v3615 = vsel %vm3612, %v3483, %v3594
      %v3616 = vsel %vm3612, %v3484, %v3595
      %v3617 = vsel %vm3613, %v3485, %v3596
      %v3618 = vsel %vm3613, %v3486, %v3597
      %v3619 = vsel %vm3614, %v3487, %v3598
      %v3620 = vsel %vm3614, %v3488, %v3599
      %v3621 = vsel %vm3546, 1, 0
      %v3622 = vsel %vm3547, 1, 0
      %v3623 = vsel %vm3548, 1, 0
      %3624 = vset.pattern.permute.xlu0 0
      %3625 = vperm.xlu0 %3624, %v3621
      %v3626 = vpop.permute.xlu0 %3625
      %3627 = vset.pattern.permute.xlu0 0
      %3628 = vperm.xlu0 %3627, %v3622
      %v3629 = vpop.permute.xlu0 %3628
      %3630 = vset.pattern.permute.xlu0 0
      %3631 = vperm.xlu0 %3630, %v3623
      %v3632 = vpop.permute.xlu0 %3631
      %vm3633 = vcmp.eq.s32.totalorder %v3626, 1
      %vm3634 = vcmp.eq.s32.totalorder %v3629, 1
      %vm3635 = vcmp.eq.s32.totalorder %v3632, 1
      %v3636 = vsel %vm3633, %v3447, %v3615
      %v3637 = vsel %vm3633, %v3448, %v3616
      %v3638 = vsel %vm3634, %v3449, %v3617
      %v3639 = vsel %vm3634, %v3450, %v3618
      %v3640 = vsel %vm3635, %v3451, %v3619
      %v3641 = vsel %vm3635, %v3452, %v3620
      %3643 = vset.pattern.permute.xlu0 0
      %3644 = vperm.xlu0 %3643, %v3392
      %v3645 = vpop.permute.xlu0 %3644
      %3648 = vset.pattern.permute.xlu0 0
      %3649 = vperm.xlu0 %3648, %v3393
      %v3650 = vpop.permute.xlu0 %3649
      %3653 = vset.pattern.permute.xlu0 0
      %3654 = vperm.xlu0 %3653, %v3394
      %v3655 = vpop.permute.xlu0 %3654
      %3658 = vset.pattern.permute.xlu0 0
      %3659 = vperm.xlu0 %3658, %v3395
      %v3660 = vpop.permute.xlu0 %3659
      %3663 = vset.pattern.permute.xlu0 0
      %3664 = vperm.xlu0 %3663, %v3396
      %v3665 = vpop.permute.xlu0 %3664
      %v3668 = vsel %vm509, %v3387, 0
      %v3671 = vsel %vm509, %v3388, 0
      %v3674 = vsel %vm509, %v3389, 0
      %v3677 = vsel %vm509, %v3390, 0
      %v3680 = vsel %vm509, %v3391, 0
      %v3683 = vsel %vm525, %v3640, 0
      %v3686 = vsel %vm525, %v3641, 0
      %3688 = vmatprep.subr.mxu0 %v3637
      %3689 = vmatpush1.msra.mxu0 %v3636
      %3690 = vmatprep.subr.mxu0 %v3639
      %3691 = vmatpush1.msra.mxu0 %v3638
      %3692 = vmatprep.subr.mxu0 %v3686
      %3693 = vmatpush1.msra.mxu0 %v3683
      %3694 = vmatprep.subr.mxu0 0.0
      %3695 = vmatpush1.msra.mxu0 0.0
      %3696 = vmatprep.subr.mxu0 0.0
      %3697 = vmatpush1.msra.mxu0 0.0
      %3698 = vmatprep.subr.mxu0 0.0
      %3699 = vmatpush1.msra.mxu0 0.0
      %3700 = vmatprep.subr.mxu0 0.0
      %3701 = vmatpush1.msra.mxu0 0.0
      %3702 = vmatprep.subr.mxu0 0.0
      %3703 = vmatpush1.msra.mxu0 0.0
      %3704 = vmatprep.subr.mxu0 0.0
      %3705 = vmatpush1.msra.mxu0 0.0
      %3706 = vmatprep.subr.mxu0 0.0
      %3707 = vmatpush1.msra.mxu0 0.0
      %3708 = vmatprep.subr.mxu0 0.0
      %3709 = vmatpush1.msra.mxu0 0.0
      %3710 = vmatprep.subr.mxu0 0.0
      %3711 = vmatpush1.msra.mxu0 0.0
      %3712 = vmatprep.subr.mxu0 0.0
      %3713 = vmatpush1.msra.mxu0 0.0
      %3714 = vmatprep.subr.mxu0 0.0
      %3715 = vmatpush1.msra.mxu0 0.0
      %3716 = vmatprep.subr.mxu0 0.0
      %3717 = vmatpush1.msra.mxu0 0.0
      %3718 = vmatprep.subr.mxu0 0.0
      %3719 = vmatpush1.msra.mxu0 0.0
      %3720 = vmatprep.subr.mxu0 0.0
      %3721 = vmatpush1.msra.mxu0 0.0
      %3722 = vmatprep.subr.mxu0 0.0
      %3723 = vmatpush1.msra.mxu0 0.0
      %3724 = vmatprep.subr.mxu0 0.0
      %3725 = vmatpush1.msra.mxu0 0.0
      %3726 = vmatprep.subr.mxu0 0.0
      %3727 = vmatpush1.msra.mxu0 0.0
      %3728 = vmatprep.subr.mxu0 0.0
      %3729 = vmatpush1.msra.mxu0 0.0
      %3730 = vmatprep.subr.mxu0 0.0
      %3731 = vmatpush1.msra.mxu0 0.0
      %3732 = vmatprep.subr.mxu0 0.0
      %3733 = vmatpush1.msra.mxu0 0.0
      %3734 = vmatprep.subr.mxu0 0.0
      %3735 = vmatpush1.msra.mxu0 0.0
      %3736 = vmatprep.subr.mxu0 0.0
      %3737 = vmatpush1.msra.mxu0 0.0
      %3738 = vmatprep.subr.mxu0 0.0
      %3739 = vmatpush1.msra.mxu0 0.0
      %3740 = vmatprep.subr.mxu0 0.0
      %3741 = vmatpush1.msra.mxu0 0.0
      %3742 = vmatprep.subr.mxu0 0.0
      %3743 = vmatpush1.msra.mxu0 0.0
      %3744 = vmatprep.subr.mxu0 0.0
      %3745 = vmatpush1.msra.mxu0 0.0
      %3746 = vmatprep.subr.mxu0 0.0
      %3747 = vmatpush1.msra.mxu0 0.0
      %3748 = vmatprep.subr.mxu0 0.0
      %3749 = vmatpush1.msra.mxu0 0.0
      %3750 = vmatprep.subr.mxu0 0.0
      %3751 = vmatpush1.msra.mxu0 0.0
      %3752 = vmatprep.mubr.f32.mxu0 0.0
      %3753 = vmatmul.mubr.f32.gmra.mrb[0].mxu0 %v3668
      %v3754 = vpop.f32.mrb[0].mxu0
      %v3755 = vadd.f32 %v3645, %v3754
      %v3756 = vpop.f32.mrb[0].mxu0
      %v3757 = vadd.f32 %v3645, %v3756
      %3758 = vmatprep.mubr.f32.mxu0 0.0
      %3759 = vmatmul.mubr.f32.gmra.mrb[0].mxu0 %v3671
      %v3760 = vpop.f32.mrb[0].mxu0
      %v3761 = vadd.f32 %v3650, %v3760
      %v3762 = vpop.f32.mrb[0].mxu0
      %v3763 = vadd.f32 %v3650, %v3762
      %3764 = vmatprep.mubr.f32.mxu0 0.0
      %3765 = vmatmul.mubr.f32.gmra.mrb[0].mxu0 %v3674
      %v3766 = vpop.f32.mrb[0].mxu0
      %v3767 = vadd.f32 %v3655, %v3766
      %v3768 = vpop.f32.mrb[0].mxu0
      %v3769 = vadd.f32 %v3655, %v3768
      %3770 = vmatprep.mubr.f32.mxu0 0.0
      %3771 = vmatmul.mubr.f32.gmra.mrb[0].mxu0 %v3677
      %v3772 = vpop.f32.mrb[0].mxu0
      %v3773 = vadd.f32 %v3660, %v3772
      %v3774 = vpop.f32.mrb[0].mxu0
      %v3775 = vadd.f32 %v3660, %v3774
      %3776 = vmatprep.mubr.f32.mxu0 0.0
      %3777 = vmatmul.mubr.f32.gmra.mrb[0].mxu0 %v3680
      %v3778 = vpop.f32.mrb[0].mxu0
      %v3779 = vadd.f32 %v3665, %v3778
      %v3780 = vpop.f32.mrb[0].mxu0
      %v3781 = vadd.f32 %v3665, %v3780
      %3782 = vdwg.mxu0
      %v3783 = vmul.f32 %v3755, 0.5
      %v3784 = vmul.f32 %v3757, 0.5
      %v3785 = vmul.f32 %v3761, 0.5
      %v3786 = vmul.f32 %v3763, 0.5
      %v3787 = vmul.f32 %v3767, 0.5
      %v3788 = vmul.f32 %v3769, 0.5
      %v3789 = vmul.f32 %v3773, 0.5
      %v3790 = vmul.f32 %v3775, 0.5
      %v3791 = vmul.f32 %v3779, 0.5
      %v3792 = vmul.f32 %v3781, 0.5
      %v3793 = vmul.f32 %v3755, 0.70710677
      %v3794 = vmul.f32 %v3757, 0.70710677
      %v3795 = vmul.f32 %v3761, 0.70710677
      %v3796 = vmul.f32 %v3763, 0.70710677
      %v3797 = vmul.f32 %v3767, 0.70710677
      %v3798 = vmul.f32 %v3769, 0.70710677
      %v3799 = vmul.f32 %v3773, 0.70710677
      %v3800 = vmul.f32 %v3775, 0.70710677
      %v3801 = vmul.f32 %v3779, 0.70710677
      %v3802 = vmul.f32 %v3781, 0.70710677
      %v3803 = vand.u32 2147483647, %v3793
      %v3804 = vand.u32 2147483647, %v3794
      %v3805 = vand.u32 2147483647, %v3795
      %v3806 = vand.u32 2147483647, %v3796
      %v3807 = vand.u32 2147483647, %v3797
      %v3808 = vand.u32 2147483647, %v3798
      %v3809 = vand.u32 2147483647, %v3799
      %v3810 = vand.u32 2147483647, %v3800
      %v3811 = vand.u32 2147483647, %v3801
      %v3812 = vand.u32 2147483647, %v3802
      %v3813 = vmul.f32 %v3803, 0.3275911
      %v3814 = vmul.f32 %v3804, 0.3275911
      %v3815 = vmul.f32 %v3805, 0.3275911
      %v3816 = vmul.f32 %v3806, 0.3275911
      %v3817 = vmul.f32 %v3807, 0.3275911
      %v3818 = vmul.f32 %v3808, 0.3275911
      %v3819 = vmul.f32 %v3809, 0.3275911
      %v3820 = vmul.f32 %v3810, 0.3275911
      %v3821 = vmul.f32 %v3811, 0.3275911
      %v3822 = vmul.f32 %v3812, 0.3275911
      %v3823 = vadd.f32 %v3813, 1.0
      %v3824 = vadd.f32 %v3814, 1.0
      %v3825 = vadd.f32 %v3815, 1.0
      %v3826 = vadd.f32 %v3816, 1.0
      %v3827 = vadd.f32 %v3817, 1.0
      %v3828 = vadd.f32 %v3818, 1.0
      %v3829 = vadd.f32 %v3819, 1.0
      %v3830 = vadd.f32 %v3820, 1.0
      %v3831 = vadd.f32 %v3821, 1.0
      %v3832 = vadd.f32 %v3822, 1.0
      %v3833 = vrcp.pop %v3823
      %v3834 = vrcp.pop %v3824
      %v3835 = vrcp.pop %v3825
      %v3836 = vrcp.pop %v3826
      %v3837 = vrcp.pop %v3827
      %v3838 = vrcp.pop %v3828
      %v3839 = vrcp.pop %v3829
      %v3840 = vrcp.pop %v3830
      %v3841 = vrcp.pop %v3831
      %v3842 = vrcp.pop %v3832
      %v3843 = vmul.f32 %v3823, %v3833
      %v3844 = vmul.f32 %v3824, %v3834
      %v3845 = vmul.f32 %v3825, %v3835
      %v3846 = vmul.f32 %v3826, %v3836
      %v3847 = vmul.f32 %v3827, %v3837
      %v3848 = vmul.f32 %v3828, %v3838
      %v3849 = vmul.f32 %v3829, %v3839
      %v3850 = vmul.f32 %v3830, %v3840
      %v3851 = vmul.f32 %v3831, %v3841
      %v3852 = vmul.f32 %v3832, %v3842
      %v3853 = vsub.f32 2.0, %v3843
      %v3854 = vsub.f32 2.0, %v3844
      %v3855 = vsub.f32 2.0, %v3845
      %v3856 = vsub.f32 2.0, %v3846
      %v3857 = vsub.f32 2.0, %v3847
      %v3858 = vsub.f32 2.0, %v3848
      %v3859 = vsub.f32 2.0, %v3849
      %v3860 = vsub.f32 2.0, %v3850
      %v3861 = vsub.f32 2.0, %v3851
      %v3862 = vsub.f32 2.0, %v3852
      %v3863 = vmul.f32 %v3833, %v3853
      %v3864 = vmul.f32 %v3834, %v3854
      %v3865 = vmul.f32 %v3835, %v3855
      %v3866 = vmul.f32 %v3836, %v3856
      %v3867 = vmul.f32 %v3837, %v3857
      %v3868 = vmul.f32 %v3838, %v3858
      %v3869 = vmul.f32 %v3839, %v3859
      %v3870 = vmul.f32 %v3840, %v3860
      %v3871 = vmul.f32 %v3841, %v3861
      %v3872 = vmul.f32 %v3842, %v3862
      %v3873 = vmul.f32 %v3863, 1.0614054
      %v3874 = vmul.f32 %v3864, 1.0614054
      %v3875 = vmul.f32 %v3865, 1.0614054
      %v3876 = vmul.f32 %v3866, 1.0614054
      %v3877 = vmul.f32 %v3867, 1.0614054
      %v3878 = vmul.f32 %v3868, 1.0614054
      %v3879 = vmul.f32 %v3869, 1.0614054
      %v3880 = vmul.f32 %v3870, 1.0614054
      %v3881 = vmul.f32 %v3871, 1.0614054
      %v3882 = vmul.f32 %v3872, 1.0614054
      %v3883 = vadd.f32 %v3873, -1.4531521
      %v3884 = vadd.f32 %v3874, -1.4531521
      %v3885 = vadd.f32 %v3875, -1.4531521
      %v3886 = vadd.f32 %v3876, -1.4531521
      %v3887 = vadd.f32 %v3877, -1.4531521
      %v3888 = vadd.f32 %v3878, -1.4531521
      %v3889 = vadd.f32 %v3879, -1.4531521
      %v3890 = vadd.f32 %v3880, -1.4531521
      %v3891 = vadd.f32 %v3881, -1.4531521
      %v3892 = vadd.f32 %v3882, -1.4531521
      %v3893 = vmul.f32 %v3883, %v3863
      %v3894 = vmul.f32 %v3884, %v3864
      %v3895 = vmul.f32 %v3885, %v3865
      %v3896 = vmul.f32 %v3886, %v3866
      %v3897 = vmul.f32 %v3887, %v3867
      %v3898 = vmul.f32 %v3888, %v3868
      %v3899 = vmul.f32 %v3889, %v3869
      %v3900 = vmul.f32 %v3890, %v3870
      %v3901 = vmul.f32 %v3891, %v3871
      %v3902 = vmul.f32 %v3892, %v3872
      %v3903 = vadd.f32 %v3893, 1.4214138
      %v3904 = vadd.f32 %v3894, 1.4214138
      %v3905 = vadd.f32 %v3895, 1.4214138
      %v3906 = vadd.f32 %v3896, 1.4214138
      %v3907 = vadd.f32 %v3897, 1.4214138
      %v3908 = vadd.f32 %v3898, 1.4214138
      %v3909 = vadd.f32 %v3899, 1.4214138
      %v3910 = vadd.f32 %v3900, 1.4214138
      %v3911 = vadd.f32 %v3901, 1.4214138
      %v3912 = vadd.f32 %v3902, 1.4214138
      %v3913 = vmul.f32 %v3903, %v3863
      %v3914 = vmul.f32 %v3904, %v3864
      %v3915 = vmul.f32 %v3905, %v3865
      %v3916 = vmul.f32 %v3906, %v3866
      %v3917 = vmul.f32 %v3907, %v3867
      %v3918 = vmul.f32 %v3908, %v3868
      %v3919 = vmul.f32 %v3909, %v3869
      %v3920 = vmul.f32 %v3910, %v3870
      %v3921 = vmul.f32 %v3911, %v3871
      %v3922 = vmul.f32 %v3912, %v3872
      %v3923 = vadd.f32 %v3913, -0.28449672
      %v3924 = vadd.f32 %v3914, -0.28449672
      %v3925 = vadd.f32 %v3915, -0.28449672
      %v3926 = vadd.f32 %v3916, -0.28449672
      %v3927 = vadd.f32 %v3917, -0.28449672
      %v3928 = vadd.f32 %v3918, -0.28449672
      %v3929 = vadd.f32 %v3919, -0.28449672
      %v3930 = vadd.f32 %v3920, -0.28449672
      %v3931 = vadd.f32 %v3921, -0.28449672
      %v3932 = vadd.f32 %v3922, -0.28449672
      %v3933 = vmul.f32 %v3923, %v3863
      %v3934 = vmul.f32 %v3924, %v3864
      %v3935 = vmul.f32 %v3925, %v3865
      %v3936 = vmul.f32 %v3926, %v3866
      %v3937 = vmul.f32 %v3927, %v3867
      %v3938 = vmul.f32 %v3928, %v3868
      %v3939 = vmul.f32 %v3929, %v3869
      %v3940 = vmul.f32 %v3930, %v3870
      %v3941 = vmul.f32 %v3931, %v3871
      %v3942 = vmul.f32 %v3932, %v3872
      %v3943 = vadd.f32 %v3933, 0.2548296
      %v3944 = vadd.f32 %v3934, 0.2548296
      %v3945 = vadd.f32 %v3935, 0.2548296
      %v3946 = vadd.f32 %v3936, 0.2548296
      %v3947 = vadd.f32 %v3937, 0.2548296
      %v3948 = vadd.f32 %v3938, 0.2548296
      %v3949 = vadd.f32 %v3939, 0.2548296
      %v3950 = vadd.f32 %v3940, 0.2548296
      %v3951 = vadd.f32 %v3941, 0.2548296
      %v3952 = vadd.f32 %v3942, 0.2548296
      %v3953 = vmul.f32 %v3943, %v3863
      %v3954 = vmul.f32 %v3944, %v3864
      %v3955 = vmul.f32 %v3945, %v3865
      %v3956 = vmul.f32 %v3946, %v3866
      %v3957 = vmul.f32 %v3947, %v3867
      %v3958 = vmul.f32 %v3948, %v3868
      %v3959 = vmul.f32 %v3949, %v3869
      %v3960 = vmul.f32 %v3950, %v3870
      %v3961 = vmul.f32 %v3951, %v3871
      %v3962 = vmul.f32 %v3952, %v3872
      %v3963 = vsub.f32 0.0, %v3803
      %v3964 = vsub.f32 0.0, %v3804
      %v3965 = vsub.f32 0.0, %v3805
      %v3966 = vsub.f32 0.0, %v3806
      %v3967 = vsub.f32 0.0, %v3807
      %v3968 = vsub.f32 0.0, %v3808
      %v3969 = vsub.f32 0.0, %v3809
      %v3970 = vsub.f32 0.0, %v3810
      %v3971 = vsub.f32 0.0, %v3811
      %v3972 = vsub.f32 0.0, %v3812
      %v3973 = vmul.f32 %v3963, %v3803
      %v3974 = vmul.f32 %v3964, %v3804
      %v3975 = vmul.f32 %v3965, %v3805
      %v3976 = vmul.f32 %v3966, %v3806
      %v3977 = vmul.f32 %v3967, %v3807
      %v3978 = vmul.f32 %v3968, %v3808
      %v3979 = vmul.f32 %v3969, %v3809
      %v3980 = vmul.f32 %v3970, %v3810
      %v3981 = vmul.f32 %v3971, %v3811
      %v3982 = vmul.f32 %v3972, %v3812
      %v3983 = vmul.f32 %v3973, 1.442695
      %v3984 = vpow.pop %v3983
      %v3985 = vmul.f32 %v3974, 1.442695
      %v3986 = vpow.pop %v3985
      %v3987 = vmul.f32 %v3975, 1.442695
      %v3988 = vpow.pop %v3987
      %v3989 = vmul.f32 %v3976, 1.442695
      %v3990 = vpow.pop %v3989
      %v3991 = vmul.f32 %v3977, 1.442695
      %v3992 = vpow.pop %v3991
      %v3993 = vmul.f32 %v3978, 1.442695
      %v3994 = vpow.pop %v3993
      %v3995 = vmul.f32 %v3979, 1.442695
      %v3996 = vpow.pop %v3995
      %v3997 = vmul.f32 %v3980, 1.442695
      %v3998 = vpow.pop %v3997
      %v3999 = vmul.f32 %v3981, 1.442695
      %v4000 = vpow.pop %v3999
      %v4001 = vmul.f32 %v3982, 1.442695
      %v4002 = vpow.pop %v4001
      %v4003 = vmul.f32 %v3953, %v3984
      %v4004 = vmul.f32 %v3954, %v3986
      %v4005 = vmul.f32 %v3955, %v3988
      %v4006 = vmul.f32 %v3956, %v3990
      %v4007 = vmul.f32 %v3957, %v3992
      %v4008 = vmul.f32 %v3958, %v3994
      %v4009 = vmul.f32 %v3959, %v3996
      %v4010 = vmul.f32 %v3960, %v3998
      %v4011 = vmul.f32 %v3961, %v4000
      %v4012 = vmul.f32 %v3962, %v4002
      %v4013 = vsub.f32 1.0, %v4003
      %v4014 = vsub.f32 1.0, %v4004
      %v4015 = vsub.f32 1.0, %v4005
      %v4016 = vsub.f32 1.0, %v4006
      %v4017 = vsub.f32 1.0, %v4007
      %v4018 = vsub.f32 1.0, %v4008
      %v4019 = vsub.f32 1.0, %v4009
      %v4020 = vsub.f32 1.0, %v4010
      %v4021 = vsub.f32 1.0, %v4011
      %v4022 = vsub.f32 1.0, %v4012
      %vm4023 = vcmp.lt.f32.partialorder %v3793, 0.0
      %vm4024 = vcmp.lt.f32.partialorder %v3794, 0.0
      %vm4025 = vcmp.lt.f32.partialorder %v3795, 0.0
      %vm4026 = vcmp.lt.f32.partialorder %v3796, 0.0
      %vm4027 = vcmp.lt.f32.partialorder %v3797, 0.0
      %vm4028 = vcmp.lt.f32.partialorder %v3798, 0.0
      %vm4029 = vcmp.lt.f32.partialorder %v3799, 0.0
      %vm4030 = vcmp.lt.f32.partialorder %v3800, 0.0
      %vm4031 = vcmp.lt.f32.partialorder %v3801, 0.0
      %vm4032 = vcmp.lt.f32.partialorder %v3802, 0.0
      %v4033 = vsub.f32 0.0, %v4013
      %v4034 = vsub.f32 0.0, %v4014
      %v4035 = vsub.f32 0.0, %v4015
      %v4036 = vsub.f32 0.0, %v4016
      %v4037 = vsub.f32 0.0, %v4017
      %v4038 = vsub.f32 0.0, %v4018
      %v4039 = vsub.f32 0.0, %v4019
      %v4040 = vsub.f32 0.0, %v4020
      %v4041 = vsub.f32 0.0, %v4021
      %v4042 = vsub.f32 0.0, %v4022
      %v4043 = vsel %vm4023, %v4033, %v4013
      %v4044 = vsel %vm4024, %v4034, %v4014
      %v4045 = vsel %vm4025, %v4035, %v4015
      %v4046 = vsel %vm4026, %v4036, %v4016
      %v4047 = vsel %vm4027, %v4037, %v4017
      %v4048 = vsel %vm4028, %v4038, %v4018
      %v4049 = vsel %vm4029, %v4039, %v4019
      %v4050 = vsel %vm4030, %v4040, %v4020
      %v4051 = vsel %vm4031, %v4041, %v4021
      %v4052 = vsel %vm4032, %v4042, %v4022
      %v4053 = vadd.f32 %v4043, 1.0
      %v4054 = vadd.f32 %v4044, 1.0
      %v4055 = vadd.f32 %v4045, 1.0
      %v4056 = vadd.f32 %v4046, 1.0
      %v4057 = vadd.f32 %v4047, 1.0
      %v4058 = vadd.f32 %v4048, 1.0
      %v4059 = vadd.f32 %v4049, 1.0
      %v4060 = vadd.f32 %v4050, 1.0
      %v4061 = vadd.f32 %v4051, 1.0
      %v4062 = vadd.f32 %v4052, 1.0
      %v4063 = vmul.f32 %v3783, %v4053
      %v4064 = vmul.f32 %v3784, %v4054
      %v4065 = vmul.f32 %v3785, %v4055
      %v4066 = vmul.f32 %v3786, %v4056
      %v4067 = vmul.f32 %v3787, %v4057
      %v4068 = vmul.f32 %v3788, %v4058
      %v4069 = vmul.f32 %v3789, %v4059
      %v4070 = vmul.f32 %v3790, %v4060
      %v4071 = vmul.f32 %v3791, %v4061
      %v4072 = vmul.f32 %v3792, %v4062
      %4073 = vrot.lane.b32.xlu0 %v4063, 127
      %v4074 = vpop.permute.xlu0 %4073
      %4075 = vrot.lane.b32.xlu0 %v4065, 127
      %v4076 = vpop.permute.xlu0 %4075
      %4077 = vrot.lane.b32.xlu0 %v4067, 127
      %v4078 = vpop.permute.xlu0 %4077
      %4079 = vrot.lane.b32.xlu0 %v4069, 127
      %v4080 = vpop.permute.xlu0 %4079
      %4081 = vrot.lane.b32.xlu0 %v4071, 127
      %v4082 = vpop.permute.xlu0 %4081
      %4083 = vrot.lane.b32.xlu0 %v4064, 127
      %v4084 = vpop.permute.xlu0 %4083
      %4085 = vrot.lane.b32.xlu0 %v4066, 127
      %v4086 = vpop.permute.xlu0 %4085
      %4087 = vrot.lane.b32.xlu0 %v4068, 127
      %v4088 = vpop.permute.xlu0 %4087
      %4089 = vrot.lane.b32.xlu0 %v4070, 127
      %v4090 = vpop.permute.xlu0 %4089
      %4091 = vrot.lane.b32.xlu0 %v4072, 127
      %v4092 = vpop.permute.xlu0 %4091
      %v4093 = vsel %vm3429, %v4074, %v4084
      %v4094 = vsel %vm3429, %v4076, %v4086
      %v4095 = vsel %vm3429, %v4078, %v4088
      %v4096 = vsel %vm3429, %v4080, %v4090
      %v4097 = vsel %vm3429, %v4082, %v4092
      %v4098 = vsel %vm3429, %v4084, %v4074
      %v4099 = vsel %vm3429, %v4086, %v4076
      %v4100 = vsel %vm3429, %v4088, %v4078
      %v4101 = vsel %vm3429, %v4090, %v4080
      %v4102 = vsel %vm3429, %v4092, %v4082
      %v4103 = vsel %vm3445, 0.0, %v4093
      %v4104 = vsel %vm3446, 0.0, %v4098
      %v4105 = vsel %vm3445, 0.0, %v4094
      %v4106 = vsel %vm3446, 0.0, %v4099
      %v4107 = vsel %vm3445, 0.0, %v4095
      %v4108 = vsel %vm3446, 0.0, %v4100
      %v4109 = vsel %vm3445, 0.0, %v4096
      %v4110 = vsel %vm3446, 0.0, %v4101
      %v4111 = vsel %vm3445, 0.0, %v4097
      %v4112 = vsel %vm3446, 0.0, %v4102
      %4113 = vrot.lane.b32.xlu0 %v4063, 1
      %v4114 = vpop.permute.xlu0 %4113
      %4115 = vrot.lane.b32.xlu0 %v4065, 1
      %v4116 = vpop.permute.xlu0 %4115
      %4117 = vrot.lane.b32.xlu0 %v4067, 1
      %v4118 = vpop.permute.xlu0 %4117
      %4119 = vrot.lane.b32.xlu0 %v4069, 1
      %v4120 = vpop.permute.xlu0 %4119
      %4121 = vrot.lane.b32.xlu0 %v4071, 1
      %v4122 = vpop.permute.xlu0 %4121
      %4123 = vrot.lane.b32.xlu0 %v4064, 1
      %v4124 = vpop.permute.xlu0 %4123
      %4125 = vrot.lane.b32.xlu0 %v4066, 1
      %v4126 = vpop.permute.xlu0 %4125
      %4127 = vrot.lane.b32.xlu0 %v4068, 1
      %v4128 = vpop.permute.xlu0 %4127
      %4129 = vrot.lane.b32.xlu0 %v4070, 1
      %v4130 = vpop.permute.xlu0 %4129
      %4131 = vrot.lane.b32.xlu0 %v4072, 1
      %v4132 = vpop.permute.xlu0 %4131
      %v4133 = vsel %vm3465, %v4114, %v4124
      %v4134 = vsel %vm3465, %v4116, %v4126
      %v4135 = vsel %vm3465, %v4118, %v4128
      %v4136 = vsel %vm3465, %v4120, %v4130
      %v4137 = vsel %vm3465, %v4122, %v4132
      %v4138 = vsel %vm3465, %v4124, %v4114
      %v4139 = vsel %vm3465, %v4126, %v4116
      %v4140 = vsel %vm3465, %v4128, %v4118
      %v4141 = vsel %vm3465, %v4130, %v4120
      %v4142 = vsel %vm3465, %v4132, %v4122
      %v4143 = vsel %vm3481, 0.0, %v4138
      %v4144 = vsel %vm3482, 0.0, %v4133
      %v4145 = vsel %vm3481, 0.0, %v4139
      %v4146 = vsel %vm3482, 0.0, %v4134
      %v4147 = vsel %vm3481, 0.0, %v4140
      %v4148 = vsel %vm3482, 0.0, %v4135
      %v4149 = vsel %vm3481, 0.0, %v4141
      %v4150 = vsel %vm3482, 0.0, %v4136
      %v4151 = vsel %vm3481, 0.0, %v4142
      %v4152 = vsel %vm3482, 0.0, %v4137
      %4153 = vrot.lane.b32.xlu0 %v4063, 112
      %v4154 = vpop.permute.xlu0 %4153
      %4155 = vrot.lane.b32.xlu0 %v4065, 112
      %v4156 = vpop.permute.xlu0 %4155
      %4157 = vrot.lane.b32.xlu0 %v4067, 112
      %v4158 = vpop.permute.xlu0 %4157
      %4159 = vrot.lane.b32.xlu0 %v4069, 112
      %v4160 = vpop.permute.xlu0 %4159
      %4161 = vrot.lane.b32.xlu0 %v4071, 112
      %v4162 = vpop.permute.xlu0 %4161
      %4163 = vrot.lane.b32.xlu0 %v4064, 112
      %v4164 = vpop.permute.xlu0 %4163
      %4165 = vrot.lane.b32.xlu0 %v4066, 112
      %v4166 = vpop.permute.xlu0 %4165
      %4167 = vrot.lane.b32.xlu0 %v4068, 112
      %v4168 = vpop.permute.xlu0 %4167
      %4169 = vrot.lane.b32.xlu0 %v4070, 112
      %v4170 = vpop.permute.xlu0 %4169
      %4171 = vrot.lane.b32.xlu0 %v4072, 112
      %v4172 = vpop.permute.xlu0 %4171
      %v4173 = vsel %vm3501, %v4154, %v4164
      %v4174 = vsel %vm3501, %v4156, %v4166
      %v4175 = vsel %vm3501, %v4158, %v4168
      %v4176 = vsel %vm3501, %v4160, %v4170
      %v4177 = vsel %vm3501, %v4162, %v4172
      %v4178 = vsel %vm3501, %v4164, %v4154
      %v4179 = vsel %vm3501, %v4166, %v4156
      %v4180 = vsel %vm3501, %v4168, %v4158
      %v4181 = vsel %vm3501, %v4170, %v4160
      %v4182 = vsel %vm3501, %v4172, %v4162
      %v4183 = vsel %vm3510, 0.0, %v4173
      %v4184 = vsel %vm3511, 0.0, %v4178
      %v4185 = vsel %vm3510, 0.0, %v4174
      %v4186 = vsel %vm3511, 0.0, %v4179
      %v4187 = vsel %vm3510, 0.0, %v4175
      %v4188 = vsel %vm3511, 0.0, %v4180
      %v4189 = vsel %vm3510, 0.0, %v4176
      %v4190 = vsel %vm3511, 0.0, %v4181
      %v4191 = vsel %vm3510, 0.0, %v4177
      %v4192 = vsel %vm3511, 0.0, %v4182
      %4193 = vrot.lane.b32.xlu0 %v4063, 16
      %v4194 = vpop.permute.xlu0 %4193
      %4195 = vrot.lane.b32.xlu0 %v4065, 16
      %v4196 = vpop.permute.xlu0 %4195
      %4197 = vrot.lane.b32.xlu0 %v4067, 16
      %v4198 = vpop.permute.xlu0 %4197
      %4199 = vrot.lane.b32.xlu0 %v4069, 16
      %v4200 = vpop.permute.xlu0 %4199
      %4201 = vrot.lane.b32.xlu0 %v4071, 16
      %v4202 = vpop.permute.xlu0 %4201
      %4203 = vrot.lane.b32.xlu0 %v4064, 16
      %v4204 = vpop.permute.xlu0 %4203
      %4205 = vrot.lane.b32.xlu0 %v4066, 16
      %v4206 = vpop.permute.xlu0 %4205
      %4207 = vrot.lane.b32.xlu0 %v4068, 16
      %v4208 = vpop.permute.xlu0 %4207
      %4209 = vrot.lane.b32.xlu0 %v4070, 16
      %v4210 = vpop.permute.xlu0 %4209
      %4211 = vrot.lane.b32.xlu0 %v4072, 16
      %v4212 = vpop.permute.xlu0 %4211
      %v4213 = vsel %vm3413, %v4194, %v4204
      %v4214 = vsel %vm3413, %v4196, %v4206
      %v4215 = vsel %vm3413, %v4198, %v4208
      %v4216 = vsel %vm3413, %v4200, %v4210
      %v4217 = vsel %vm3413, %v4202, %v4212
      %v4218 = vsel %vm3413, %v4204, %v4194
      %v4219 = vsel %vm3413, %v4206, %v4196
      %v4220 = vsel %vm3413, %v4208, %v4198
      %v4221 = vsel %vm3413, %v4210, %v4200
      %v4222 = vsel %vm3413, %v4212, %v4202
      %v4223 = vsel %vm3538, 0.0, %v4218
      %v4224 = vsel %vm3539, 0.0, %v4213
      %v4225 = vsel %vm3538, 0.0, %v4219
      %v4226 = vsel %vm3539, 0.0, %v4214
      %v4227 = vsel %vm3538, 0.0, %v4220
      %v4228 = vsel %vm3539, 0.0, %v4215
      %v4229 = vsel %vm3538, 0.0, %v4221
      %v4230 = vsel %vm3539, 0.0, %v4216
      %v4231 = vsel %vm3538, 0.0, %v4222
      %v4232 = vsel %vm3539, 0.0, %v4217
      %vm4233 = vcmp.eq.s32.totalorder %v3406, 0
      %vm4234 = vcmp.eq.s32.totalorder %v3407, 0
      %vm4235 = vcmp.eq.s32.totalorder %v3408, 0
      %vm4236 = vcmp.eq.s32.totalorder %v3409, 0
      %vm4237 = vcmp.eq.s32.totalorder %v3410, 0
      %vm4238 = vcmp.eq.s32.totalorder %v3406, 1
      %vm4239 = vcmp.eq.s32.totalorder %v3407, 1
      %vm4240 = vcmp.eq.s32.totalorder %v3408, 1
      %vm4241 = vcmp.eq.s32.totalorder %v3409, 1
      %vm4242 = vcmp.eq.s32.totalorder %v3410, 1
      %vm4243 = vcmp.eq.s32.totalorder %v3406, 2
      %vm4244 = vcmp.eq.s32.totalorder %v3407, 2
      %vm4245 = vcmp.eq.s32.totalorder %v3408, 2
      %vm4246 = vcmp.eq.s32.totalorder %v3409, 2
      %vm4247 = vcmp.eq.s32.totalorder %v3410, 2
      %vm4248 = vcmp.eq.s32.totalorder %v3406, 3
      %vm4249 = vcmp.eq.s32.totalorder %v3407, 3
      %vm4250 = vcmp.eq.s32.totalorder %v3408, 3
      %vm4251 = vcmp.eq.s32.totalorder %v3409, 3
      %vm4252 = vcmp.eq.s32.totalorder %v3410, 3
      %v4253 = vsel %vm4248, 1, 0
      %v4254 = vsel %vm4249, 1, 0
      %v4255 = vsel %vm4250, 1, 0
      %v4256 = vsel %vm4251, 1, 0
      %v4257 = vsel %vm4252, 1, 0
      %4258 = vset.pattern.permute.xlu0 0
      %4259 = vperm.xlu0 %4258, %v4253
      %v4260 = vpop.permute.xlu0 %4259
      %4261 = vset.pattern.permute.xlu0 0
      %4262 = vperm.xlu0 %4261, %v4254
      %v4263 = vpop.permute.xlu0 %4262
      %4264 = vset.pattern.permute.xlu0 0
      %4265 = vperm.xlu0 %4264, %v4255
      %v4266 = vpop.permute.xlu0 %4265
      %4267 = vset.pattern.permute.xlu0 0
      %4268 = vperm.xlu0 %4267, %v4256
      %v4269 = vpop.permute.xlu0 %4268
      %4270 = vset.pattern.permute.xlu0 0
      %4271 = vperm.xlu0 %4270, %v4257
      %v4272 = vpop.permute.xlu0 %4271
      %vm4273 = vcmp.eq.s32.totalorder %v4260, 1
      %vm4274 = vcmp.eq.s32.totalorder %v4263, 1
      %vm4275 = vcmp.eq.s32.totalorder %v4266, 1
      %vm4276 = vcmp.eq.s32.totalorder %v4269, 1
      %vm4277 = vcmp.eq.s32.totalorder %v4272, 1
      %v4278 = vsel %vm4273, %v4223, %v4063
      %v4279 = vsel %vm4273, %v4224, %v4064
      %v4280 = vsel %vm4274, %v4225, %v4065
      %v4281 = vsel %vm4274, %v4226, %v4066
      %v4282 = vsel %vm4275, %v4227, %v4067
      %v4283 = vsel %vm4275, %v4228, %v4068
      %v4284 = vsel %vm4276, %v4229, %v4069
      %v4285 = vsel %vm4276, %v4230, %v4070
      %v4286 = vsel %vm4277, %v4231, %v4071
      %v4287 = vsel %vm4277, %v4232, %v4072
      %v4288 = vsel %vm4243, 1, 0
      %v4289 = vsel %vm4244, 1, 0
      %v4290 = vsel %vm4245, 1, 0
      %v4291 = vsel %vm4246, 1, 0
      %v4292 = vsel %vm4247, 1, 0
      %4293 = vset.pattern.permute.xlu0 0
      %4294 = vperm.xlu0 %4293, %v4288
      %v4295 = vpop.permute.xlu0 %4294
      %4296 = vset.pattern.permute.xlu0 0
      %4297 = vperm.xlu0 %4296, %v4289
      %v4298 = vpop.permute.xlu0 %4297
      %4299 = vset.pattern.permute.xlu0 0
      %4300 = vperm.xlu0 %4299, %v4290
      %v4301 = vpop.permute.xlu0 %4300
      %4302 = vset.pattern.permute.xlu0 0
      %4303 = vperm.xlu0 %4302, %v4291
      %v4304 = vpop.permute.xlu0 %4303
      %4305 = vset.pattern.permute.xlu0 0
      %4306 = vperm.xlu0 %4305, %v4292
      %v4307 = vpop.permute.xlu0 %4306
      %vm4308 = vcmp.eq.s32.totalorder %v4295, 1
      %vm4309 = vcmp.eq.s32.totalorder %v4298, 1
      %vm4310 = vcmp.eq.s32.totalorder %v4301, 1
      %vm4311 = vcmp.eq.s32.totalorder %v4304, 1
      %vm4312 = vcmp.eq.s32.totalorder %v4307, 1
      %v4313 = vsel %vm4308, %v4183, %v4278
      %v4314 = vsel %vm4308, %v4184, %v4279
      %v4315 = vsel %vm4309, %v4185, %v4280
      %v4316 = vsel %vm4309, %v4186, %v4281
      %v4317 = vsel %vm4310, %v4187, %v4282
      %v4318 = vsel %vm4310, %v4188, %v4283
      %v4319 = vsel %vm4311, %v4189, %v4284
      %v4320 = vsel %vm4311, %v4190, %v4285
      %v4321 = vsel %vm4312, %v4191, %v4286
      %v4322 = vsel %vm4312, %v4192, %v4287
      %v4323 = vsel %vm4238, 1, 0
      %v4324 = vsel %vm4239, 1, 0
      %v4325 = vsel %vm4240, 1, 0
      %v4326 = vsel %vm4241, 1, 0
      %v4327 = vsel %vm4242, 1, 0
      %4328 = vset.pattern.permute.xlu0 0
      %4329 = vperm.xlu0 %4328, %v4323
      %v4330 = vpop.permute.xlu0 %4329
      %4331 = vset.pattern.permute.xlu0 0
      %4332 = vperm.xlu0 %4331, %v4324
      %v4333 = vpop.permute.xlu0 %4332
      %4334 = vset.pattern.permute.xlu0 0
      %4335 = vperm.xlu0 %4334, %v4325
      %v4336 = vpop.permute.xlu0 %4335
      %4337 = vset.pattern.permute.xlu0 0
      %4338 = vperm.xlu0 %4337, %v4326
      %v4339 = vpop.permute.xlu0 %4338
      %4340 = vset.pattern.permute.xlu0 0
      %4341 = vperm.xlu0 %4340, %v4327
      %v4342 = vpop.permute.xlu0 %4341
      %vm4343 = vcmp.eq.s32.totalorder %v4330, 1
      %vm4344 = vcmp.eq.s32.totalorder %v4333, 1
      %vm4345 = vcmp.eq.s32.totalorder %v4336, 1
      %vm4346 = vcmp.eq.s32.totalorder %v4339, 1
      %vm4347 = vcmp.eq.s32.totalorder %v4342, 1
      %v4348 = vsel %vm4343, %v4143, %v4313
      %v4349 = vsel %vm4343, %v4144, %v4314
      %v4350 = vsel %vm4344, %v4145, %v4315
      %v4351 = vsel %vm4344, %v4146, %v4316
      %v4352 = vsel %vm4345, %v4147, %v4317
      %v4353 = vsel %vm4345, %v4148, %v4318
      %v4354 = vsel %vm4346, %v4149, %v4319
      %v4355 = vsel %vm4346, %v4150, %v4320
      %v4356 = vsel %vm4347, %v4151, %v4321
      %v4357 = vsel %vm4347, %v4152, %v4322
      %v4358 = vsel %vm4233, 1, 0
      %v4359 = vsel %vm4234, 1, 0
      %v4360 = vsel %vm4235, 1, 0
      %v4361 = vsel %vm4236, 1, 0
      %v4362 = vsel %vm4237, 1, 0
      %4363 = vset.pattern.permute.xlu0 0
      %4364 = vperm.xlu0 %4363, %v4358
      %v4365 = vpop.permute.xlu0 %4364
      %4366 = vset.pattern.permute.xlu0 0
      %4367 = vperm.xlu0 %4366, %v4359
      %v4368 = vpop.permute.xlu0 %4367
      %4369 = vset.pattern.permute.xlu0 0
      %4370 = vperm.xlu0 %4369, %v4360
      %v4371 = vpop.permute.xlu0 %4370
      %4372 = vset.pattern.permute.xlu0 0
      %4373 = vperm.xlu0 %4372, %v4361
      %v4374 = vpop.permute.xlu0 %4373
      %4375 = vset.pattern.permute.xlu0 0
      %4376 = vperm.xlu0 %4375, %v4362
      %v4377 = vpop.permute.xlu0 %4376
      %vm4378 = vcmp.eq.s32.totalorder %v4365, 1
      %vm4379 = vcmp.eq.s32.totalorder %v4368, 1
      %vm4380 = vcmp.eq.s32.totalorder %v4371, 1
      %vm4381 = vcmp.eq.s32.totalorder %v4374, 1
      %vm4382 = vcmp.eq.s32.totalorder %v4377, 1
      %v4383 = vsel %vm4378, %v4103, %v4348
      %v4384 = vsel %vm4378, %v4104, %v4349
      %v4385 = vsel %vm4379, %v4105, %v4350
      %v4386 = vsel %vm4379, %v4106, %v4351
      %v4387 = vsel %vm4380, %v4107, %v4352
      %v4388 = vsel %vm4380, %v4108, %v4353
      %v4389 = vsel %vm4381, %v4109, %v4354
      %v4390 = vsel %vm4381, %v4110, %v4355
      %v4391 = vsel %vm4382, %v4111, %v4356
      %v4392 = vsel %vm4382, %v4112, %v4357
      %4394 = vset.pattern.permute.xlu0 0
      %4395 = vperm.xlu0 %4394, %v3400
      %v4396 = vpop.permute.xlu0 %4395
      %4399 = vset.pattern.permute.xlu0 0
      %4400 = vperm.xlu0 %4399, %v3401
      %v4401 = vpop.permute.xlu0 %4400
      %4404 = vset.pattern.permute.xlu0 0
      %4405 = vperm.xlu0 %4404, %v3402
      %v4406 = vpop.permute.xlu0 %4405
      %vm4408 = vcmask 326656
      %v4410 = vsel %vm4408, %v3397, 0
      %v4413 = vsel %vm4408, %v3398, 0
      %v4416 = vsel %vm4408, %v3399, 0
      %4418 = vmatprep.subr.mxu0 %v4384
      %4419 = vmatpush1.msra.mxu0 %v4383
      %4420 = vmatprep.subr.mxu0 %v4386
      %4421 = vmatpush1.msra.mxu0 %v4385
      %4422 = vmatprep.subr.mxu0 %v4388
      %4423 = vmatpush1.msra.mxu0 %v4387
      %4424 = vmatprep.subr.mxu0 %v4390
      %4425 = vmatpush1.msra.mxu0 %v4389
      %4426 = vmatprep.subr.mxu0 %v4392
      %4427 = vmatpush1.msra.mxu0 %v4391
      %4428 = vmatprep.subr.mxu0 0.0
      %4429 = vmatpush1.msra.mxu0 0.0
      %4430 = vmatprep.subr.mxu0 0.0
      %4431 = vmatpush1.msra.mxu0 0.0
      %4432 = vmatprep.subr.mxu0 0.0
      %4433 = vmatpush1.msra.mxu0 0.0
      %4434 = vmatprep.subr.mxu0 0.0
      %4435 = vmatpush1.msra.mxu0 0.0
      %4436 = vmatprep.subr.mxu0 0.0
      %4437 = vmatpush1.msra.mxu0 0.0
      %4438 = vmatprep.subr.mxu0 0.0
      %4439 = vmatpush1.msra.mxu0 0.0
      %4440 = vmatprep.subr.mxu0 0.0
      %4441 = vmatpush1.msra.mxu0 0.0
      %4442 = vmatprep.subr.mxu0 0.0
      %4443 = vmatpush1.msra.mxu0 0.0
      %4444 = vmatprep.subr.mxu0 0.0
      %4445 = vmatpush1.msra.mxu0 0.0
      %4446 = vmatprep.subr.mxu0 0.0
      %4447 = vmatpush1.msra.mxu0 0.0
      %4448 = vmatprep.subr.mxu0 0.0
      %4449 = vmatpush1.msra.mxu0 0.0
      %4450 = vmatprep.subr.mxu0 0.0
      %4451 = vmatpush1.msra.mxu0 0.0
      %4452 = vmatprep.subr.mxu0 0.0
      %4453 = vmatpush1.msra.mxu0 0.0
      %4454 = vmatprep.subr.mxu0 0.0
      %4455 = vmatpush1.msra.mxu0 0.0
      %4456 = vmatprep.subr.mxu0 0.0
      %4457 = vmatpush1.msra.mxu0 0.0
      %4458 = vmatprep.subr.mxu0 0.0
      %4459 = vmatpush1.msra.mxu0 0.0
      %4460 = vmatprep.subr.mxu0 0.0
      %4461 = vmatpush1.msra.mxu0 0.0
      %4462 = vmatprep.subr.mxu0 0.0
      %4463 = vmatpush1.msra.mxu0 0.0
      %4464 = vmatprep.subr.mxu0 0.0
      %4465 = vmatpush1.msra.mxu0 0.0
      %4466 = vmatprep.subr.mxu0 0.0
      %4467 = vmatpush1.msra.mxu0 0.0
      %4468 = vmatprep.subr.mxu0 0.0
      %4469 = vmatpush1.msra.mxu0 0.0
      %4470 = vmatprep.subr.mxu0 0.0
      %4471 = vmatpush1.msra.mxu0 0.0
      %4472 = vmatprep.subr.mxu0 0.0
      %4473 = vmatpush1.msra.mxu0 0.0
      %4474 = vmatprep.subr.mxu0 0.0
      %4475 = vmatpush1.msra.mxu0 0.0
      %4476 = vmatprep.subr.mxu0 0.0
      %4477 = vmatpush1.msra.mxu0 0.0
      %4478 = vmatprep.subr.mxu0 0.0
      %4479 = vmatpush1.msra.mxu0 0.0
      %4480 = vmatprep.subr.mxu0 0.0
      %4481 = vmatpush1.msra.mxu0 0.0
      %4482 = vmatprep.mubr.f32.mxu0 0.0
      %4483 = vmatmul.mubr.f32.gmra.mrb[0].mxu0 %v4410
      %v4484 = vpop.f32.mrb[0].mxu0
      %v4485 = vadd.f32 %v4396, %v4484
      %v4486 = vpop.f32.mrb[0].mxu0
      %v4487 = vadd.f32 %v4396, %v4486
      %4488 = vmatprep.mubr.f32.mxu0 0.0
      %4489 = vmatmul.mubr.f32.gmra.mrb[0].mxu0 %v4413
      %v4490 = vpop.f32.mrb[0].mxu0
      %v4491 = vadd.f32 %v4401, %v4490
      %v4492 = vpop.f32.mrb[0].mxu0
      %v4493 = vadd.f32 %v4401, %v4492
      %4494 = vmatprep.mubr.f32.mxu0 0.0
      %4495 = vmatmul.mubr.f32.gmra.mrb[0].mxu0 %v4416
      %v4496 = vpop.f32.mrb[0].mxu0
      %v4497 = vadd.f32 %v4406, %v4496
      %v4498 = vpop.f32.mrb[0].mxu0
      %v4499 = vadd.f32 %v4406, %v4498
      %4500 = vdwg.mxu0
      %v4501 = vadd.f32 %v3377, %v4485
      %v4502 = vadd.f32 %v3378, %v4487
      %v4503 = vadd.f32 %v3379, %v4491
      %v4504 = vadd.f32 %v3380, %v4493
      %v4505 = vadd.f32 %v3381, %v4497
      %v4506 = vadd.f32 %v3382, %v4499
      %4507 = vst [vmem:[%s467] sm:$0xff] %v4501
      %4508 = vst [vmem:[%s467 + $0x8] sm:$0xff] %v4502
      %4509 = vst [vmem:[%s467 + $0x10] sm:$0xff] %v4503
      %4510 = vst [vmem:[%s467 + $0x18] sm:$0xff] %v4504
      %4511 = vst [vmem:[%s467 + $0x20] sm:$0xf] %v4505
      %4512 = vst [vmem:[%s467 + $0x28] sm:$0xf] %v4506
      %p4513 = scmp.lt.s32.totalorder %s25, 1
      %s4514 = scalar_select %p4513, %s25, 1
      %s4515 = smul.addr %s4514, 6
      %s4516 = smul.addr %s4515, 8
      %s4517 = scalar_lea.vmem %s14, %s4516
      // Predicated region
      $region77: #{lgt_group_forward.3} parent=75 // pred_check
        %p4518 = pneg %p342
      $region78: #{lgt_group_forward.3} parent=75 // pred_check_branch
        %4520 = sbr.rel (%p4518) target = $region80
      $region79: #{lgt_group_forward.3} parent=75 // pred_region
        _
      $region80: #{lgt_group_forward.3} parent=75 // pred_fallthru
        _
    $region76: #{lgt_group_forward.3} parent=5 // pred_fallthru
      _
    %p4521 = scmp.le.s32.totalorder 2, %s20
    // Predicated region
    $region81: #{lgt_group_forward.3} parent=5 // pred_check
      %p4522 = pneg %p4521
    $region82: #{lgt_group_forward.3} parent=5 // pred_check_branch
      %4524 = sbr.rel (%p4522) target = $region84
    $region83: #{lgt_group_forward.3} parent=5 // pred_region
      %s4525 = ssub.s32 %s20, 2
      // Predicated region
      $region85: #{lgt_group_forward.3} parent=83 // pred_check
        %p4526 = pneg %p348
      $region86: #{lgt_group_forward.3} parent=83 // pred_check_branch
        %4528 = sbr.rel (%p4526) target = $region88
      $region87: #{lgt_group_forward.3} parent=83 // pred_region
        %p4529 = scmp.lt.s32.totalorder %s26, 1
        %s4530 = scalar_select %p4529, %s26, 1
        %s4531 = smul.addr %s4530, 6
        %s4532 = smul.addr %s4531, 8
        %s4533 = scalar_lea.vmem %s14, %s4532
      $region88: #{lgt_group_forward.3} parent=83 // pred_fallthru
        _
    $region84: #{lgt_group_forward.3} parent=5 // pred_fallthru
      _
  $region6: #{lgt_group_forward.3} parent=0 // loop_footer
    %s24 = sadd.s32 1, %s20
  $region7: #{lgt_group_forward.3} parent=0 // loop_footer_branch
    %19 = sbr.rel target = $region3
  $region8: #{lgt_group_forward.3} parent=0 // loop_exit
    _

</llo_original>
